<compile_context>
chip_gen: v7x
topology: tpu7x:2x2x1
jax: 0.10.0
libtpu: 0.0.40
codegen_flags: <defaults>
</compile_context>

<pallas_src>
import jax
import jax.numpy as jnp
from jax.experimental import pallas as pl
from jax.experimental.pallas import tpu as pltpu


K_IN = 20000          # 50 * 20 * 20 fc1 input features
K_PAD = 20480         # 5 * 4096  (lane-aligned K blocks)
M1_PAD = 512          # fc1 out 500 -> 512 (lane dense)
BLOCK_K = 4096
M_SPLIT = 2           # fc1 output-column split (v7x megacore "parallel" axis)


# ----------------------------------------------------------------------------
# Conv-as-matmul kernel: (rows, K) @ (K, Cout) + bias, ReLU.  Whole batch in
# one grid step (rows = N*Ho*Wo), contraction on the MXU.
# ----------------------------------------------------------------------------
def mm_bias_relu_kernel(x_ref, w_ref, b_ref, o_ref):
    acc = jnp.dot(x_ref[...], w_ref[...], preferred_element_type=jnp.float32)
    acc = acc + b_ref[...].astype(jnp.float32)
    o_ref[...] = jnp.maximum(acc, 0.0).astype(o_ref.dtype)


def matmul_bias_relu(x, w, b):
    rows, kdim = x.shape
    _, m = w.shape
    return pl.pallas_call(
        mm_bias_relu_kernel,
        out_shape=jax.ShapeDtypeStruct((rows, m), x.dtype),
        grid_spec=pltpu.PrefetchScalarGridSpec(
            num_scalar_prefetch=0,
            grid=(1,),
            in_specs=[
                pl.BlockSpec((rows, kdim), lambda i: (0, 0)),
                pl.BlockSpec((kdim, m), lambda i: (0, 0)),
                pl.BlockSpec((1, m), lambda i: (0, 0)),
            ],
            out_specs=pl.BlockSpec((rows, m), lambda i: (0, 0)),
        ),
        compiler_params=pltpu.CompilerParams(
            dimension_semantics=("arbitrary",)),
    )(x, w, b)


def im2col(x_nhwc, kh, kw):
    """Patch matrix (N*Ho*Wo, kh*kw*Cin); rows ordered (n, oh, ow),
    columns ordered (kh, kw, cin) to match w_hwio.reshape(kh*kw*cin, cout)."""
    n, h, w, c = x_nhwc.shape
    ho, wo = h - kh + 1, w - kw + 1
    cols = []
    for i in range(kh):
        for j in range(kw):
            cols.append(x_nhwc[:, i:i + ho, j:j + wo, :].reshape(n * ho * wo, c))
    return jnp.concatenate(cols, axis=1)


def conv2d_relu(x_nhwc, w_flat, b_row, kh, kw, cout):
    n, h, w, _ = x_nhwc.shape
    ho, wo = h - kh + 1, w - kw + 1
    patches = im2col(x_nhwc, kh, kw)                     # (n*ho*wo, kh*kw*cin)
    out = matmul_bias_relu(patches, w_flat, b_row)       # (n*ho*wo, cout)
    return out.reshape(n, ho, wo, cout)


# ----------------------------------------------------------------------------
# Fused fc1 (+ReLU) + fc2 kernel.
#   grid = (M_SPLIT, K_PAD // BLOCK_K)   -> ("parallel", "arbitrary")
#   Each j computes a 256-wide half of fc1, applies bias+ReLU on the last K
#   step, multiplies by the matching fc2_w row-half and writes a partial
#   (N, 10) fc2 result (fc2 bias added only for j == 0).
# ----------------------------------------------------------------------------
def fc_fused_kernel(x_ref, w1_ref, b1_ref, w2_ref, b2_ref, o_ref, acc_ref):
    j = pl.program_id(0)
    k = pl.program_id(1)

    @pl.when(k == 0)
    def _():
        acc_ref[...] = jnp.zeros_like(acc_ref)

    acc_ref[...] += jnp.dot(x_ref[...], w1_ref[...],
                            preferred_element_type=jnp.float32)

    @pl.when(k == pl.num_programs(1) - 1)
    def _():
        h = jnp.maximum(acc_ref[...] + b1_ref[...].astype(jnp.float32), 0.0)
        out2 = jnp.dot(h, w2_ref[...].astype(jnp.float32),
                       preferred_element_type=jnp.float32)
        out2 = out2 + jnp.where(j == 0, b2_ref[...].astype(jnp.float32), 0.0)
        o_ref[...] = out2.astype(o_ref.dtype)[None]


def fc1_fc2_fused(x, w1, b1, w2, b2, *, block_k=BLOCK_K, m_split=M_SPLIT):
    n, k_pad = x.shape
    _, m1 = w1.shape
    _, m2 = w2.shape
    m_half = m1 // m_split
    grid_k = k_pad // block_k

    partial = pl.pallas_call(
        fc_fused_kernel,
        out_shape=jax.ShapeDtypeStruct((m_split, n, m2), jnp.float32),
        grid_spec=pltpu.PrefetchScalarGridSpec(
            num_scalar_prefetch=0,
            grid=(m_split, grid_k),
            in_specs=[
                pl.BlockSpec((n, block_k), lambda j, k: (0, k)),
                pl.BlockSpec((block_k, m_half), lambda j, k: (k, j)),
                pl.BlockSpec((1, m_half), lambda j, k: (0, j)),
                pl.BlockSpec((m_half, m2), lambda j, k: (j, 0)),
                pl.BlockSpec((1, m2), lambda j, k: (0, 0)),
            ],
            out_specs=pl.BlockSpec((1, n, m2), lambda j, k: (j, 0, 0)),
            scratch_shapes=[pltpu.VMEM((n, m_half), jnp.float32)],
        ),
        compiler_params=pltpu.CompilerParams(
            dimension_semantics=("parallel", "arbitrary"),
            vmem_limit_bytes=32 * 1024 * 1024),
    )(x, w1, b1, w2, b2)
    return jnp.sum(partial, axis=0)                      # (n, m2)


# ----------------------------------------------------------------------------
# One-time parameter re-layout (permutation + padding; numerically exact).
# ----------------------------------------------------------------------------
def prepare_params(p):
    kp = {}
    kp["w1f"] = p["w1"].reshape(5 * 5 * 1, 20)           # (25, 20)
    kp["b1r"] = p["b1"].reshape(1, 20)
    kp["w2f"] = p["w2"].reshape(5 * 5 * 20, 50)          # (500, 50)
    kp["b2r"] = p["b2"].reshape(1, 50)

    # torch x.view(N,-1) flattens CHW (c*400 + h*20 + w); our conv2 output
    # flattens HWC ((h*20 + w)*50 + c).  Permute fc1_w rows once to match.
    idx = jnp.arange(K_IN)
    hw = idx // 50
    c = idx % 50
    fc1_w = p["fc1_w"][c * 400 + hw, :]                  # (20000, 500)
    # Pad K 20000->20480 and M 500->512 with zeros (exact: ReLU(0)=0 and the
    # matching fc2_w rows are zero-padded below).
    kp["fc1_w"] = jnp.pad(fc1_w, ((0, K_PAD - K_IN), (0, M1_PAD - 500)))
    kp["fc1_b"] = jnp.pad(p["fc1_b"], (0, M1_PAD - 500)).reshape(1, M1_PAD)
    kp["fc2_w"] = jnp.pad(p["fc2_w"], ((0, M1_PAD - 500), (0, 0)))  # (512, 10)
    kp["fc2_b"] = p["fc2_b"].reshape(1, 10)
    return kp


# ----------------------------------------------------------------------------
# LeNet forward (glue around the Pallas kernels).
# ----------------------------------------------------------------------------
def lenet_forward(x_nchw, kp):
    n = x_nchw.shape[0]
    x = jnp.transpose(x_nchw, (0, 2, 3, 1))              # NCHW -> NHWC
    x = conv2d_relu(x, kp["w1f"], kp["b1r"], 5, 5, 20)   # (N, 24, 24, 20)
    x = conv2d_relu(x, kp["w2f"], kp["b2r"], 5, 5, 50)   # (N, 20, 20, 50)
    # HWC flatten (fc1_w rows are pre-permuted to this order) + K padding.
    xf = x.reshape(n, K_IN)
    xf = jnp.pad(xf, ((0, 0), (0, K_PAD - K_IN)))
    # TODO(synk): F.dropout path (use_dropout=True) not implemented; module
    # default is dropout=False so the eval/no-dropout path is reproduced.
    return fc1_fc2_fused(xf, kp["fc1_w"], kp["fc1_b"],
                         kp["fc2_w"], kp["fc2_b"])


def lenet_reference(x_nchw, p):
    """Pure-JAX reference with identical semantics (for validation)."""
    x = jnp.transpose(x_nchw, (0, 2, 3, 1))
    dn = ("NHWC", "HWIO", "NHWC")
    x = jax.lax.conv_general_dilated(x, p["w1"], (1, 1), "VALID",
                                     dimension_numbers=dn)
    x = jnp.maximum(x + p["b1"], 0.0)
    x = jax.lax.conv_general_dilated(x, p["w2"], (1, 1), "VALID",
                                     dimension_numbers=dn)
    x = jnp.maximum(x + p["b2"], 0.0)
    n = x.shape[0]
    x = jnp.transpose(x, (0, 3, 1, 2)).reshape(n, -1)    # torch CHW flatten
    x = jnp.maximum(x @ p["fc1_w"] + p["fc1_b"], 0.0)
    return x @ p["fc2_w"] + p["fc2_b"]


def init_params(key):
    ks = jax.random.split(key, 8)

    def u(k, shape, fan_in):
        bound = 1.0 / jnp.sqrt(float(fan_in))
        return jax.random.uniform(k, shape, jnp.float32, -bound, bound)

    return {
        "w1": u(ks[0], (5, 5, 1, 20), 5 * 5 * 1),        # conv1 (HWIO)
        "b1": u(ks[1], (20,), 5 * 5 * 1),
        "w2": u(ks[2], (5, 5, 20, 50), 5 * 5 * 20),      # conv2 (HWIO)
        "b2": u(ks[3], (50,), 5 * 5 * 20),
        "fc1_w": u(ks[4], (20000, 500), 20000),          # fc1 (in, out)
        "fc1_b": u(ks[5], (500,), 20000),
        "fc2_w": u(ks[6], (500, 10), 500),               # fc2 (in, out)
        "fc2_b": u(ks[7], (10,), 500),
    }


if __name__ == "__main__":
    key = jax.random.PRNGKey(0)
    k_params, k_x = jax.random.split(key)
    params = init_params(k_params)
    kparams = prepare_params(params)                     # one-time re-layout

    # LeNet's fc1 hard-codes 20000 = 50*20*20 features => 28x28 single-channel
    # inputs; small batch of 2.
    x = jax.random.normal(k_x, (2, 1, 28, 28), dtype=jnp.float32)

    out = jax.jit(lenet_forward)(x, kparams)
    out = jax.block_until_ready(out)
    assert out.shape == (2, 10), out.shape

    ref = jax.block_until_ready(jax.jit(lenet_reference)(x, params))
    assert jnp.allclose(out, ref, atol=2e-3, rtol=2e-3), (
        float(jnp.max(jnp.abs(out - ref))))

    print("KERNEL_OK")
</pallas_src>

<mosaic_0001>
module attributes {stable_mosaic.version = 11 : i64} {
  func.func @mm_bias_relu_kernel(%arg0: i32, %arg1: memref<1152x25xf32, #tpu.memory_space<vmem>>, %arg2: memref<25x20xf32, #tpu.memory_space<vmem>>, %arg3: memref<1x20xf32, #tpu.memory_space<vmem>>, %arg4: memref<1152x20xf32, #tpu.memory_space<vmem>>) attributes {dimension_semantics = [#tpu.dimension_semantics<arbitrary>], iteration_bounds = array<i64: 1>, scalar_prefetch = 0 : i64, scratch_operands = 0 : i64, tpu.core_type = #tpu.core_type<tc>, window_params = [{pipeline_mode = #tpu.pipeline_mode<synchronous>, transform_indices = @transform_0, window_bounds = array<i64: 1152, 25>}, {pipeline_mode = #tpu.pipeline_mode<synchronous>, transform_indices = @transform_1, window_bounds = array<i64: 25, 20>}, {pipeline_mode = #tpu.pipeline_mode<synchronous>, transform_indices = @transform_2, window_bounds = array<i64: 1, 20>}, {pipeline_mode = #tpu.pipeline_mode<synchronous>, transform_indices = @transform_3, window_bounds = array<i64: 1152, 20>}]} {
    %c0 = arith.constant 0 : index
    %c0_0 = arith.constant 0 : index
    %0 = vector.load %arg1[%c0, %c0_0] : memref<1152x25xf32, #tpu.memory_space<vmem>>, vector<1152x25xf32>
    %c0_1 = arith.constant 0 : index
    %c0_2 = arith.constant 0 : index
    %1 = vector.load %arg2[%c0_1, %c0_2] : memref<25x20xf32, #tpu.memory_space<vmem>>, vector<25x20xf32>
    %cst = arith.constant dense<0.000000e+00> : vector<1152x20xf32>
    %2 = tpu.matmul %0, %1, %cst {dimension_numbers = #tpu.dot_dimension_numbers<[1], [0], [0], [1], [0, 0, 1, 1], [], []>} : vector<1152x25xf32>, vector<25x20xf32>, vector<1152x20xf32> -> vector<1152x20xf32>
    %c0_3 = arith.constant 0 : index
    %c0_4 = arith.constant 0 : index
    %3 = vector.load %arg3[%c0_3, %c0_4] : memref<1x20xf32, #tpu.memory_space<vmem>>, vector<1x20xf32>
    %4 = vector.broadcast %3 : vector<1x20xf32> to vector<1152x20xf32>
    %5 = arith.addf %2, %4 : vector<1152x20xf32>
    %cst_5 = arith.constant 0.000000e+00 : f32
    %6 = vector.broadcast %cst_5 : f32 to vector<1152x20xf32>
    %7 = arith.maximumf %5, %6 : vector<1152x20xf32>
    %c0_6 = arith.constant 0 : index
    %c0_7 = arith.constant 0 : index
    %8 = vector.load %arg4[%c0_6, %c0_7] : memref<1152x20xf32, #tpu.memory_space<vmem>>, vector<1152x20xf32>
    tpu.vector_store %arg4[%c0_6, %c0_7], %7 {strides = array<i32>} : memref<1152x20xf32, #tpu.memory_space<vmem>>, vector<1152x20xf32>,
    return
  }
  func.func @transform_0(%arg0: i32) -> (i32, i32) {
    %c0_i32 = arith.constant 0 : i32
    %c0_i32_0 = arith.constant 0 : i32
    %c0_i32_1 = arith.constant 0 : i32
    return %c0_i32, %c0_i32_0 : i32, i32
  }
  func.func @transform_1(%arg0: i32) -> (i32, i32) {
    %c0_i32 = arith.constant 0 : i32
    %c0_i32_0 = arith.constant 0 : i32
    %c0_i32_1 = arith.constant 0 : i32
    return %c0_i32, %c0_i32_0 : i32, i32
  }
  func.func @transform_2(%arg0: i32) -> (i32, i32) {
    %c0_i32 = arith.constant 0 : i32
    %c0_i32_0 = arith.constant 0 : i32
    %c0_i32_1 = arith.constant 0 : i32
    return %c0_i32, %c0_i32_0 : i32, i32
  }
  func.func @transform_3(%arg0: i32) -> (i32, i32) {
    %c0_i32 = arith.constant 0 : i32
    %c0_i32_0 = arith.constant 0 : i32
    %c0_i32_1 = arith.constant 0 : i32
    return %c0_i32, %c0_i32_0 : i32, i32
  }
}

module attributes {stable_mosaic.version = 11 : i64} {
  func.func @mm_bias_relu_kernel(%arg0: i32, %arg1: memref<800x500xf32, #tpu.memory_space<vmem>>, %arg2: memref<500x50xf32, #tpu.memory_space<vmem>>, %arg3: memref<1x50xf32, #tpu.memory_space<vmem>>, %arg4: memref<800x50xf32, #tpu.memory_space<vmem>>) attributes {dimension_semantics = [#tpu.dimension_semantics<arbitrary>], iteration_bounds = array<i64: 1>, scalar_prefetch = 0 : i64, scratch_operands = 0 : i64, tpu.core_type = #tpu.core_type<tc>, window_params = [{pipeline_mode = #tpu.pipeline_mode<synchronous>, transform_indices = @transform_0, window_bounds = array<i64: 800, 500>}, {pipeline_mode = #tpu.pipeline_mode<synchronous>, transform_indices = @transform_1, window_bounds = array<i64: 500, 50>}, {pipeline_mode = #tpu.pipeline_mode<synchronous>, transform_indices = @transform_2, window_bounds = array<i64: 1, 50>}, {pipeline_mode = #tpu.pipeline_mode<synchronous>, transform_indices = @transform_3, window_bounds = array<i64: 800, 50>}]} {
    %c0 = arith.constant 0 : index
    %c0_0 = arith.constant 0 : index
    %0 = vector.load %arg1[%c0, %c0_0] : memref<800x500xf32, #tpu.memory_space<vmem>>, vector<800x500xf32>
    %c0_1 = arith.constant 0 : index
    %c0_2 = arith.constant 0 : index
    %1 = vector.load %arg2[%c0_1, %c0_2] : memref<500x50xf32, #tpu.memory_space<vmem>>, vector<500x50xf32>
    %cst = arith.constant dense<0.000000e+00> : vector<800x50xf32>
    %2 = tpu.matmul %0, %1, %cst {dimension_numbers = #tpu.dot_dimension_numbers<[1], [0], [0], [1], [0, 0, 1, 1], [], []>} : vector<800x500xf32>, vector<500x50xf32>, vector<800x50xf32> -> vector<800x50xf32>
    %c0_3 = arith.constant 0 : index
    %c0_4 = arith.constant 0 : index
    %3 = vector.load %arg3[%c0_3, %c0_4] : memref<1x50xf32, #tpu.memory_space<vmem>>, vector<1x50xf32>
    %4 = vector.broadcast %3 : vector<1x50xf32> to vector<800x50xf32>
    %5 = arith.addf %2, %4 : vector<800x50xf32>
    %cst_5 = arith.constant 0.000000e+00 : f32
    %6 = vector.broadcast %cst_5 : f32 to vector<800x50xf32>
    %7 = arith.maximumf %5, %6 : vector<800x50xf32>
    %c0_6 = arith.constant 0 : index
    %c0_7 = arith.constant 0 : index
    %8 = vector.load %arg4[%c0_6, %c0_7] : memref<800x50xf32, #tpu.memory_space<vmem>>, vector<800x50xf32>
    tpu.vector_store %arg4[%c0_6, %c0_7], %7 {strides = array<i32>} : memref<800x50xf32, #tpu.memory_space<vmem>>, vector<800x50xf32>,
    return
  }
  func.func @transform_0(%arg0: i32) -> (i32, i32) {
    %c0_i32 = arith.constant 0 : i32
    %c0_i32_0 = arith.constant 0 : i32
    %c0_i32_1 = arith.constant 0 : i32
    return %c0_i32, %c0_i32_0 : i32, i32
  }
  func.func @transform_1(%arg0: i32) -> (i32, i32) {
    %c0_i32 = arith.constant 0 : i32
    %c0_i32_0 = arith.constant 0 : i32
    %c0_i32_1 = arith.constant 0 : i32
    return %c0_i32, %c0_i32_0 : i32, i32
  }
  func.func @transform_2(%arg0: i32) -> (i32, i32) {
    %c0_i32 = arith.constant 0 : i32
    %c0_i32_0 = arith.constant 0 : i32
    %c0_i32_1 = arith.constant 0 : i32
    return %c0_i32, %c0_i32_0 : i32, i32
  }
  func.func @transform_3(%arg0: i32) -> (i32, i32) {
    %c0_i32 = arith.constant 0 : i32
    %c0_i32_0 = arith.constant 0 : i32
    %c0_i32_1 = arith.constant 0 : i32
    return %c0_i32, %c0_i32_0 : i32, i32
  }
}

module attributes {stable_mosaic.version = 11 : i64} {
  func.func @fc_fused_kernel(%arg0: i32, %arg1: i32, %arg2: memref<2x4096xf32, #tpu.memory_space<vmem>>, %arg3: memref<4096x256xf32, #tpu.memory_space<vmem>>, %arg4: memref<1x256xf32, #tpu.memory_space<vmem>>, %arg5: memref<256x10xf32, #tpu.memory_space<vmem>>, %arg6: memref<1x10xf32, #tpu.memory_space<vmem>>, %arg7: memref<1x2x10xf32, #tpu.memory_space<vmem>>, %arg8: memref<2x256xf32, #tpu.memory_space<vmem>>) attributes {dimension_semantics = [#tpu.dimension_semantics<parallel>, #tpu.dimension_semantics<arbitrary>], iteration_bounds = array<i64: 2, 5>, scalar_prefetch = 0 : i64, scratch_operands = 1 : i64, tpu.core_type = #tpu.core_type<tc>, window_params = [{transform_indices = @transform_0, window_bounds = array<i64: 2, 4096>}, {transform_indices = @transform_1, window_bounds = array<i64: 4096, 256>}, {transform_indices = @transform_2, window_bounds = array<i64: 1, 256>}, {transform_indices = @transform_3, window_bounds = array<i64: 256, 10>}, {pipeline_mode = #tpu.pipeline_mode<synchronous>, transform_indices = @transform_4, window_bounds = array<i64: 1, 10>}, {transform_indices = @transform_5, window_bounds = array<i64: 1, 2, 10>}]} {
    %c0_i32 = arith.constant 0 : i32
    %0 = arith.cmpi eq, %arg1, %c0_i32 : i32
    %1 = arith.extui %0 : i1 to i32
    %c0_i32_0 = arith.constant 0 : i32
    %2 = arith.cmpi ne, %1, %c0_i32_0 : i32
    scf.if %2 {
      %cst_9 = arith.constant 0.000000e+00 : f32
      %12 = vector.broadcast %cst_9 : f32 to vector<2x256xf32>
      %c0_10 = arith.constant 0 : index
      %c0_11 = arith.constant 0 : index
      %13 = vector.load %arg8[%c0_10, %c0_11] : memref<2x256xf32, #tpu.memory_space<vmem>>, vector<2x256xf32>
      tpu.vector_store %arg8[%c0_10, %c0_11], %12 {strides = array<i32>} : memref<2x256xf32, #tpu.memory_space<vmem>>, vector<2x256xf32>,
    } else {
    }
    %c0 = arith.constant 0 : index
    %c0_1 = arith.constant 0 : index
    %3 = vector.load %arg8[%c0, %c0_1] : memref<2x256xf32, #tpu.memory_space<vmem>>, vector<2x256xf32>
    %c0_2 = arith.constant 0 : index
    %c0_3 = arith.constant 0 : index
    %4 = vector.load %arg2[%c0_2, %c0_3] : memref<2x4096xf32, #tpu.memory_space<vmem>>, vector<2x4096xf32>
    %c0_4 = arith.constant 0 : index
    %c0_5 = arith.constant 0 : index
    %5 = vector.load %arg3[%c0_4, %c0_5] : memref<4096x256xf32, #tpu.memory_space<vmem>>, vector<4096x256xf32>
    %cst = arith.constant dense<0.000000e+00> : vector<2x256xf32>
    %6 = tpu.matmul %4, %5, %cst {dimension_numbers = #tpu.dot_dimension_numbers<[1], [0], [0], [1], [0, 0, 1, 1], [], []>} : vector<2x4096xf32>, vector<4096x256xf32>, vector<2x256xf32> -> vector<2x256xf32>
    %7 = arith.addf %3, %6 : vector<2x256xf32>
    %c0_6 = arith.constant 0 : index
    %c0_7 = arith.constant 0 : index
    %8 = vector.load %arg8[%c0_6, %c0_7] : memref<2x256xf32, #tpu.memory_space<vmem>>, vector<2x256xf32>
    tpu.vector_store %arg8[%c0_6, %c0_7], %7 {strides = array<i32>} : memref<2x256xf32, #tpu.memory_space<vmem>>, vector<2x256xf32>,
    %c4_i32 = arith.constant 4 : i32
    %9 = arith.cmpi eq, %arg1, %c4_i32 : i32
    %10 = arith.extui %9 : i1 to i32
    %c0_i32_8 = arith.constant 0 : i32
    %11 = arith.cmpi ne, %10, %c0_i32_8 : i32
    scf.if %11 {
      %c0_9 = arith.constant 0 : index
      %c0_10 = arith.constant 0 : index
      %12 = vector.load %arg8[%c0_9, %c0_10] : memref<2x256xf32, #tpu.memory_space<vmem>>, vector<2x256xf32>
      %c0_11 = arith.constant 0 : index
      %c0_12 = arith.constant 0 : index
      %13 = vector.load %arg4[%c0_11, %c0_12] : memref<1x256xf32, #tpu.memory_space<vmem>>, vector<1x256xf32>
      %14 = vector.broadcast %13 : vector<1x256xf32> to vector<2x256xf32>
      %15 = arith.addf %12, %14 : vector<2x256xf32>
      %cst_13 = arith.constant 0.000000e+00 : f32
      %16 = vector.broadcast %cst_13 : f32 to vector<2x256xf32>
      %17 = arith.maximumf %15, %16 : vector<2x256xf32>
      %c0_14 = arith.constant 0 : index
      %c0_15 = arith.constant 0 : index
      %18 = vector.load %arg5[%c0_14, %c0_15] : memref<256x10xf32, #tpu.memory_space<vmem>>, vector<256x10xf32>
      %cst_16 = arith.constant dense<0.000000e+00> : vector<2x10xf32>
      %19 = tpu.matmul %17, %18, %cst_16 {dimension_numbers = #tpu.dot_dimension_numbers<[1], [0], [0], [1], [0, 0, 1, 1], [], []>} : vector<2x256xf32>, vector<256x10xf32>, vector<2x10xf32> -> vector<2x10xf32>
      %c0_i32_17 = arith.constant 0 : i32
      %20 = arith.cmpi eq, %arg0, %c0_i32_17 : i32
      %c0_18 = arith.constant 0 : index
      %c0_19 = arith.constant 0 : index
      %21 = vector.load %arg6[%c0_18, %c0_19] : memref<1x10xf32, #tpu.memory_space<vmem>>, vector<1x10xf32>
      %cst_20 = arith.constant 0.000000e+00 : f32
      %22 = vector.broadcast %cst_20 : f32 to vector<1x10xf32>
      %23 = arith.select %20, %21, %22 : vector<1x10xf32>
      %24 = vector.broadcast %23 : vector<1x10xf32> to vector<2x10xf32>
      %25 = arith.addf %19, %24 : vector<2x10xf32>
      %26 = vector.shape_cast %25 : vector<2x10xf32> to vector<1x2x10xf32>
      %c0_21 = arith.constant 0 : index
      %c0_22 = arith.constant 0 : index
      %c0_23 = arith.constant 0 : index
      %27 = vector.load %arg7[%c0_21, %c0_22, %c0_23] : memref<1x2x10xf32, #tpu.memory_space<vmem>>, vector<1x2x10xf32>
      tpu.vector_store %arg7[%c0_21, %c0_22, %c0_23], %26 {strides = array<i32>} : memref<1x2x10xf32, #tpu.memory_space<vmem>>, vector<1x2x10xf32>,
    } else {
    }
    return
  }
  func.func @transform_0(%arg0: i32, %arg1: i32) -> (i32, i32) {
    %c0_i32 = arith.constant 0 : i32
    %c0_i32_0 = arith.constant 0 : i32
    return %c0_i32, %arg1 : i32, i32
  }
  func.func @transform_1(%arg0: i32, %arg1: i32) -> (i32, i32) {
    %c0_i32 = arith.constant 0 : i32
    return %arg1, %arg0 : i32, i32
  }
  func.func @transform_2(%arg0: i32, %arg1: i32) -> (i32, i32) {
    %c0_i32 = arith.constant 0 : i32
    %c0_i32_0 = arith.constant 0 : i32
    return %c0_i32, %arg0 : i32, i32
  }
  func.func @transform_3(%arg0: i32, %arg1: i32) -> (i32, i32) {
    %c0_i32 = arith.constant 0 : i32
    %c0_i32_0 = arith.constant 0 : i32
    return %arg0, %c0_i32 : i32, i32
  }
  func.func @transform_4(%arg0: i32, %arg1: i32) -> (i32, i32) {
    %c0_i32 = arith.constant 0 : i32
    %c0_i32_0 = arith.constant 0 : i32
    %c0_i32_1 = arith.constant 0 : i32
    return %c0_i32, %c0_i32_0 : i32, i32
  }
  func.func @transform_5(%arg0: i32, %arg1: i32) -> (i32, i32, i32) {
    %c0_i32 = arith.constant 0 : i32
    %c0_i32_0 = arith.constant 0 : i32
    %c0_i32_1 = arith.constant 0 : i32
    return %arg0, %c0_i32, %c0_i32_0 : i32, i32, i32
  }
}

</mosaic_0001>

<llo_original>
// kernel: lenet_forward.3
$region0: #{lenet_forward.3}
  #allocation0 [shape = 'u32[]', space=smem, size = 0x4, offset = 0x4, fixed_abs, tag = 'smem constant byte address 0x4 - core index']
  #allocation1 [shape = 'u32[144,128]{1,0:T(1,128)}', space=vmem, size = 0x12000, scoped, tag = 'internal scratch']
  %s0 = inlined_call_operand.vmem [shape: f32[1152,25], index: 0, kind: input, shape index: {}]
  %s1 = inlined_call_operand.vmem [shape: f32[25,20], index: 1, kind: input, shape index: {}]
  %s2 = inlined_call_operand.hbm [shape: f32[1,20], index: 2, kind: input, shape index: {}]
  %s3 = inlined_call_operand.vmem [shape: f32[1152,20], index: 3, kind: output, shape index: {}]
  %s4 = sld [smem:[#allocation0]]
  $region26: #{lenet_forward.3} parent=0
    _
  %s6 = ssub.s32 1, %s4
  %s7 = scalar_select 0, %s6, %s4
  $region1: #{lenet_forward.3} parent=0
    #allocation2 [shape = 'u8[512]{0}', space=vmem, size = 0x400, scoped, tag = 'input window, operand 2, single buffered']
    #allocation3 [shape = 's32[1]{0}', space=sflag, size = 0x4, scoped, tag = 'scoped memory for lenet_forward.3']
    %8 = vsyncpa [#allocation3], 0
    // Predicated region
    $region2: #{lenet_forward.3} parent=1 // pred_check
      _
    $region3: #{lenet_forward.3} parent=1 // pred_check_branch
      %10 = sbr.rel (0) target = $region5
    $region4: #{lenet_forward.3} parent=1 // pred_region
      _
    $region5: #{lenet_forward.3} parent=1 // pred_fallthru
      _
    // Predicated region
    $region6: #{lenet_forward.3} parent=1 // pred_check
      _
    $region7: #{lenet_forward.3} parent=1 // pred_check_branch
      %12 = sbr.rel (0) target = $region9
    $region8: #{lenet_forward.3} parent=1 // pred_region
      _
    $region9: #{lenet_forward.3} parent=1 // pred_fallthru
      _
    // Predicated region
    $region10: #{lenet_forward.3} parent=1 // pred_check
      _
    $region11: #{lenet_forward.3} parent=1 // pred_check_branch
      %14 = sbr.rel (0) target = $region13
    $region12: #{lenet_forward.3} parent=1 // pred_region
      %s16 = ssub.s32 16, 16
      %17 = vsyncadd [#allocation3], %s16
      %s19 = sshll.u32 [#allocation2], 4
      %s20 = int_to_ptr.vmem [resolvable:$true] %s19
      %22 = dma.hbm_to_vmem [thread:$0]  %s2, 16, %s20, [#allocation3]
    $region13: #{lenet_forward.3} parent=1 // pred_fallthru
      _
    // Predicated region
    $region14: #{lenet_forward.3} parent=1 // pred_check
      _
    $region15: #{lenet_forward.3} parent=1 // pred_check_branch
      %24 = sbr.rel (0) target = $region17
    $region16: #{lenet_forward.3} parent=1 // pred_region
      %25 = dma.done [#allocation3], 16
    $region17: #{lenet_forward.3} parent=1 // pred_fallthru
      _
    %v26 = vld [vmem:[%s0] sm:$0xff]
    %v27 = vld [vmem:[%s0 + $0x8] sm:$0xff]
    %v28 = vld [vmem:[%s0 + $0x10] sm:$0xff]
    %v29 = vld [vmem:[%s0 + $0x18] sm:$0xff]
    %v30 = vld [vmem:[%s0 + $0x20] sm:$0xff]
    %v31 = vld [vmem:[%s0 + $0x28] sm:$0xff]
    %v32 = vld [vmem:[%s0 + $0x30] sm:$0xff]
    %v33 = vld [vmem:[%s0 + $0x38] sm:$0xff]
    %v34 = vld [vmem:[%s0 + $0x40] sm:$0xff]
    %v35 = vld [vmem:[%s0 + $0x48] sm:$0xff]
    %v36 = vld [vmem:[%s0 + $0x50] sm:$0xff]
    %v37 = vld [vmem:[%s0 + $0x58] sm:$0xff]
    %v38 = vld [vmem:[%s0 + $0x60] sm:$0xff]
    %v39 = vld [vmem:[%s0 + $0x68] sm:$0xff]
    %v40 = vld [vmem:[%s0 + $0x70] sm:$0xff]
    %v41 = vld [vmem:[%s0 + $0x78] sm:$0xff]
    %v42 = vld [vmem:[%s0 + $0x80] sm:$0xff]
    %v43 = vld [vmem:[%s0 + $0x88] sm:$0xff]
    %v44 = vld [vmem:[%s0 + $0x90] sm:$0xff]
    %v45 = vld [vmem:[%s0 + $0x98] sm:$0xff]
    %v46 = vld [vmem:[%s0 + $0xa0] sm:$0xff]
    %v47 = vld [vmem:[%s0 + $0xa8] sm:$0xff]
    %v48 = vld [vmem:[%s0 + $0xb0] sm:$0xff]
    %v49 = vld [vmem:[%s0 + $0xb8] sm:$0xff]
    %v50 = vld [vmem:[%s0 + $0xc0] sm:$0xff]
    %v51 = vld [vmem:[%s0 + $0xc8] sm:$0xff]
    %v52 = vld [vmem:[%s0 + $0xd0] sm:$0xff]
    %v53 = vld [vmem:[%s0 + $0xd8] sm:$0xff]
    %v54 = vld [vmem:[%s0 + $0xe0] sm:$0xff]
    %v55 = vld [vmem:[%s0 + $0xe8] sm:$0xff]
    %v56 = vld [vmem:[%s0 + $0xf0] sm:$0xff]
    %v57 = vld [vmem:[%s0 + $0xf8] sm:$0xff]
    %v58 = vld [vmem:[%s0 + $0x100] sm:$0xff]
    %v59 = vld [vmem:[%s0 + $0x108] sm:$0xff]
    %v60 = vld [vmem:[%s0 + $0x110] sm:$0xff]
    %v61 = vld [vmem:[%s0 + $0x118] sm:$0xff]
    %v62 = vld [vmem:[%s0 + $0x120] sm:$0xff]
    %v63 = vld [vmem:[%s0 + $0x128] sm:$0xff]
    %v64 = vld [vmem:[%s0 + $0x130] sm:$0xff]
    %v65 = vld [vmem:[%s0 + $0x138] sm:$0xff]
    %v66 = vld [vmem:[%s0 + $0x140] sm:$0xff]
    %v67 = vld [vmem:[%s0 + $0x148] sm:$0xff]
    %v68 = vld [vmem:[%s0 + $0x150] sm:$0xff]
    %v69 = vld [vmem:[%s0 + $0x158] sm:$0xff]
    %v70 = vld [vmem:[%s0 + $0x160] sm:$0xff]
    %v71 = vld [vmem:[%s0 + $0x168] sm:$0xff]
    %v72 = vld [vmem:[%s0 + $0x170] sm:$0xff]
    %v73 = vld [vmem:[%s0 + $0x178] sm:$0xff]
    %v74 = vld [vmem:[%s0 + $0x180] sm:$0xff]
    %v75 = vld [vmem:[%s0 + $0x188] sm:$0xff]
    %v76 = vld [vmem:[%s0 + $0x190] sm:$0xff]
    %v77 = vld [vmem:[%s0 + $0x198] sm:$0xff]
    %v78 = vld [vmem:[%s0 + $0x1a0] sm:$0xff]
    %v79 = vld [vmem:[%s0 + $0x1a8] sm:$0xff]
    %v80 = vld [vmem:[%s0 + $0x1b0] sm:$0xff]
    %v81 = vld [vmem:[%s0 + $0x1b8] sm:$0xff]
    %v82 = vld [vmem:[%s0 + $0x1c0] sm:$0xff]
    %v83 = vld [vmem:[%s0 + $0x1c8] sm:$0xff]
    %v84 = vld [vmem:[%s0 + $0x1d0] sm:$0xff]
    %v85 = vld [vmem:[%s0 + $0x1d8] sm:$0xff]
    %v86 = vld [vmem:[%s0 + $0x1e0] sm:$0xff]
    %v87 = vld [vmem:[%s0 + $0x1e8] sm:$0xff]
    %v88 = vld [vmem:[%s0 + $0x1f0] sm:$0xff]
    %v89 = vld [vmem:[%s0 + $0x1f8] sm:$0xff]
    %v90 = vld [vmem:[%s0 + $0x200] sm:$0xff]
    %v91 = vld [vmem:[%s0 + $0x208] sm:$0xff]
    %v92 = vld [vmem:[%s0 + $0x210] sm:$0xff]
    %v93 = vld [vmem:[%s0 + $0x218] sm:$0xff]
    %v94 = vld [vmem:[%s0 + $0x220] sm:$0xff]
    %v95 = vld [vmem:[%s0 + $0x228] sm:$0xff]
    %v96 = vld [vmem:[%s0 + $0x230] sm:$0xff]
    %v97 = vld [vmem:[%s0 + $0x238] sm:$0xff]
    %v98 = vld [vmem:[%s0 + $0x240] sm:$0xff]
    %v99 = vld [vmem:[%s0 + $0x248] sm:$0xff]
    %v100 = vld [vmem:[%s0 + $0x250] sm:$0xff]
    %v101 = vld [vmem:[%s0 + $0x258] sm:$0xff]
    %v102 = vld [vmem:[%s0 + $0x260] sm:$0xff]
    %v103 = vld [vmem:[%s0 + $0x268] sm:$0xff]
    %v104 = vld [vmem:[%s0 + $0x270] sm:$0xff]
    %v105 = vld [vmem:[%s0 + $0x278] sm:$0xff]
    %v106 = vld [vmem:[%s0 + $0x280] sm:$0xff]
    %v107 = vld [vmem:[%s0 + $0x288] sm:$0xff]
    %v108 = vld [vmem:[%s0 + $0x290] sm:$0xff]
    %v109 = vld [vmem:[%s0 + $0x298] sm:$0xff]
    %v110 = vld [vmem:[%s0 + $0x2a0] sm:$0xff]
    %v111 = vld [vmem:[%s0 + $0x2a8] sm:$0xff]
    %v112 = vld [vmem:[%s0 + $0x2b0] sm:$0xff]
    %v113 = vld [vmem:[%s0 + $0x2b8] sm:$0xff]
    %v114 = vld [vmem:[%s0 + $0x2c0] sm:$0xff]
    %v115 = vld [vmem:[%s0 + $0x2c8] sm:$0xff]
    %v116 = vld [vmem:[%s0 + $0x2d0] sm:$0xff]
    %v117 = vld [vmem:[%s0 + $0x2d8] sm:$0xff]
    %v118 = vld [vmem:[%s0 + $0x2e0] sm:$0xff]
    %v119 = vld [vmem:[%s0 + $0x2e8] sm:$0xff]
    %v120 = vld [vmem:[%s0 + $0x2f0] sm:$0xff]
    %v121 = vld [vmem:[%s0 + $0x2f8] sm:$0xff]
    %v122 = vld [vmem:[%s0 + $0x300] sm:$0xff]
    %v123 = vld [vmem:[%s0 + $0x308] sm:$0xff]
    %v124 = vld [vmem:[%s0 + $0x310] sm:$0xff]
    %v125 = vld [vmem:[%s0 + $0x318] sm:$0xff]
    %v126 = vld [vmem:[%s0 + $0x320] sm:$0xff]
    %v127 = vld [vmem:[%s0 + $0x328] sm:$0xff]
    %v128 = vld [vmem:[%s0 + $0x330] sm:$0xff]
    %v129 = vld [vmem:[%s0 + $0x338] sm:$0xff]
    %v130 = vld [vmem:[%s0 + $0x340] sm:$0xff]
    %v131 = vld [vmem:[%s0 + $0x348] sm:$0xff]
    %v132 = vld [vmem:[%s0 + $0x350] sm:$0xff]
    %v133 = vld [vmem:[%s0 + $0x358] sm:$0xff]
    %v134 = vld [vmem:[%s0 + $0x360] sm:$0xff]
    %v135 = vld [vmem:[%s0 + $0x368] sm:$0xff]
    %v136 = vld [vmem:[%s0 + $0x370] sm:$0xff]
    %v137 = vld [vmem:[%s0 + $0x378] sm:$0xff]
    %v138 = vld [vmem:[%s0 + $0x380] sm:$0xff]
    %v139 = vld [vmem:[%s0 + $0x388] sm:$0xff]
    %v140 = vld [vmem:[%s0 + $0x390] sm:$0xff]
    %v141 = vld [vmem:[%s0 + $0x398] sm:$0xff]
    %v142 = vld [vmem:[%s0 + $0x3a0] sm:$0xff]
    %v143 = vld [vmem:[%s0 + $0x3a8] sm:$0xff]
    %v144 = vld [vmem:[%s0 + $0x3b0] sm:$0xff]
    %v145 = vld [vmem:[%s0 + $0x3b8] sm:$0xff]
    %v146 = vld [vmem:[%s0 + $0x3c0] sm:$0xff]
    %v147 = vld [vmem:[%s0 + $0x3c8] sm:$0xff]
    %v148 = vld [vmem:[%s0 + $0x3d0] sm:$0xff]
    %v149 = vld [vmem:[%s0 + $0x3d8] sm:$0xff]
    %v150 = vld [vmem:[%s0 + $0x3e0] sm:$0xff]
    %v151 = vld [vmem:[%s0 + $0x3e8] sm:$0xff]
    %v152 = vld [vmem:[%s0 + $0x3f0] sm:$0xff]
    %v153 = vld [vmem:[%s0 + $0x3f8] sm:$0xff]
    %v154 = vld [vmem:[%s0 + $0x400] sm:$0xff]
    %v155 = vld [vmem:[%s0 + $0x408] sm:$0xff]
    %v156 = vld [vmem:[%s0 + $0x410] sm:$0xff]
    %v157 = vld [vmem:[%s0 + $0x418] sm:$0xff]
    %v158 = vld [vmem:[%s0 + $0x420] sm:$0xff]
    %v159 = vld [vmem:[%s0 + $0x428] sm:$0xff]
    %v160 = vld [vmem:[%s0 + $0x430] sm:$0xff]
    %v161 = vld [vmem:[%s0 + $0x438] sm:$0xff]
    %v162 = vld [vmem:[%s0 + $0x440] sm:$0xff]
    %v163 = vld [vmem:[%s0 + $0x448] sm:$0xff]
    %v164 = vld [vmem:[%s0 + $0x450] sm:$0xff]
    %v165 = vld [vmem:[%s0 + $0x458] sm:$0xff]
    %v166 = vld [vmem:[%s0 + $0x460] sm:$0xff]
    %v167 = vld [vmem:[%s0 + $0x468] sm:$0xff]
    %v168 = vld [vmem:[%s0 + $0x470] sm:$0xff]
    %v169 = vld [vmem:[%s0 + $0x478] sm:$0xff]
    %v170 = vld [vmem:[%s1] sm:$0xff]
    %v171 = vld [vmem:[%s1 + $0x8] sm:$0xff]
    %v172 = vld [vmem:[%s1 + $0x10] sm:$0xff]
    %v173 = vld [vmem:[%s1 + $0x18] sm:$0x1]
    %v174 = vld [vmem:[#allocation2] sm:$0x1]
    %v176 = vlaneseq
    %v177 = vshrl.u32 %v176, 7
    %v178 = vsub.s32 0, %v177
    %v179 = vrot.slane %v174, %v178
    %vm181 = vcmask 203776
    %v183 = vsel %vm181, %v26, 0
    %v186 = vsel %vm181, %v27, 0
    %v189 = vsel %vm181, %v28, 0
    %v192 = vsel %vm181, %v29, 0
    %v195 = vsel %vm181, %v30, 0
    %v198 = vsel %vm181, %v31, 0
    %v201 = vsel %vm181, %v32, 0
    %v204 = vsel %vm181, %v33, 0
    %v207 = vsel %vm181, %v34, 0
    %v210 = vsel %vm181, %v35, 0
    %v213 = vsel %vm181, %v36, 0
    %v216 = vsel %vm181, %v37, 0
    %v219 = vsel %vm181, %v38, 0
    %v222 = vsel %vm181, %v39, 0
    %v225 = vsel %vm181, %v40, 0
    %v228 = vsel %vm181, %v41, 0
    %v231 = vsel %vm181, %v42, 0
    %v234 = vsel %vm181, %v43, 0
    %v237 = vsel %vm181, %v44, 0
    %v240 = vsel %vm181, %v45, 0
    %v243 = vsel %vm181, %v46, 0
    %v246 = vsel %vm181, %v47, 0
    %v249 = vsel %vm181, %v48, 0
    %v252 = vsel %vm181, %v49, 0
    %v255 = vsel %vm181, %v50, 0
    %v258 = vsel %vm181, %v51, 0
    %v261 = vsel %vm181, %v52, 0
    %v264 = vsel %vm181, %v53, 0
    %v267 = vsel %vm181, %v54, 0
    %v270 = vsel %vm181, %v55, 0
    %v273 = vsel %vm181, %v56, 0
    %v276 = vsel %vm181, %v57, 0
    %v279 = vsel %vm181, %v58, 0
    %v282 = vsel %vm181, %v59, 0
    %v285 = vsel %vm181, %v60, 0
    %v288 = vsel %vm181, %v61, 0
    %v291 = vsel %vm181, %v62, 0
    %v294 = vsel %vm181, %v63, 0
    %v297 = vsel %vm181, %v64, 0
    %v300 = vsel %vm181, %v65, 0
    %v303 = vsel %vm181, %v66, 0
    %v306 = vsel %vm181, %v67, 0
    %v309 = vsel %vm181, %v68, 0
    %v312 = vsel %vm181, %v69, 0
    %v315 = vsel %vm181, %v70, 0
    %v318 = vsel %vm181, %v71, 0
    %v321 = vsel %vm181, %v72, 0
    %v324 = vsel %vm181, %v73, 0
    %v327 = vsel %vm181, %v74, 0
    %v330 = vsel %vm181, %v75, 0
    %v333 = vsel %vm181, %v76, 0
    %v336 = vsel %vm181, %v77, 0
    %v339 = vsel %vm181, %v78, 0
    %v342 = vsel %vm181, %v79, 0
    %v345 = vsel %vm181, %v80, 0
    %v348 = vsel %vm181, %v81, 0
    %v351 = vsel %vm181, %v82, 0
    %v354 = vsel %vm181, %v83, 0
    %v357 = vsel %vm181, %v84, 0
    %v360 = vsel %vm181, %v85, 0
    %v363 = vsel %vm181, %v86, 0
    %v366 = vsel %vm181, %v87, 0
    %v369 = vsel %vm181, %v88, 0
    %v372 = vsel %vm181, %v89, 0
    %v375 = vsel %vm181, %v90, 0
    %v378 = vsel %vm181, %v91, 0
    %v381 = vsel %vm181, %v92, 0
    %v384 = vsel %vm181, %v93, 0
    %v387 = vsel %vm181, %v94, 0
    %v390 = vsel %vm181, %v95, 0
    %v393 = vsel %vm181, %v96, 0
    %v396 = vsel %vm181, %v97, 0
    %v399 = vsel %vm181, %v98, 0
    %v402 = vsel %vm181, %v99, 0
    %v405 = vsel %vm181, %v100, 0
    %v408 = vsel %vm181, %v101, 0
    %v411 = vsel %vm181, %v102, 0
    %v414 = vsel %vm181, %v103, 0
    %v417 = vsel %vm181, %v104, 0
    %v420 = vsel %vm181, %v105, 0
    %v423 = vsel %vm181, %v106, 0
    %v426 = vsel %vm181, %v107, 0
    %v429 = vsel %vm181, %v108, 0
    %v432 = vsel %vm181, %v109, 0
    %v435 = vsel %vm181, %v110, 0
    %v438 = vsel %vm181, %v111, 0
    %v441 = vsel %vm181, %v112, 0
    %v444 = vsel %vm181, %v113, 0
    %v447 = vsel %vm181, %v114, 0
    %v450 = vsel %vm181, %v115, 0
    %v453 = vsel %vm181, %v116, 0
    %v456 = vsel %vm181, %v117, 0
    %v459 = vsel %vm181, %v118, 0
    %v462 = vsel %vm181, %v119, 0
    %v465 = vsel %vm181, %v120, 0
    %v468 = vsel %vm181, %v121, 0
    %v471 = vsel %vm181, %v122, 0
    %v474 = vsel %vm181, %v123, 0
    %v477 = vsel %vm181, %v124, 0
    %v480 = vsel %vm181, %v125, 0
    %v483 = vsel %vm181, %v126, 0
    %v486 = vsel %vm181, %v127, 0
    %v489 = vsel %vm181, %v128, 0
    %v492 = vsel %vm181, %v129, 0
    %v495 = vsel %vm181, %v130, 0
    %v498 = vsel %vm181, %v131, 0
    %v501 = vsel %vm181, %v132, 0
    %v504 = vsel %vm181, %v133, 0
    %v507 = vsel %vm181, %v134, 0
    %v510 = vsel %vm181, %v135, 0
    %v513 = vsel %vm181, %v136, 0
    %v516 = vsel %vm181, %v137, 0
    %v519 = vsel %vm181, %v138, 0
    %v522 = vsel %vm181, %v139, 0
    %v525 = vsel %vm181, %v140, 0
    %v528 = vsel %vm181, %v141, 0
    %v531 = vsel %vm181, %v142, 0
    %v534 = vsel %vm181, %v143, 0
    %v537 = vsel %vm181, %v144, 0
    %v540 = vsel %vm181, %v145, 0
    %v543 = vsel %vm181, %v146, 0
    %v546 = vsel %vm181, %v147, 0
    %v549 = vsel %vm181, %v148, 0
    %v552 = vsel %vm181, %v149, 0
    %v555 = vsel %vm181, %v150, 0
    %v558 = vsel %vm181, %v151, 0
    %v561 = vsel %vm181, %v152, 0
    %v564 = vsel %vm181, %v153, 0
    %v567 = vsel %vm181, %v154, 0
    %v570 = vsel %vm181, %v155, 0
    %v573 = vsel %vm181, %v156, 0
    %v576 = vsel %vm181, %v157, 0
    %v579 = vsel %vm181, %v158, 0
    %v582 = vsel %vm181, %v159, 0
    %v585 = vsel %vm181, %v160, 0
    %v588 = vsel %vm181, %v161, 0
    %v591 = vsel %vm181, %v162, 0
    %v594 = vsel %vm181, %v163, 0
    %v597 = vsel %vm181, %v164, 0
    %v600 = vsel %vm181, %v165, 0
    %v603 = vsel %vm181, %v166, 0
    %v606 = vsel %vm181, %v167, 0
    %v609 = vsel %vm181, %v168, 0
    %v612 = vsel %vm181, %v169, 0
    %vm614 = vcmask 1040384
    %v616 = vsel %vm614, %v173, 0
    %618 = vmatprep.subr.mxu0 0.0
    %619 = vmatpush1.msra.mxu0 %v170
    %620 = vmatprep.subr.mxu0 0.0
    %621 = vmatpush1.msra.mxu0 %v171
    %622 = vmatprep.subr.mxu0 0.0
    %623 = vmatpush1.msra.mxu0 %v172
    %624 = vmatprep.subr.mxu0 0.0
    %625 = vmatpush1.msra.mxu0 %v616
    %626 = vmatprep.subr.mxu0 0.0
    %627 = vmatpush1.msra.mxu0 0.0
    %628 = vmatprep.subr.mxu0 0.0
    %629 = vmatpush1.msra.mxu0 0.0
    %630 = vmatprep.subr.mxu0 0.0
    %631 = vmatpush1.msra.mxu0 0.0
    %632 = vmatprep.subr.mxu0 0.0
    %633 = vmatpush1.msra.mxu0 0.0
    %634 = vmatprep.subr.mxu0 0.0
    %635 = vmatpush1.msra.mxu0 0.0
    %636 = vmatprep.subr.mxu0 0.0
    %637 = vmatpush1.msra.mxu0 0.0
    %638 = vmatprep.subr.mxu0 0.0
    %639 = vmatpush1.msra.mxu0 0.0
    %640 = vmatprep.subr.mxu0 0.0
    %641 = vmatpush1.msra.mxu0 0.0
    %642 = vmatprep.subr.mxu0 0.0
    %643 = vmatpush1.msra.mxu0 0.0
    %644 = vmatprep.subr.mxu0 0.0
    %645 = vmatpush1.msra.mxu0 0.0
    %646 = vmatprep.subr.mxu0 0.0
    %647 = vmatpush1.msra.mxu0 0.0
    %648 = vmatprep.subr.mxu0 0.0
    %649 = vmatpush1.msra.mxu0 0.0
    %650 = vmatprep.subr.mxu0 0.0
    %651 = vmatpush1.msra.mxu0 0.0
    %652 = vmatprep.subr.mxu0 0.0
    %653 = vmatpush1.msra.mxu0 0.0
    %654 = vmatprep.subr.mxu0 0.0
    %655 = vmatpush1.msra.mxu0 0.0
    %656 = vmatprep.subr.mxu0 0.0
    %657 = vmatpush1.msra.mxu0 0.0
    %658 = vmatprep.subr.mxu0 0.0
    %659 = vmatpush1.msra.mxu0 0.0
    %660 = vmatprep.subr.mxu0 0.0
    %661 = vmatpush1.msra.mxu0 0.0
    %662 = vmatprep.subr.mxu0 0.0
    %663 = vmatpush1.msra.mxu0 0.0
    %664 = vmatprep.subr.mxu0 0.0
    %665 = vmatpush1.msra.mxu0 0.0
    %666 = vmatprep.subr.mxu0 0.0
    %667 = vmatpush1.msra.mxu0 0.0
    %668 = vmatprep.subr.mxu0 0.0
    %669 = vmatpush1.msra.mxu0 0.0
    %670 = vmatprep.subr.mxu0 0.0
    %671 = vmatpush1.msra.mxu0 0.0
    %672 = vmatprep.subr.mxu0 0.0
    %673 = vmatpush1.msra.mxu0 0.0
    %674 = vmatprep.subr.mxu0 0.0
    %675 = vmatpush1.msra.mxu0 0.0
    %676 = vmatprep.subr.mxu0 0.0
    %677 = vmatpush1.msra.mxu0 0.0
    %678 = vmatprep.subr.mxu0 0.0
    %679 = vmatpush1.msra.mxu0 0.0
    %680 = vmatprep.subr.mxu0 0.0
    %681 = vmatpush1.msra.mxu0 0.0
    %682 = vmatprep.mubr.f32.mxu0 0.0
    %683 = vmatmul.mubr.f32.gmra.mrb[0].mxu0 %v183
    %v684 = vpop.f32.mrb[0].mxu0
    %v685 = vadd.f32 %v179, %v684
    %v686 = vpop.f32.mrb[0].mxu0
    %687 = vmatprep.mubr.f32.mxu0 0.0
    %688 = vmatmul.mubr.f32.gmra.mrb[0].mxu0 %v186
    %v689 = vpop.f32.mrb[0].mxu0
    %v690 = vadd.f32 %v179, %v689
    %v691 = vpop.f32.mrb[0].mxu0
    %692 = vmatprep.mubr.f32.mxu0 0.0
    %693 = vmatmul.mubr.f32.gmra.mrb[0].mxu0 %v189
    %v694 = vpop.f32.mrb[0].mxu0
    %v695 = vadd.f32 %v179, %v694
    %v696 = vpop.f32.mrb[0].mxu0
    %697 = vmatprep.mubr.f32.mxu0 0.0
    %698 = vmatmul.mubr.f32.gmra.mrb[0].mxu0 %v192
    %v699 = vpop.f32.mrb[0].mxu0
    %v700 = vadd.f32 %v179, %v699
    %v701 = vpop.f32.mrb[0].mxu0
    %702 = vmatprep.mubr.f32.mxu0 0.0
    %703 = vmatmul.mubr.f32.gmra.mrb[0].mxu0 %v195
    %v704 = vpop.f32.mrb[0].mxu0
    %v705 = vadd.f32 %v179, %v704
    %v706 = vpop.f32.mrb[0].mxu0
    %707 = vmatprep.mubr.f32.mxu0 0.0
    %708 = vmatmul.mubr.f32.gmra.mrb[0].mxu0 %v198
    %v709 = vpop.f32.mrb[0].mxu0
    %v710 = vadd.f32 %v179, %v709
    %v711 = vpop.f32.mrb[0].mxu0
    %712 = vmatprep.mubr.f32.mxu0 0.0
    %713 = vmatmul.mubr.f32.gmra.mrb[0].mxu0 %v201
    %v714 = vpop.f32.mrb[0].mxu0
    %v715 = vadd.f32 %v179, %v714
    %v716 = vpop.f32.mrb[0].mxu0
    %717 = vmatprep.mubr.f32.mxu0 0.0
    %718 = vmatmul.mubr.f32.gmra.mrb[0].mxu0 %v204
    %v719 = vpop.f32.mrb[0].mxu0
    %v720 = vadd.f32 %v179, %v719
    %v721 = vpop.f32.mrb[0].mxu0
    %722 = vmatprep.mubr.f32.mxu0 0.0
    %723 = vmatmul.mubr.f32.gmra.mrb[0].mxu0 %v207
    %v724 = vpop.f32.mrb[0].mxu0
    %v725 = vadd.f32 %v179, %v724
    %v726 = vpop.f32.mrb[0].mxu0
    %727 = vmatprep.mubr.f32.mxu0 0.0
    %728 = vmatmul.mubr.f32.gmra.mrb[0].mxu0 %v210
    %v729 = vpop.f32.mrb[0].mxu0
    %v730 = vadd.f32 %v179, %v729
    %v731 = vpop.f32.mrb[0].mxu0
    %732 = vmatprep.mubr.f32.mxu0 0.0
    %733 = vmatmul.mubr.f32.gmra.mrb[0].mxu0 %v213
    %v734 = vpop.f32.mrb[0].mxu0
    %v735 = vadd.f32 %v179, %v734
    %v736 = vpop.f32.mrb[0].mxu0
    %737 = vmatprep.mubr.f32.mxu0 0.0
    %738 = vmatmul.mubr.f32.gmra.mrb[0].mxu0 %v216
    %v739 = vpop.f32.mrb[0].mxu0
    %v740 = vadd.f32 %v179, %v739
    %v741 = vpop.f32.mrb[0].mxu0
    %742 = vmatprep.mubr.f32.mxu0 0.0
    %743 = vmatmul.mubr.f32.gmra.mrb[0].mxu0 %v219
    %v744 = vpop.f32.mrb[0].mxu0
    %v745 = vadd.f32 %v179, %v744
    %v746 = vpop.f32.mrb[0].mxu0
    %747 = vmatprep.mubr.f32.mxu0 0.0
    %748 = vmatmul.mubr.f32.gmra.mrb[0].mxu0 %v222
    %v749 = vpop.f32.mrb[0].mxu0
    %v750 = vadd.f32 %v179, %v749
    %v751 = vpop.f32.mrb[0].mxu0
    %752 = vmatprep.mubr.f32.mxu0 0.0
    %753 = vmatmul.mubr.f32.gmra.mrb[0].mxu0 %v225
    %v754 = vpop.f32.mrb[0].mxu0
    %v755 = vadd.f32 %v179, %v754
    %v756 = vpop.f32.mrb[0].mxu0
    %757 = vmatprep.mubr.f32.mxu0 0.0
    %758 = vmatmul.mubr.f32.gmra.mrb[0].mxu0 %v228
    %v759 = vpop.f32.mrb[0].mxu0
    %v760 = vadd.f32 %v179, %v759
    %v761 = vpop.f32.mrb[0].mxu0
    %762 = vmatprep.mubr.f32.mxu0 0.0
    %763 = vmatmul.mubr.f32.gmra.mrb[0].mxu0 %v231
    %v764 = vpop.f32.mrb[0].mxu0
    %v765 = vadd.f32 %v179, %v764
    %v766 = vpop.f32.mrb[0].mxu0
    %767 = vmatprep.mubr.f32.mxu0 0.0
    %768 = vmatmul.mubr.f32.gmra.mrb[0].mxu0 %v234
    %v769 = vpop.f32.mrb[0].mxu0
    %v770 = vadd.f32 %v179, %v769
    %v771 = vpop.f32.mrb[0].mxu0
    %772 = vmatprep.mubr.f32.mxu0 0.0
    %773 = vmatmul.mubr.f32.gmra.mrb[0].mxu0 %v237
    %v774 = vpop.f32.mrb[0].mxu0
    %v775 = vadd.f32 %v179, %v774
    %v776 = vpop.f32.mrb[0].mxu0
    %777 = vmatprep.mubr.f32.mxu0 0.0
    %778 = vmatmul.mubr.f32.gmra.mrb[0].mxu0 %v240
    %v779 = vpop.f32.mrb[0].mxu0
    %v780 = vadd.f32 %v179, %v779
    %v781 = vpop.f32.mrb[0].mxu0
    %782 = vmatprep.mubr.f32.mxu0 0.0
    %783 = vmatmul.mubr.f32.gmra.mrb[0].mxu0 %v243
    %v784 = vpop.f32.mrb[0].mxu0
    %v785 = vadd.f32 %v179, %v784
    %v786 = vpop.f32.mrb[0].mxu0
    %787 = vmatprep.mubr.f32.mxu0 0.0
    %788 = vmatmul.mubr.f32.gmra.mrb[0].mxu0 %v246
    %v789 = vpop.f32.mrb[0].mxu0
    %v790 = vadd.f32 %v179, %v789
    %v791 = vpop.f32.mrb[0].mxu0
    %792 = vmatprep.mubr.f32.mxu0 0.0
    %793 = vmatmul.mubr.f32.gmra.mrb[0].mxu0 %v249
    %v794 = vpop.f32.mrb[0].mxu0
    %v795 = vadd.f32 %v179, %v794
    %v796 = vpop.f32.mrb[0].mxu0
    %797 = vmatprep.mubr.f32.mxu0 0.0
    %798 = vmatmul.mubr.f32.gmra.mrb[0].mxu0 %v252
    %v799 = vpop.f32.mrb[0].mxu0
    %v800 = vadd.f32 %v179, %v799
    %v801 = vpop.f32.mrb[0].mxu0
    %802 = vmatprep.mubr.f32.mxu0 0.0
    %803 = vmatmul.mubr.f32.gmra.mrb[0].mxu0 %v255
    %v804 = vpop.f32.mrb[0].mxu0
    %v805 = vadd.f32 %v179, %v804
    %v806 = vpop.f32.mrb[0].mxu0
    %807 = vmatprep.mubr.f32.mxu0 0.0
    %808 = vmatmul.mubr.f32.gmra.mrb[0].mxu0 %v258
    %v809 = vpop.f32.mrb[0].mxu0
    %v810 = vadd.f32 %v179, %v809
    %v811 = vpop.f32.mrb[0].mxu0
    %812 = vmatprep.mubr.f32.mxu0 0.0
    %813 = vmatmul.mubr.f32.gmra.mrb[0].mxu0 %v261
    %v814 = vpop.f32.mrb[0].mxu0
    %v815 = vadd.f32 %v179, %v814
    %v816 = vpop.f32.mrb[0].mxu0
    %817 = vmatprep.mubr.f32.mxu0 0.0
    %818 = vmatmul.mubr.f32.gmra.mrb[0].mxu0 %v264
    %v819 = vpop.f32.mrb[0].mxu0
    %v820 = vadd.f32 %v179, %v819
    %v821 = vpop.f32.mrb[0].mxu0
    %822 = vmatprep.mubr.f32.mxu0 0.0
    %823 = vmatmul.mubr.f32.gmra.mrb[0].mxu0 %v267
    %v824 = vpop.f32.mrb[0].mxu0
    %v825 = vadd.f32 %v179, %v824
    %v826 = vpop.f32.mrb[0].mxu0
    %827 = vmatprep.mubr.f32.mxu0 0.0
    %828 = vmatmul.mubr.f32.gmra.mrb[0].mxu0 %v270
    %v829 = vpop.f32.mrb[0].mxu0
    %v830 = vadd.f32 %v179, %v829
    %v831 = vpop.f32.mrb[0].mxu0
    %832 = vmatprep.mubr.f32.mxu0 0.0
    %833 = vmatmul.mubr.f32.gmra.mrb[0].mxu0 %v273
    %v834 = vpop.f32.mrb[0].mxu0
    %v835 = vadd.f32 %v179, %v834
    %v836 = vpop.f32.mrb[0].mxu0
    %837 = vmatprep.mubr.f32.mxu0 0.0
    %838 = vmatmul.mubr.f32.gmra.mrb[0].mxu0 %v276
    %v839 = vpop.f32.mrb[0].mxu0
    %v840 = vadd.f32 %v179, %v839
    %v841 = vpop.f32.mrb[0].mxu0
    %842 = vmatprep.mubr.f32.mxu0 0.0
    %843 = vmatmul.mubr.f32.gmra.mrb[0].mxu0 %v279
    %v844 = vpop.f32.mrb[0].mxu0
    %v845 = vadd.f32 %v179, %v844
    %v846 = vpop.f32.mrb[0].mxu0
    %847 = vmatprep.mubr.f32.mxu0 0.0
    %848 = vmatmul.mubr.f32.gmra.mrb[0].mxu0 %v282
    %v849 = vpop.f32.mrb[0].mxu0
    %v850 = vadd.f32 %v179, %v849
    %v851 = vpop.f32.mrb[0].mxu0
    %852 = vmatprep.mubr.f32.mxu0 0.0
    %853 = vmatmul.mubr.f32.gmra.mrb[0].mxu0 %v285
    %v854 = vpop.f32.mrb[0].mxu0
    %v855 = vadd.f32 %v179, %v854
    %v856 = vpop.f32.mrb[0].mxu0
    %857 = vmatprep.mubr.f32.mxu0 0.0
    %858 = vmatmul.mubr.f32.gmra.mrb[0].mxu0 %v288
    %v859 = vpop.f32.mrb[0].mxu0
    %v860 = vadd.f32 %v179, %v859
    %v861 = vpop.f32.mrb[0].mxu0
    %862 = vmatprep.mubr.f32.mxu0 0.0
    %863 = vmatmul.mubr.f32.gmra.mrb[0].mxu0 %v291
    %v864 = vpop.f32.mrb[0].mxu0
    %v865 = vadd.f32 %v179, %v864
    %v866 = vpop.f32.mrb[0].mxu0
    %867 = vmatprep.mubr.f32.mxu0 0.0
    %868 = vmatmul.mubr.f32.gmra.mrb[0].mxu0 %v294
    %v869 = vpop.f32.mrb[0].mxu0
    %v870 = vadd.f32 %v179, %v869
    %v871 = vpop.f32.mrb[0].mxu0
    %872 = vmatprep.mubr.f32.mxu0 0.0
    %873 = vmatmul.mubr.f32.gmra.mrb[0].mxu0 %v297
    %v874 = vpop.f32.mrb[0].mxu0
    %v875 = vadd.f32 %v179, %v874
    %v876 = vpop.f32.mrb[0].mxu0
    %877 = vmatprep.mubr.f32.mxu0 0.0
    %878 = vmatmul.mubr.f32.gmra.mrb[0].mxu0 %v300
    %v879 = vpop.f32.mrb[0].mxu0
    %v880 = vadd.f32 %v179, %v879
    %v881 = vpop.f32.mrb[0].mxu0
    %882 = vmatprep.mubr.f32.mxu0 0.0
    %883 = vmatmul.mubr.f32.gmra.mrb[0].mxu0 %v303
    %v884 = vpop.f32.mrb[0].mxu0
    %v885 = vadd.f32 %v179, %v884
    %v886 = vpop.f32.mrb[0].mxu0
    %887 = vmatprep.mubr.f32.mxu0 0.0
    %888 = vmatmul.mubr.f32.gmra.mrb[0].mxu0 %v306
    %v889 = vpop.f32.mrb[0].mxu0
    %v890 = vadd.f32 %v179, %v889
    %v891 = vpop.f32.mrb[0].mxu0
    %892 = vmatprep.mubr.f32.mxu0 0.0
    %893 = vmatmul.mubr.f32.gmra.mrb[0].mxu0 %v309
    %v894 = vpop.f32.mrb[0].mxu0
    %v895 = vadd.f32 %v179, %v894
    %v896 = vpop.f32.mrb[0].mxu0
    %897 = vmatprep.mubr.f32.mxu0 0.0
    %898 = vmatmul.mubr.f32.gmra.mrb[0].mxu0 %v312
    %v899 = vpop.f32.mrb[0].mxu0
    %v900 = vadd.f32 %v179, %v899
    %v901 = vpop.f32.mrb[0].mxu0
    %902 = vmatprep.mubr.f32.mxu0 0.0
    %903 = vmatmul.mubr.f32.gmra.mrb[0].mxu0 %v315
    %v904 = vpop.f32.mrb[0].mxu0
    %v905 = vadd.f32 %v179, %v904
    %v906 = vpop.f32.mrb[0].mxu0
    %907 = vmatprep.mubr.f32.mxu0 0.0
    %908 = vmatmul.mubr.f32.gmra.mrb[0].mxu0 %v318
    %v909 = vpop.f32.mrb[0].mxu0
    %v910 = vadd.f32 %v179, %v909
    %v911 = vpop.f32.mrb[0].mxu0
    %912 = vmatprep.mubr.f32.mxu0 0.0
    %913 = vmatmul.mubr.f32.gmra.mrb[0].mxu0 %v321
    %v914 = vpop.f32.mrb[0].mxu0
    %v915 = vadd.f32 %v179, %v914
    %v916 = vpop.f32.mrb[0].mxu0
    %917 = vmatprep.mubr.f32.mxu0 0.0
    %918 = vmatmul.mubr.f32.gmra.mrb[0].mxu0 %v324
    %v919 = vpop.f32.mrb[0].mxu0
    %v920 = vadd.f32 %v179, %v919
    %v921 = vpop.f32.mrb[0].mxu0
    %922 = vmatprep.mubr.f32.mxu0 0.0
    %923 = vmatmul.mubr.f32.gmra.mrb[0].mxu0 %v327
    %v924 = vpop.f32.mrb[0].mxu0
    %v925 = vadd.f32 %v179, %v924
    %v926 = vpop.f32.mrb[0].mxu0
    %927 = vmatprep.mubr.f32.mxu0 0.0
    %928 = vmatmul.mubr.f32.gmra.mrb[0].mxu0 %v330
    %v929 = vpop.f32.mrb[0].mxu0
    %v930 = vadd.f32 %v179, %v929
    %v931 = vpop.f32.mrb[0].mxu0
    %932 = vmatprep.mubr.f32.mxu0 0.0
    %933 = vmatmul.mubr.f32.gmra.mrb[0].mxu0 %v333
    %v934 = vpop.f32.mrb[0].mxu0
    %v935 = vadd.f32 %v179, %v934
    %v936 = vpop.f32.mrb[0].mxu0
    %937 = vmatprep.mubr.f32.mxu0 0.0
    %938 = vmatmul.mubr.f32.gmra.mrb[0].mxu0 %v336
    %v939 = vpop.f32.mrb[0].mxu0
    %v940 = vadd.f32 %v179, %v939
    %v941 = vpop.f32.mrb[0].mxu0
    %942 = vmatprep.mubr.f32.mxu0 0.0
    %943 = vmatmul.mubr.f32.gmra.mrb[0].mxu0 %v339
    %v944 = vpop.f32.mrb[0].mxu0
    %v945 = vadd.f32 %v179, %v944
    %v946 = vpop.f32.mrb[0].mxu0
    %947 = vmatprep.mubr.f32.mxu0 0.0
    %948 = vmatmul.mubr.f32.gmra.mrb[0].mxu0 %v342
    %v949 = vpop.f32.mrb[0].mxu0
    %v950 = vadd.f32 %v179, %v949
    %v951 = vpop.f32.mrb[0].mxu0
    %952 = vmatprep.mubr.f32.mxu0 0.0
    %953 = vmatmul.mubr.f32.gmra.mrb[0].mxu0 %v345
    %v954 = vpop.f32.mrb[0].mxu0
    %v955 = vadd.f32 %v179, %v954
    %v956 = vpop.f32.mrb[0].mxu0
    %957 = vmatprep.mubr.f32.mxu0 0.0
    %958 = vmatmul.mubr.f32.gmra.mrb[0].mxu0 %v348
    %v959 = vpop.f32.mrb[0].mxu0
    %v960 = vadd.f32 %v179, %v959
    %v961 = vpop.f32.mrb[0].mxu0
    %962 = vmatprep.mubr.f32.mxu0 0.0
    %963 = vmatmul.mubr.f32.gmra.mrb[0].mxu0 %v351
    %v964 = vpop.f32.mrb[0].mxu0
    %v965 = vadd.f32 %v179, %v964
    %v966 = vpop.f32.mrb[0].mxu0
    %967 = vmatprep.mubr.f32.mxu0 0.0
    %968 = vmatmul.mubr.f32.gmra.mrb[0].mxu0 %v354
    %v969 = vpop.f32.mrb[0].mxu0
    %v970 = vadd.f32 %v179, %v969
    %v971 = vpop.f32.mrb[0].mxu0
    %972 = vmatprep.mubr.f32.mxu0 0.0
    %973 = vmatmul.mubr.f32.gmra.mrb[0].mxu0 %v357
    %v974 = vpop.f32.mrb[0].mxu0
    %v975 = vadd.f32 %v179, %v974
    %v976 = vpop.f32.mrb[0].mxu0
    %977 = vmatprep.mubr.f32.mxu0 0.0
    %978 = vmatmul.mubr.f32.gmra.mrb[0].mxu0 %v360
    %v979 = vpop.f32.mrb[0].mxu0
    %v980 = vadd.f32 %v179, %v979
    %v981 = vpop.f32.mrb[0].mxu0
    %982 = vmatprep.mubr.f32.mxu0 0.0
    %983 = vmatmul.mubr.f32.gmra.mrb[0].mxu0 %v363
    %v984 = vpop.f32.mrb[0].mxu0
    %v985 = vadd.f32 %v179, %v984
    %v986 = vpop.f32.mrb[0].mxu0
    %987 = vmatprep.mubr.f32.mxu0 0.0
    %988 = vmatmul.mubr.f32.gmra.mrb[0].mxu0 %v366
    %v989 = vpop.f32.mrb[0].mxu0
    %v990 = vadd.f32 %v179, %v989
    %v991 = vpop.f32.mrb[0].mxu0
    %992 = vmatprep.mubr.f32.mxu0 0.0
    %993 = vmatmul.mubr.f32.gmra.mrb[0].mxu0 %v369
    %v994 = vpop.f32.mrb[0].mxu0
    %v995 = vadd.f32 %v179, %v994
    %v996 = vpop.f32.mrb[0].mxu0
    %997 = vmatprep.mubr.f32.mxu0 0.0
    %998 = vmatmul.mubr.f32.gmra.mrb[0].mxu0 %v372
    %v999 = vpop.f32.mrb[0].mxu0
    %v1000 = vadd.f32 %v179, %v999
    %v1001 = vpop.f32.mrb[0].mxu0
    %1002 = vmatprep.mubr.f32.mxu0 0.0
    %1003 = vmatmul.mubr.f32.gmra.mrb[0].mxu0 %v375
    %v1004 = vpop.f32.mrb[0].mxu0
    %v1005 = vadd.f32 %v179, %v1004
    %v1006 = vpop.f32.mrb[0].mxu0
    %1007 = vmatprep.mubr.f32.mxu0 0.0
    %1008 = vmatmul.mubr.f32.gmra.mrb[0].mxu0 %v378
    %v1009 = vpop.f32.mrb[0].mxu0
    %v1010 = vadd.f32 %v179, %v1009
    %v1011 = vpop.f32.mrb[0].mxu0
    %1012 = vmatprep.mubr.f32.mxu0 0.0
    %1013 = vmatmul.mubr.f32.gmra.mrb[0].mxu0 %v381
    %v1014 = vpop.f32.mrb[0].mxu0
    %v1015 = vadd.f32 %v179, %v1014
    %v1016 = vpop.f32.mrb[0].mxu0
    %1017 = vmatprep.mubr.f32.mxu0 0.0
    %1018 = vmatmul.mubr.f32.gmra.mrb[0].mxu0 %v384
    %v1019 = vpop.f32.mrb[0].mxu0
    %v1020 = vadd.f32 %v179, %v1019
    %v1021 = vpop.f32.mrb[0].mxu0
    %1022 = vmatprep.mubr.f32.mxu0 0.0
    %1023 = vmatmul.mubr.f32.gmra.mrb[0].mxu0 %v387
    %v1024 = vpop.f32.mrb[0].mxu0
    %v1025 = vadd.f32 %v179, %v1024
    %v1026 = vpop.f32.mrb[0].mxu0
    %1027 = vmatprep.mubr.f32.mxu0 0.0
    %1028 = vmatmul.mubr.f32.gmra.mrb[0].mxu0 %v390
    %v1029 = vpop.f32.mrb[0].mxu0
    %v1030 = vadd.f32 %v179, %v1029
    %v1031 = vpop.f32.mrb[0].mxu0
    %1032 = vmatprep.mubr.f32.mxu0 0.0
    %1033 = vmatmul.mubr.f32.gmra.mrb[0].mxu0 %v393
    %v1034 = vpop.f32.mrb[0].mxu0
    %v1035 = vadd.f32 %v179, %v1034
    %v1036 = vpop.f32.mrb[0].mxu0
    %1037 = vmatprep.mubr.f32.mxu0 0.0
    %1038 = vmatmul.mubr.f32.gmra.mrb[0].mxu0 %v396
    %v1039 = vpop.f32.mrb[0].mxu0
    %v1040 = vadd.f32 %v179, %v1039
    %v1041 = vpop.f32.mrb[0].mxu0
    %1042 = vmatprep.mubr.f32.mxu0 0.0
    %1043 = vmatmul.mubr.f32.gmra.mrb[0].mxu0 %v399
    %v1044 = vpop.f32.mrb[0].mxu0
    %v1045 = vadd.f32 %v179, %v1044
    %v1046 = vpop.f32.mrb[0].mxu0
    %1047 = vmatprep.mubr.f32.mxu0 0.0
    %1048 = vmatmul.mubr.f32.gmra.mrb[0].mxu0 %v402
    %v1049 = vpop.f32.mrb[0].mxu0
    %v1050 = vadd.f32 %v179, %v1049
    %v1051 = vpop.f32.mrb[0].mxu0
    %1052 = vmatprep.mubr.f32.mxu0 0.0
    %1053 = vmatmul.mubr.f32.gmra.mrb[0].mxu0 %v405
    %v1054 = vpop.f32.mrb[0].mxu0
    %v1055 = vadd.f32 %v179, %v1054
    %v1056 = vpop.f32.mrb[0].mxu0
    %1057 = vmatprep.mubr.f32.mxu0 0.0
    %1058 = vmatmul.mubr.f32.gmra.mrb[0].mxu0 %v408
    %v1059 = vpop.f32.mrb[0].mxu0
    %v1060 = vadd.f32 %v179, %v1059
    %v1061 = vpop.f32.mrb[0].mxu0
    %1062 = vmatprep.mubr.f32.mxu0 0.0
    %1063 = vmatmul.mubr.f32.gmra.mrb[0].mxu0 %v411
    %v1064 = vpop.f32.mrb[0].mxu0
    %v1065 = vadd.f32 %v179, %v1064
    %v1066 = vpop.f32.mrb[0].mxu0
    %1067 = vmatprep.mubr.f32.mxu0 0.0
    %1068 = vmatmul.mubr.f32.gmra.mrb[0].mxu0 %v414
    %v1069 = vpop.f32.mrb[0].mxu0
    %v1070 = vadd.f32 %v179, %v1069
    %v1071 = vpop.f32.mrb[0].mxu0
    %1072 = vmatprep.mubr.f32.mxu0 0.0
    %1073 = vmatmul.mubr.f32.gmra.mrb[0].mxu0 %v417
    %v1074 = vpop.f32.mrb[0].mxu0
    %v1075 = vadd.f32 %v179, %v1074
    %v1076 = vpop.f32.mrb[0].mxu0
    %1077 = vmatprep.mubr.f32.mxu0 0.0
    %1078 = vmatmul.mubr.f32.gmra.mrb[0].mxu0 %v420
    %v1079 = vpop.f32.mrb[0].mxu0
    %v1080 = vadd.f32 %v179, %v1079
    %v1081 = vpop.f32.mrb[0].mxu0
    %1082 = vmatprep.mubr.f32.mxu0 0.0
    %1083 = vmatmul.mubr.f32.gmra.mrb[0].mxu0 %v423
    %v1084 = vpop.f32.mrb[0].mxu0
    %v1085 = vadd.f32 %v179, %v1084
    %v1086 = vpop.f32.mrb[0].mxu0
    %1087 = vmatprep.mubr.f32.mxu0 0.0
    %1088 = vmatmul.mubr.f32.gmra.mrb[0].mxu0 %v426
    %v1089 = vpop.f32.mrb[0].mxu0
    %v1090 = vadd.f32 %v179, %v1089
    %v1091 = vpop.f32.mrb[0].mxu0
    %1092 = vmatprep.mubr.f32.mxu0 0.0
    %1093 = vmatmul.mubr.f32.gmra.mrb[0].mxu0 %v429
    %v1094 = vpop.f32.mrb[0].mxu0
    %v1095 = vadd.f32 %v179, %v1094
    %v1096 = vpop.f32.mrb[0].mxu0
    %1097 = vmatprep.mubr.f32.mxu0 0.0
    %1098 = vmatmul.mubr.f32.gmra.mrb[0].mxu0 %v432
    %v1099 = vpop.f32.mrb[0].mxu0
    %v1100 = vadd.f32 %v179, %v1099
    %v1101 = vpop.f32.mrb[0].mxu0
    %1102 = vmatprep.mubr.f32.mxu0 0.0
    %1103 = vmatmul.mubr.f32.gmra.mrb[0].mxu0 %v435
    %v1104 = vpop.f32.mrb[0].mxu0
    %v1105 = vadd.f32 %v179, %v1104
    %v1106 = vpop.f32.mrb[0].mxu0
    %1107 = vmatprep.mubr.f32.mxu0 0.0
    %1108 = vmatmul.mubr.f32.gmra.mrb[0].mxu0 %v438
    %v1109 = vpop.f32.mrb[0].mxu0
    %v1110 = vadd.f32 %v179, %v1109
    %v1111 = vpop.f32.mrb[0].mxu0
    %1112 = vmatprep.mubr.f32.mxu0 0.0
    %1113 = vmatmul.mubr.f32.gmra.mrb[0].mxu0 %v441
    %v1114 = vpop.f32.mrb[0].mxu0
    %v1115 = vadd.f32 %v179, %v1114
    %v1116 = vpop.f32.mrb[0].mxu0
    %1117 = vmatprep.mubr.f32.mxu0 0.0
    %1118 = vmatmul.mubr.f32.gmra.mrb[0].mxu0 %v444
    %v1119 = vpop.f32.mrb[0].mxu0
    %v1120 = vadd.f32 %v179, %v1119
    %v1121 = vpop.f32.mrb[0].mxu0
    %1122 = vmatprep.mubr.f32.mxu0 0.0
    %1123 = vmatmul.mubr.f32.gmra.mrb[0].mxu0 %v447
    %v1124 = vpop.f32.mrb[0].mxu0
    %v1125 = vadd.f32 %v179, %v1124
    %v1126 = vpop.f32.mrb[0].mxu0
    %1127 = vmatprep.mubr.f32.mxu0 0.0
    %1128 = vmatmul.mubr.f32.gmra.mrb[0].mxu0 %v450
    %v1129 = vpop.f32.mrb[0].mxu0
    %v1130 = vadd.f32 %v179, %v1129
    %v1131 = vpop.f32.mrb[0].mxu0
    %1132 = vmatprep.mubr.f32.mxu0 0.0
    %1133 = vmatmul.mubr.f32.gmra.mrb[0].mxu0 %v453
    %v1134 = vpop.f32.mrb[0].mxu0
    %v1135 = vadd.f32 %v179, %v1134
    %v1136 = vpop.f32.mrb[0].mxu0
    %1137 = vmatprep.mubr.f32.mxu0 0.0
    %1138 = vmatmul.mubr.f32.gmra.mrb[0].mxu0 %v456
    %v1139 = vpop.f32.mrb[0].mxu0
    %v1140 = vadd.f32 %v179, %v1139
    %v1141 = vpop.f32.mrb[0].mxu0
    %1142 = vmatprep.mubr.f32.mxu0 0.0
    %1143 = vmatmul.mubr.f32.gmra.mrb[0].mxu0 %v459
    %v1144 = vpop.f32.mrb[0].mxu0
    %v1145 = vadd.f32 %v179, %v1144
    %v1146 = vpop.f32.mrb[0].mxu0
    %1147 = vmatprep.mubr.f32.mxu0 0.0
    %1148 = vmatmul.mubr.f32.gmra.mrb[0].mxu0 %v462
    %v1149 = vpop.f32.mrb[0].mxu0
    %v1150 = vadd.f32 %v179, %v1149
    %v1151 = vpop.f32.mrb[0].mxu0
    %1152 = vmatprep.mubr.f32.mxu0 0.0
    %1153 = vmatmul.mubr.f32.gmra.mrb[0].mxu0 %v465
    %v1154 = vpop.f32.mrb[0].mxu0
    %v1155 = vadd.f32 %v179, %v1154
    %v1156 = vpop.f32.mrb[0].mxu0
    %1157 = vmatprep.mubr.f32.mxu0 0.0
    %1158 = vmatmul.mubr.f32.gmra.mrb[0].mxu0 %v468
    %v1159 = vpop.f32.mrb[0].mxu0
    %v1160 = vadd.f32 %v179, %v1159
    %v1161 = vpop.f32.mrb[0].mxu0
    %1162 = vmatprep.mubr.f32.mxu0 0.0
    %1163 = vmatmul.mubr.f32.gmra.mrb[0].mxu0 %v471
    %v1164 = vpop.f32.mrb[0].mxu0
    %v1165 = vadd.f32 %v179, %v1164
    %v1166 = vpop.f32.mrb[0].mxu0
    %1167 = vmatprep.mubr.f32.mxu0 0.0
    %1168 = vmatmul.mubr.f32.gmra.mrb[0].mxu0 %v474
    %v1169 = vpop.f32.mrb[0].mxu0
    %v1170 = vadd.f32 %v179, %v1169
    %v1171 = vpop.f32.mrb[0].mxu0
    %1172 = vmatprep.mubr.f32.mxu0 0.0
    %1173 = vmatmul.mubr.f32.gmra.mrb[0].mxu0 %v477
    %v1174 = vpop.f32.mrb[0].mxu0
    %v1175 = vadd.f32 %v179, %v1174
    %v1176 = vpop.f32.mrb[0].mxu0
    %1177 = vmatprep.mubr.f32.mxu0 0.0
    %1178 = vmatmul.mubr.f32.gmra.mrb[0].mxu0 %v480
    %v1179 = vpop.f32.mrb[0].mxu0
    %v1180 = vadd.f32 %v179, %v1179
    %v1181 = vpop.f32.mrb[0].mxu0
    %1182 = vmatprep.mubr.f32.mxu0 0.0
    %1183 = vmatmul.mubr.f32.gmra.mrb[0].mxu0 %v483
    %v1184 = vpop.f32.mrb[0].mxu0
    %v1185 = vadd.f32 %v179, %v1184
    %v1186 = vpop.f32.mrb[0].mxu0
    %1187 = vmatprep.mubr.f32.mxu0 0.0
    %1188 = vmatmul.mubr.f32.gmra.mrb[0].mxu0 %v486
    %v1189 = vpop.f32.mrb[0].mxu0
    %v1190 = vadd.f32 %v179, %v1189
    %v1191 = vpop.f32.mrb[0].mxu0
    %1192 = vmatprep.mubr.f32.mxu0 0.0
    %1193 = vmatmul.mubr.f32.gmra.mrb[0].mxu0 %v489
    %v1194 = vpop.f32.mrb[0].mxu0
    %v1195 = vadd.f32 %v179, %v1194
    %v1196 = vpop.f32.mrb[0].mxu0
    %1197 = vmatprep.mubr.f32.mxu0 0.0
    %1198 = vmatmul.mubr.f32.gmra.mrb[0].mxu0 %v492
    %v1199 = vpop.f32.mrb[0].mxu0
    %v1200 = vadd.f32 %v179, %v1199
    %v1201 = vpop.f32.mrb[0].mxu0
    %1202 = vmatprep.mubr.f32.mxu0 0.0
    %1203 = vmatmul.mubr.f32.gmra.mrb[0].mxu0 %v495
    %v1204 = vpop.f32.mrb[0].mxu0
    %v1205 = vadd.f32 %v179, %v1204
    %v1206 = vpop.f32.mrb[0].mxu0
    %1207 = vmatprep.mubr.f32.mxu0 0.0
    %1208 = vmatmul.mubr.f32.gmra.mrb[0].mxu0 %v498
    %v1209 = vpop.f32.mrb[0].mxu0
    %v1210 = vadd.f32 %v179, %v1209
    %v1211 = vpop.f32.mrb[0].mxu0
    %1212 = vmatprep.mubr.f32.mxu0 0.0
    %1213 = vmatmul.mubr.f32.gmra.mrb[0].mxu0 %v501
    %v1214 = vpop.f32.mrb[0].mxu0
    %v1215 = vadd.f32 %v179, %v1214
    %v1216 = vpop.f32.mrb[0].mxu0
    %1217 = vmatprep.mubr.f32.mxu0 0.0
    %1218 = vmatmul.mubr.f32.gmra.mrb[0].mxu0 %v504
    %v1219 = vpop.f32.mrb[0].mxu0
    %v1220 = vadd.f32 %v179, %v1219
    %v1221 = vpop.f32.mrb[0].mxu0
    %1222 = vmatprep.mubr.f32.mxu0 0.0
    %1223 = vmatmul.mubr.f32.gmra.mrb[0].mxu0 %v507
    %v1224 = vpop.f32.mrb[0].mxu0
    %v1225 = vadd.f32 %v179, %v1224
    %v1226 = vpop.f32.mrb[0].mxu0
    %1227 = vmatprep.mubr.f32.mxu0 0.0
    %1228 = vmatmul.mubr.f32.gmra.mrb[0].mxu0 %v510
    %v1229 = vpop.f32.mrb[0].mxu0
    %v1230 = vadd.f32 %v179, %v1229
    %v1231 = vpop.f32.mrb[0].mxu0
    %1232 = vmatprep.mubr.f32.mxu0 0.0
    %1233 = vmatmul.mubr.f32.gmra.mrb[0].mxu0 %v513
    %v1234 = vpop.f32.mrb[0].mxu0
    %v1235 = vadd.f32 %v179, %v1234
    %v1236 = vpop.f32.mrb[0].mxu0
    %1237 = vmatprep.mubr.f32.mxu0 0.0
    %1238 = vmatmul.mubr.f32.gmra.mrb[0].mxu0 %v516
    %v1239 = vpop.f32.mrb[0].mxu0
    %v1240 = vadd.f32 %v179, %v1239
    %v1241 = vpop.f32.mrb[0].mxu0
    %1242 = vmatprep.mubr.f32.mxu0 0.0
    %1243 = vmatmul.mubr.f32.gmra.mrb[0].mxu0 %v519
    %v1244 = vpop.f32.mrb[0].mxu0
    %v1245 = vadd.f32 %v179, %v1244
    %v1246 = vpop.f32.mrb[0].mxu0
    %1247 = vmatprep.mubr.f32.mxu0 0.0
    %1248 = vmatmul.mubr.f32.gmra.mrb[0].mxu0 %v522
    %v1249 = vpop.f32.mrb[0].mxu0
    %v1250 = vadd.f32 %v179, %v1249
    %v1251 = vpop.f32.mrb[0].mxu0
    %1252 = vmatprep.mubr.f32.mxu0 0.0
    %1253 = vmatmul.mubr.f32.gmra.mrb[0].mxu0 %v525
    %v1254 = vpop.f32.mrb[0].mxu0
    %v1255 = vadd.f32 %v179, %v1254
    %v1256 = vpop.f32.mrb[0].mxu0
    %1257 = vmatprep.mubr.f32.mxu0 0.0
    %1258 = vmatmul.mubr.f32.gmra.mrb[0].mxu0 %v528
    %v1259 = vpop.f32.mrb[0].mxu0
    %v1260 = vadd.f32 %v179, %v1259
    %v1261 = vpop.f32.mrb[0].mxu0
    %1262 = vmatprep.mubr.f32.mxu0 0.0
    %1263 = vmatmul.mubr.f32.gmra.mrb[0].mxu0 %v531
    %v1264 = vpop.f32.mrb[0].mxu0
    %v1265 = vadd.f32 %v179, %v1264
    %v1266 = vpop.f32.mrb[0].mxu0
    %1267 = vmatprep.mubr.f32.mxu0 0.0
    %1268 = vmatmul.mubr.f32.gmra.mrb[0].mxu0 %v534
    %v1269 = vpop.f32.mrb[0].mxu0
    %v1270 = vadd.f32 %v179, %v1269
    %v1271 = vpop.f32.mrb[0].mxu0
    %1272 = vmatprep.mubr.f32.mxu0 0.0
    %1273 = vmatmul.mubr.f32.gmra.mrb[0].mxu0 %v537
    %v1274 = vpop.f32.mrb[0].mxu0
    %v1275 = vadd.f32 %v179, %v1274
    %v1276 = vpop.f32.mrb[0].mxu0
    %1277 = vmatprep.mubr.f32.mxu0 0.0
    %1278 = vmatmul.mubr.f32.gmra.mrb[0].mxu0 %v540
    %v1279 = vpop.f32.mrb[0].mxu0
    %v1280 = vadd.f32 %v179, %v1279
    %v1281 = vpop.f32.mrb[0].mxu0
    %1282 = vmatprep.mubr.f32.mxu0 0.0
    %1283 = vmatmul.mubr.f32.gmra.mrb[0].mxu0 %v543
    %v1284 = vpop.f32.mrb[0].mxu0
    %v1285 = vadd.f32 %v179, %v1284
    %v1286 = vpop.f32.mrb[0].mxu0
    %1287 = vmatprep.mubr.f32.mxu0 0.0
    %1288 = vmatmul.mubr.f32.gmra.mrb[0].mxu0 %v546
    %v1289 = vpop.f32.mrb[0].mxu0
    %v1290 = vadd.f32 %v179, %v1289
    %v1291 = vpop.f32.mrb[0].mxu0
    %1292 = vmatprep.mubr.f32.mxu0 0.0
    %1293 = vmatmul.mubr.f32.gmra.mrb[0].mxu0 %v549
    %v1294 = vpop.f32.mrb[0].mxu0
    %v1295 = vadd.f32 %v179, %v1294
    %v1296 = vpop.f32.mrb[0].mxu0
    %1297 = vmatprep.mubr.f32.mxu0 0.0
    %1298 = vmatmul.mubr.f32.gmra.mrb[0].mxu0 %v552
    %v1299 = vpop.f32.mrb[0].mxu0
    %v1300 = vadd.f32 %v179, %v1299
    %v1301 = vpop.f32.mrb[0].mxu0
    %1302 = vmatprep.mubr.f32.mxu0 0.0
    %1303 = vmatmul.mubr.f32.gmra.mrb[0].mxu0 %v555
    %v1304 = vpop.f32.mrb[0].mxu0
    %v1305 = vadd.f32 %v179, %v1304
    %v1306 = vpop.f32.mrb[0].mxu0
    %1307 = vmatprep.mubr.f32.mxu0 0.0
    %1308 = vmatmul.mubr.f32.gmra.mrb[0].mxu0 %v558
    %v1309 = vpop.f32.mrb[0].mxu0
    %v1310 = vadd.f32 %v179, %v1309
    %v1311 = vpop.f32.mrb[0].mxu0
    %1312 = vmatprep.mubr.f32.mxu0 0.0
    %1313 = vmatmul.mubr.f32.gmra.mrb[0].mxu0 %v561
    %v1314 = vpop.f32.mrb[0].mxu0
    %v1315 = vadd.f32 %v179, %v1314
    %v1316 = vpop.f32.mrb[0].mxu0
    %1317 = vmatprep.mubr.f32.mxu0 0.0
    %1318 = vmatmul.mubr.f32.gmra.mrb[0].mxu0 %v564
    %v1319 = vpop.f32.mrb[0].mxu0
    %v1320 = vadd.f32 %v179, %v1319
    %v1321 = vpop.f32.mrb[0].mxu0
    %1322 = vmatprep.mubr.f32.mxu0 0.0
    %1323 = vmatmul.mubr.f32.gmra.mrb[0].mxu0 %v567
    %v1324 = vpop.f32.mrb[0].mxu0
    %v1325 = vadd.f32 %v179, %v1324
    %v1326 = vpop.f32.mrb[0].mxu0
    %1327 = vmatprep.mubr.f32.mxu0 0.0
    %1328 = vmatmul.mubr.f32.gmra.mrb[0].mxu0 %v570
    %v1329 = vpop.f32.mrb[0].mxu0
    %v1330 = vadd.f32 %v179, %v1329
    %v1331 = vpop.f32.mrb[0].mxu0
    %1332 = vmatprep.mubr.f32.mxu0 0.0
    %1333 = vmatmul.mubr.f32.gmra.mrb[0].mxu0 %v573
    %v1334 = vpop.f32.mrb[0].mxu0
    %v1335 = vadd.f32 %v179, %v1334
    %v1336 = vpop.f32.mrb[0].mxu0
    %1337 = vmatprep.mubr.f32.mxu0 0.0
    %1338 = vmatmul.mubr.f32.gmra.mrb[0].mxu0 %v576
    %v1339 = vpop.f32.mrb[0].mxu0
    %v1340 = vadd.f32 %v179, %v1339
    %v1341 = vpop.f32.mrb[0].mxu0
    %1342 = vmatprep.mubr.f32.mxu0 0.0
    %1343 = vmatmul.mubr.f32.gmra.mrb[0].mxu0 %v579
    %v1344 = vpop.f32.mrb[0].mxu0
    %v1345 = vadd.f32 %v179, %v1344
    %v1346 = vpop.f32.mrb[0].mxu0
    %1347 = vmatprep.mubr.f32.mxu0 0.0
    %1348 = vmatmul.mubr.f32.gmra.mrb[0].mxu0 %v582
    %v1349 = vpop.f32.mrb[0].mxu0
    %v1350 = vadd.f32 %v179, %v1349
    %v1351 = vpop.f32.mrb[0].mxu0
    %1352 = vmatprep.mubr.f32.mxu0 0.0
    %1353 = vmatmul.mubr.f32.gmra.mrb[0].mxu0 %v585
    %v1354 = vpop.f32.mrb[0].mxu0
    %v1355 = vadd.f32 %v179, %v1354
    %v1356 = vpop.f32.mrb[0].mxu0
    %1357 = vmatprep.mubr.f32.mxu0 0.0
    %1358 = vmatmul.mubr.f32.gmra.mrb[0].mxu0 %v588
    %v1359 = vpop.f32.mrb[0].mxu0
    %v1360 = vadd.f32 %v179, %v1359
    %v1361 = vpop.f32.mrb[0].mxu0
    %1362 = vmatprep.mubr.f32.mxu0 0.0
    %1363 = vmatmul.mubr.f32.gmra.mrb[0].mxu0 %v591
    %v1364 = vpop.f32.mrb[0].mxu0
    %v1365 = vadd.f32 %v179, %v1364
    %v1366 = vpop.f32.mrb[0].mxu0
    %1367 = vmatprep.mubr.f32.mxu0 0.0
    %1368 = vmatmul.mubr.f32.gmra.mrb[0].mxu0 %v594
    %v1369 = vpop.f32.mrb[0].mxu0
    %v1370 = vadd.f32 %v179, %v1369
    %v1371 = vpop.f32.mrb[0].mxu0
    %1372 = vmatprep.mubr.f32.mxu0 0.0
    %1373 = vmatmul.mubr.f32.gmra.mrb[0].mxu0 %v597
    %v1374 = vpop.f32.mrb[0].mxu0
    %v1375 = vadd.f32 %v179, %v1374
    %v1376 = vpop.f32.mrb[0].mxu0
    %1377 = vmatprep.mubr.f32.mxu0 0.0
    %1378 = vmatmul.mubr.f32.gmra.mrb[0].mxu0 %v600
    %v1379 = vpop.f32.mrb[0].mxu0
    %v1380 = vadd.f32 %v179, %v1379
    %v1381 = vpop.f32.mrb[0].mxu0
    %1382 = vmatprep.mubr.f32.mxu0 0.0
    %1383 = vmatmul.mubr.f32.gmra.mrb[0].mxu0 %v603
    %v1384 = vpop.f32.mrb[0].mxu0
    %v1385 = vadd.f32 %v179, %v1384
    %v1386 = vpop.f32.mrb[0].mxu0
    %1387 = vmatprep.mubr.f32.mxu0 0.0
    %1388 = vmatmul.mubr.f32.gmra.mrb[0].mxu0 %v606
    %v1389 = vpop.f32.mrb[0].mxu0
    %v1390 = vadd.f32 %v179, %v1389
    %v1391 = vpop.f32.mrb[0].mxu0
    %1392 = vmatprep.mubr.f32.mxu0 0.0
    %1393 = vmatmul.mubr.f32.gmra.mrb[0].mxu0 %v609
    %v1394 = vpop.f32.mrb[0].mxu0
    %v1395 = vadd.f32 %v179, %v1394
    %v1396 = vpop.f32.mrb[0].mxu0
    %1397 = vmatprep.mubr.f32.mxu0 0.0
    %1398 = vmatmul.mubr.f32.gmra.mrb[0].mxu0 %v612
    %v1399 = vpop.f32.mrb[0].mxu0
    %v1400 = vadd.f32 %v179, %v1399
    %v1401 = vpop.f32.mrb[0].mxu0
    %1402 = vdwg.mxu0
    %v1403 = vmax.f32 %v685, 0.0
    %v1404 = vmax.f32 %v690, 0.0
    %v1405 = vmax.f32 %v695, 0.0
    %v1406 = vmax.f32 %v700, 0.0
    %v1407 = vmax.f32 %v705, 0.0
    %v1408 = vmax.f32 %v710, 0.0
    %v1409 = vmax.f32 %v715, 0.0
    %v1410 = vmax.f32 %v720, 0.0
    %v1411 = vmax.f32 %v725, 0.0
    %v1412 = vmax.f32 %v730, 0.0
    %v1413 = vmax.f32 %v735, 0.0
    %v1414 = vmax.f32 %v740, 0.0
    %v1415 = vmax.f32 %v745, 0.0
    %v1416 = vmax.f32 %v750, 0.0
    %v1417 = vmax.f32 %v755, 0.0
    %v1418 = vmax.f32 %v760, 0.0
    %v1419 = vmax.f32 %v765, 0.0
    %v1420 = vmax.f32 %v770, 0.0
    %v1421 = vmax.f32 %v775, 0.0
    %v1422 = vmax.f32 %v780, 0.0
    %v1423 = vmax.f32 %v785, 0.0
    %v1424 = vmax.f32 %v790, 0.0
    %v1425 = vmax.f32 %v795, 0.0
    %v1426 = vmax.f32 %v800, 0.0
    %v1427 = vmax.f32 %v805, 0.0
    %v1428 = vmax.f32 %v810, 0.0
    %v1429 = vmax.f32 %v815, 0.0
    %v1430 = vmax.f32 %v820, 0.0
    %v1431 = vmax.f32 %v825, 0.0
    %v1432 = vmax.f32 %v830, 0.0
    %v1433 = vmax.f32 %v835, 0.0
    %v1434 = vmax.f32 %v840, 0.0
    %v1435 = vmax.f32 %v845, 0.0
    %v1436 = vmax.f32 %v850, 0.0
    %v1437 = vmax.f32 %v855, 0.0
    %v1438 = vmax.f32 %v860, 0.0
    %v1439 = vmax.f32 %v865, 0.0
    %v1440 = vmax.f32 %v870, 0.0
    %v1441 = vmax.f32 %v875, 0.0
    %v1442 = vmax.f32 %v880, 0.0
    %v1443 = vmax.f32 %v885, 0.0
    %v1444 = vmax.f32 %v890, 0.0
    %v1445 = vmax.f32 %v895, 0.0
    %v1446 = vmax.f32 %v900, 0.0
    %v1447 = vmax.f32 %v905, 0.0
    %v1448 = vmax.f32 %v910, 0.0
    %v1449 = vmax.f32 %v915, 0.0
    %v1450 = vmax.f32 %v920, 0.0
    %v1451 = vmax.f32 %v925, 0.0
    %v1452 = vmax.f32 %v930, 0.0
    %v1453 = vmax.f32 %v935, 0.0
    %v1454 = vmax.f32 %v940, 0.0
    %v1455 = vmax.f32 %v945, 0.0
    %v1456 = vmax.f32 %v950, 0.0
    %v1457 = vmax.f32 %v955, 0.0
    %v1458 = vmax.f32 %v960, 0.0
    %v1459 = vmax.f32 %v965, 0.0
    %v1460 = vmax.f32 %v970, 0.0
    %v1461 = vmax.f32 %v975, 0.0
    %v1462 = vmax.f32 %v980, 0.0
    %v1463 = vmax.f32 %v985, 0.0
    %v1464 = vmax.f32 %v990, 0.0
    %v1465 = vmax.f32 %v995, 0.0
    %v1466 = vmax.f32 %v1000, 0.0
    %v1467 = vmax.f32 %v1005, 0.0
    %v1468 = vmax.f32 %v1010, 0.0
    %v1469 = vmax.f32 %v1015, 0.0
    %v1470 = vmax.f32 %v1020, 0.0
    %v1471 = vmax.f32 %v1025, 0.0
    %v1472 = vmax.f32 %v1030, 0.0
    %v1473 = vmax.f32 %v1035, 0.0
    %v1474 = vmax.f32 %v1040, 0.0
    %v1475 = vmax.f32 %v1045, 0.0
    %v1476 = vmax.f32 %v1050, 0.0
    %v1477 = vmax.f32 %v1055, 0.0
    %v1478 = vmax.f32 %v1060, 0.0
    %v1479 = vmax.f32 %v1065, 0.0
    %v1480 = vmax.f32 %v1070, 0.0
    %v1481 = vmax.f32 %v1075, 0.0
    %v1482 = vmax.f32 %v1080, 0.0
    %v1483 = vmax.f32 %v1085, 0.0
    %v1484 = vmax.f32 %v1090, 0.0
    %v1485 = vmax.f32 %v1095, 0.0
    %v1486 = vmax.f32 %v1100, 0.0
    %v1487 = vmax.f32 %v1105, 0.0
    %v1488 = vmax.f32 %v1110, 0.0
    %v1489 = vmax.f32 %v1115, 0.0
    %v1490 = vmax.f32 %v1120, 0.0
    %v1491 = vmax.f32 %v1125, 0.0
    %v1492 = vmax.f32 %v1130, 0.0
    %v1493 = vmax.f32 %v1135, 0.0
    %v1494 = vmax.f32 %v1140, 0.0
    %v1495 = vmax.f32 %v1145, 0.0
    %v1496 = vmax.f32 %v1150, 0.0
    %v1497 = vmax.f32 %v1155, 0.0
    %v1498 = vmax.f32 %v1160, 0.0
    %v1499 = vmax.f32 %v1165, 0.0
    %v1500 = vmax.f32 %v1170, 0.0
    %v1501 = vmax.f32 %v1175, 0.0
    %v1502 = vmax.f32 %v1180, 0.0
    %v1503 = vmax.f32 %v1185, 0.0
    %v1504 = vmax.f32 %v1190, 0.0
    %v1505 = vmax.f32 %v1195, 0.0
    %v1506 = vmax.f32 %v1200, 0.0
    %v1507 = vmax.f32 %v1205, 0.0
    %v1508 = vmax.f32 %v1210, 0.0
    %v1509 = vmax.f32 %v1215, 0.0
    %v1510 = vmax.f32 %v1220, 0.0
    %v1511 = vmax.f32 %v1225, 0.0
    %v1512 = vmax.f32 %v1230, 0.0
    %v1513 = vmax.f32 %v1235, 0.0
    %v1514 = vmax.f32 %v1240, 0.0
    %v1515 = vmax.f32 %v1245, 0.0
    %v1516 = vmax.f32 %v1250, 0.0
    %v1517 = vmax.f32 %v1255, 0.0
    %v1518 = vmax.f32 %v1260, 0.0
    %v1519 = vmax.f32 %v1265, 0.0
    %v1520 = vmax.f32 %v1270, 0.0
    %v1521 = vmax.f32 %v1275, 0.0
    %v1522 = vmax.f32 %v1280, 0.0
    %v1523 = vmax.f32 %v1285, 0.0
    %v1524 = vmax.f32 %v1290, 0.0
    %v1525 = vmax.f32 %v1295, 0.0
    %v1526 = vmax.f32 %v1300, 0.0
    %v1527 = vmax.f32 %v1305, 0.0
    %v1528 = vmax.f32 %v1310, 0.0
    %v1529 = vmax.f32 %v1315, 0.0
    %v1530 = vmax.f32 %v1320, 0.0
    %v1531 = vmax.f32 %v1325, 0.0
    %v1532 = vmax.f32 %v1330, 0.0
    %v1533 = vmax.f32 %v1335, 0.0
    %v1534 = vmax.f32 %v1340, 0.0
    %v1535 = vmax.f32 %v1345, 0.0
    %v1536 = vmax.f32 %v1350, 0.0
    %v1537 = vmax.f32 %v1355, 0.0
    %v1538 = vmax.f32 %v1360, 0.0
    %v1539 = vmax.f32 %v1365, 0.0
    %v1540 = vmax.f32 %v1370, 0.0
    %v1541 = vmax.f32 %v1375, 0.0
    %v1542 = vmax.f32 %v1380, 0.0
    %v1543 = vmax.f32 %v1385, 0.0
    %v1544 = vmax.f32 %v1390, 0.0
    %v1545 = vmax.f32 %v1395, 0.0
    %v1546 = vmax.f32 %v1400, 0.0
    %vm1547 = vcmask 162816
    %1548 = vst.msk [vmem:[%s3] sm:$0xff] %vm1547, %v1403
    %1549 = vst.msk [vmem:[%s3 + $0x8] sm:$0xff] %vm1547, %v1404
    %1550 = vst.msk [vmem:[%s3 + $0x10] sm:$0xff] %vm1547, %v1405
    %1551 = vst.msk [vmem:[%s3 + $0x18] sm:$0xff] %vm1547, %v1406
    %1552 = vst.msk [vmem:[%s3 + $0x20] sm:$0xff] %vm1547, %v1407
    %1553 = vst.msk [vmem:[%s3 + $0x28] sm:$0xff] %vm1547, %v1408
    %1554 = vst.msk [vmem:[%s3 + $0x30] sm:$0xff] %vm1547, %v1409
    %1555 = vst.msk [vmem:[%s3 + $0x38] sm:$0xff] %vm1547, %v1410
    %1556 = vst.msk [vmem:[%s3 + $0x40] sm:$0xff] %vm1547, %v1411
    %1557 = vst.msk [vmem:[%s3 + $0x48] sm:$0xff] %vm1547, %v1412
    %1558 = vst.msk [vmem:[%s3 + $0x50] sm:$0xff] %vm1547, %v1413
    %1559 = vst.msk [vmem:[%s3 + $0x58] sm:$0xff] %vm1547, %v1414
    %1560 = vst.msk [vmem:[%s3 + $0x60] sm:$0xff] %vm1547, %v1415
    %1561 = vst.msk [vmem:[%s3 + $0x68] sm:$0xff] %vm1547, %v1416
    %1562 = vst.msk [vmem:[%s3 + $0x70] sm:$0xff] %vm1547, %v1417
    %1563 = vst.msk [vmem:[%s3 + $0x78] sm:$0xff] %vm1547, %v1418
    %1564 = vst.msk [vmem:[%s3 + $0x80] sm:$0xff] %vm1547, %v1419
    %1565 = vst.msk [vmem:[%s3 + $0x88] sm:$0xff] %vm1547, %v1420
    %1566 = vst.msk [vmem:[%s3 + $0x90] sm:$0xff] %vm1547, %v1421
    %1567 = vst.msk [vmem:[%s3 + $0x98] sm:$0xff] %vm1547, %v1422
    %1568 = vst.msk [vmem:[%s3 + $0xa0] sm:$0xff] %vm1547, %v1423
    %1569 = vst.msk [vmem:[%s3 + $0xa8] sm:$0xff] %vm1547, %v1424
    %1570 = vst.msk [vmem:[%s3 + $0xb0] sm:$0xff] %vm1547, %v1425
    %1571 = vst.msk [vmem:[%s3 + $0xb8] sm:$0xff] %vm1547, %v1426
    %1572 = vst.msk [vmem:[%s3 + $0xc0] sm:$0xff] %vm1547, %v1427
    %1573 = vst.msk [vmem:[%s3 + $0xc8] sm:$0xff] %vm1547, %v1428
    %1574 = vst.msk [vmem:[%s3 + $0xd0] sm:$0xff] %vm1547, %v1429
    %1575 = vst.msk [vmem:[%s3 + $0xd8] sm:$0xff] %vm1547, %v1430
    %1576 = vst.msk [vmem:[%s3 + $0xe0] sm:$0xff] %vm1547, %v1431
    %1577 = vst.msk [vmem:[%s3 + $0xe8] sm:$0xff] %vm1547, %v1432
    %1578 = vst.msk [vmem:[%s3 + $0xf0] sm:$0xff] %vm1547, %v1433
    %1579 = vst.msk [vmem:[%s3 + $0xf8] sm:$0xff] %vm1547, %v1434
    %1580 = vst.msk [vmem:[%s3 + $0x100] sm:$0xff] %vm1547, %v1435
    %1581 = vst.msk [vmem:[%s3 + $0x108] sm:$0xff] %vm1547, %v1436
    %1582 = vst.msk [vmem:[%s3 + $0x110] sm:$0xff] %vm1547, %v1437
    %1583 = vst.msk [vmem:[%s3 + $0x118] sm:$0xff] %vm1547, %v1438
    %1584 = vst.msk [vmem:[%s3 + $0x120] sm:$0xff] %vm1547, %v1439
    %1585 = vst.msk [vmem:[%s3 + $0x128] sm:$0xff] %vm1547, %v1440
    %1586 = vst.msk [vmem:[%s3 + $0x130] sm:$0xff] %vm1547, %v1441
    %1587 = vst.msk [vmem:[%s3 + $0x138] sm:$0xff] %vm1547, %v1442
    %1588 = vst.msk [vmem:[%s3 + $0x140] sm:$0xff] %vm1547, %v1443
    %1589 = vst.msk [vmem:[%s3 + $0x148] sm:$0xff] %vm1547, %v1444
    %1590 = vst.msk [vmem:[%s3 + $0x150] sm:$0xff] %vm1547, %v1445
    %1591 = vst.msk [vmem:[%s3 + $0x158] sm:$0xff] %vm1547, %v1446
    %1592 = vst.msk [vmem:[%s3 + $0x160] sm:$0xff] %vm1547, %v1447
    %1593 = vst.msk [vmem:[%s3 + $0x168] sm:$0xff] %vm1547, %v1448
    %1594 = vst.msk [vmem:[%s3 + $0x170] sm:$0xff] %vm1547, %v1449
    %1595 = vst.msk [vmem:[%s3 + $0x178] sm:$0xff] %vm1547, %v1450
    %1596 = vst.msk [vmem:[%s3 + $0x180] sm:$0xff] %vm1547, %v1451
    %1597 = vst.msk [vmem:[%s3 + $0x188] sm:$0xff] %vm1547, %v1452
    %1598 = vst.msk [vmem:[%s3 + $0x190] sm:$0xff] %vm1547, %v1453
    %1599 = vst.msk [vmem:[%s3 + $0x198] sm:$0xff] %vm1547, %v1454
    %1600 = vst.msk [vmem:[%s3 + $0x1a0] sm:$0xff] %vm1547, %v1455
    %1601 = vst.msk [vmem:[%s3 + $0x1a8] sm:$0xff] %vm1547, %v1456
    %1602 = vst.msk [vmem:[%s3 + $0x1b0] sm:$0xff] %vm1547, %v1457
    %1603 = vst.msk [vmem:[%s3 + $0x1b8] sm:$0xff] %vm1547, %v1458
    %1604 = vst.msk [vmem:[%s3 + $0x1c0] sm:$0xff] %vm1547, %v1459
    %1605 = vst.msk [vmem:[%s3 + $0x1c8] sm:$0xff] %vm1547, %v1460
    %1606 = vst.msk [vmem:[%s3 + $0x1d0] sm:$0xff] %vm1547, %v1461
    %1607 = vst.msk [vmem:[%s3 + $0x1d8] sm:$0xff] %vm1547, %v1462
    %1608 = vst.msk [vmem:[%s3 + $0x1e0] sm:$0xff] %vm1547, %v1463
    %1609 = vst.msk [vmem:[%s3 + $0x1e8] sm:$0xff] %vm1547, %v1464
    %1610 = vst.msk [vmem:[%s3 + $0x1f0] sm:$0xff] %vm1547, %v1465
    %1611 = vst.msk [vmem:[%s3 + $0x1f8] sm:$0xff] %vm1547, %v1466
    %1612 = vst.msk [vmem:[%s3 + $0x200] sm:$0xff] %vm1547, %v1467
    %1613 = vst.msk [vmem:[%s3 + $0x208] sm:$0xff] %vm1547, %v1468
    %1614 = vst.msk [vmem:[%s3 + $0x210] sm:$0xff] %vm1547, %v1469
    %1615 = vst.msk [vmem:[%s3 + $0x218] sm:$0xff] %vm1547, %v1470
    %1616 = vst.msk [vmem:[%s3 + $0x220] sm:$0xff] %vm1547, %v1471
    %1617 = vst.msk [vmem:[%s3 + $0x228] sm:$0xff] %vm1547, %v1472
    %1618 = vst.msk [vmem:[%s3 + $0x230] sm:$0xff] %vm1547, %v1473
    %1619 = vst.msk [vmem:[%s3 + $0x238] sm:$0xff] %vm1547, %v1474
    %1620 = vst.msk [vmem:[%s3 + $0x240] sm:$0xff] %vm1547, %v1475
    %1621 = vst.msk [vmem:[%s3 + $0x248] sm:$0xff] %vm1547, %v1476
    %1622 = vst.msk [vmem:[%s3 + $0x250] sm:$0xff] %vm1547, %v1477
    %1623 = vst.msk [vmem:[%s3 + $0x258] sm:$0xff] %vm1547, %v1478
    %1624 = vst.msk [vmem:[%s3 + $0x260] sm:$0xff] %vm1547, %v1479
    %1625 = vst.msk [vmem:[%s3 + $0x268] sm:$0xff] %vm1547, %v1480
    %1626 = vst.msk [vmem:[%s3 + $0x270] sm:$0xff] %vm1547, %v1481
    %1627 = vst.msk [vmem:[%s3 + $0x278] sm:$0xff] %vm1547, %v1482
    %1628 = vst.msk [vmem:[%s3 + $0x280] sm:$0xff] %vm1547, %v1483
    %1629 = vst.msk [vmem:[%s3 + $0x288] sm:$0xff] %vm1547, %v1484
    %1630 = vst.msk [vmem:[%s3 + $0x290] sm:$0xff] %vm1547, %v1485
    %1631 = vst.msk [vmem:[%s3 + $0x298] sm:$0xff] %vm1547, %v1486
    %1632 = vst.msk [vmem:[%s3 + $0x2a0] sm:$0xff] %vm1547, %v1487
    %1633 = vst.msk [vmem:[%s3 + $0x2a8] sm:$0xff] %vm1547, %v1488
    %1634 = vst.msk [vmem:[%s3 + $0x2b0] sm:$0xff] %vm1547, %v1489
    %1635 = vst.msk [vmem:[%s3 + $0x2b8] sm:$0xff] %vm1547, %v1490
    %1636 = vst.msk [vmem:[%s3 + $0x2c0] sm:$0xff] %vm1547, %v1491
    %1637 = vst.msk [vmem:[%s3 + $0x2c8] sm:$0xff] %vm1547, %v1492
    %1638 = vst.msk [vmem:[%s3 + $0x2d0] sm:$0xff] %vm1547, %v1493
    %1639 = vst.msk [vmem:[%s3 + $0x2d8] sm:$0xff] %vm1547, %v1494
    %1640 = vst.msk [vmem:[%s3 + $0x2e0] sm:$0xff] %vm1547, %v1495
    %1641 = vst.msk [vmem:[%s3 + $0x2e8] sm:$0xff] %vm1547, %v1496
    %1642 = vst.msk [vmem:[%s3 + $0x2f0] sm:$0xff] %vm1547, %v1497
    %1643 = vst.msk [vmem:[%s3 + $0x2f8] sm:$0xff] %vm1547, %v1498
    %1644 = vst.msk [vmem:[%s3 + $0x300] sm:$0xff] %vm1547, %v1499
    %1645 = vst.msk [vmem:[%s3 + $0x308] sm:$0xff] %vm1547, %v1500
    %1646 = vst.msk [vmem:[%s3 + $0x310] sm:$0xff] %vm1547, %v1501
    %1647 = vst.msk [vmem:[%s3 + $0x318] sm:$0xff] %vm1547, %v1502
    %1648 = vst.msk [vmem:[%s3 + $0x320] sm:$0xff] %vm1547, %v1503
    %1649 = vst.msk [vmem:[%s3 + $0x328] sm:$0xff] %vm1547, %v1504
    %1650 = vst.msk [vmem:[%s3 + $0x330] sm:$0xff] %vm1547, %v1505
    %1651 = vst.msk [vmem:[%s3 + $0x338] sm:$0xff] %vm1547, %v1506
    %1652 = vst.msk [vmem:[%s3 + $0x340] sm:$0xff] %vm1547, %v1507
    %1653 = vst.msk [vmem:[%s3 + $0x348] sm:$0xff] %vm1547, %v1508
    %1654 = vst.msk [vmem:[%s3 + $0x350] sm:$0xff] %vm1547, %v1509
    %1655 = vst.msk [vmem:[%s3 + $0x358] sm:$0xff] %vm1547, %v1510
    %1656 = vst.msk [vmem:[%s3 + $0x360] sm:$0xff] %vm1547, %v1511
    %1657 = vst.msk [vmem:[%s3 + $0x368] sm:$0xff] %vm1547, %v1512
    %1658 = vst.msk [vmem:[%s3 + $0x370] sm:$0xff] %vm1547, %v1513
    %1659 = vst.msk [vmem:[%s3 + $0x378] sm:$0xff] %vm1547, %v1514
    %1660 = vst.msk [vmem:[%s3 + $0x380] sm:$0xff] %vm1547, %v1515
    %1661 = vst.msk [vmem:[%s3 + $0x388] sm:$0xff] %vm1547, %v1516
    %1662 = vst.msk [vmem:[%s3 + $0x390] sm:$0xff] %vm1547, %v1517
    %1663 = vst.msk [vmem:[%s3 + $0x398] sm:$0xff] %vm1547, %v1518
    %1664 = vst.msk [vmem:[%s3 + $0x3a0] sm:$0xff] %vm1547, %v1519
    %1665 = vst.msk [vmem:[%s3 + $0x3a8] sm:$0xff] %vm1547, %v1520
    %1666 = vst.msk [vmem:[%s3 + $0x3b0] sm:$0xff] %vm1547, %v1521
    %1667 = vst.msk [vmem:[%s3 + $0x3b8] sm:$0xff] %vm1547, %v1522
    %1668 = vst.msk [vmem:[%s3 + $0x3c0] sm:$0xff] %vm1547, %v1523
    %1669 = vst.msk [vmem:[%s3 + $0x3c8] sm:$0xff] %vm1547, %v1524
    %1670 = vst.msk [vmem:[%s3 + $0x3d0] sm:$0xff] %vm1547, %v1525
    %1671 = vst.msk [vmem:[%s3 + $0x3d8] sm:$0xff] %vm1547, %v1526
    %1672 = vst.msk [vmem:[%s3 + $0x3e0] sm:$0xff] %vm1547, %v1527
    %1673 = vst.msk [vmem:[%s3 + $0x3e8] sm:$0xff] %vm1547, %v1528
    %1674 = vst.msk [vmem:[%s3 + $0x3f0] sm:$0xff] %vm1547, %v1529
    %1675 = vst.msk [vmem:[%s3 + $0x3f8] sm:$0xff] %vm1547, %v1530
    %1676 = vst.msk [vmem:[%s3 + $0x400] sm:$0xff] %vm1547, %v1531
    %1677 = vst.msk [vmem:[%s3 + $0x408] sm:$0xff] %vm1547, %v1532
    %1678 = vst.msk [vmem:[%s3 + $0x410] sm:$0xff] %vm1547, %v1533
    %1679 = vst.msk [vmem:[%s3 + $0x418] sm:$0xff] %vm1547, %v1534
    %1680 = vst.msk [vmem:[%s3 + $0x420] sm:$0xff] %vm1547, %v1535
    %1681 = vst.msk [vmem:[%s3 + $0x428] sm:$0xff] %vm1547, %v1536
    %1682 = vst.msk [vmem:[%s3 + $0x430] sm:$0xff] %vm1547, %v1537
    %1683 = vst.msk [vmem:[%s3 + $0x438] sm:$0xff] %vm1547, %v1538
    %1684 = vst.msk [vmem:[%s3 + $0x440] sm:$0xff] %vm1547, %v1539
    %1685 = vst.msk [vmem:[%s3 + $0x448] sm:$0xff] %vm1547, %v1540
    %1686 = vst.msk [vmem:[%s3 + $0x450] sm:$0xff] %vm1547, %v1541
    %1687 = vst.msk [vmem:[%s3 + $0x458] sm:$0xff] %vm1547, %v1542
    %1688 = vst.msk [vmem:[%s3 + $0x460] sm:$0xff] %vm1547, %v1543
    %1689 = vst.msk [vmem:[%s3 + $0x468] sm:$0xff] %vm1547, %v1544
    %1690 = vst.msk [vmem:[%s3 + $0x470] sm:$0xff] %vm1547, %v1545
    %1691 = vst.msk [vmem:[%s3 + $0x478] sm:$0xff] %vm1547, %v1546
    // Predicated region
    $region18: #{lenet_forward.3} parent=1 // pred_check
      _
    $region19: #{lenet_forward.3} parent=1 // pred_check_branch
      %1693 = sbr.rel (0) target = $region21
    $region20: #{lenet_forward.3} parent=1 // pred_region
      _
    $region21: #{lenet_forward.3} parent=1 // pred_fallthru
      _
    // Predicated region
    $region22: #{lenet_forward.3} parent=1 // pred_check
      _
    $region23: #{lenet_forward.3} parent=1 // pred_check_branch
      %1695 = sbr.rel (0) target = $region25
    $region24: #{lenet_forward.3} parent=1 // pred_region
      _
    $region25: #{lenet_forward.3} parent=1 // pred_fallthru
      _
    %1696 = vsyncpa [#allocation3], 1

// kernel: lenet_forward.4
$region0: #{lenet_forward.4}
  #allocation0 [shape = 'u32[]', space=smem, size = 0x4, offset = 0x4, fixed_abs, tag = 'smem constant byte address 0x4 - core index']
  #allocation1 [shape = 'u32[144,128]{1,0:T(1,128)}', space=vmem, size = 0x12000, scoped, tag = 'internal scratch']
  %s0 = inlined_call_operand.vmem [shape: f32[800,500], index: 0, kind: input, shape index: {}]
  %s1 = inlined_call_operand.vmem [shape: f32[500,50], index: 1, kind: input, shape index: {}]
  %s2 = inlined_call_operand.vmem [shape: f32[1,50], index: 2, kind: input, shape index: {}]
  %s3 = inlined_call_operand.vmem [shape: f32[800,50], index: 3, kind: output, shape index: {}]
  %s4 = sld [smem:[#allocation0]]
  $region22: #{lenet_forward.4} parent=0
    _
  %s6 = ssub.s32 1, %s4
  %s7 = scalar_select 0, %s6, %s4
  // Predicated region
  $region2: #{lenet_forward.4} parent=0 // pred_check
    _
  $region3: #{lenet_forward.4} parent=0 // pred_check_branch
    %9 = sbr.rel (0) target = $region5
  $region4: #{lenet_forward.4} parent=0 // pred_region
    _
  $region5: #{lenet_forward.4} parent=0 // pred_fallthru
    _
  // Predicated region
  $region6: #{lenet_forward.4} parent=0 // pred_check
    _
  $region7: #{lenet_forward.4} parent=0 // pred_check_branch
    %11 = sbr.rel (0) target = $region9
  $region8: #{lenet_forward.4} parent=0 // pred_region
    _
  $region9: #{lenet_forward.4} parent=0 // pred_fallthru
    _
  // Predicated region
  $region10: #{lenet_forward.4} parent=0 // pred_check
    _
  $region11: #{lenet_forward.4} parent=0 // pred_check_branch
    %13 = sbr.rel (0) target = $region13
  $region12: #{lenet_forward.4} parent=0 // pred_region
    _
  $region13: #{lenet_forward.4} parent=0 // pred_fallthru
    _
  %v14 = vld [vmem:[%s0] sm:$0xff]
  %v15 = vld [vmem:[%s0 + $0x8] sm:$0xff]
  %v16 = vld [vmem:[%s0 + $0x10] sm:$0xff]
  %v17 = vld [vmem:[%s0 + $0x18] sm:$0xff]
  %v18 = vld [vmem:[%s0 + $0x20] sm:$0xff]
  %v19 = vld [vmem:[%s0 + $0x28] sm:$0xff]
  %v20 = vld [vmem:[%s0 + $0x30] sm:$0xff]
  %v21 = vld [vmem:[%s0 + $0x38] sm:$0xff]
  %v22 = vld [vmem:[%s0 + $0x40] sm:$0xff]
  %v23 = vld [vmem:[%s0 + $0x48] sm:$0xff]
  %v24 = vld [vmem:[%s0 + $0x50] sm:$0xff]
  %v25 = vld [vmem:[%s0 + $0x58] sm:$0xff]
  %v26 = vld [vmem:[%s0 + $0x60] sm:$0xff]
  %v27 = vld [vmem:[%s0 + $0x68] sm:$0xff]
  %v28 = vld [vmem:[%s0 + $0x70] sm:$0xff]
  %v29 = vld [vmem:[%s0 + $0x78] sm:$0xff]
  %v30 = vld [vmem:[%s0 + $0x80] sm:$0xff]
  %v31 = vld [vmem:[%s0 + $0x88] sm:$0xff]
  %v32 = vld [vmem:[%s0 + $0x90] sm:$0xff]
  %v33 = vld [vmem:[%s0 + $0x98] sm:$0xff]
  %v34 = vld [vmem:[%s0 + $0xa0] sm:$0xff]
  %v35 = vld [vmem:[%s0 + $0xa8] sm:$0xff]
  %v36 = vld [vmem:[%s0 + $0xb0] sm:$0xff]
  %v37 = vld [vmem:[%s0 + $0xb8] sm:$0xff]
  %v38 = vld [vmem:[%s0 + $0xc0] sm:$0xff]
  %v39 = vld [vmem:[%s0 + $0xc8] sm:$0xff]
  %v40 = vld [vmem:[%s0 + $0xd0] sm:$0xff]
  %v41 = vld [vmem:[%s0 + $0xd8] sm:$0xff]
  %v42 = vld [vmem:[%s0 + $0xe0] sm:$0xff]
  %v43 = vld [vmem:[%s0 + $0xe8] sm:$0xff]
  %v44 = vld [vmem:[%s0 + $0xf0] sm:$0xff]
  %v45 = vld [vmem:[%s0 + $0xf8] sm:$0xff]
  %v46 = vld [vmem:[%s0 + $0x100] sm:$0xff]
  %v47 = vld [vmem:[%s0 + $0x108] sm:$0xff]
  %v48 = vld [vmem:[%s0 + $0x110] sm:$0xff]
  %v49 = vld [vmem:[%s0 + $0x118] sm:$0xff]
  %v50 = vld [vmem:[%s0 + $0x120] sm:$0xff]
  %v51 = vld [vmem:[%s0 + $0x128] sm:$0xff]
  %v52 = vld [vmem:[%s0 + $0x130] sm:$0xff]
  %v53 = vld [vmem:[%s0 + $0x138] sm:$0xff]
  %v54 = vld [vmem:[%s0 + $0x140] sm:$0xff]
  %v55 = vld [vmem:[%s0 + $0x148] sm:$0xff]
  %v56 = vld [vmem:[%s0 + $0x150] sm:$0xff]
  %v57 = vld [vmem:[%s0 + $0x158] sm:$0xff]
  %v58 = vld [vmem:[%s0 + $0x160] sm:$0xff]
  %v59 = vld [vmem:[%s0 + $0x168] sm:$0xff]
  %v60 = vld [vmem:[%s0 + $0x170] sm:$0xff]
  %v61 = vld [vmem:[%s0 + $0x178] sm:$0xff]
  %v62 = vld [vmem:[%s0 + $0x180] sm:$0xff]
  %v63 = vld [vmem:[%s0 + $0x188] sm:$0xff]
  %v64 = vld [vmem:[%s0 + $0x190] sm:$0xff]
  %v65 = vld [vmem:[%s0 + $0x198] sm:$0xff]
  %v66 = vld [vmem:[%s0 + $0x1a0] sm:$0xff]
  %v67 = vld [vmem:[%s0 + $0x1a8] sm:$0xff]
  %v68 = vld [vmem:[%s0 + $0x1b0] sm:$0xff]
  %v69 = vld [vmem:[%s0 + $0x1b8] sm:$0xff]
  %v70 = vld [vmem:[%s0 + $0x1c0] sm:$0xff]
  %v71 = vld [vmem:[%s0 + $0x1c8] sm:$0xff]
  %v72 = vld [vmem:[%s0 + $0x1d0] sm:$0xff]
  %v73 = vld [vmem:[%s0 + $0x1d8] sm:$0xff]
  %v74 = vld [vmem:[%s0 + $0x1e0] sm:$0xff]
  %v75 = vld [vmem:[%s0 + $0x1e8] sm:$0xff]
  %v76 = vld [vmem:[%s0 + $0x1f0] sm:$0xff]
  %v77 = vld [vmem:[%s0 + $0x1f8] sm:$0xff]
  %v78 = vld [vmem:[%s0 + $0x200] sm:$0xff]
  %v79 = vld [vmem:[%s0 + $0x208] sm:$0xff]
  %v80 = vld [vmem:[%s0 + $0x210] sm:$0xff]
  %v81 = vld [vmem:[%s0 + $0x218] sm:$0xff]
  %v82 = vld [vmem:[%s0 + $0x220] sm:$0xff]
  %v83 = vld [vmem:[%s0 + $0x228] sm:$0xff]
  %v84 = vld [vmem:[%s0 + $0x230] sm:$0xff]
  %v85 = vld [vmem:[%s0 + $0x238] sm:$0xff]
  %v86 = vld [vmem:[%s0 + $0x240] sm:$0xff]
  %v87 = vld [vmem:[%s0 + $0x248] sm:$0xff]
  %v88 = vld [vmem:[%s0 + $0x250] sm:$0xff]
  %v89 = vld [vmem:[%s0 + $0x258] sm:$0xff]
  %v90 = vld [vmem:[%s0 + $0x260] sm:$0xff]
  %v91 = vld [vmem:[%s0 + $0x268] sm:$0xff]
  %v92 = vld [vmem:[%s0 + $0x270] sm:$0xff]
  %v93 = vld [vmem:[%s0 + $0x278] sm:$0xff]
  %v94 = vld [vmem:[%s0 + $0x280] sm:$0xff]
  %v95 = vld [vmem:[%s0 + $0x288] sm:$0xff]
  %v96 = vld [vmem:[%s0 + $0x290] sm:$0xff]
  %v97 = vld [vmem:[%s0 + $0x298] sm:$0xff]
  %v98 = vld [vmem:[%s0 + $0x2a0] sm:$0xff]
  %v99 = vld [vmem:[%s0 + $0x2a8] sm:$0xff]
  %v100 = vld [vmem:[%s0 + $0x2b0] sm:$0xff]
  %v101 = vld [vmem:[%s0 + $0x2b8] sm:$0xff]
  %v102 = vld [vmem:[%s0 + $0x2c0] sm:$0xff]
  %v103 = vld [vmem:[%s0 + $0x2c8] sm:$0xff]
  %v104 = vld [vmem:[%s0 + $0x2d0] sm:$0xff]
  %v105 = vld [vmem:[%s0 + $0x2d8] sm:$0xff]
  %v106 = vld [vmem:[%s0 + $0x2e0] sm:$0xff]
  %v107 = vld [vmem:[%s0 + $0x2e8] sm:$0xff]
  %v108 = vld [vmem:[%s0 + $0x2f0] sm:$0xff]
  %v109 = vld [vmem:[%s0 + $0x2f8] sm:$0xff]
  %v110 = vld [vmem:[%s0 + $0x300] sm:$0xff]
  %v111 = vld [vmem:[%s0 + $0x308] sm:$0xff]
  %v112 = vld [vmem:[%s0 + $0x310] sm:$0xff]
  %v113 = vld [vmem:[%s0 + $0x318] sm:$0xff]
  %v114 = vld [vmem:[%s0 + $0x320] sm:$0xff]
  %v115 = vld [vmem:[%s0 + $0x328] sm:$0xff]
  %v116 = vld [vmem:[%s0 + $0x330] sm:$0xff]
  %v117 = vld [vmem:[%s0 + $0x338] sm:$0xff]
  %v118 = vld [vmem:[%s0 + $0x340] sm:$0xff]
  %v119 = vld [vmem:[%s0 + $0x348] sm:$0xff]
  %v120 = vld [vmem:[%s0 + $0x350] sm:$0xff]
  %v121 = vld [vmem:[%s0 + $0x358] sm:$0xff]
  %v122 = vld [vmem:[%s0 + $0x360] sm:$0xff]
  %v123 = vld [vmem:[%s0 + $0x368] sm:$0xff]
  %v124 = vld [vmem:[%s0 + $0x370] sm:$0xff]
  %v125 = vld [vmem:[%s0 + $0x378] sm:$0xff]
  %v126 = vld [vmem:[%s0 + $0x380] sm:$0xff]
  %v127 = vld [vmem:[%s0 + $0x388] sm:$0xff]
  %v128 = vld [vmem:[%s0 + $0x390] sm:$0xff]
  %v129 = vld [vmem:[%s0 + $0x398] sm:$0xff]
  %v130 = vld [vmem:[%s0 + $0x3a0] sm:$0xff]
  %v131 = vld [vmem:[%s0 + $0x3a8] sm:$0xff]
  %v132 = vld [vmem:[%s0 + $0x3b0] sm:$0xff]
  %v133 = vld [vmem:[%s0 + $0x3b8] sm:$0xff]
  %v134 = vld [vmem:[%s0 + $0x3c0] sm:$0xff]
  %v135 = vld [vmem:[%s0 + $0x3c8] sm:$0xff]
  %v136 = vld [vmem:[%s0 + $0x3d0] sm:$0xff]
  %v137 = vld [vmem:[%s0 + $0x3d8] sm:$0xff]
  %v138 = vld [vmem:[%s0 + $0x3e0] sm:$0xff]
  %v139 = vld [vmem:[%s0 + $0x3e8] sm:$0xff]
  %v140 = vld [vmem:[%s0 + $0x3f0] sm:$0xff]
  %v141 = vld [vmem:[%s0 + $0x3f8] sm:$0xff]
  %v142 = vld [vmem:[%s0 + $0x400] sm:$0xff]
  %v143 = vld [vmem:[%s0 + $0x408] sm:$0xff]
  %v144 = vld [vmem:[%s0 + $0x410] sm:$0xff]
  %v145 = vld [vmem:[%s0 + $0x418] sm:$0xff]
  %v146 = vld [vmem:[%s0 + $0x420] sm:$0xff]
  %v147 = vld [vmem:[%s0 + $0x428] sm:$0xff]
  %v148 = vld [vmem:[%s0 + $0x430] sm:$0xff]
  %v149 = vld [vmem:[%s0 + $0x438] sm:$0xff]
  %v150 = vld [vmem:[%s0 + $0x440] sm:$0xff]
  %v151 = vld [vmem:[%s0 + $0x448] sm:$0xff]
  %v152 = vld [vmem:[%s0 + $0x450] sm:$0xff]
  %v153 = vld [vmem:[%s0 + $0x458] sm:$0xff]
  %v154 = vld [vmem:[%s0 + $0x460] sm:$0xff]
  %v155 = vld [vmem:[%s0 + $0x468] sm:$0xff]
  %v156 = vld [vmem:[%s0 + $0x470] sm:$0xff]
  %v157 = vld [vmem:[%s0 + $0x478] sm:$0xff]
  %v158 = vld [vmem:[%s0 + $0x480] sm:$0xff]
  %v159 = vld [vmem:[%s0 + $0x488] sm:$0xff]
  %v160 = vld [vmem:[%s0 + $0x490] sm:$0xff]
  %v161 = vld [vmem:[%s0 + $0x498] sm:$0xff]
  %v162 = vld [vmem:[%s0 + $0x4a0] sm:$0xff]
  %v163 = vld [vmem:[%s0 + $0x4a8] sm:$0xff]
  %v164 = vld [vmem:[%s0 + $0x4b0] sm:$0xff]
  %v165 = vld [vmem:[%s0 + $0x4b8] sm:$0xff]
  %v166 = vld [vmem:[%s0 + $0x4c0] sm:$0xff]
  %v167 = vld [vmem:[%s0 + $0x4c8] sm:$0xff]
  %v168 = vld [vmem:[%s0 + $0x4d0] sm:$0xff]
  %v169 = vld [vmem:[%s0 + $0x4d8] sm:$0xff]
  %v170 = vld [vmem:[%s0 + $0x4e0] sm:$0xff]
  %v171 = vld [vmem:[%s0 + $0x4e8] sm:$0xff]
  %v172 = vld [vmem:[%s0 + $0x4f0] sm:$0xff]
  %v173 = vld [vmem:[%s0 + $0x4f8] sm:$0xff]
  %v174 = vld [vmem:[%s0 + $0x500] sm:$0xff]
  %v175 = vld [vmem:[%s0 + $0x508] sm:$0xff]
  %v176 = vld [vmem:[%s0 + $0x510] sm:$0xff]
  %v177 = vld [vmem:[%s0 + $0x518] sm:$0xff]
  %v178 = vld [vmem:[%s0 + $0x520] sm:$0xff]
  %v179 = vld [vmem:[%s0 + $0x528] sm:$0xff]
  %v180 = vld [vmem:[%s0 + $0x530] sm:$0xff]
  %v181 = vld [vmem:[%s0 + $0x538] sm:$0xff]
  %v182 = vld [vmem:[%s0 + $0x540] sm:$0xff]
  %v183 = vld [vmem:[%s0 + $0x548] sm:$0xff]
  %v184 = vld [vmem:[%s0 + $0x550] sm:$0xff]
  %v185 = vld [vmem:[%s0 + $0x558] sm:$0xff]
  %v186 = vld [vmem:[%s0 + $0x560] sm:$0xff]
  %v187 = vld [vmem:[%s0 + $0x568] sm:$0xff]
  %v188 = vld [vmem:[%s0 + $0x570] sm:$0xff]
  %v189 = vld [vmem:[%s0 + $0x578] sm:$0xff]
  %v190 = vld [vmem:[%s0 + $0x580] sm:$0xff]
  %v191 = vld [vmem:[%s0 + $0x588] sm:$0xff]
  %v192 = vld [vmem:[%s0 + $0x590] sm:$0xff]
  %v193 = vld [vmem:[%s0 + $0x598] sm:$0xff]
  %v194 = vld [vmem:[%s0 + $0x5a0] sm:$0xff]
  %v195 = vld [vmem:[%s0 + $0x5a8] sm:$0xff]
  %v196 = vld [vmem:[%s0 + $0x5b0] sm:$0xff]
  %v197 = vld [vmem:[%s0 + $0x5b8] sm:$0xff]
  %v198 = vld [vmem:[%s0 + $0x5c0] sm:$0xff]
  %v199 = vld [vmem:[%s0 + $0x5c8] sm:$0xff]
  %v200 = vld [vmem:[%s0 + $0x5d0] sm:$0xff]
  %v201 = vld [vmem:[%s0 + $0x5d8] sm:$0xff]
  %v202 = vld [vmem:[%s0 + $0x5e0] sm:$0xff]
  %v203 = vld [vmem:[%s0 + $0x5e8] sm:$0xff]
  %v204 = vld [vmem:[%s0 + $0x5f0] sm:$0xff]
  %v205 = vld [vmem:[%s0 + $0x5f8] sm:$0xff]
  %v206 = vld [vmem:[%s0 + $0x600] sm:$0xff]
  %v207 = vld [vmem:[%s0 + $0x608] sm:$0xff]
  %v208 = vld [vmem:[%s0 + $0x610] sm:$0xff]
  %v209 = vld [vmem:[%s0 + $0x618] sm:$0xff]
  %v210 = vld [vmem:[%s0 + $0x620] sm:$0xff]
  %v211 = vld [vmem:[%s0 + $0x628] sm:$0xff]
  %v212 = vld [vmem:[%s0 + $0x630] sm:$0xff]
  %v213 = vld [vmem:[%s0 + $0x638] sm:$0xff]
  %v214 = vld [vmem:[%s0 + $0x640] sm:$0xff]
  %v215 = vld [vmem:[%s0 + $0x648] sm:$0xff]
  %v216 = vld [vmem:[%s0 + $0x650] sm:$0xff]
  %v217 = vld [vmem:[%s0 + $0x658] sm:$0xff]
  %v218 = vld [vmem:[%s0 + $0x660] sm:$0xff]
  %v219 = vld [vmem:[%s0 + $0x668] sm:$0xff]
  %v220 = vld [vmem:[%s0 + $0x670] sm:$0xff]
  %v221 = vld [vmem:[%s0 + $0x678] sm:$0xff]
  %v222 = vld [vmem:[%s0 + $0x680] sm:$0xff]
  %v223 = vld [vmem:[%s0 + $0x688] sm:$0xff]
  %v224 = vld [vmem:[%s0 + $0x690] sm:$0xff]
  %v225 = vld [vmem:[%s0 + $0x698] sm:$0xff]
  %v226 = vld [vmem:[%s0 + $0x6a0] sm:$0xff]
  %v227 = vld [vmem:[%s0 + $0x6a8] sm:$0xff]
  %v228 = vld [vmem:[%s0 + $0x6b0] sm:$0xff]
  %v229 = vld [vmem:[%s0 + $0x6b8] sm:$0xff]
  %v230 = vld [vmem:[%s0 + $0x6c0] sm:$0xff]
  %v231 = vld [vmem:[%s0 + $0x6c8] sm:$0xff]
  %v232 = vld [vmem:[%s0 + $0x6d0] sm:$0xff]
  %v233 = vld [vmem:[%s0 + $0x6d8] sm:$0xff]
  %v234 = vld [vmem:[%s0 + $0x6e0] sm:$0xff]
  %v235 = vld [vmem:[%s0 + $0x6e8] sm:$0xff]
  %v236 = vld [vmem:[%s0 + $0x6f0] sm:$0xff]
  %v237 = vld [vmem:[%s0 + $0x6f8] sm:$0xff]
  %v238 = vld [vmem:[%s0 + $0x700] sm:$0xff]
  %v239 = vld [vmem:[%s0 + $0x708] sm:$0xff]
  %v240 = vld [vmem:[%s0 + $0x710] sm:$0xff]
  %v241 = vld [vmem:[%s0 + $0x718] sm:$0xff]
  %v242 = vld [vmem:[%s0 + $0x720] sm:$0xff]
  %v243 = vld [vmem:[%s0 + $0x728] sm:$0xff]
  %v244 = vld [vmem:[%s0 + $0x730] sm:$0xff]
  %v245 = vld [vmem:[%s0 + $0x738] sm:$0xff]
  %v246 = vld [vmem:[%s0 + $0x740] sm:$0xff]
  %v247 = vld [vmem:[%s0 + $0x748] sm:$0xff]
  %v248 = vld [vmem:[%s0 + $0x750] sm:$0xff]
  %v249 = vld [vmem:[%s0 + $0x758] sm:$0xff]
  %v250 = vld [vmem:[%s0 + $0x760] sm:$0xff]
  %v251 = vld [vmem:[%s0 + $0x768] sm:$0xff]
  %v252 = vld [vmem:[%s0 + $0x770] sm:$0xff]
  %v253 = vld [vmem:[%s0 + $0x778] sm:$0xff]
  %v254 = vld [vmem:[%s0 + $0x780] sm:$0xff]
  %v255 = vld [vmem:[%s0 + $0x788] sm:$0xff]
  %v256 = vld [vmem:[%s0 + $0x790] sm:$0xff]
  %v257 = vld [vmem:[%s0 + $0x798] sm:$0xff]
  %v258 = vld [vmem:[%s0 + $0x7a0] sm:$0xff]
  %v259 = vld [vmem:[%s0 + $0x7a8] sm:$0xff]
  %v260 = vld [vmem:[%s0 + $0x7b0] sm:$0xff]
  %v261 = vld [vmem:[%s0 + $0x7b8] sm:$0xff]
  %v262 = vld [vmem:[%s0 + $0x7c0] sm:$0xff]
  %v263 = vld [vmem:[%s0 + $0x7c8] sm:$0xff]
  %v264 = vld [vmem:[%s0 + $0x7d0] sm:$0xff]
  %v265 = vld [vmem:[%s0 + $0x7d8] sm:$0xff]
  %v266 = vld [vmem:[%s0 + $0x7e0] sm:$0xff]
  %v267 = vld [vmem:[%s0 + $0x7e8] sm:$0xff]
  %v268 = vld [vmem:[%s0 + $0x7f0] sm:$0xff]
  %v269 = vld [vmem:[%s0 + $0x7f8] sm:$0xff]
  %v270 = vld [vmem:[%s0 + $0x800] sm:$0xff]
  %v271 = vld [vmem:[%s0 + $0x808] sm:$0xff]
  %v272 = vld [vmem:[%s0 + $0x810] sm:$0xff]
  %v273 = vld [vmem:[%s0 + $0x818] sm:$0xff]
  %v274 = vld [vmem:[%s0 + $0x820] sm:$0xff]
  %v275 = vld [vmem:[%s0 + $0x828] sm:$0xff]
  %v276 = vld [vmem:[%s0 + $0x830] sm:$0xff]
  %v277 = vld [vmem:[%s0 + $0x838] sm:$0xff]
  %v278 = vld [vmem:[%s0 + $0x840] sm:$0xff]
  %v279 = vld [vmem:[%s0 + $0x848] sm:$0xff]
  %v280 = vld [vmem:[%s0 + $0x850] sm:$0xff]
  %v281 = vld [vmem:[%s0 + $0x858] sm:$0xff]
  %v282 = vld [vmem:[%s0 + $0x860] sm:$0xff]
  %v283 = vld [vmem:[%s0 + $0x868] sm:$0xff]
  %v284 = vld [vmem:[%s0 + $0x870] sm:$0xff]
  %v285 = vld [vmem:[%s0 + $0x878] sm:$0xff]
  %v286 = vld [vmem:[%s0 + $0x880] sm:$0xff]
  %v287 = vld [vmem:[%s0 + $0x888] sm:$0xff]
  %v288 = vld [vmem:[%s0 + $0x890] sm:$0xff]
  %v289 = vld [vmem:[%s0 + $0x898] sm:$0xff]
  %v290 = vld [vmem:[%s0 + $0x8a0] sm:$0xff]
  %v291 = vld [vmem:[%s0 + $0x8a8] sm:$0xff]
  %v292 = vld [vmem:[%s0 + $0x8b0] sm:$0xff]
  %v293 = vld [vmem:[%s0 + $0x8b8] sm:$0xff]
  %v294 = vld [vmem:[%s0 + $0x8c0] sm:$0xff]
  %v295 = vld [vmem:[%s0 + $0x8c8] sm:$0xff]
  %v296 = vld [vmem:[%s0 + $0x8d0] sm:$0xff]
  %v297 = vld [vmem:[%s0 + $0x8d8] sm:$0xff]
  %v298 = vld [vmem:[%s0 + $0x8e0] sm:$0xff]
  %v299 = vld [vmem:[%s0 + $0x8e8] sm:$0xff]
  %v300 = vld [vmem:[%s0 + $0x8f0] sm:$0xff]
  %v301 = vld [vmem:[%s0 + $0x8f8] sm:$0xff]
  %v302 = vld [vmem:[%s0 + $0x900] sm:$0xff]
  %v303 = vld [vmem:[%s0 + $0x908] sm:$0xff]
  %v304 = vld [vmem:[%s0 + $0x910] sm:$0xff]
  %v305 = vld [vmem:[%s0 + $0x918] sm:$0xff]
  %v306 = vld [vmem:[%s0 + $0x920] sm:$0xff]
  %v307 = vld [vmem:[%s0 + $0x928] sm:$0xff]
  %v308 = vld [vmem:[%s0 + $0x930] sm:$0xff]
  %v309 = vld [vmem:[%s0 + $0x938] sm:$0xff]
  %v310 = vld [vmem:[%s0 + $0x940] sm:$0xff]
  %v311 = vld [vmem:[%s0 + $0x948] sm:$0xff]
  %v312 = vld [vmem:[%s0 + $0x950] sm:$0xff]
  %v313 = vld [vmem:[%s0 + $0x958] sm:$0xff]
  %v314 = vld [vmem:[%s0 + $0x960] sm:$0xff]
  %v315 = vld [vmem:[%s0 + $0x968] sm:$0xff]
  %v316 = vld [vmem:[%s0 + $0x970] sm:$0xff]
  %v317 = vld [vmem:[%s0 + $0x978] sm:$0xff]
  %v318 = vld [vmem:[%s0 + $0x980] sm:$0xff]
  %v319 = vld [vmem:[%s0 + $0x988] sm:$0xff]
  %v320 = vld [vmem:[%s0 + $0x990] sm:$0xff]
  %v321 = vld [vmem:[%s0 + $0x998] sm:$0xff]
  %v322 = vld [vmem:[%s0 + $0x9a0] sm:$0xff]
  %v323 = vld [vmem:[%s0 + $0x9a8] sm:$0xff]
  %v324 = vld [vmem:[%s0 + $0x9b0] sm:$0xff]
  %v325 = vld [vmem:[%s0 + $0x9b8] sm:$0xff]
  %v326 = vld [vmem:[%s0 + $0x9c0] sm:$0xff]
  %v327 = vld [vmem:[%s0 + $0x9c8] sm:$0xff]
  %v328 = vld [vmem:[%s0 + $0x9d0] sm:$0xff]
  %v329 = vld [vmem:[%s0 + $0x9d8] sm:$0xff]
  %v330 = vld [vmem:[%s0 + $0x9e0] sm:$0xff]
  %v331 = vld [vmem:[%s0 + $0x9e8] sm:$0xff]
  %v332 = vld [vmem:[%s0 + $0x9f0] sm:$0xff]
  %v333 = vld [vmem:[%s0 + $0x9f8] sm:$0xff]
  %v334 = vld [vmem:[%s0 + $0xa00] sm:$0xff]
  %v335 = vld [vmem:[%s0 + $0xa08] sm:$0xff]
  %v336 = vld [vmem:[%s0 + $0xa10] sm:$0xff]
  %v337 = vld [vmem:[%s0 + $0xa18] sm:$0xff]
  %v338 = vld [vmem:[%s0 + $0xa20] sm:$0xff]
  %v339 = vld [vmem:[%s0 + $0xa28] sm:$0xff]
  %v340 = vld [vmem:[%s0 + $0xa30] sm:$0xff]
  %v341 = vld [vmem:[%s0 + $0xa38] sm:$0xff]
  %v342 = vld [vmem:[%s0 + $0xa40] sm:$0xff]
  %v343 = vld [vmem:[%s0 + $0xa48] sm:$0xff]
  %v344 = vld [vmem:[%s0 + $0xa50] sm:$0xff]
  %v345 = vld [vmem:[%s0 + $0xa58] sm:$0xff]
  %v346 = vld [vmem:[%s0 + $0xa60] sm:$0xff]
  %v347 = vld [vmem:[%s0 + $0xa68] sm:$0xff]
  %v348 = vld [vmem:[%s0 + $0xa70] sm:$0xff]
  %v349 = vld [vmem:[%s0 + $0xa78] sm:$0xff]
  %v350 = vld [vmem:[%s0 + $0xa80] sm:$0xff]
  %v351 = vld [vmem:[%s0 + $0xa88] sm:$0xff]
  %v352 = vld [vmem:[%s0 + $0xa90] sm:$0xff]
  %v353 = vld [vmem:[%s0 + $0xa98] sm:$0xff]
  %v354 = vld [vmem:[%s0 + $0xaa0] sm:$0xff]
  %v355 = vld [vmem:[%s0 + $0xaa8] sm:$0xff]
  %v356 = vld [vmem:[%s0 + $0xab0] sm:$0xff]
  %v357 = vld [vmem:[%s0 + $0xab8] sm:$0xff]
  %v358 = vld [vmem:[%s0 + $0xac0] sm:$0xff]
  %v359 = vld [vmem:[%s0 + $0xac8] sm:$0xff]
  %v360 = vld [vmem:[%s0 + $0xad0] sm:$0xff]
  %v361 = vld [vmem:[%s0 + $0xad8] sm:$0xff]
  %v362 = vld [vmem:[%s0 + $0xae0] sm:$0xff]
  %v363 = vld [vmem:[%s0 + $0xae8] sm:$0xff]
  %v364 = vld [vmem:[%s0 + $0xaf0] sm:$0xff]
  %v365 = vld [vmem:[%s0 + $0xaf8] sm:$0xff]
  %v366 = vld [vmem:[%s0 + $0xb00] sm:$0xff]
  %v367 = vld [vmem:[%s0 + $0xb08] sm:$0xff]
  %v368 = vld [vmem:[%s0 + $0xb10] sm:$0xff]
  %v369 = vld [vmem:[%s0 + $0xb18] sm:$0xff]
  %v370 = vld [vmem:[%s0 + $0xb20] sm:$0xff]
  %v371 = vld [vmem:[%s0 + $0xb28] sm:$0xff]
  %v372 = vld [vmem:[%s0 + $0xb30] sm:$0xff]
  %v373 = vld [vmem:[%s0 + $0xb38] sm:$0xff]
  %v374 = vld [vmem:[%s0 + $0xb40] sm:$0xff]
  %v375 = vld [vmem:[%s0 + $0xb48] sm:$0xff]
  %v376 = vld [vmem:[%s0 + $0xb50] sm:$0xff]
  %v377 = vld [vmem:[%s0 + $0xb58] sm:$0xff]
  %v378 = vld [vmem:[%s0 + $0xb60] sm:$0xff]
  %v379 = vld [vmem:[%s0 + $0xb68] sm:$0xff]
  %v380 = vld [vmem:[%s0 + $0xb70] sm:$0xff]
  %v381 = vld [vmem:[%s0 + $0xb78] sm:$0xff]
  %v382 = vld [vmem:[%s0 + $0xb80] sm:$0xff]
  %v383 = vld [vmem:[%s0 + $0xb88] sm:$0xff]
  %v384 = vld [vmem:[%s0 + $0xb90] sm:$0xff]
  %v385 = vld [vmem:[%s0 + $0xb98] sm:$0xff]
  %v386 = vld [vmem:[%s0 + $0xba0] sm:$0xff]
  %v387 = vld [vmem:[%s0 + $0xba8] sm:$0xff]
  %v388 = vld [vmem:[%s0 + $0xbb0] sm:$0xff]
  %v389 = vld [vmem:[%s0 + $0xbb8] sm:$0xff]
  %v390 = vld [vmem:[%s0 + $0xbc0] sm:$0xff]
  %v391 = vld [vmem:[%s0 + $0xbc8] sm:$0xff]
  %v392 = vld [vmem:[%s0 + $0xbd0] sm:$0xff]
  %v393 = vld [vmem:[%s0 + $0xbd8] sm:$0xff]
  %v394 = vld [vmem:[%s0 + $0xbe0] sm:$0xff]
  %v395 = vld [vmem:[%s0 + $0xbe8] sm:$0xff]
  %v396 = vld [vmem:[%s0 + $0xbf0] sm:$0xff]
  %v397 = vld [vmem:[%s0 + $0xbf8] sm:$0xff]
  %v398 = vld [vmem:[%s0 + $0xc00] sm:$0xff]
  %v399 = vld [vmem:[%s0 + $0xc08] sm:$0xff]
  %v400 = vld [vmem:[%s0 + $0xc10] sm:$0xff]
  %v401 = vld [vmem:[%s0 + $0xc18] sm:$0xff]
  %v402 = vld [vmem:[%s0 + $0xc20] sm:$0xff]
  %v403 = vld [vmem:[%s0 + $0xc28] sm:$0xff]
  %v404 = vld [vmem:[%s0 + $0xc30] sm:$0xff]
  %v405 = vld [vmem:[%s0 + $0xc38] sm:$0xff]
  %v406 = vld [vmem:[%s0 + $0xc40] sm:$0xff]
  %v407 = vld [vmem:[%s0 + $0xc48] sm:$0xff]
  %v408 = vld [vmem:[%s0 + $0xc50] sm:$0xff]
  %v409 = vld [vmem:[%s0 + $0xc58] sm:$0xff]
  %v410 = vld [vmem:[%s0 + $0xc60] sm:$0xff]
  %v411 = vld [vmem:[%s0 + $0xc68] sm:$0xff]
  %v412 = vld [vmem:[%s0 + $0xc70] sm:$0xff]
  %v413 = vld [vmem:[%s0 + $0xc78] sm:$0xff]
  %v414 = vld [vmem:[%s1] sm:$0xff]
  %v415 = vld [vmem:[%s1 + $0x8] sm:$0xff]
  %v416 = vld [vmem:[%s1 + $0x10] sm:$0xff]
  %v417 = vld [vmem:[%s1 + $0x18] sm:$0xff]
  %v418 = vld [vmem:[%s1 + $0x20] sm:$0xff]
  %v419 = vld [vmem:[%s1 + $0x28] sm:$0xff]
  %v420 = vld [vmem:[%s1 + $0x30] sm:$0xff]
  %v421 = vld [vmem:[%s1 + $0x38] sm:$0xff]
  %v422 = vld [vmem:[%s1 + $0x40] sm:$0xff]
  %v423 = vld [vmem:[%s1 + $0x48] sm:$0xff]
  %v424 = vld [vmem:[%s1 + $0x50] sm:$0xff]
  %v425 = vld [vmem:[%s1 + $0x58] sm:$0xff]
  %v426 = vld [vmem:[%s1 + $0x60] sm:$0xff]
  %v427 = vld [vmem:[%s1 + $0x68] sm:$0xff]
  %v428 = vld [vmem:[%s1 + $0x70] sm:$0xff]
  %v429 = vld [vmem:[%s1 + $0x78] sm:$0xff]
  %v430 = vld [vmem:[%s1 + $0x80] sm:$0xff]
  %v431 = vld [vmem:[%s1 + $0x88] sm:$0xff]
  %v432 = vld [vmem:[%s1 + $0x90] sm:$0xff]
  %v433 = vld [vmem:[%s1 + $0x98] sm:$0xff]
  %v434 = vld [vmem:[%s1 + $0xa0] sm:$0xff]
  %v435 = vld [vmem:[%s1 + $0xa8] sm:$0xff]
  %v436 = vld [vmem:[%s1 + $0xb0] sm:$0xff]
  %v437 = vld [vmem:[%s1 + $0xb8] sm:$0xff]
  %v438 = vld [vmem:[%s1 + $0xc0] sm:$0xff]
  %v439 = vld [vmem:[%s1 + $0xc8] sm:$0xff]
  %v440 = vld [vmem:[%s1 + $0xd0] sm:$0xff]
  %v441 = vld [vmem:[%s1 + $0xd8] sm:$0xff]
  %v442 = vld [vmem:[%s1 + $0xe0] sm:$0xff]
  %v443 = vld [vmem:[%s1 + $0xe8] sm:$0xff]
  %v444 = vld [vmem:[%s1 + $0xf0] sm:$0xff]
  %v445 = vld [vmem:[%s1 + $0xf8] sm:$0xff]
  %v446 = vld [vmem:[%s1 + $0x100] sm:$0xff]
  %v447 = vld [vmem:[%s1 + $0x108] sm:$0xff]
  %v448 = vld [vmem:[%s1 + $0x110] sm:$0xff]
  %v449 = vld [vmem:[%s1 + $0x118] sm:$0xff]
  %v450 = vld [vmem:[%s1 + $0x120] sm:$0xff]
  %v451 = vld [vmem:[%s1 + $0x128] sm:$0xff]
  %v452 = vld [vmem:[%s1 + $0x130] sm:$0xff]
  %v453 = vld [vmem:[%s1 + $0x138] sm:$0xff]
  %v454 = vld [vmem:[%s1 + $0x140] sm:$0xff]
  %v455 = vld [vmem:[%s1 + $0x148] sm:$0xff]
  %v456 = vld [vmem:[%s1 + $0x150] sm:$0xff]
  %v457 = vld [vmem:[%s1 + $0x158] sm:$0xff]
  %v458 = vld [vmem:[%s1 + $0x160] sm:$0xff]
  %v459 = vld [vmem:[%s1 + $0x168] sm:$0xff]
  %v460 = vld [vmem:[%s1 + $0x170] sm:$0xff]
  %v461 = vld [vmem:[%s1 + $0x178] sm:$0xff]
  %v462 = vld [vmem:[%s1 + $0x180] sm:$0xff]
  %v463 = vld [vmem:[%s1 + $0x188] sm:$0xff]
  %v464 = vld [vmem:[%s1 + $0x190] sm:$0xff]
  %v465 = vld [vmem:[%s1 + $0x198] sm:$0xff]
  %v466 = vld [vmem:[%s1 + $0x1a0] sm:$0xff]
  %v467 = vld [vmem:[%s1 + $0x1a8] sm:$0xff]
  %v468 = vld [vmem:[%s1 + $0x1b0] sm:$0xff]
  %v469 = vld [vmem:[%s1 + $0x1b8] sm:$0xff]
  %v470 = vld [vmem:[%s1 + $0x1c0] sm:$0xff]
  %v471 = vld [vmem:[%s1 + $0x1c8] sm:$0xff]
  %v472 = vld [vmem:[%s1 + $0x1d0] sm:$0xff]
  %v473 = vld [vmem:[%s1 + $0x1d8] sm:$0xff]
  %v474 = vld [vmem:[%s1 + $0x1e0] sm:$0xff]
  %v475 = vld [vmem:[%s1 + $0x1e8] sm:$0xff]
  %v476 = vld [vmem:[%s1 + $0x1f0] sm:$0xf]
  %v477 = vld [vmem:[%s2] sm:$0x1]
  %v479 = vlaneseq
  %v480 = vshrl.u32 %v479, 7
  %v481 = vsub.s32 0, %v480
  %v482 = vrot.slane %v477, %v481
  %vm484 = vcmask 949248
  %v486 = vsel %vm484, %v17, 0
  %v489 = vsel %vm484, %v21, 0
  %v492 = vsel %vm484, %v25, 0
  %v495 = vsel %vm484, %v29, 0
  %v498 = vsel %vm484, %v33, 0
  %v501 = vsel %vm484, %v37, 0
  %v504 = vsel %vm484, %v41, 0
  %v507 = vsel %vm484, %v45, 0
  %v510 = vsel %vm484, %v49, 0
  %v513 = vsel %vm484, %v53, 0
  %v516 = vsel %vm484, %v57, 0
  %v519 = vsel %vm484, %v61, 0
  %v522 = vsel %vm484, %v65, 0
  %v525 = vsel %vm484, %v69, 0
  %v528 = vsel %vm484, %v73, 0
  %v531 = vsel %vm484, %v77, 0
  %v534 = vsel %vm484, %v81, 0
  %v537 = vsel %vm484, %v85, 0
  %v540 = vsel %vm484, %v89, 0
  %v543 = vsel %vm484, %v93, 0
  %v546 = vsel %vm484, %v97, 0
  %v549 = vsel %vm484, %v101, 0
  %v552 = vsel %vm484, %v105, 0
  %v555 = vsel %vm484, %v109, 0
  %v558 = vsel %vm484, %v113, 0
  %v561 = vsel %vm484, %v117, 0
  %v564 = vsel %vm484, %v121, 0
  %v567 = vsel %vm484, %v125, 0
  %v570 = vsel %vm484, %v129, 0
  %v573 = vsel %vm484, %v133, 0
  %v576 = vsel %vm484, %v137, 0
  %v579 = vsel %vm484, %v141, 0
  %v582 = vsel %vm484, %v145, 0
  %v585 = vsel %vm484, %v149, 0
  %v588 = vsel %vm484, %v153, 0
  %v591 = vsel %vm484, %v157, 0
  %v594 = vsel %vm484, %v161, 0
  %v597 = vsel %vm484, %v165, 0
  %v600 = vsel %vm484, %v169, 0
  %v603 = vsel %vm484, %v173, 0
  %v606 = vsel %vm484, %v177, 0
  %v609 = vsel %vm484, %v181, 0
  %v612 = vsel %vm484, %v185, 0
  %v615 = vsel %vm484, %v189, 0
  %v618 = vsel %vm484, %v193, 0
  %v621 = vsel %vm484, %v197, 0
  %v624 = vsel %vm484, %v201, 0
  %v627 = vsel %vm484, %v205, 0
  %v630 = vsel %vm484, %v209, 0
  %v633 = vsel %vm484, %v213, 0
  %v636 = vsel %vm484, %v217, 0
  %v639 = vsel %vm484, %v221, 0
  %v642 = vsel %vm484, %v225, 0
  %v645 = vsel %vm484, %v229, 0
  %v648 = vsel %vm484, %v233, 0
  %v651 = vsel %vm484, %v237, 0
  %v654 = vsel %vm484, %v241, 0
  %v657 = vsel %vm484, %v245, 0
  %v660 = vsel %vm484, %v249, 0
  %v663 = vsel %vm484, %v253, 0
  %v666 = vsel %vm484, %v257, 0
  %v669 = vsel %vm484, %v261, 0
  %v672 = vsel %vm484, %v265, 0
  %v675 = vsel %vm484, %v269, 0
  %v678 = vsel %vm484, %v273, 0
  %v681 = vsel %vm484, %v277, 0
  %v684 = vsel %vm484, %v281, 0
  %v687 = vsel %vm484, %v285, 0
  %v690 = vsel %vm484, %v289, 0
  %v693 = vsel %vm484, %v293, 0
  %v696 = vsel %vm484, %v297, 0
  %v699 = vsel %vm484, %v301, 0
  %v702 = vsel %vm484, %v305, 0
  %v705 = vsel %vm484, %v309, 0
  %v708 = vsel %vm484, %v313, 0
  %v711 = vsel %vm484, %v317, 0
  %v714 = vsel %vm484, %v321, 0
  %v717 = vsel %vm484, %v325, 0
  %v720 = vsel %vm484, %v329, 0
  %v723 = vsel %vm484, %v333, 0
  %v726 = vsel %vm484, %v337, 0
  %v729 = vsel %vm484, %v341, 0
  %v732 = vsel %vm484, %v345, 0
  %v735 = vsel %vm484, %v349, 0
  %v738 = vsel %vm484, %v353, 0
  %v741 = vsel %vm484, %v357, 0
  %v744 = vsel %vm484, %v361, 0
  %v747 = vsel %vm484, %v365, 0
  %v750 = vsel %vm484, %v369, 0
  %v753 = vsel %vm484, %v373, 0
  %v756 = vsel %vm484, %v377, 0
  %v759 = vsel %vm484, %v381, 0
  %v762 = vsel %vm484, %v385, 0
  %v765 = vsel %vm484, %v389, 0
  %v768 = vsel %vm484, %v393, 0
  %v771 = vsel %vm484, %v397, 0
  %v774 = vsel %vm484, %v401, 0
  %v777 = vsel %vm484, %v405, 0
  %v780 = vsel %vm484, %v409, 0
  %v783 = vsel %vm484, %v413, 0
  %vm785 = vcmask 1043456
  %v787 = vsel %vm785, %v476, 0
  %789 = vmatprep.subr.mxu0 0.0
  %790 = vmatpush1.msra.mxu0 %v414
  %791 = vmatprep.subr.mxu0 0.0
  %792 = vmatpush1.msra.mxu0 %v415
  %793 = vmatprep.subr.mxu0 0.0
  %794 = vmatpush1.msra.mxu0 %v416
  %795 = vmatprep.subr.mxu0 0.0
  %796 = vmatpush1.msra.mxu0 %v417
  %797 = vmatprep.subr.mxu0 0.0
  %798 = vmatpush1.msra.mxu0 %v418
  %799 = vmatprep.subr.mxu0 0.0
  %800 = vmatpush1.msra.mxu0 %v419
  %801 = vmatprep.subr.mxu0 0.0
  %802 = vmatpush1.msra.mxu0 %v420
  %803 = vmatprep.subr.mxu0 0.0
  %804 = vmatpush1.msra.mxu0 %v421
  %805 = vmatprep.subr.mxu0 0.0
  %806 = vmatpush1.msra.mxu0 %v422
  %807 = vmatprep.subr.mxu0 0.0
  %808 = vmatpush1.msra.mxu0 %v423
  %809 = vmatprep.subr.mxu0 0.0
  %810 = vmatpush1.msra.mxu0 %v424
  %811 = vmatprep.subr.mxu0 0.0
  %812 = vmatpush1.msra.mxu0 %v425
  %813 = vmatprep.subr.mxu0 0.0
  %814 = vmatpush1.msra.mxu0 %v426
  %815 = vmatprep.subr.mxu0 0.0
  %816 = vmatpush1.msra.mxu0 %v427
  %817 = vmatprep.subr.mxu0 0.0
  %818 = vmatpush1.msra.mxu0 %v428
  %819 = vmatprep.subr.mxu0 0.0
  %820 = vmatpush1.msra.mxu0 %v429
  %821 = vmatprep.subr.mxu0 0.0
  %822 = vmatpush1.msra.mxu0 %v430
  %823 = vmatprep.subr.mxu0 0.0
  %824 = vmatpush1.msra.mxu0 %v431
  %825 = vmatprep.subr.mxu0 0.0
  %826 = vmatpush1.msra.mxu0 %v432
  %827 = vmatprep.subr.mxu0 0.0
  %828 = vmatpush1.msra.mxu0 %v433
  %829 = vmatprep.subr.mxu0 0.0
  %830 = vmatpush1.msra.mxu0 %v434
  %831 = vmatprep.subr.mxu0 0.0
  %832 = vmatpush1.msra.mxu0 %v435
  %833 = vmatprep.subr.mxu0 0.0
  %834 = vmatpush1.msra.mxu0 %v436
  %835 = vmatprep.subr.mxu0 0.0
  %836 = vmatpush1.msra.mxu0 %v437
  %837 = vmatprep.subr.mxu0 0.0
  %838 = vmatpush1.msra.mxu0 %v438
  %839 = vmatprep.subr.mxu0 0.0
  %840 = vmatpush1.msra.mxu0 %v439
  %841 = vmatprep.subr.mxu0 0.0
  %842 = vmatpush1.msra.mxu0 %v440
  %843 = vmatprep.subr.mxu0 0.0
  %844 = vmatpush1.msra.mxu0 %v441
  %845 = vmatprep.subr.mxu0 0.0
  %846 = vmatpush1.msra.mxu0 %v442
  %847 = vmatprep.subr.mxu0 0.0
  %848 = vmatpush1.msra.mxu0 %v443
  %849 = vmatprep.subr.mxu0 0.0
  %850 = vmatpush1.msra.mxu0 %v444
  %851 = vmatprep.subr.mxu0 0.0
  %852 = vmatpush1.msra.mxu0 %v445
  %853 = vmatprep.mubr.f32.mxu0 %v15
  %854 = vmatmul.mubr.f32.gmra.mrb[0].mxu0 %v14
  %v855 = vpop.f32.mrb[0].mxu0
  %v856 = vadd.f32 %v482, %v855
  %v857 = vpop.f32.mrb[0].mxu0
  %858 = vmatprep.mubr.f32.mxu0 %v19
  %859 = vmatmul.mubr.f32.gmra.mrb[0].mxu0 %v18
  %v860 = vpop.f32.mrb[0].mxu0
  %v861 = vadd.f32 %v482, %v860
  %v862 = vpop.f32.mrb[0].mxu0
  %863 = vmatprep.mubr.f32.mxu0 %v23
  %864 = vmatmul.mubr.f32.gmra.mrb[0].mxu0 %v22
  %v865 = vpop.f32.mrb[0].mxu0
  %v866 = vadd.f32 %v482, %v865
  %v867 = vpop.f32.mrb[0].mxu0
  %868 = vmatprep.mubr.f32.mxu0 %v27
  %869 = vmatmul.mubr.f32.gmra.mrb[0].mxu0 %v26
  %v870 = vpop.f32.mrb[0].mxu0
  %v871 = vadd.f32 %v482, %v870
  %v872 = vpop.f32.mrb[0].mxu0
  %873 = vmatprep.mubr.f32.mxu0 %v31
  %874 = vmatmul.mubr.f32.gmra.mrb[0].mxu0 %v30
  %v875 = vpop.f32.mrb[0].mxu0
  %v876 = vadd.f32 %v482, %v875
  %v877 = vpop.f32.mrb[0].mxu0
  %878 = vmatprep.mubr.f32.mxu0 %v35
  %879 = vmatmul.mubr.f32.gmra.mrb[0].mxu0 %v34
  %v880 = vpop.f32.mrb[0].mxu0
  %v881 = vadd.f32 %v482, %v880
  %v882 = vpop.f32.mrb[0].mxu0
  %883 = vmatprep.mubr.f32.mxu0 %v39
  %884 = vmatmul.mubr.f32.gmra.mrb[0].mxu0 %v38
  %v885 = vpop.f32.mrb[0].mxu0
  %v886 = vadd.f32 %v482, %v885
  %v887 = vpop.f32.mrb[0].mxu0
  %888 = vmatprep.mubr.f32.mxu0 %v43
  %889 = vmatmul.mubr.f32.gmra.mrb[0].mxu0 %v42
  %v890 = vpop.f32.mrb[0].mxu0
  %v891 = vadd.f32 %v482, %v890
  %v892 = vpop.f32.mrb[0].mxu0
  %893 = vmatprep.mubr.f32.mxu0 %v47
  %894 = vmatmul.mubr.f32.gmra.mrb[0].mxu0 %v46
  %v895 = vpop.f32.mrb[0].mxu0
  %v896 = vadd.f32 %v482, %v895
  %v897 = vpop.f32.mrb[0].mxu0
  %898 = vmatprep.mubr.f32.mxu0 %v51
  %899 = vmatmul.mubr.f32.gmra.mrb[0].mxu0 %v50
  %v900 = vpop.f32.mrb[0].mxu0
  %v901 = vadd.f32 %v482, %v900
  %v902 = vpop.f32.mrb[0].mxu0
  %903 = vmatprep.mubr.f32.mxu0 %v55
  %904 = vmatmul.mubr.f32.gmra.mrb[0].mxu0 %v54
  %v905 = vpop.f32.mrb[0].mxu0
  %v906 = vadd.f32 %v482, %v905
  %v907 = vpop.f32.mrb[0].mxu0
  %908 = vmatprep.mubr.f32.mxu0 %v59
  %909 = vmatmul.mubr.f32.gmra.mrb[0].mxu0 %v58
  %v910 = vpop.f32.mrb[0].mxu0
  %v911 = vadd.f32 %v482, %v910
  %v912 = vpop.f32.mrb[0].mxu0
  %913 = vmatprep.mubr.f32.mxu0 %v63
  %914 = vmatmul.mubr.f32.gmra.mrb[0].mxu0 %v62
  %v915 = vpop.f32.mrb[0].mxu0
  %v916 = vadd.f32 %v482, %v915
  %v917 = vpop.f32.mrb[0].mxu0
  %918 = vmatprep.mubr.f32.mxu0 %v67
  %919 = vmatmul.mubr.f32.gmra.mrb[0].mxu0 %v66
  %v920 = vpop.f32.mrb[0].mxu0
  %v921 = vadd.f32 %v482, %v920
  %v922 = vpop.f32.mrb[0].mxu0
  %923 = vmatprep.mubr.f32.mxu0 %v71
  %924 = vmatmul.mubr.f32.gmra.mrb[0].mxu0 %v70
  %v925 = vpop.f32.mrb[0].mxu0
  %v926 = vadd.f32 %v482, %v925
  %v927 = vpop.f32.mrb[0].mxu0
  %928 = vmatprep.mubr.f32.mxu0 %v75
  %929 = vmatmul.mubr.f32.gmra.mrb[0].mxu0 %v74
  %v930 = vpop.f32.mrb[0].mxu0
  %v931 = vadd.f32 %v482, %v930
  %v932 = vpop.f32.mrb[0].mxu0
  %933 = vmatprep.mubr.f32.mxu0 %v79
  %934 = vmatmul.mubr.f32.gmra.mrb[0].mxu0 %v78
  %v935 = vpop.f32.mrb[0].mxu0
  %v936 = vadd.f32 %v482, %v935
  %v937 = vpop.f32.mrb[0].mxu0
  %938 = vmatprep.mubr.f32.mxu0 %v83
  %939 = vmatmul.mubr.f32.gmra.mrb[0].mxu0 %v82
  %v940 = vpop.f32.mrb[0].mxu0
  %v941 = vadd.f32 %v482, %v940
  %v942 = vpop.f32.mrb[0].mxu0
  %943 = vmatprep.mubr.f32.mxu0 %v87
  %944 = vmatmul.mubr.f32.gmra.mrb[0].mxu0 %v86
  %v945 = vpop.f32.mrb[0].mxu0
  %v946 = vadd.f32 %v482, %v945
  %v947 = vpop.f32.mrb[0].mxu0
  %948 = vmatprep.mubr.f32.mxu0 %v91
  %949 = vmatmul.mubr.f32.gmra.mrb[0].mxu0 %v90
  %v950 = vpop.f32.mrb[0].mxu0
  %v951 = vadd.f32 %v482, %v950
  %v952 = vpop.f32.mrb[0].mxu0
  %953 = vmatprep.mubr.f32.mxu0 %v95
  %954 = vmatmul.mubr.f32.gmra.mrb[0].mxu0 %v94
  %v955 = vpop.f32.mrb[0].mxu0
  %v956 = vadd.f32 %v482, %v955
  %v957 = vpop.f32.mrb[0].mxu0
  %958 = vmatprep.mubr.f32.mxu0 %v99
  %959 = vmatmul.mubr.f32.gmra.mrb[0].mxu0 %v98
  %v960 = vpop.f32.mrb[0].mxu0
  %v961 = vadd.f32 %v482, %v960
  %v962 = vpop.f32.mrb[0].mxu0
  %963 = vmatprep.mubr.f32.mxu0 %v103
  %964 = vmatmul.mubr.f32.gmra.mrb[0].mxu0 %v102
  %v965 = vpop.f32.mrb[0].mxu0
  %v966 = vadd.f32 %v482, %v965
  %v967 = vpop.f32.mrb[0].mxu0
  %968 = vmatprep.mubr.f32.mxu0 %v107
  %969 = vmatmul.mubr.f32.gmra.mrb[0].mxu0 %v106
  %v970 = vpop.f32.mrb[0].mxu0
  %v971 = vadd.f32 %v482, %v970
  %v972 = vpop.f32.mrb[0].mxu0
  %973 = vmatprep.mubr.f32.mxu0 %v111
  %974 = vmatmul.mubr.f32.gmra.mrb[0].mxu0 %v110
  %v975 = vpop.f32.mrb[0].mxu0
  %v976 = vadd.f32 %v482, %v975
  %v977 = vpop.f32.mrb[0].mxu0
  %978 = vmatprep.mubr.f32.mxu0 %v115
  %979 = vmatmul.mubr.f32.gmra.mrb[0].mxu0 %v114
  %v980 = vpop.f32.mrb[0].mxu0
  %v981 = vadd.f32 %v482, %v980
  %v982 = vpop.f32.mrb[0].mxu0
  %983 = vmatprep.mubr.f32.mxu0 %v119
  %984 = vmatmul.mubr.f32.gmra.mrb[0].mxu0 %v118
  %v985 = vpop.f32.mrb[0].mxu0
  %v986 = vadd.f32 %v482, %v985
  %v987 = vpop.f32.mrb[0].mxu0
  %988 = vmatprep.mubr.f32.mxu0 %v123
  %989 = vmatmul.mubr.f32.gmra.mrb[0].mxu0 %v122
  %v990 = vpop.f32.mrb[0].mxu0
  %v991 = vadd.f32 %v482, %v990
  %v992 = vpop.f32.mrb[0].mxu0
  %993 = vmatprep.mubr.f32.mxu0 %v127
  %994 = vmatmul.mubr.f32.gmra.mrb[0].mxu0 %v126
  %v995 = vpop.f32.mrb[0].mxu0
  %v996 = vadd.f32 %v482, %v995
  %v997 = vpop.f32.mrb[0].mxu0
  %998 = vmatprep.mubr.f32.mxu0 %v131
  %999 = vmatmul.mubr.f32.gmra.mrb[0].mxu0 %v130
  %v1000 = vpop.f32.mrb[0].mxu0
  %v1001 = vadd.f32 %v482, %v1000
  %v1002 = vpop.f32.mrb[0].mxu0
  %1003 = vmatprep.mubr.f32.mxu0 %v135
  %1004 = vmatmul.mubr.f32.gmra.mrb[0].mxu0 %v134
  %v1005 = vpop.f32.mrb[0].mxu0
  %v1006 = vadd.f32 %v482, %v1005
  %v1007 = vpop.f32.mrb[0].mxu0
  %1008 = vmatprep.mubr.f32.mxu0 %v139
  %1009 = vmatmul.mubr.f32.gmra.mrb[0].mxu0 %v138
  %v1010 = vpop.f32.mrb[0].mxu0
  %v1011 = vadd.f32 %v482, %v1010
  %v1012 = vpop.f32.mrb[0].mxu0
  %1013 = vmatprep.mubr.f32.mxu0 %v143
  %1014 = vmatmul.mubr.f32.gmra.mrb[0].mxu0 %v142
  %v1015 = vpop.f32.mrb[0].mxu0
  %v1016 = vadd.f32 %v482, %v1015
  %v1017 = vpop.f32.mrb[0].mxu0
  %1018 = vmatprep.mubr.f32.mxu0 %v147
  %1019 = vmatmul.mubr.f32.gmra.mrb[0].mxu0 %v146
  %v1020 = vpop.f32.mrb[0].mxu0
  %v1021 = vadd.f32 %v482, %v1020
  %v1022 = vpop.f32.mrb[0].mxu0
  %1023 = vmatprep.mubr.f32.mxu0 %v151
  %1024 = vmatmul.mubr.f32.gmra.mrb[0].mxu0 %v150
  %v1025 = vpop.f32.mrb[0].mxu0
  %v1026 = vadd.f32 %v482, %v1025
  %v1027 = vpop.f32.mrb[0].mxu0
  %1028 = vmatprep.mubr.f32.mxu0 %v155
  %1029 = vmatmul.mubr.f32.gmra.mrb[0].mxu0 %v154
  %v1030 = vpop.f32.mrb[0].mxu0
  %v1031 = vadd.f32 %v482, %v1030
  %v1032 = vpop.f32.mrb[0].mxu0
  %1033 = vmatprep.mubr.f32.mxu0 %v159
  %1034 = vmatmul.mubr.f32.gmra.mrb[0].mxu0 %v158
  %v1035 = vpop.f32.mrb[0].mxu0
  %v1036 = vadd.f32 %v482, %v1035
  %v1037 = vpop.f32.mrb[0].mxu0
  %1038 = vmatprep.mubr.f32.mxu0 %v163
  %1039 = vmatmul.mubr.f32.gmra.mrb[0].mxu0 %v162
  %v1040 = vpop.f32.mrb[0].mxu0
  %v1041 = vadd.f32 %v482, %v1040
  %v1042 = vpop.f32.mrb[0].mxu0
  %1043 = vmatprep.mubr.f32.mxu0 %v167
  %1044 = vmatmul.mubr.f32.gmra.mrb[0].mxu0 %v166
  %v1045 = vpop.f32.mrb[0].mxu0
  %v1046 = vadd.f32 %v482, %v1045
  %v1047 = vpop.f32.mrb[0].mxu0
  %1048 = vmatprep.mubr.f32.mxu0 %v171
  %1049 = vmatmul.mubr.f32.gmra.mrb[0].mxu0 %v170
  %v1050 = vpop.f32.mrb[0].mxu0
  %v1051 = vadd.f32 %v482, %v1050
  %v1052 = vpop.f32.mrb[0].mxu0
  %1053 = vmatprep.mubr.f32.mxu0 %v175
  %1054 = vmatmul.mubr.f32.gmra.mrb[0].mxu0 %v174
  %v1055 = vpop.f32.mrb[0].mxu0
  %v1056 = vadd.f32 %v482, %v1055
  %v1057 = vpop.f32.mrb[0].mxu0
  %1058 = vmatprep.mubr.f32.mxu0 %v179
  %1059 = vmatmul.mubr.f32.gmra.mrb[0].mxu0 %v178
  %v1060 = vpop.f32.mrb[0].mxu0
  %v1061 = vadd.f32 %v482, %v1060
  %v1062 = vpop.f32.mrb[0].mxu0
  %1063 = vmatprep.mubr.f32.mxu0 %v183
  %1064 = vmatmul.mubr.f32.gmra.mrb[0].mxu0 %v182
  %v1065 = vpop.f32.mrb[0].mxu0
  %v1066 = vadd.f32 %v482, %v1065
  %v1067 = vpop.f32.mrb[0].mxu0
  %1068 = vmatprep.mubr.f32.mxu0 %v187
  %1069 = vmatmul.mubr.f32.gmra.mrb[0].mxu0 %v186
  %v1070 = vpop.f32.mrb[0].mxu0
  %v1071 = vadd.f32 %v482, %v1070
  %v1072 = vpop.f32.mrb[0].mxu0
  %1073 = vmatprep.mubr.f32.mxu0 %v191
  %1074 = vmatmul.mubr.f32.gmra.mrb[0].mxu0 %v190
  %v1075 = vpop.f32.mrb[0].mxu0
  %v1076 = vadd.f32 %v482, %v1075
  %v1077 = vpop.f32.mrb[0].mxu0
  %1078 = vmatprep.mubr.f32.mxu0 %v195
  %1079 = vmatmul.mubr.f32.gmra.mrb[0].mxu0 %v194
  %v1080 = vpop.f32.mrb[0].mxu0
  %v1081 = vadd.f32 %v482, %v1080
  %v1082 = vpop.f32.mrb[0].mxu0
  %1083 = vmatprep.mubr.f32.mxu0 %v199
  %1084 = vmatmul.mubr.f32.gmra.mrb[0].mxu0 %v198
  %v1085 = vpop.f32.mrb[0].mxu0
  %v1086 = vadd.f32 %v482, %v1085
  %v1087 = vpop.f32.mrb[0].mxu0
  %1088 = vmatprep.mubr.f32.mxu0 %v203
  %1089 = vmatmul.mubr.f32.gmra.mrb[0].mxu0 %v202
  %v1090 = vpop.f32.mrb[0].mxu0
  %v1091 = vadd.f32 %v482, %v1090
  %v1092 = vpop.f32.mrb[0].mxu0
  %1093 = vmatprep.mubr.f32.mxu0 %v207
  %1094 = vmatmul.mubr.f32.gmra.mrb[0].mxu0 %v206
  %v1095 = vpop.f32.mrb[0].mxu0
  %v1096 = vadd.f32 %v482, %v1095
  %v1097 = vpop.f32.mrb[0].mxu0
  %1098 = vmatprep.mubr.f32.mxu0 %v211
  %1099 = vmatmul.mubr.f32.gmra.mrb[0].mxu0 %v210
  %v1100 = vpop.f32.mrb[0].mxu0
  %v1101 = vadd.f32 %v482, %v1100
  %v1102 = vpop.f32.mrb[0].mxu0
  %1103 = vmatprep.mubr.f32.mxu0 %v215
  %1104 = vmatmul.mubr.f32.gmra.mrb[0].mxu0 %v214
  %v1105 = vpop.f32.mrb[0].mxu0
  %v1106 = vadd.f32 %v482, %v1105
  %v1107 = vpop.f32.mrb[0].mxu0
  %1108 = vmatprep.mubr.f32.mxu0 %v219
  %1109 = vmatmul.mubr.f32.gmra.mrb[0].mxu0 %v218
  %v1110 = vpop.f32.mrb[0].mxu0
  %v1111 = vadd.f32 %v482, %v1110
  %v1112 = vpop.f32.mrb[0].mxu0
  %1113 = vmatprep.mubr.f32.mxu0 %v223
  %1114 = vmatmul.mubr.f32.gmra.mrb[0].mxu0 %v222
  %v1115 = vpop.f32.mrb[0].mxu0
  %v1116 = vadd.f32 %v482, %v1115
  %v1117 = vpop.f32.mrb[0].mxu0
  %1118 = vmatprep.mubr.f32.mxu0 %v227
  %1119 = vmatmul.mubr.f32.gmra.mrb[0].mxu0 %v226
  %v1120 = vpop.f32.mrb[0].mxu0
  %v1121 = vadd.f32 %v482, %v1120
  %v1122 = vpop.f32.mrb[0].mxu0
  %1123 = vmatprep.mubr.f32.mxu0 %v231
  %1124 = vmatmul.mubr.f32.gmra.mrb[0].mxu0 %v230
  %v1125 = vpop.f32.mrb[0].mxu0
  %v1126 = vadd.f32 %v482, %v1125
  %v1127 = vpop.f32.mrb[0].mxu0
  %1128 = vmatprep.mubr.f32.mxu0 %v235
  %1129 = vmatmul.mubr.f32.gmra.mrb[0].mxu0 %v234
  %v1130 = vpop.f32.mrb[0].mxu0
  %v1131 = vadd.f32 %v482, %v1130
  %v1132 = vpop.f32.mrb[0].mxu0
  %1133 = vmatprep.mubr.f32.mxu0 %v239
  %1134 = vmatmul.mubr.f32.gmra.mrb[0].mxu0 %v238
  %v1135 = vpop.f32.mrb[0].mxu0
  %v1136 = vadd.f32 %v482, %v1135
  %v1137 = vpop.f32.mrb[0].mxu0
  %1138 = vmatprep.mubr.f32.mxu0 %v243
  %1139 = vmatmul.mubr.f32.gmra.mrb[0].mxu0 %v242
  %v1140 = vpop.f32.mrb[0].mxu0
  %v1141 = vadd.f32 %v482, %v1140
  %v1142 = vpop.f32.mrb[0].mxu0
  %1143 = vmatprep.mubr.f32.mxu0 %v247
  %1144 = vmatmul.mubr.f32.gmra.mrb[0].mxu0 %v246
  %v1145 = vpop.f32.mrb[0].mxu0
  %v1146 = vadd.f32 %v482, %v1145
  %v1147 = vpop.f32.mrb[0].mxu0
  %1148 = vmatprep.mubr.f32.mxu0 %v251
  %1149 = vmatmul.mubr.f32.gmra.mrb[0].mxu0 %v250
  %v1150 = vpop.f32.mrb[0].mxu0
  %v1151 = vadd.f32 %v482, %v1150
  %v1152 = vpop.f32.mrb[0].mxu0
  %1153 = vmatprep.mubr.f32.mxu0 %v255
  %1154 = vmatmul.mubr.f32.gmra.mrb[0].mxu0 %v254
  %v1155 = vpop.f32.mrb[0].mxu0
  %v1156 = vadd.f32 %v482, %v1155
  %v1157 = vpop.f32.mrb[0].mxu0
  %1158 = vmatprep.mubr.f32.mxu0 %v259
  %1159 = vmatmul.mubr.f32.gmra.mrb[0].mxu0 %v258
  %v1160 = vpop.f32.mrb[0].mxu0
  %v1161 = vadd.f32 %v482, %v1160
  %v1162 = vpop.f32.mrb[0].mxu0
  %1163 = vmatprep.mubr.f32.mxu0 %v263
  %1164 = vmatmul.mubr.f32.gmra.mrb[0].mxu0 %v262
  %v1165 = vpop.f32.mrb[0].mxu0
  %v1166 = vadd.f32 %v482, %v1165
  %v1167 = vpop.f32.mrb[0].mxu0
  %1168 = vmatprep.mubr.f32.mxu0 %v267
  %1169 = vmatmul.mubr.f32.gmra.mrb[0].mxu0 %v266
  %v1170 = vpop.f32.mrb[0].mxu0
  %v1171 = vadd.f32 %v482, %v1170
  %v1172 = vpop.f32.mrb[0].mxu0
  %1173 = vmatprep.mubr.f32.mxu0 %v271
  %1174 = vmatmul.mubr.f32.gmra.mrb[0].mxu0 %v270
  %v1175 = vpop.f32.mrb[0].mxu0
  %v1176 = vadd.f32 %v482, %v1175
  %v1177 = vpop.f32.mrb[0].mxu0
  %1178 = vmatprep.mubr.f32.mxu0 %v275
  %1179 = vmatmul.mubr.f32.gmra.mrb[0].mxu0 %v274
  %v1180 = vpop.f32.mrb[0].mxu0
  %v1181 = vadd.f32 %v482, %v1180
  %v1182 = vpop.f32.mrb[0].mxu0
  %1183 = vmatprep.mubr.f32.mxu0 %v279
  %1184 = vmatmul.mubr.f32.gmra.mrb[0].mxu0 %v278
  %v1185 = vpop.f32.mrb[0].mxu0
  %v1186 = vadd.f32 %v482, %v1185
  %v1187 = vpop.f32.mrb[0].mxu0
  %1188 = vmatprep.mubr.f32.mxu0 %v283
  %1189 = vmatmul.mubr.f32.gmra.mrb[0].mxu0 %v282
  %v1190 = vpop.f32.mrb[0].mxu0
  %v1191 = vadd.f32 %v482, %v1190
  %v1192 = vpop.f32.mrb[0].mxu0
  %1193 = vmatprep.mubr.f32.mxu0 %v287
  %1194 = vmatmul.mubr.f32.gmra.mrb[0].mxu0 %v286
  %v1195 = vpop.f32.mrb[0].mxu0
  %v1196 = vadd.f32 %v482, %v1195
  %v1197 = vpop.f32.mrb[0].mxu0
  %1198 = vmatprep.mubr.f32.mxu0 %v291
  %1199 = vmatmul.mubr.f32.gmra.mrb[0].mxu0 %v290
  %v1200 = vpop.f32.mrb[0].mxu0
  %v1201 = vadd.f32 %v482, %v1200
  %v1202 = vpop.f32.mrb[0].mxu0
  %1203 = vmatprep.mubr.f32.mxu0 %v295
  %1204 = vmatmul.mubr.f32.gmra.mrb[0].mxu0 %v294
  %v1205 = vpop.f32.mrb[0].mxu0
  %v1206 = vadd.f32 %v482, %v1205
  %v1207 = vpop.f32.mrb[0].mxu0
  %1208 = vmatprep.mubr.f32.mxu0 %v299
  %1209 = vmatmul.mubr.f32.gmra.mrb[0].mxu0 %v298
  %v1210 = vpop.f32.mrb[0].mxu0
  %v1211 = vadd.f32 %v482, %v1210
  %v1212 = vpop.f32.mrb[0].mxu0
  %1213 = vmatprep.mubr.f32.mxu0 %v303
  %1214 = vmatmul.mubr.f32.gmra.mrb[0].mxu0 %v302
  %v1215 = vpop.f32.mrb[0].mxu0
  %v1216 = vadd.f32 %v482, %v1215
  %v1217 = vpop.f32.mrb[0].mxu0
  %1218 = vmatprep.mubr.f32.mxu0 %v307
  %1219 = vmatmul.mubr.f32.gmra.mrb[0].mxu0 %v306
  %v1220 = vpop.f32.mrb[0].mxu0
  %v1221 = vadd.f32 %v482, %v1220
  %v1222 = vpop.f32.mrb[0].mxu0
  %1223 = vmatprep.mubr.f32.mxu0 %v311
  %1224 = vmatmul.mubr.f32.gmra.mrb[0].mxu0 %v310
  %v1225 = vpop.f32.mrb[0].mxu0
  %v1226 = vadd.f32 %v482, %v1225
  %v1227 = vpop.f32.mrb[0].mxu0
  %1228 = vmatprep.mubr.f32.mxu0 %v315
  %1229 = vmatmul.mubr.f32.gmra.mrb[0].mxu0 %v314
  %v1230 = vpop.f32.mrb[0].mxu0
  %v1231 = vadd.f32 %v482, %v1230
  %v1232 = vpop.f32.mrb[0].mxu0
  %1233 = vmatprep.mubr.f32.mxu0 %v319
  %1234 = vmatmul.mubr.f32.gmra.mrb[0].mxu0 %v318
  %v1235 = vpop.f32.mrb[0].mxu0
  %v1236 = vadd.f32 %v482, %v1235
  %v1237 = vpop.f32.mrb[0].mxu0
  %1238 = vmatprep.mubr.f32.mxu0 %v323
  %1239 = vmatmul.mubr.f32.gmra.mrb[0].mxu0 %v322
  %v1240 = vpop.f32.mrb[0].mxu0
  %v1241 = vadd.f32 %v482, %v1240
  %v1242 = vpop.f32.mrb[0].mxu0
  %1243 = vmatprep.mubr.f32.mxu0 %v327
  %1244 = vmatmul.mubr.f32.gmra.mrb[0].mxu0 %v326
  %v1245 = vpop.f32.mrb[0].mxu0
  %v1246 = vadd.f32 %v482, %v1245
  %v1247 = vpop.f32.mrb[0].mxu0
  %1248 = vmatprep.mubr.f32.mxu0 %v331
  %1249 = vmatmul.mubr.f32.gmra.mrb[0].mxu0 %v330
  %v1250 = vpop.f32.mrb[0].mxu0
  %v1251 = vadd.f32 %v482, %v1250
  %v1252 = vpop.f32.mrb[0].mxu0
  %1253 = vmatprep.mubr.f32.mxu0 %v335
  %1254 = vmatmul.mubr.f32.gmra.mrb[0].mxu0 %v334
  %v1255 = vpop.f32.mrb[0].mxu0
  %v1256 = vadd.f32 %v482, %v1255
  %v1257 = vpop.f32.mrb[0].mxu0
  %1258 = vmatprep.mubr.f32.mxu0 %v339
  %1259 = vmatmul.mubr.f32.gmra.mrb[0].mxu0 %v338
  %v1260 = vpop.f32.mrb[0].mxu0
  %v1261 = vadd.f32 %v482, %v1260
  %v1262 = vpop.f32.mrb[0].mxu0
  %1263 = vmatprep.mubr.f32.mxu0 %v343
  %1264 = vmatmul.mubr.f32.gmra.mrb[0].mxu0 %v342
  %v1265 = vpop.f32.mrb[0].mxu0
  %v1266 = vadd.f32 %v482, %v1265
  %v1267 = vpop.f32.mrb[0].mxu0
  %1268 = vmatprep.mubr.f32.mxu0 %v347
  %1269 = vmatmul.mubr.f32.gmra.mrb[0].mxu0 %v346
  %v1270 = vpop.f32.mrb[0].mxu0
  %v1271 = vadd.f32 %v482, %v1270
  %v1272 = vpop.f32.mrb[0].mxu0
  %1273 = vmatprep.mubr.f32.mxu0 %v351
  %1274 = vmatmul.mubr.f32.gmra.mrb[0].mxu0 %v350
  %v1275 = vpop.f32.mrb[0].mxu0
  %v1276 = vadd.f32 %v482, %v1275
  %v1277 = vpop.f32.mrb[0].mxu0
  %1278 = vmatprep.mubr.f32.mxu0 %v355
  %1279 = vmatmul.mubr.f32.gmra.mrb[0].mxu0 %v354
  %v1280 = vpop.f32.mrb[0].mxu0
  %v1281 = vadd.f32 %v482, %v1280
  %v1282 = vpop.f32.mrb[0].mxu0
  %1283 = vmatprep.mubr.f32.mxu0 %v359
  %1284 = vmatmul.mubr.f32.gmra.mrb[0].mxu0 %v358
  %v1285 = vpop.f32.mrb[0].mxu0
  %v1286 = vadd.f32 %v482, %v1285
  %v1287 = vpop.f32.mrb[0].mxu0
  %1288 = vmatprep.mubr.f32.mxu0 %v363
  %1289 = vmatmul.mubr.f32.gmra.mrb[0].mxu0 %v362
  %v1290 = vpop.f32.mrb[0].mxu0
  %v1291 = vadd.f32 %v482, %v1290
  %v1292 = vpop.f32.mrb[0].mxu0
  %1293 = vmatprep.mubr.f32.mxu0 %v367
  %1294 = vmatmul.mubr.f32.gmra.mrb[0].mxu0 %v366
  %v1295 = vpop.f32.mrb[0].mxu0
  %v1296 = vadd.f32 %v482, %v1295
  %v1297 = vpop.f32.mrb[0].mxu0
  %1298 = vmatprep.mubr.f32.mxu0 %v371
  %1299 = vmatmul.mubr.f32.gmra.mrb[0].mxu0 %v370
  %v1300 = vpop.f32.mrb[0].mxu0
  %v1301 = vadd.f32 %v482, %v1300
  %v1302 = vpop.f32.mrb[0].mxu0
  %1303 = vmatprep.mubr.f32.mxu0 %v375
  %1304 = vmatmul.mubr.f32.gmra.mrb[0].mxu0 %v374
  %v1305 = vpop.f32.mrb[0].mxu0
  %v1306 = vadd.f32 %v482, %v1305
  %v1307 = vpop.f32.mrb[0].mxu0
  %1308 = vmatprep.mubr.f32.mxu0 %v379
  %1309 = vmatmul.mubr.f32.gmra.mrb[0].mxu0 %v378
  %v1310 = vpop.f32.mrb[0].mxu0
  %v1311 = vadd.f32 %v482, %v1310
  %v1312 = vpop.f32.mrb[0].mxu0
  %1313 = vmatprep.mubr.f32.mxu0 %v383
  %1314 = vmatmul.mubr.f32.gmra.mrb[0].mxu0 %v382
  %v1315 = vpop.f32.mrb[0].mxu0
  %v1316 = vadd.f32 %v482, %v1315
  %v1317 = vpop.f32.mrb[0].mxu0
  %1318 = vmatprep.mubr.f32.mxu0 %v387
  %1319 = vmatmul.mubr.f32.gmra.mrb[0].mxu0 %v386
  %v1320 = vpop.f32.mrb[0].mxu0
  %v1321 = vadd.f32 %v482, %v1320
  %v1322 = vpop.f32.mrb[0].mxu0
  %1323 = vmatprep.mubr.f32.mxu0 %v391
  %1324 = vmatmul.mubr.f32.gmra.mrb[0].mxu0 %v390
  %v1325 = vpop.f32.mrb[0].mxu0
  %v1326 = vadd.f32 %v482, %v1325
  %v1327 = vpop.f32.mrb[0].mxu0
  %1328 = vmatprep.mubr.f32.mxu0 %v395
  %1329 = vmatmul.mubr.f32.gmra.mrb[0].mxu0 %v394
  %v1330 = vpop.f32.mrb[0].mxu0
  %v1331 = vadd.f32 %v482, %v1330
  %v1332 = vpop.f32.mrb[0].mxu0
  %1333 = vmatprep.mubr.f32.mxu0 %v399
  %1334 = vmatmul.mubr.f32.gmra.mrb[0].mxu0 %v398
  %v1335 = vpop.f32.mrb[0].mxu0
  %v1336 = vadd.f32 %v482, %v1335
  %v1337 = vpop.f32.mrb[0].mxu0
  %1338 = vmatprep.mubr.f32.mxu0 %v403
  %1339 = vmatmul.mubr.f32.gmra.mrb[0].mxu0 %v402
  %v1340 = vpop.f32.mrb[0].mxu0
  %v1341 = vadd.f32 %v482, %v1340
  %v1342 = vpop.f32.mrb[0].mxu0
  %1343 = vmatprep.mubr.f32.mxu0 %v407
  %1344 = vmatmul.mubr.f32.gmra.mrb[0].mxu0 %v406
  %v1345 = vpop.f32.mrb[0].mxu0
  %v1346 = vadd.f32 %v482, %v1345
  %v1347 = vpop.f32.mrb[0].mxu0
  %1348 = vmatprep.mubr.f32.mxu0 %v411
  %1349 = vmatmul.mubr.f32.gmra.mrb[0].mxu0 %v410
  %v1350 = vpop.f32.mrb[0].mxu0
  %v1351 = vadd.f32 %v482, %v1350
  %v1352 = vpop.f32.mrb[0].mxu0
  %1353 = vdwg.mxu0
  %1354 = vmatprep.subr.mxu0 0.0
  %1355 = vmatpush1.msra.mxu0 %v446
  %1356 = vmatprep.subr.mxu0 0.0
  %1357 = vmatpush1.msra.mxu0 %v447
  %1358 = vmatprep.subr.mxu0 0.0
  %1359 = vmatpush1.msra.mxu0 %v448
  %1360 = vmatprep.subr.mxu0 0.0
  %1361 = vmatpush1.msra.mxu0 %v449
  %1362 = vmatprep.subr.mxu0 0.0
  %1363 = vmatpush1.msra.mxu0 %v450
  %1364 = vmatprep.subr.mxu0 0.0
  %1365 = vmatpush1.msra.mxu0 %v451
  %1366 = vmatprep.subr.mxu0 0.0
  %1367 = vmatpush1.msra.mxu0 %v452
  %1368 = vmatprep.subr.mxu0 0.0
  %1369 = vmatpush1.msra.mxu0 %v453
  %1370 = vmatprep.subr.mxu0 0.0
  %1371 = vmatpush1.msra.mxu0 %v454
  %1372 = vmatprep.subr.mxu0 0.0
  %1373 = vmatpush1.msra.mxu0 %v455
  %1374 = vmatprep.subr.mxu0 0.0
  %1375 = vmatpush1.msra.mxu0 %v456
  %1376 = vmatprep.subr.mxu0 0.0
  %1377 = vmatpush1.msra.mxu0 %v457
  %1378 = vmatprep.subr.mxu0 0.0
  %1379 = vmatpush1.msra.mxu0 %v458
  %1380 = vmatprep.subr.mxu0 0.0
  %1381 = vmatpush1.msra.mxu0 %v459
  %1382 = vmatprep.subr.mxu0 0.0
  %1383 = vmatpush1.msra.mxu0 %v460
  %1384 = vmatprep.subr.mxu0 0.0
  %1385 = vmatpush1.msra.mxu0 %v461
  %1386 = vmatprep.subr.mxu0 0.0
  %1387 = vmatpush1.msra.mxu0 %v462
  %1388 = vmatprep.subr.mxu0 0.0
  %1389 = vmatpush1.msra.mxu0 %v463
  %1390 = vmatprep.subr.mxu0 0.0
  %1391 = vmatpush1.msra.mxu0 %v464
  %1392 = vmatprep.subr.mxu0 0.0
  %1393 = vmatpush1.msra.mxu0 %v465
  %1394 = vmatprep.subr.mxu0 0.0
  %1395 = vmatpush1.msra.mxu0 %v466
  %1396 = vmatprep.subr.mxu0 0.0
  %1397 = vmatpush1.msra.mxu0 %v467
  %1398 = vmatprep.subr.mxu0 0.0
  %1399 = vmatpush1.msra.mxu0 %v468
  %1400 = vmatprep.subr.mxu0 0.0
  %1401 = vmatpush1.msra.mxu0 %v469
  %1402 = vmatprep.subr.mxu0 0.0
  %1403 = vmatpush1.msra.mxu0 %v470
  %1404 = vmatprep.subr.mxu0 0.0
  %1405 = vmatpush1.msra.mxu0 %v471
  %1406 = vmatprep.subr.mxu0 0.0
  %1407 = vmatpush1.msra.mxu0 %v472
  %1408 = vmatprep.subr.mxu0 0.0
  %1409 = vmatpush1.msra.mxu0 %v473
  %1410 = vmatprep.subr.mxu0 0.0
  %1411 = vmatpush1.msra.mxu0 %v474
  %1412 = vmatprep.subr.mxu0 0.0
  %1413 = vmatpush1.msra.mxu0 %v475
  %1414 = vmatprep.subr.mxu0 0.0
  %1415 = vmatpush1.msra.mxu0 %v787
  %1416 = vmatprep.subr.mxu0 0.0
  %1417 = vmatpush1.msra.mxu0 0.0
  %1418 = vmatprep.mubr.f32.mxu0 %v486
  %1419 = vmatmul.mubr.f32.gmra.mrb[0].mxu0 %v16
  %v1420 = vpop.f32.mrb[0].mxu0
  %v1421 = vadd.f32 %v856, %v1420
  %v1422 = vpop.f32.mrb[0].mxu0
  %1423 = vmatprep.mubr.f32.mxu0 %v489
  %1424 = vmatmul.mubr.f32.gmra.mrb[0].mxu0 %v20
  %v1425 = vpop.f32.mrb[0].mxu0
  %v1426 = vadd.f32 %v861, %v1425
  %v1427 = vpop.f32.mrb[0].mxu0
  %1428 = vmatprep.mubr.f32.mxu0 %v492
  %1429 = vmatmul.mubr.f32.gmra.mrb[0].mxu0 %v24
  %v1430 = vpop.f32.mrb[0].mxu0
  %v1431 = vadd.f32 %v866, %v1430
  %v1432 = vpop.f32.mrb[0].mxu0
  %1433 = vmatprep.mubr.f32.mxu0 %v495
  %1434 = vmatmul.mubr.f32.gmra.mrb[0].mxu0 %v28
  %v1435 = vpop.f32.mrb[0].mxu0
  %v1436 = vadd.f32 %v871, %v1435
  %v1437 = vpop.f32.mrb[0].mxu0
  %1438 = vmatprep.mubr.f32.mxu0 %v498
  %1439 = vmatmul.mubr.f32.gmra.mrb[0].mxu0 %v32
  %v1440 = vpop.f32.mrb[0].mxu0
  %v1441 = vadd.f32 %v876, %v1440
  %v1442 = vpop.f32.mrb[0].mxu0
  %1443 = vmatprep.mubr.f32.mxu0 %v501
  %1444 = vmatmul.mubr.f32.gmra.mrb[0].mxu0 %v36
  %v1445 = vpop.f32.mrb[0].mxu0
  %v1446 = vadd.f32 %v881, %v1445
  %v1447 = vpop.f32.mrb[0].mxu0
  %1448 = vmatprep.mubr.f32.mxu0 %v504
  %1449 = vmatmul.mubr.f32.gmra.mrb[0].mxu0 %v40
  %v1450 = vpop.f32.mrb[0].mxu0
  %v1451 = vadd.f32 %v886, %v1450
  %v1452 = vpop.f32.mrb[0].mxu0
  %1453 = vmatprep.mubr.f32.mxu0 %v507
  %1454 = vmatmul.mubr.f32.gmra.mrb[0].mxu0 %v44
  %v1455 = vpop.f32.mrb[0].mxu0
  %v1456 = vadd.f32 %v891, %v1455
  %v1457 = vpop.f32.mrb[0].mxu0
  %1458 = vmatprep.mubr.f32.mxu0 %v510
  %1459 = vmatmul.mubr.f32.gmra.mrb[0].mxu0 %v48
  %v1460 = vpop.f32.mrb[0].mxu0
  %v1461 = vadd.f32 %v896, %v1460
  %v1462 = vpop.f32.mrb[0].mxu0
  %1463 = vmatprep.mubr.f32.mxu0 %v513
  %1464 = vmatmul.mubr.f32.gmra.mrb[0].mxu0 %v52
  %v1465 = vpop.f32.mrb[0].mxu0
  %v1466 = vadd.f32 %v901, %v1465
  %v1467 = vpop.f32.mrb[0].mxu0
  %1468 = vmatprep.mubr.f32.mxu0 %v516
  %1469 = vmatmul.mubr.f32.gmra.mrb[0].mxu0 %v56
  %v1470 = vpop.f32.mrb[0].mxu0
  %v1471 = vadd.f32 %v906, %v1470
  %v1472 = vpop.f32.mrb[0].mxu0
  %1473 = vmatprep.mubr.f32.mxu0 %v519
  %1474 = vmatmul.mubr.f32.gmra.mrb[0].mxu0 %v60
  %v1475 = vpop.f32.mrb[0].mxu0
  %v1476 = vadd.f32 %v911, %v1475
  %v1477 = vpop.f32.mrb[0].mxu0
  %1478 = vmatprep.mubr.f32.mxu0 %v522
  %1479 = vmatmul.mubr.f32.gmra.mrb[0].mxu0 %v64
  %v1480 = vpop.f32.mrb[0].mxu0
  %v1481 = vadd.f32 %v916, %v1480
  %v1482 = vpop.f32.mrb[0].mxu0
  %1483 = vmatprep.mubr.f32.mxu0 %v525
  %1484 = vmatmul.mubr.f32.gmra.mrb[0].mxu0 %v68
  %v1485 = vpop.f32.mrb[0].mxu0
  %v1486 = vadd.f32 %v921, %v1485
  %v1487 = vpop.f32.mrb[0].mxu0
  %1488 = vmatprep.mubr.f32.mxu0 %v528
  %1489 = vmatmul.mubr.f32.gmra.mrb[0].mxu0 %v72
  %v1490 = vpop.f32.mrb[0].mxu0
  %v1491 = vadd.f32 %v926, %v1490
  %v1492 = vpop.f32.mrb[0].mxu0
  %1493 = vmatprep.mubr.f32.mxu0 %v531
  %1494 = vmatmul.mubr.f32.gmra.mrb[0].mxu0 %v76
  %v1495 = vpop.f32.mrb[0].mxu0
  %v1496 = vadd.f32 %v931, %v1495
  %v1497 = vpop.f32.mrb[0].mxu0
  %1498 = vmatprep.mubr.f32.mxu0 %v534
  %1499 = vmatmul.mubr.f32.gmra.mrb[0].mxu0 %v80
  %v1500 = vpop.f32.mrb[0].mxu0
  %v1501 = vadd.f32 %v936, %v1500
  %v1502 = vpop.f32.mrb[0].mxu0
  %1503 = vmatprep.mubr.f32.mxu0 %v537
  %1504 = vmatmul.mubr.f32.gmra.mrb[0].mxu0 %v84
  %v1505 = vpop.f32.mrb[0].mxu0
  %v1506 = vadd.f32 %v941, %v1505
  %v1507 = vpop.f32.mrb[0].mxu0
  %1508 = vmatprep.mubr.f32.mxu0 %v540
  %1509 = vmatmul.mubr.f32.gmra.mrb[0].mxu0 %v88
  %v1510 = vpop.f32.mrb[0].mxu0
  %v1511 = vadd.f32 %v946, %v1510
  %v1512 = vpop.f32.mrb[0].mxu0
  %1513 = vmatprep.mubr.f32.mxu0 %v543
  %1514 = vmatmul.mubr.f32.gmra.mrb[0].mxu0 %v92
  %v1515 = vpop.f32.mrb[0].mxu0
  %v1516 = vadd.f32 %v951, %v1515
  %v1517 = vpop.f32.mrb[0].mxu0
  %1518 = vmatprep.mubr.f32.mxu0 %v546
  %1519 = vmatmul.mubr.f32.gmra.mrb[0].mxu0 %v96
  %v1520 = vpop.f32.mrb[0].mxu0
  %v1521 = vadd.f32 %v956, %v1520
  %v1522 = vpop.f32.mrb[0].mxu0
  %1523 = vmatprep.mubr.f32.mxu0 %v549
  %1524 = vmatmul.mubr.f32.gmra.mrb[0].mxu0 %v100
  %v1525 = vpop.f32.mrb[0].mxu0
  %v1526 = vadd.f32 %v961, %v1525
  %v1527 = vpop.f32.mrb[0].mxu0
  %1528 = vmatprep.mubr.f32.mxu0 %v552
  %1529 = vmatmul.mubr.f32.gmra.mrb[0].mxu0 %v104
  %v1530 = vpop.f32.mrb[0].mxu0
  %v1531 = vadd.f32 %v966, %v1530
  %v1532 = vpop.f32.mrb[0].mxu0
  %1533 = vmatprep.mubr.f32.mxu0 %v555
  %1534 = vmatmul.mubr.f32.gmra.mrb[0].mxu0 %v108
  %v1535 = vpop.f32.mrb[0].mxu0
  %v1536 = vadd.f32 %v971, %v1535
  %v1537 = vpop.f32.mrb[0].mxu0
  %1538 = vmatprep.mubr.f32.mxu0 %v558
  %1539 = vmatmul.mubr.f32.gmra.mrb[0].mxu0 %v112
  %v1540 = vpop.f32.mrb[0].mxu0
  %v1541 = vadd.f32 %v976, %v1540
  %v1542 = vpop.f32.mrb[0].mxu0
  %1543 = vmatprep.mubr.f32.mxu0 %v561
  %1544 = vmatmul.mubr.f32.gmra.mrb[0].mxu0 %v116
  %v1545 = vpop.f32.mrb[0].mxu0
  %v1546 = vadd.f32 %v981, %v1545
  %v1547 = vpop.f32.mrb[0].mxu0
  %1548 = vmatprep.mubr.f32.mxu0 %v564
  %1549 = vmatmul.mubr.f32.gmra.mrb[0].mxu0 %v120
  %v1550 = vpop.f32.mrb[0].mxu0
  %v1551 = vadd.f32 %v986, %v1550
  %v1552 = vpop.f32.mrb[0].mxu0
  %1553 = vmatprep.mubr.f32.mxu0 %v567
  %1554 = vmatmul.mubr.f32.gmra.mrb[0].mxu0 %v124
  %v1555 = vpop.f32.mrb[0].mxu0
  %v1556 = vadd.f32 %v991, %v1555
  %v1557 = vpop.f32.mrb[0].mxu0
  %1558 = vmatprep.mubr.f32.mxu0 %v570
  %1559 = vmatmul.mubr.f32.gmra.mrb[0].mxu0 %v128
  %v1560 = vpop.f32.mrb[0].mxu0
  %v1561 = vadd.f32 %v996, %v1560
  %v1562 = vpop.f32.mrb[0].mxu0
  %1563 = vmatprep.mubr.f32.mxu0 %v573
  %1564 = vmatmul.mubr.f32.gmra.mrb[0].mxu0 %v132
  %v1565 = vpop.f32.mrb[0].mxu0
  %v1566 = vadd.f32 %v1001, %v1565
  %v1567 = vpop.f32.mrb[0].mxu0
  %1568 = vmatprep.mubr.f32.mxu0 %v576
  %1569 = vmatmul.mubr.f32.gmra.mrb[0].mxu0 %v136
  %v1570 = vpop.f32.mrb[0].mxu0
  %v1571 = vadd.f32 %v1006, %v1570
  %v1572 = vpop.f32.mrb[0].mxu0
  %1573 = vmatprep.mubr.f32.mxu0 %v579
  %1574 = vmatmul.mubr.f32.gmra.mrb[0].mxu0 %v140
  %v1575 = vpop.f32.mrb[0].mxu0
  %v1576 = vadd.f32 %v1011, %v1575
  %v1577 = vpop.f32.mrb[0].mxu0
  %1578 = vmatprep.mubr.f32.mxu0 %v582
  %1579 = vmatmul.mubr.f32.gmra.mrb[0].mxu0 %v144
  %v1580 = vpop.f32.mrb[0].mxu0
  %v1581 = vadd.f32 %v1016, %v1580
  %v1582 = vpop.f32.mrb[0].mxu0
  %1583 = vmatprep.mubr.f32.mxu0 %v585
  %1584 = vmatmul.mubr.f32.gmra.mrb[0].mxu0 %v148
  %v1585 = vpop.f32.mrb[0].mxu0
  %v1586 = vadd.f32 %v1021, %v1585
  %v1587 = vpop.f32.mrb[0].mxu0
  %1588 = vmatprep.mubr.f32.mxu0 %v588
  %1589 = vmatmul.mubr.f32.gmra.mrb[0].mxu0 %v152
  %v1590 = vpop.f32.mrb[0].mxu0
  %v1591 = vadd.f32 %v1026, %v1590
  %v1592 = vpop.f32.mrb[0].mxu0
  %1593 = vmatprep.mubr.f32.mxu0 %v591
  %1594 = vmatmul.mubr.f32.gmra.mrb[0].mxu0 %v156
  %v1595 = vpop.f32.mrb[0].mxu0
  %v1596 = vadd.f32 %v1031, %v1595
  %v1597 = vpop.f32.mrb[0].mxu0
  %1598 = vmatprep.mubr.f32.mxu0 %v594
  %1599 = vmatmul.mubr.f32.gmra.mrb[0].mxu0 %v160
  %v1600 = vpop.f32.mrb[0].mxu0
  %v1601 = vadd.f32 %v1036, %v1600
  %v1602 = vpop.f32.mrb[0].mxu0
  %1603 = vmatprep.mubr.f32.mxu0 %v597
  %1604 = vmatmul.mubr.f32.gmra.mrb[0].mxu0 %v164
  %v1605 = vpop.f32.mrb[0].mxu0
  %v1606 = vadd.f32 %v1041, %v1605
  %v1607 = vpop.f32.mrb[0].mxu0
  %1608 = vmatprep.mubr.f32.mxu0 %v600
  %1609 = vmatmul.mubr.f32.gmra.mrb[0].mxu0 %v168
  %v1610 = vpop.f32.mrb[0].mxu0
  %v1611 = vadd.f32 %v1046, %v1610
  %v1612 = vpop.f32.mrb[0].mxu0
  %1613 = vmatprep.mubr.f32.mxu0 %v603
  %1614 = vmatmul.mubr.f32.gmra.mrb[0].mxu0 %v172
  %v1615 = vpop.f32.mrb[0].mxu0
  %v1616 = vadd.f32 %v1051, %v1615
  %v1617 = vpop.f32.mrb[0].mxu0
  %1618 = vmatprep.mubr.f32.mxu0 %v606
  %1619 = vmatmul.mubr.f32.gmra.mrb[0].mxu0 %v176
  %v1620 = vpop.f32.mrb[0].mxu0
  %v1621 = vadd.f32 %v1056, %v1620
  %v1622 = vpop.f32.mrb[0].mxu0
  %1623 = vmatprep.mubr.f32.mxu0 %v609
  %1624 = vmatmul.mubr.f32.gmra.mrb[0].mxu0 %v180
  %v1625 = vpop.f32.mrb[0].mxu0
  %v1626 = vadd.f32 %v1061, %v1625
  %v1627 = vpop.f32.mrb[0].mxu0
  %1628 = vmatprep.mubr.f32.mxu0 %v612
  %1629 = vmatmul.mubr.f32.gmra.mrb[0].mxu0 %v184
  %v1630 = vpop.f32.mrb[0].mxu0
  %v1631 = vadd.f32 %v1066, %v1630
  %v1632 = vpop.f32.mrb[0].mxu0
  %1633 = vmatprep.mubr.f32.mxu0 %v615
  %1634 = vmatmul.mubr.f32.gmra.mrb[0].mxu0 %v188
  %v1635 = vpop.f32.mrb[0].mxu0
  %v1636 = vadd.f32 %v1071, %v1635
  %v1637 = vpop.f32.mrb[0].mxu0
  %1638 = vmatprep.mubr.f32.mxu0 %v618
  %1639 = vmatmul.mubr.f32.gmra.mrb[0].mxu0 %v192
  %v1640 = vpop.f32.mrb[0].mxu0
  %v1641 = vadd.f32 %v1076, %v1640
  %v1642 = vpop.f32.mrb[0].mxu0
  %1643 = vmatprep.mubr.f32.mxu0 %v621
  %1644 = vmatmul.mubr.f32.gmra.mrb[0].mxu0 %v196
  %v1645 = vpop.f32.mrb[0].mxu0
  %v1646 = vadd.f32 %v1081, %v1645
  %v1647 = vpop.f32.mrb[0].mxu0
  %1648 = vmatprep.mubr.f32.mxu0 %v624
  %1649 = vmatmul.mubr.f32.gmra.mrb[0].mxu0 %v200
  %v1650 = vpop.f32.mrb[0].mxu0
  %v1651 = vadd.f32 %v1086, %v1650
  %v1652 = vpop.f32.mrb[0].mxu0
  %1653 = vmatprep.mubr.f32.mxu0 %v627
  %1654 = vmatmul.mubr.f32.gmra.mrb[0].mxu0 %v204
  %v1655 = vpop.f32.mrb[0].mxu0
  %v1656 = vadd.f32 %v1091, %v1655
  %v1657 = vpop.f32.mrb[0].mxu0
  %1658 = vmatprep.mubr.f32.mxu0 %v630
  %1659 = vmatmul.mubr.f32.gmra.mrb[0].mxu0 %v208
  %v1660 = vpop.f32.mrb[0].mxu0
  %v1661 = vadd.f32 %v1096, %v1660
  %v1662 = vpop.f32.mrb[0].mxu0
  %1663 = vmatprep.mubr.f32.mxu0 %v633
  %1664 = vmatmul.mubr.f32.gmra.mrb[0].mxu0 %v212
  %v1665 = vpop.f32.mrb[0].mxu0
  %v1666 = vadd.f32 %v1101, %v1665
  %v1667 = vpop.f32.mrb[0].mxu0
  %1668 = vmatprep.mubr.f32.mxu0 %v636
  %1669 = vmatmul.mubr.f32.gmra.mrb[0].mxu0 %v216
  %v1670 = vpop.f32.mrb[0].mxu0
  %v1671 = vadd.f32 %v1106, %v1670
  %v1672 = vpop.f32.mrb[0].mxu0
  %1673 = vmatprep.mubr.f32.mxu0 %v639
  %1674 = vmatmul.mubr.f32.gmra.mrb[0].mxu0 %v220
  %v1675 = vpop.f32.mrb[0].mxu0
  %v1676 = vadd.f32 %v1111, %v1675
  %v1677 = vpop.f32.mrb[0].mxu0
  %1678 = vmatprep.mubr.f32.mxu0 %v642
  %1679 = vmatmul.mubr.f32.gmra.mrb[0].mxu0 %v224
  %v1680 = vpop.f32.mrb[0].mxu0
  %v1681 = vadd.f32 %v1116, %v1680
  %v1682 = vpop.f32.mrb[0].mxu0
  %1683 = vmatprep.mubr.f32.mxu0 %v645
  %1684 = vmatmul.mubr.f32.gmra.mrb[0].mxu0 %v228
  %v1685 = vpop.f32.mrb[0].mxu0
  %v1686 = vadd.f32 %v1121, %v1685
  %v1687 = vpop.f32.mrb[0].mxu0
  %1688 = vmatprep.mubr.f32.mxu0 %v648
  %1689 = vmatmul.mubr.f32.gmra.mrb[0].mxu0 %v232
  %v1690 = vpop.f32.mrb[0].mxu0
  %v1691 = vadd.f32 %v1126, %v1690
  %v1692 = vpop.f32.mrb[0].mxu0
  %1693 = vmatprep.mubr.f32.mxu0 %v651
  %1694 = vmatmul.mubr.f32.gmra.mrb[0].mxu0 %v236
  %v1695 = vpop.f32.mrb[0].mxu0
  %v1696 = vadd.f32 %v1131, %v1695
  %v1697 = vpop.f32.mrb[0].mxu0
  %1698 = vmatprep.mubr.f32.mxu0 %v654
  %1699 = vmatmul.mubr.f32.gmra.mrb[0].mxu0 %v240
  %v1700 = vpop.f32.mrb[0].mxu0
  %v1701 = vadd.f32 %v1136, %v1700
  %v1702 = vpop.f32.mrb[0].mxu0
  %1703 = vmatprep.mubr.f32.mxu0 %v657
  %1704 = vmatmul.mubr.f32.gmra.mrb[0].mxu0 %v244
  %v1705 = vpop.f32.mrb[0].mxu0
  %v1706 = vadd.f32 %v1141, %v1705
  %v1707 = vpop.f32.mrb[0].mxu0
  %1708 = vmatprep.mubr.f32.mxu0 %v660
  %1709 = vmatmul.mubr.f32.gmra.mrb[0].mxu0 %v248
  %v1710 = vpop.f32.mrb[0].mxu0
  %v1711 = vadd.f32 %v1146, %v1710
  %v1712 = vpop.f32.mrb[0].mxu0
  %1713 = vmatprep.mubr.f32.mxu0 %v663
  %1714 = vmatmul.mubr.f32.gmra.mrb[0].mxu0 %v252
  %v1715 = vpop.f32.mrb[0].mxu0
  %v1716 = vadd.f32 %v1151, %v1715
  %v1717 = vpop.f32.mrb[0].mxu0
  %1718 = vmatprep.mubr.f32.mxu0 %v666
  %1719 = vmatmul.mubr.f32.gmra.mrb[0].mxu0 %v256
  %v1720 = vpop.f32.mrb[0].mxu0
  %v1721 = vadd.f32 %v1156, %v1720
  %v1722 = vpop.f32.mrb[0].mxu0
  %1723 = vmatprep.mubr.f32.mxu0 %v669
  %1724 = vmatmul.mubr.f32.gmra.mrb[0].mxu0 %v260
  %v1725 = vpop.f32.mrb[0].mxu0
  %v1726 = vadd.f32 %v1161, %v1725
  %v1727 = vpop.f32.mrb[0].mxu0
  %1728 = vmatprep.mubr.f32.mxu0 %v672
  %1729 = vmatmul.mubr.f32.gmra.mrb[0].mxu0 %v264
  %v1730 = vpop.f32.mrb[0].mxu0
  %v1731 = vadd.f32 %v1166, %v1730
  %v1732 = vpop.f32.mrb[0].mxu0
  %1733 = vmatprep.mubr.f32.mxu0 %v675
  %1734 = vmatmul.mubr.f32.gmra.mrb[0].mxu0 %v268
  %v1735 = vpop.f32.mrb[0].mxu0
  %v1736 = vadd.f32 %v1171, %v1735
  %v1737 = vpop.f32.mrb[0].mxu0
  %1738 = vmatprep.mubr.f32.mxu0 %v678
  %1739 = vmatmul.mubr.f32.gmra.mrb[0].mxu0 %v272
  %v1740 = vpop.f32.mrb[0].mxu0
  %v1741 = vadd.f32 %v1176, %v1740
  %v1742 = vpop.f32.mrb[0].mxu0
  %1743 = vmatprep.mubr.f32.mxu0 %v681
  %1744 = vmatmul.mubr.f32.gmra.mrb[0].mxu0 %v276
  %v1745 = vpop.f32.mrb[0].mxu0
  %v1746 = vadd.f32 %v1181, %v1745
  %v1747 = vpop.f32.mrb[0].mxu0
  %1748 = vmatprep.mubr.f32.mxu0 %v684
  %1749 = vmatmul.mubr.f32.gmra.mrb[0].mxu0 %v280
  %v1750 = vpop.f32.mrb[0].mxu0
  %v1751 = vadd.f32 %v1186, %v1750
  %v1752 = vpop.f32.mrb[0].mxu0
  %1753 = vmatprep.mubr.f32.mxu0 %v687
  %1754 = vmatmul.mubr.f32.gmra.mrb[0].mxu0 %v284
  %v1755 = vpop.f32.mrb[0].mxu0
  %v1756 = vadd.f32 %v1191, %v1755
  %v1757 = vpop.f32.mrb[0].mxu0
  %1758 = vmatprep.mubr.f32.mxu0 %v690
  %1759 = vmatmul.mubr.f32.gmra.mrb[0].mxu0 %v288
  %v1760 = vpop.f32.mrb[0].mxu0
  %v1761 = vadd.f32 %v1196, %v1760
  %v1762 = vpop.f32.mrb[0].mxu0
  %1763 = vmatprep.mubr.f32.mxu0 %v693
  %1764 = vmatmul.mubr.f32.gmra.mrb[0].mxu0 %v292
  %v1765 = vpop.f32.mrb[0].mxu0
  %v1766 = vadd.f32 %v1201, %v1765
  %v1767 = vpop.f32.mrb[0].mxu0
  %1768 = vmatprep.mubr.f32.mxu0 %v696
  %1769 = vmatmul.mubr.f32.gmra.mrb[0].mxu0 %v296
  %v1770 = vpop.f32.mrb[0].mxu0
  %v1771 = vadd.f32 %v1206, %v1770
  %v1772 = vpop.f32.mrb[0].mxu0
  %1773 = vmatprep.mubr.f32.mxu0 %v699
  %1774 = vmatmul.mubr.f32.gmra.mrb[0].mxu0 %v300
  %v1775 = vpop.f32.mrb[0].mxu0
  %v1776 = vadd.f32 %v1211, %v1775
  %v1777 = vpop.f32.mrb[0].mxu0
  %1778 = vmatprep.mubr.f32.mxu0 %v702
  %1779 = vmatmul.mubr.f32.gmra.mrb[0].mxu0 %v304
  %v1780 = vpop.f32.mrb[0].mxu0
  %v1781 = vadd.f32 %v1216, %v1780
  %v1782 = vpop.f32.mrb[0].mxu0
  %1783 = vmatprep.mubr.f32.mxu0 %v705
  %1784 = vmatmul.mubr.f32.gmra.mrb[0].mxu0 %v308
  %v1785 = vpop.f32.mrb[0].mxu0
  %v1786 = vadd.f32 %v1221, %v1785
  %v1787 = vpop.f32.mrb[0].mxu0
  %1788 = vmatprep.mubr.f32.mxu0 %v708
  %1789 = vmatmul.mubr.f32.gmra.mrb[0].mxu0 %v312
  %v1790 = vpop.f32.mrb[0].mxu0
  %v1791 = vadd.f32 %v1226, %v1790
  %v1792 = vpop.f32.mrb[0].mxu0
  %1793 = vmatprep.mubr.f32.mxu0 %v711
  %1794 = vmatmul.mubr.f32.gmra.mrb[0].mxu0 %v316
  %v1795 = vpop.f32.mrb[0].mxu0
  %v1796 = vadd.f32 %v1231, %v1795
  %v1797 = vpop.f32.mrb[0].mxu0
  %1798 = vmatprep.mubr.f32.mxu0 %v714
  %1799 = vmatmul.mubr.f32.gmra.mrb[0].mxu0 %v320
  %v1800 = vpop.f32.mrb[0].mxu0
  %v1801 = vadd.f32 %v1236, %v1800
  %v1802 = vpop.f32.mrb[0].mxu0
  %1803 = vmatprep.mubr.f32.mxu0 %v717
  %1804 = vmatmul.mubr.f32.gmra.mrb[0].mxu0 %v324
  %v1805 = vpop.f32.mrb[0].mxu0
  %v1806 = vadd.f32 %v1241, %v1805
  %v1807 = vpop.f32.mrb[0].mxu0
  %1808 = vmatprep.mubr.f32.mxu0 %v720
  %1809 = vmatmul.mubr.f32.gmra.mrb[0].mxu0 %v328
  %v1810 = vpop.f32.mrb[0].mxu0
  %v1811 = vadd.f32 %v1246, %v1810
  %v1812 = vpop.f32.mrb[0].mxu0
  %1813 = vmatprep.mubr.f32.mxu0 %v723
  %1814 = vmatmul.mubr.f32.gmra.mrb[0].mxu0 %v332
  %v1815 = vpop.f32.mrb[0].mxu0
  %v1816 = vadd.f32 %v1251, %v1815
  %v1817 = vpop.f32.mrb[0].mxu0
  %1818 = vmatprep.mubr.f32.mxu0 %v726
  %1819 = vmatmul.mubr.f32.gmra.mrb[0].mxu0 %v336
  %v1820 = vpop.f32.mrb[0].mxu0
  %v1821 = vadd.f32 %v1256, %v1820
  %v1822 = vpop.f32.mrb[0].mxu0
  %1823 = vmatprep.mubr.f32.mxu0 %v729
  %1824 = vmatmul.mubr.f32.gmra.mrb[0].mxu0 %v340
  %v1825 = vpop.f32.mrb[0].mxu0
  %v1826 = vadd.f32 %v1261, %v1825
  %v1827 = vpop.f32.mrb[0].mxu0
  %1828 = vmatprep.mubr.f32.mxu0 %v732
  %1829 = vmatmul.mubr.f32.gmra.mrb[0].mxu0 %v344
  %v1830 = vpop.f32.mrb[0].mxu0
  %v1831 = vadd.f32 %v1266, %v1830
  %v1832 = vpop.f32.mrb[0].mxu0
  %1833 = vmatprep.mubr.f32.mxu0 %v735
  %1834 = vmatmul.mubr.f32.gmra.mrb[0].mxu0 %v348
  %v1835 = vpop.f32.mrb[0].mxu0
  %v1836 = vadd.f32 %v1271, %v1835
  %v1837 = vpop.f32.mrb[0].mxu0
  %1838 = vmatprep.mubr.f32.mxu0 %v738
  %1839 = vmatmul.mubr.f32.gmra.mrb[0].mxu0 %v352
  %v1840 = vpop.f32.mrb[0].mxu0
  %v1841 = vadd.f32 %v1276, %v1840
  %v1842 = vpop.f32.mrb[0].mxu0
  %1843 = vmatprep.mubr.f32.mxu0 %v741
  %1844 = vmatmul.mubr.f32.gmra.mrb[0].mxu0 %v356
  %v1845 = vpop.f32.mrb[0].mxu0
  %v1846 = vadd.f32 %v1281, %v1845
  %v1847 = vpop.f32.mrb[0].mxu0
  %1848 = vmatprep.mubr.f32.mxu0 %v744
  %1849 = vmatmul.mubr.f32.gmra.mrb[0].mxu0 %v360
  %v1850 = vpop.f32.mrb[0].mxu0
  %v1851 = vadd.f32 %v1286, %v1850
  %v1852 = vpop.f32.mrb[0].mxu0
  %1853 = vmatprep.mubr.f32.mxu0 %v747
  %1854 = vmatmul.mubr.f32.gmra.mrb[0].mxu0 %v364
  %v1855 = vpop.f32.mrb[0].mxu0
  %v1856 = vadd.f32 %v1291, %v1855
  %v1857 = vpop.f32.mrb[0].mxu0
  %1858 = vmatprep.mubr.f32.mxu0 %v750
  %1859 = vmatmul.mubr.f32.gmra.mrb[0].mxu0 %v368
  %v1860 = vpop.f32.mrb[0].mxu0
  %v1861 = vadd.f32 %v1296, %v1860
  %v1862 = vpop.f32.mrb[0].mxu0
  %1863 = vmatprep.mubr.f32.mxu0 %v753
  %1864 = vmatmul.mubr.f32.gmra.mrb[0].mxu0 %v372
  %v1865 = vpop.f32.mrb[0].mxu0
  %v1866 = vadd.f32 %v1301, %v1865
  %v1867 = vpop.f32.mrb[0].mxu0
  %1868 = vmatprep.mubr.f32.mxu0 %v756
  %1869 = vmatmul.mubr.f32.gmra.mrb[0].mxu0 %v376
  %v1870 = vpop.f32.mrb[0].mxu0
  %v1871 = vadd.f32 %v1306, %v1870
  %v1872 = vpop.f32.mrb[0].mxu0
  %1873 = vmatprep.mubr.f32.mxu0 %v759
  %1874 = vmatmul.mubr.f32.gmra.mrb[0].mxu0 %v380
  %v1875 = vpop.f32.mrb[0].mxu0
  %v1876 = vadd.f32 %v1311, %v1875
  %v1877 = vpop.f32.mrb[0].mxu0
  %1878 = vmatprep.mubr.f32.mxu0 %v762
  %1879 = vmatmul.mubr.f32.gmra.mrb[0].mxu0 %v384
  %v1880 = vpop.f32.mrb[0].mxu0
  %v1881 = vadd.f32 %v1316, %v1880
  %v1882 = vpop.f32.mrb[0].mxu0
  %1883 = vmatprep.mubr.f32.mxu0 %v765
  %1884 = vmatmul.mubr.f32.gmra.mrb[0].mxu0 %v388
  %v1885 = vpop.f32.mrb[0].mxu0
  %v1886 = vadd.f32 %v1321, %v1885
  %v1887 = vpop.f32.mrb[0].mxu0
  %1888 = vmatprep.mubr.f32.mxu0 %v768
  %1889 = vmatmul.mubr.f32.gmra.mrb[0].mxu0 %v392
  %v1890 = vpop.f32.mrb[0].mxu0
  %v1891 = vadd.f32 %v1326, %v1890
  %v1892 = vpop.f32.mrb[0].mxu0
  %1893 = vmatprep.mubr.f32.mxu0 %v771
  %1894 = vmatmul.mubr.f32.gmra.mrb[0].mxu0 %v396
  %v1895 = vpop.f32.mrb[0].mxu0
  %v1896 = vadd.f32 %v1331, %v1895
  %v1897 = vpop.f32.mrb[0].mxu0
  %1898 = vmatprep.mubr.f32.mxu0 %v774
  %1899 = vmatmul.mubr.f32.gmra.mrb[0].mxu0 %v400
  %v1900 = vpop.f32.mrb[0].mxu0
  %v1901 = vadd.f32 %v1336, %v1900
  %v1902 = vpop.f32.mrb[0].mxu0
  %1903 = vmatprep.mubr.f32.mxu0 %v777
  %1904 = vmatmul.mubr.f32.gmra.mrb[0].mxu0 %v404
  %v1905 = vpop.f32.mrb[0].mxu0
  %v1906 = vadd.f32 %v1341, %v1905
  %v1907 = vpop.f32.mrb[0].mxu0
  %1908 = vmatprep.mubr.f32.mxu0 %v780
  %1909 = vmatmul.mubr.f32.gmra.mrb[0].mxu0 %v408
  %v1910 = vpop.f32.mrb[0].mxu0
  %v1911 = vadd.f32 %v1346, %v1910
  %v1912 = vpop.f32.mrb[0].mxu0
  %1913 = vmatprep.mubr.f32.mxu0 %v783
  %1914 = vmatmul.mubr.f32.gmra.mrb[0].mxu0 %v412
  %v1915 = vpop.f32.mrb[0].mxu0
  %v1916 = vadd.f32 %v1351, %v1915
  %v1917 = vpop.f32.mrb[0].mxu0
  %1918 = vdwg.mxu0
  %v1919 = vmax.f32 %v1421, 0.0
  %v1920 = vmax.f32 %v1426, 0.0
  %v1921 = vmax.f32 %v1431, 0.0
  %v1922 = vmax.f32 %v1436, 0.0
  %v1923 = vmax.f32 %v1441, 0.0
  %v1924 = vmax.f32 %v1446, 0.0
  %v1925 = vmax.f32 %v1451, 0.0
  %v1926 = vmax.f32 %v1456, 0.0
  %v1927 = vmax.f32 %v1461, 0.0
  %v1928 = vmax.f32 %v1466, 0.0
  %v1929 = vmax.f32 %v1471, 0.0
  %v1930 = vmax.f32 %v1476, 0.0
  %v1931 = vmax.f32 %v1481, 0.0
  %v1932 = vmax.f32 %v1486, 0.0
  %v1933 = vmax.f32 %v1491, 0.0
  %v1934 = vmax.f32 %v1496, 0.0
  %v1935 = vmax.f32 %v1501, 0.0
  %v1936 = vmax.f32 %v1506, 0.0
  %v1937 = vmax.f32 %v1511, 0.0
  %v1938 = vmax.f32 %v1516, 0.0
  %v1939 = vmax.f32 %v1521, 0.0
  %v1940 = vmax.f32 %v1526, 0.0
  %v1941 = vmax.f32 %v1531, 0.0
  %v1942 = vmax.f32 %v1536, 0.0
  %v1943 = vmax.f32 %v1541, 0.0
  %v1944 = vmax.f32 %v1546, 0.0
  %v1945 = vmax.f32 %v1551, 0.0
  %v1946 = vmax.f32 %v1556, 0.0
  %v1947 = vmax.f32 %v1561, 0.0
  %v1948 = vmax.f32 %v1566, 0.0
  %v1949 = vmax.f32 %v1571, 0.0
  %v1950 = vmax.f32 %v1576, 0.0
  %v1951 = vmax.f32 %v1581, 0.0
  %v1952 = vmax.f32 %v1586, 0.0
  %v1953 = vmax.f32 %v1591, 0.0
  %v1954 = vmax.f32 %v1596, 0.0
  %v1955 = vmax.f32 %v1601, 0.0
  %v1956 = vmax.f32 %v1606, 0.0
  %v1957 = vmax.f32 %v1611, 0.0
  %v1958 = vmax.f32 %v1616, 0.0
  %v1959 = vmax.f32 %v1621, 0.0
  %v1960 = vmax.f32 %v1626, 0.0
  %v1961 = vmax.f32 %v1631, 0.0
  %v1962 = vmax.f32 %v1636, 0.0
  %v1963 = vmax.f32 %v1641, 0.0
  %v1964 = vmax.f32 %v1646, 0.0
  %v1965 = vmax.f32 %v1651, 0.0
  %v1966 = vmax.f32 %v1656, 0.0
  %v1967 = vmax.f32 %v1661, 0.0
  %v1968 = vmax.f32 %v1666, 0.0
  %v1969 = vmax.f32 %v1671, 0.0
  %v1970 = vmax.f32 %v1676, 0.0
  %v1971 = vmax.f32 %v1681, 0.0
  %v1972 = vmax.f32 %v1686, 0.0
  %v1973 = vmax.f32 %v1691, 0.0
  %v1974 = vmax.f32 %v1696, 0.0
  %v1975 = vmax.f32 %v1701, 0.0
  %v1976 = vmax.f32 %v1706, 0.0
  %v1977 = vmax.f32 %v1711, 0.0
  %v1978 = vmax.f32 %v1716, 0.0
  %v1979 = vmax.f32 %v1721, 0.0
  %v1980 = vmax.f32 %v1726, 0.0
  %v1981 = vmax.f32 %v1731, 0.0
  %v1982 = vmax.f32 %v1736, 0.0
  %v1983 = vmax.f32 %v1741, 0.0
  %v1984 = vmax.f32 %v1746, 0.0
  %v1985 = vmax.f32 %v1751, 0.0
  %v1986 = vmax.f32 %v1756, 0.0
  %v1987 = vmax.f32 %v1761, 0.0
  %v1988 = vmax.f32 %v1766, 0.0
  %v1989 = vmax.f32 %v1771, 0.0
  %v1990 = vmax.f32 %v1776, 0.0
  %v1991 = vmax.f32 %v1781, 0.0
  %v1992 = vmax.f32 %v1786, 0.0
  %v1993 = vmax.f32 %v1791, 0.0
  %v1994 = vmax.f32 %v1796, 0.0
  %v1995 = vmax.f32 %v1801, 0.0
  %v1996 = vmax.f32 %v1806, 0.0
  %v1997 = vmax.f32 %v1811, 0.0
  %v1998 = vmax.f32 %v1816, 0.0
  %v1999 = vmax.f32 %v1821, 0.0
  %v2000 = vmax.f32 %v1826, 0.0
  %v2001 = vmax.f32 %v1831, 0.0
  %v2002 = vmax.f32 %v1836, 0.0
  %v2003 = vmax.f32 %v1841, 0.0
  %v2004 = vmax.f32 %v1846, 0.0
  %v2005 = vmax.f32 %v1851, 0.0
  %v2006 = vmax.f32 %v1856, 0.0
  %v2007 = vmax.f32 %v1861, 0.0
  %v2008 = vmax.f32 %v1866, 0.0
  %v2009 = vmax.f32 %v1871, 0.0
  %v2010 = vmax.f32 %v1876, 0.0
  %v2011 = vmax.f32 %v1881, 0.0
  %v2012 = vmax.f32 %v1886, 0.0
  %v2013 = vmax.f32 %v1891, 0.0
  %v2014 = vmax.f32 %v1896, 0.0
  %v2015 = vmax.f32 %v1901, 0.0
  %v2016 = vmax.f32 %v1906, 0.0
  %v2017 = vmax.f32 %v1911, 0.0
  %v2018 = vmax.f32 %v1916, 0.0
  %vm2019 = vcmask 408576
  %2020 = vst.msk [vmem:[%s3] sm:$0xff] %vm2019, %v1919
  %2021 = vst.msk [vmem:[%s3 + $0x8] sm:$0xff] %vm2019, %v1920
  %2022 = vst.msk [vmem:[%s3 + $0x10] sm:$0xff] %vm2019, %v1921
  %2023 = vst.msk [vmem:[%s3 + $0x18] sm:$0xff] %vm2019, %v1922
  %2024 = vst.msk [vmem:[%s3 + $0x20] sm:$0xff] %vm2019, %v1923
  %2025 = vst.msk [vmem:[%s3 + $0x28] sm:$0xff] %vm2019, %v1924
  %2026 = vst.msk [vmem:[%s3 + $0x30] sm:$0xff] %vm2019, %v1925
  %2027 = vst.msk [vmem:[%s3 + $0x38] sm:$0xff] %vm2019, %v1926
  %2028 = vst.msk [vmem:[%s3 + $0x40] sm:$0xff] %vm2019, %v1927
  %2029 = vst.msk [vmem:[%s3 + $0x48] sm:$0xff] %vm2019, %v1928
  %2030 = vst.msk [vmem:[%s3 + $0x50] sm:$0xff] %vm2019, %v1929
  %2031 = vst.msk [vmem:[%s3 + $0x58] sm:$0xff] %vm2019, %v1930
  %2032 = vst.msk [vmem:[%s3 + $0x60] sm:$0xff] %vm2019, %v1931
  %2033 = vst.msk [vmem:[%s3 + $0x68] sm:$0xff] %vm2019, %v1932
  %2034 = vst.msk [vmem:[%s3 + $0x70] sm:$0xff] %vm2019, %v1933
  %2035 = vst.msk [vmem:[%s3 + $0x78] sm:$0xff] %vm2019, %v1934
  %2036 = vst.msk [vmem:[%s3 + $0x80] sm:$0xff] %vm2019, %v1935
  %2037 = vst.msk [vmem:[%s3 + $0x88] sm:$0xff] %vm2019, %v1936
  %2038 = vst.msk [vmem:[%s3 + $0x90] sm:$0xff] %vm2019, %v1937
  %2039 = vst.msk [vmem:[%s3 + $0x98] sm:$0xff] %vm2019, %v1938
  %2040 = vst.msk [vmem:[%s3 + $0xa0] sm:$0xff] %vm2019, %v1939
  %2041 = vst.msk [vmem:[%s3 + $0xa8] sm:$0xff] %vm2019, %v1940
  %2042 = vst.msk [vmem:[%s3 + $0xb0] sm:$0xff] %vm2019, %v1941
  %2043 = vst.msk [vmem:[%s3 + $0xb8] sm:$0xff] %vm2019, %v1942
  %2044 = vst.msk [vmem:[%s3 + $0xc0] sm:$0xff] %vm2019, %v1943
  %2045 = vst.msk [vmem:[%s3 + $0xc8] sm:$0xff] %vm2019, %v1944
  %2046 = vst.msk [vmem:[%s3 + $0xd0] sm:$0xff] %vm2019, %v1945
  %2047 = vst.msk [vmem:[%s3 + $0xd8] sm:$0xff] %vm2019, %v1946
  %2048 = vst.msk [vmem:[%s3 + $0xe0] sm:$0xff] %vm2019, %v1947
  %2049 = vst.msk [vmem:[%s3 + $0xe8] sm:$0xff] %vm2019, %v1948
  %2050 = vst.msk [vmem:[%s3 + $0xf0] sm:$0xff] %vm2019, %v1949
  %2051 = vst.msk [vmem:[%s3 + $0xf8] sm:$0xff] %vm2019, %v1950
  %2052 = vst.msk [vmem:[%s3 + $0x100] sm:$0xff] %vm2019, %v1951
  %2053 = vst.msk [vmem:[%s3 + $0x108] sm:$0xff] %vm2019, %v1952
  %2054 = vst.msk [vmem:[%s3 + $0x110] sm:$0xff] %vm2019, %v1953
  %2055 = vst.msk [vmem:[%s3 + $0x118] sm:$0xff] %vm2019, %v1954
  %2056 = vst.msk [vmem:[%s3 + $0x120] sm:$0xff] %vm2019, %v1955
  %2057 = vst.msk [vmem:[%s3 + $0x128] sm:$0xff] %vm2019, %v1956
  %2058 = vst.msk [vmem:[%s3 + $0x130] sm:$0xff] %vm2019, %v1957
  %2059 = vst.msk [vmem:[%s3 + $0x138] sm:$0xff] %vm2019, %v1958
  %2060 = vst.msk [vmem:[%s3 + $0x140] sm:$0xff] %vm2019, %v1959
  %2061 = vst.msk [vmem:[%s3 + $0x148] sm:$0xff] %vm2019, %v1960
  %2062 = vst.msk [vmem:[%s3 + $0x150] sm:$0xff] %vm2019, %v1961
  %2063 = vst.msk [vmem:[%s3 + $0x158] sm:$0xff] %vm2019, %v1962
  %2064 = vst.msk [vmem:[%s3 + $0x160] sm:$0xff] %vm2019, %v1963
  %2065 = vst.msk [vmem:[%s3 + $0x168] sm:$0xff] %vm2019, %v1964
  %2066 = vst.msk [vmem:[%s3 + $0x170] sm:$0xff] %vm2019, %v1965
  %2067 = vst.msk [vmem:[%s3 + $0x178] sm:$0xff] %vm2019, %v1966
  %2068 = vst.msk [vmem:[%s3 + $0x180] sm:$0xff] %vm2019, %v1967
  %2069 = vst.msk [vmem:[%s3 + $0x188] sm:$0xff] %vm2019, %v1968
  %2070 = vst.msk [vmem:[%s3 + $0x190] sm:$0xff] %vm2019, %v1969
  %2071 = vst.msk [vmem:[%s3 + $0x198] sm:$0xff] %vm2019, %v1970
  %2072 = vst.msk [vmem:[%s3 + $0x1a0] sm:$0xff] %vm2019, %v1971
  %2073 = vst.msk [vmem:[%s3 + $0x1a8] sm:$0xff] %vm2019, %v1972
  %2074 = vst.msk [vmem:[%s3 + $0x1b0] sm:$0xff] %vm2019, %v1973
  %2075 = vst.msk [vmem:[%s3 + $0x1b8] sm:$0xff] %vm2019, %v1974
  %2076 = vst.msk [vmem:[%s3 + $0x1c0] sm:$0xff] %vm2019, %v1975
  %2077 = vst.msk [vmem:[%s3 + $0x1c8] sm:$0xff] %vm2019, %v1976
  %2078 = vst.msk [vmem:[%s3 + $0x1d0] sm:$0xff] %vm2019, %v1977
  %2079 = vst.msk [vmem:[%s3 + $0x1d8] sm:$0xff] %vm2019, %v1978
  %2080 = vst.msk [vmem:[%s3 + $0x1e0] sm:$0xff] %vm2019, %v1979
  %2081 = vst.msk [vmem:[%s3 + $0x1e8] sm:$0xff] %vm2019, %v1980
  %2082 = vst.msk [vmem:[%s3 + $0x1f0] sm:$0xff] %vm2019, %v1981
  %2083 = vst.msk [vmem:[%s3 + $0x1f8] sm:$0xff] %vm2019, %v1982
  %2084 = vst.msk [vmem:[%s3 + $0x200] sm:$0xff] %vm2019, %v1983
  %2085 = vst.msk [vmem:[%s3 + $0x208] sm:$0xff] %vm2019, %v1984
  %2086 = vst.msk [vmem:[%s3 + $0x210] sm:$0xff] %vm2019, %v1985
  %2087 = vst.msk [vmem:[%s3 + $0x218] sm:$0xff] %vm2019, %v1986
  %2088 = vst.msk [vmem:[%s3 + $0x220] sm:$0xff] %vm2019, %v1987
  %2089 = vst.msk [vmem:[%s3 + $0x228] sm:$0xff] %vm2019, %v1988
  %2090 = vst.msk [vmem:[%s3 + $0x230] sm:$0xff] %vm2019, %v1989
  %2091 = vst.msk [vmem:[%s3 + $0x238] sm:$0xff] %vm2019, %v1990
  %2092 = vst.msk [vmem:[%s3 + $0x240] sm:$0xff] %vm2019, %v1991
  %2093 = vst.msk [vmem:[%s3 + $0x248] sm:$0xff] %vm2019, %v1992
  %2094 = vst.msk [vmem:[%s3 + $0x250] sm:$0xff] %vm2019, %v1993
  %2095 = vst.msk [vmem:[%s3 + $0x258] sm:$0xff] %vm2019, %v1994
  %2096 = vst.msk [vmem:[%s3 + $0x260] sm:$0xff] %vm2019, %v1995
  %2097 = vst.msk [vmem:[%s3 + $0x268] sm:$0xff] %vm2019, %v1996
  %2098 = vst.msk [vmem:[%s3 + $0x270] sm:$0xff] %vm2019, %v1997
  %2099 = vst.msk [vmem:[%s3 + $0x278] sm:$0xff] %vm2019, %v1998
  %2100 = vst.msk [vmem:[%s3 + $0x280] sm:$0xff] %vm2019, %v1999
  %2101 = vst.msk [vmem:[%s3 + $0x288] sm:$0xff] %vm2019, %v2000
  %2102 = vst.msk [vmem:[%s3 + $0x290] sm:$0xff] %vm2019, %v2001
  %2103 = vst.msk [vmem:[%s3 + $0x298] sm:$0xff] %vm2019, %v2002
  %2104 = vst.msk [vmem:[%s3 + $0x2a0] sm:$0xff] %vm2019, %v2003
  %2105 = vst.msk [vmem:[%s3 + $0x2a8] sm:$0xff] %vm2019, %v2004
  %2106 = vst.msk [vmem:[%s3 + $0x2b0] sm:$0xff] %vm2019, %v2005
  %2107 = vst.msk [vmem:[%s3 + $0x2b8] sm:$0xff] %vm2019, %v2006
  %2108 = vst.msk [vmem:[%s3 + $0x2c0] sm:$0xff] %vm2019, %v2007
  %2109 = vst.msk [vmem:[%s3 + $0x2c8] sm:$0xff] %vm2019, %v2008
  %2110 = vst.msk [vmem:[%s3 + $0x2d0] sm:$0xff] %vm2019, %v2009
  %2111 = vst.msk [vmem:[%s3 + $0x2d8] sm:$0xff] %vm2019, %v2010
  %2112 = vst.msk [vmem:[%s3 + $0x2e0] sm:$0xff] %vm2019, %v2011
  %2113 = vst.msk [vmem:[%s3 + $0x2e8] sm:$0xff] %vm2019, %v2012
  %2114 = vst.msk [vmem:[%s3 + $0x2f0] sm:$0xff] %vm2019, %v2013
  %2115 = vst.msk [vmem:[%s3 + $0x2f8] sm:$0xff] %vm2019, %v2014
  %2116 = vst.msk [vmem:[%s3 + $0x300] sm:$0xff] %vm2019, %v2015
  %2117 = vst.msk [vmem:[%s3 + $0x308] sm:$0xff] %vm2019, %v2016
  %2118 = vst.msk [vmem:[%s3 + $0x310] sm:$0xff] %vm2019, %v2017
  %2119 = vst.msk [vmem:[%s3 + $0x318] sm:$0xff] %vm2019, %v2018
  // Predicated region
  $region14: #{lenet_forward.4} parent=0 // pred_check
    _
  $region15: #{lenet_forward.4} parent=0 // pred_check_branch
    %2121 = sbr.rel (0) target = $region17
  $region16: #{lenet_forward.4} parent=0 // pred_region
    _
  $region17: #{lenet_forward.4} parent=0 // pred_fallthru
    _
  // Predicated region
  $region18: #{lenet_forward.4} parent=0 // pred_check
    _
  $region19: #{lenet_forward.4} parent=0 // pred_check_branch
    %2123 = sbr.rel (0) target = $region21
  $region20: #{lenet_forward.4} parent=0 // pred_region
    _
  $region21: #{lenet_forward.4} parent=0 // pred_fallthru
    _

// kernel: lenet_forward.5
$region0: #{lenet_forward.5}
  #allocation0 [shape = 'u32[]', space=smem, size = 0x4, offset = 0x4, fixed_abs, tag = 'smem constant byte address 0x4 - core index']
  #allocation1 [shape = 'u32[144,128]{1,0:T(1,128)}', space=vmem, size = 0x12000, scoped, tag = 'internal scratch']
  #allocation2 [shape = 'f32[2,256]{1,0:T(2,128)}', space=vmem, size = 0x800, scoped, tag = 'scratch operand']
  %s0 = inlined_call_operand.vmem [shape: f32[2,20480], index: 0, kind: input, shape index: {}]
  %s1 = inlined_call_operand.hbm [shape: f32[20480,512], index: 1, kind: input, shape index: {}]
  %s2 = inlined_call_operand.vmem [shape: f32[1,512], index: 2, kind: input, shape index: {}]
  %s3 = inlined_call_operand.vmem [shape: f32[512,10], index: 3, kind: input, shape index: {}]
  %s4 = inlined_call_operand.vmem [shape: f32[1,10], index: 4, kind: input, shape index: {}]
  %s5 = inlined_call_operand.vmem [shape: f32[2,2,10], index: 5, kind: output, shape index: {}]
  %s6 = sld [smem:[#allocation0]]
  $region65: #{lenet_forward.5} parent=0
    _
  %s8 = ssub.s32 1, %s6
  %s9 = scalar_select 0, %s8, %s6
  $region1: #{lenet_forward.5} parent=0
    #allocation3 [shape = 'u8[8388608]{0}', space=vmem, size = 0x800000, scoped, tag = 'input window, operand 1']
    #allocation4 [shape = 's32[2]{0}', space=sflag, size = 0x8, scoped, tag = 'scoped memory for lenet_forward.5']
    %10 = vsyncpa [#allocation4], 0
    %s11 = scalar_lea.sflag [#allocation4], 1
    %12 = vsyncpa %s11, 0
    loop: start=0, step=1, limit=12
    $region2: #{lenet_forward.5} parent=1 // loop_pre_header
      _
    $region3: #{lenet_forward.5} parent=1 // loop_header
      %s14 = sphi 0, %s18
      %p15 = scmp.ge.s32.totalorder %s14, 12
      %s21 = sphi 0, %s33
      %s22 = sphi 0, %s29
      %s23 = sphi 0, %s21
      %s24 = sphi 0, %s22
      %s25 = sphi 0, %s23
      %s26 = sphi 0, %s24
      %s36 = sphi 0, %s38
      %s39 = sphi 0, %s36
      %s40 = sphi 0, %s39
      %s56 = sphi 0, %s40
      %s64 = sphi 0, %s66
      %s67 = sphi 0, %s64
      %s68 = sphi 0, %s67
      %s84 = sphi 0, %s68
      %s90 = sphi 0, %s92
      %s93 = sphi 0, %s90
      %s94 = sphi 0, %s93
      %s110 = sphi 0, %s94
      %s116 = sphi 0, %s118
      %s119 = sphi 0, %s116
      %s120 = sphi 0, %s119
      %s136 = sphi 0, %s120
      %s140 = sphi 0, %s140
      %s142 = sphi 0, %s140
      %s143 = sphi 0, %s142
      %s157 = sphi 0, %s143
      %s163 = sphi 0, %s165
      %s166 = sphi 0, %s163
      %s167 = sphi 0, %s166
      %s183 = sphi 0, %s167
    $region4: #{lenet_forward.5} parent=1 // loop_header_branch
      %17 = sbr.rel (%p15) target = $region8
    $region5: #{lenet_forward.5} parent=1 // loop_body
      %s19 = ssub.s32 %s14, 1
      %s20 = ssub.s32 %s14, 2
      %s27 = sadd.s32 1, %s22
      %p28 = scmp.ge.s32.totalorder %s27, 5
      %s29 = scalar_select %p28, 0, %s27
      %s30 = sadd.s32 1, %s21
      %s31 = scalar_select %p28, %s30, %s21
      %p32 = scmp.ge.s32.totalorder %s31, 2
      %s33 = scalar_select %p32, 0, %s31
      %s34 = ssub.s32 %s22, %s29
      %p35 = scmp.eq.s32.totalorder %s34, 0
      %s37 = sadd.s32 %s36, 1
      %s38 = scalar_select %p35, %s36, %s37
      %p41 = pneg %p35
      %p42 = scmp.eq.s32.totalorder %s14, 9
      %p43 = por %p41, %p42
      %p44 = scmp.ne.s32.totalorder %s36, %s39
      %p45 = scmp.eq.s32.totalorder %s14, 0
      %p46 = por %p44, %p45
      %p47 = scmp.ne.s32.totalorder %s36, %s39
      %p48 = scmp.eq.s32.totalorder %s19, 9
      %p49 = por %p47, %p48
      %p50 = scmp.ne.s32.totalorder %s39, %s40
      %p51 = scmp.eq.s32.totalorder %s19, 0
      %p52 = por %p50, %p51
      %p53 = scmp.ne.s32.totalorder %s39, %s40
      %p54 = scmp.eq.s32.totalorder %s20, 9
      %p55 = por %p53, %p54
      %p57 = scmp.ne.s32.totalorder %s40, %s56
      %p58 = scmp.eq.s32.totalorder %s20, 0
      %p59 = por %p57, %p58
      %s60 = ssub.s32 %s22, %s29
      %s61 = ssub.s32 %s21, %s33
      %s62 = sor.u32 %s60, %s61
      %p63 = scmp.eq.s32.totalorder %s62, 0
      %s65 = sadd.s32 %s64, 1
      %s66 = scalar_select %p63, %s64, %s65
      %p69 = pneg %p63
      %p70 = scmp.eq.s32.totalorder %s14, 9
      %p71 = por %p69, %p70
      %p72 = scmp.ne.s32.totalorder %s64, %s67
      %p73 = scmp.eq.s32.totalorder %s14, 0
      %p74 = por %p72, %p73
      %p75 = scmp.ne.s32.totalorder %s64, %s67
      %p76 = scmp.eq.s32.totalorder %s19, 9
      %p77 = por %p75, %p76
      %p78 = scmp.ne.s32.totalorder %s67, %s68
      %p79 = scmp.eq.s32.totalorder %s19, 0
      %p80 = por %p78, %p79
      %p81 = scmp.ne.s32.totalorder %s67, %s68
      %p82 = scmp.eq.s32.totalorder %s20, 9
      %p83 = por %p81, %p82
      %p85 = scmp.ne.s32.totalorder %s68, %s84
      %p86 = scmp.eq.s32.totalorder %s20, 0
      %p87 = por %p85, %p86
      %s88 = ssub.s32 %s21, %s33
      %p89 = scmp.eq.s32.totalorder %s88, 0
      %s91 = sadd.s32 %s90, 1
      %s92 = scalar_select %p89, %s90, %s91
      %p95 = pneg %p89
      %p96 = scmp.eq.s32.totalorder %s14, 9
      %p97 = por %p95, %p96
      %p98 = scmp.ne.s32.totalorder %s90, %s93
      %p99 = scmp.eq.s32.totalorder %s14, 0
      %p100 = por %p98, %p99
      %p101 = scmp.ne.s32.totalorder %s90, %s93
      %p102 = scmp.eq.s32.totalorder %s19, 9
      %p103 = por %p101, %p102
      %p104 = scmp.ne.s32.totalorder %s93, %s94
      %p105 = scmp.eq.s32.totalorder %s19, 0
      %p106 = por %p104, %p105
      %p107 = scmp.ne.s32.totalorder %s93, %s94
      %p108 = scmp.eq.s32.totalorder %s20, 9
      %p109 = por %p107, %p108
      %p111 = scmp.ne.s32.totalorder %s94, %s110
      %p112 = scmp.eq.s32.totalorder %s20, 0
      %p113 = por %p111, %p112
      %s114 = ssub.s32 %s21, %s33
      %p115 = scmp.eq.s32.totalorder %s114, 0
      %s117 = sadd.s32 %s116, 1
      %s118 = scalar_select %p115, %s116, %s117
      %p121 = pneg %p115
      %p122 = scmp.eq.s32.totalorder %s14, 9
      %p123 = por %p121, %p122
      %p124 = scmp.ne.s32.totalorder %s116, %s119
      %p125 = scmp.eq.s32.totalorder %s14, 0
      %p126 = por %p124, %p125
      %p127 = scmp.ne.s32.totalorder %s116, %s119
      %p128 = scmp.eq.s32.totalorder %s19, 9
      %p129 = por %p127, %p128
      %p130 = scmp.ne.s32.totalorder %s119, %s120
      %p131 = scmp.eq.s32.totalorder %s19, 0
      %p132 = por %p130, %p131
      %p133 = scmp.ne.s32.totalorder %s119, %s120
      %p134 = scmp.eq.s32.totalorder %s20, 9
      %p135 = por %p133, %p134
      %p137 = scmp.ne.s32.totalorder %s120, %s136
      %p138 = scmp.eq.s32.totalorder %s20, 0
      %p139 = por %p137, %p138
      %s141 = sadd.s32 %s140, 1
      %p144 = scmp.eq.s32.totalorder %s14, 9
      %p145 = scmp.ne.s32.totalorder %s140, %s142
      %p146 = scmp.eq.s32.totalorder %s14, 0
      %p147 = por %p145, %p146
      %p148 = scmp.ne.s32.totalorder %s140, %s142
      %p149 = scmp.eq.s32.totalorder %s19, 9
      %p150 = por %p148, %p149
      %p151 = scmp.ne.s32.totalorder %s142, %s143
      %p152 = scmp.eq.s32.totalorder %s19, 0
      %p153 = por %p151, %p152
      %p154 = scmp.ne.s32.totalorder %s142, %s143
      %p155 = scmp.eq.s32.totalorder %s20, 9
      %p156 = por %p154, %p155
      %p158 = scmp.ne.s32.totalorder %s143, %s157
      %p159 = scmp.eq.s32.totalorder %s20, 0
      %p160 = por %p158, %p159
      %s161 = ssub.s32 %s21, %s33
      %p162 = scmp.eq.s32.totalorder %s161, 0
      %s164 = sadd.s32 %s163, 1
      %s165 = scalar_select %p162, %s163, %s164
      %p168 = pneg %p162
      %p169 = scmp.eq.s32.totalorder %s14, 9
      %p170 = por %p168, %p169
      %p171 = scmp.ne.s32.totalorder %s163, %s166
      %p172 = scmp.eq.s32.totalorder %s14, 0
      %p173 = por %p171, %p172
      %p174 = scmp.ne.s32.totalorder %s163, %s166
      %p175 = scmp.eq.s32.totalorder %s19, 9
      %p176 = por %p174, %p175
      %p177 = scmp.ne.s32.totalorder %s166, %s167
      %p178 = scmp.eq.s32.totalorder %s19, 0
      %p179 = por %p177, %p178
      %p180 = scmp.ne.s32.totalorder %s166, %s167
      %p181 = scmp.eq.s32.totalorder %s20, 9
      %p182 = por %p180, %p181
      %p184 = scmp.ne.s32.totalorder %s167, %s183
      %p185 = scmp.eq.s32.totalorder %s20, 0
      %p186 = por %p184, %p185
      %p187 = scmp.le.s32.totalorder 1, %s14
      %p188 = scmp.lt.s32.totalorder %s14, 11
      %p189 = pnand %p187, %p188
      %p190 = pneg %p189
      // Predicated region
      $region9: #{lenet_forward.5} parent=5 // pred_check
        _
      $region10: #{lenet_forward.5} parent=5 // pred_check_branch
        %192 = sbr.rel (%p189) target = $region12
      $region11: #{lenet_forward.5} parent=5 // pred_region
        %s193 = ssub.s32 %s14, 1
        // Predicated region
        $region13: #{lenet_forward.5} parent=11 // pred_check
          %p194 = pneg %p153
        $region14: #{lenet_forward.5} parent=11 // pred_check_branch
          %196 = sbr.rel (%p194) target = $region16
        $region15: #{lenet_forward.5} parent=11 // pred_region
          _
        $region16: #{lenet_forward.5} parent=11 // pred_fallthru
          _
      $region12: #{lenet_forward.5} parent=5 // pred_fallthru
        _
      %p197 = scmp.lt.s32.totalorder %s14, 10
      // Predicated region
      $region17: #{lenet_forward.5} parent=5 // pred_check
        %p198 = pneg %p197
      $region18: #{lenet_forward.5} parent=5 // pred_check_branch
        %200 = sbr.rel (%p198) target = $region20
      $region19: #{lenet_forward.5} parent=5 // pred_region
        // Predicated region
        $region21: #{lenet_forward.5} parent=19 // pred_check
          %p201 = pneg %p46
        $region22: #{lenet_forward.5} parent=19 // pred_check_branch
          %203 = sbr.rel (%p201) target = $region24
        $region23: #{lenet_forward.5} parent=19 // pred_region
          %s204 = smul.u32 32, %s22
          %p205 = scmp.lt.s32.totalorder %s204, 159
          %s206 = scalar_select %p205, %s204, 159
          %s207 = smul.addr %s206, 2
          %s208 = scalar_lea.vmem %s0, %s207
          %s209 = smul.u32 32, %s22
        $region24: #{lenet_forward.5} parent=19 // pred_fallthru
          _
        // Predicated region
        $region25: #{lenet_forward.5} parent=19 // pred_check
          %p210 = pneg %p74
        $region26: #{lenet_forward.5} parent=19 // pred_check_branch
          %212 = sbr.rel (%p210) target = $region28
        $region27: #{lenet_forward.5} parent=19 // pred_region
          %s213 = sand.u32 %s64, 1
          %s214 = scalar_lea.sflag [#allocation4], %s213
          %s215 = sand.u32 %s64, 1
          %s216 = smul.addr %s215, 8192
          %s217 = scalar_lea.vmem [#allocation3], %s216
          %s218 = smul.u32 512, %s22
          %s219 = smul.u32 2, %s21
          %s221 = ssub.s32 131072, 131072
          %222 = vsyncadd %s214, %s221
          %s223 = smul.addr %s218, 4
          %s224 = sadd.s32 %s219, %s223
          %s225 = smul.addr %s224, 128
          %s226 = scalar_lea.hbm %s1, %s225
          %s227 = sshll.u32 %s217, 4
          %s228 = int_to_ptr.vmem [resolvable:$true] %s227
          %233 = dma.hbm_to_vmem [thread:$0]  %s226, 131072, %s228, %s214, 512, 256, 16
        $region28: #{lenet_forward.5} parent=19 // pred_fallthru
          _
        // Predicated region
        $region29: #{lenet_forward.5} parent=19 // pred_check
          %p234 = pneg %p100
        $region30: #{lenet_forward.5} parent=19 // pred_check_branch
          %236 = sbr.rel (%p234) target = $region32
        $region31: #{lenet_forward.5} parent=19 // pred_region
          %s237 = smul.u32 2, %s21
          %p238 = scmp.lt.s32.totalorder %s237, 3
          %s239 = scalar_select %p238, %s237, 3
          %s240 = scalar_lea.vmem %s2, %s239
          %s241 = smul.u32 2, %s21
        $region32: #{lenet_forward.5} parent=19 // pred_fallthru
          _
        // Predicated region
        $region33: #{lenet_forward.5} parent=19 // pred_check
          %p242 = pneg %p126
        $region34: #{lenet_forward.5} parent=19 // pred_check_branch
          %244 = sbr.rel (%p242) target = $region36
        $region35: #{lenet_forward.5} parent=19 // pred_region
          %s245 = smul.u32 32, %s21
          %p246 = scmp.lt.s32.totalorder %s245, 63
          %s247 = scalar_select %p246, %s245, 63
          %s248 = smul.addr %s247, 8
          %s249 = scalar_lea.vmem %s3, %s248
          %s250 = smul.u32 32, %s21
        $region36: #{lenet_forward.5} parent=19 // pred_fallthru
          _
      $region20: #{lenet_forward.5} parent=5 // pred_fallthru
        _
      %p251 = scmp.le.s32.totalorder 1, %s14
      %p252 = scmp.lt.s32.totalorder %s14, 11
      %p253 = pnand %p251, %p252
      %p254 = pneg %p253
      // Predicated region
      $region37: #{lenet_forward.5} parent=5 // pred_check
        _
      $region38: #{lenet_forward.5} parent=5 // pred_check_branch
        %256 = sbr.rel (%p253) target = $region40
      $region39: #{lenet_forward.5} parent=5 // pred_region
        %s257 = ssub.s32 %s14, 1
        %s258 = sand.u32 %s67, 1
        %s259 = scalar_lea.sflag [#allocation4], %s258
        %s260 = sand.u32 %s67, 1
        %s261 = smul.addr %s260, 8192
        %s262 = scalar_lea.vmem [#allocation3], %s261
        // Predicated region
        $region41: #{lenet_forward.5} parent=39 // pred_check
          %p263 = pneg %p80
        $region42: #{lenet_forward.5} parent=39 // pred_check_branch
          %265 = sbr.rel (%p263) target = $region44
        $region43: #{lenet_forward.5} parent=39 // pred_region
          %266 = dma.done %s259, 131072
        $region44: #{lenet_forward.5} parent=39 // pred_fallthru
          _
        %s267 = smul.u32 32, %s24
        %p268 = scmp.lt.s32.totalorder %s267, 159
        %s269 = scalar_select %p268, %s267, 159
        %s270 = smul.addr %s269, 2
        %s271 = scalar_lea.vmem %s0, %s270
        %p272 = pneg %p52
        %p273 = pneg %p49
        %s274 = sand.u32 %s67, 1
        %s275 = scalar_lea.sflag [#allocation4], %s274
        %s276 = sand.u32 %s67, 1
        %s277 = smul.addr %s276, 8192
        %s278 = scalar_lea.vmem [#allocation3], %s277
        %p279 = pneg %p80
        %p280 = pneg %p77
        %s281 = smul.u32 2, %s23
        %p282 = scmp.lt.s32.totalorder %s281, 3
        %s283 = scalar_select %p282, %s281, 3
        %s284 = scalar_lea.vmem %s2, %s283
        %p285 = pneg %p106
        %p286 = pneg %p103
        %s287 = smul.u32 32, %s23
        %p288 = scmp.lt.s32.totalorder %s287, 63
        %s289 = scalar_select %p288, %s287, 63
        %s290 = smul.addr %s289, 8
        %s291 = scalar_lea.vmem %s3, %s290
        %p292 = pneg %p132
        %p293 = pneg %p129
        %p294 = pneg %p153
        %p295 = pneg %p150
        %p296 = pneg %p179
        %p297 = pneg %p176
        %p298 = scmp.lt.s32.totalorder %s23, 1
        %s299 = scalar_select %p298, %s23, 1
        %s300 = smul.addr %s299, 2
        %s301 = scalar_lea.vmem %s5, %s300
        %s302 = smul.u32 32, %s24
        %p303 = scmp.lt.s32.totalorder %s302, 159
        %s304 = scalar_select %p303, %s302, 159
        %s305 = smul.addr %s304, 2
        %s306 = scalar_lea.vmem %s0, %s305
        %s307 = smul.u32 32, %s24
        %s308 = smul.u32 512, %s24
        %s309 = smul.u32 2, %s23
        %s310 = smul.u32 2, %s23
        %p311 = scmp.lt.s32.totalorder %s310, 3
        %s312 = scalar_select %p311, %s310, 3
        %s313 = scalar_lea.vmem %s2, %s312
        %s314 = smul.u32 2, %s23
        %s315 = smul.u32 32, %s23
        %p316 = scmp.lt.s32.totalorder %s315, 63
        %s317 = scalar_select %p316, %s315, 63
        %s318 = smul.addr %s317, 8
        %s319 = scalar_lea.vmem %s3, %s318
        %s320 = smul.u32 32, %s23
        %p321 = scmp.lt.s32.totalorder %s23, 1
        %s322 = scalar_select %p321, %s23, 1
        %s323 = smul.addr %s322, 2
        %s324 = scalar_lea.vmem %s5, %s323
        %p325 = scmp.eq.s32.totalorder %s24, 0
        // Predicated region
        $region45: #{lenet_forward.5} parent=39 // pred_check
          %p326 = pneg %p325
        $region46: #{lenet_forward.5} parent=39 // pred_check_branch
          %328 = sbr.rel (%p326) target = $region48
        $region47: #{lenet_forward.5} parent=39 // pred_region
          %329 = vst [vmem:[#allocation2] sm:$0xf] 0.0
        $region48: #{lenet_forward.5} parent=39 // pred_fallthru
          _
        %v330 = vld [vmem:[#allocation2] sm:$0xf]
        %v331 = vld [vmem:[%s306] sm:$0xff]
        %v332 = vld [vmem:[%s306 + $0x8] sm:$0xff]
        %v333 = vld [vmem:[%s306 + $0x10] sm:$0xff]
        %v334 = vld [vmem:[%s306 + $0x18] sm:$0xff]
        %v335 = vld [vmem:[%s306 + $0x20] sm:$0xff]
        %v336 = vld [vmem:[%s306 + $0x28] sm:$0xff]
        %v337 = vld [vmem:[%s306 + $0x30] sm:$0xff]
        %v338 = vld [vmem:[%s306 + $0x38] sm:$0xff]
        %v339 = vld [vmem:[%s262] sm:$0xff]
        %v340 = vld [vmem:[%s262 + $0x8] sm:$0xff]
        %v341 = vld [vmem:[%s262 + $0x10] sm:$0xff]
        %v342 = vld [vmem:[%s262 + $0x18] sm:$0xff]
        %v343 = vld [vmem:[%s262 + $0x20] sm:$0xff]
        %v344 = vld [vmem:[%s262 + $0x28] sm:$0xff]
        %v345 = vld [vmem:[%s262 + $0x30] sm:$0xff]
        %v346 = vld [vmem:[%s262 + $0x38] sm:$0xff]
        %v347 = vld [vmem:[%s262 + $0x40] sm:$0xff]
        %v348 = vld [vmem:[%s262 + $0x48] sm:$0xff]
        %v349 = vld [vmem:[%s262 + $0x50] sm:$0xff]
        %v350 = vld [vmem:[%s262 + $0x58] sm:$0xff]
        %v351 = vld [vmem:[%s262 + $0x60] sm:$0xff]
        %v352 = vld [vmem:[%s262 + $0x68] sm:$0xff]
        %v353 = vld [vmem:[%s262 + $0x70] sm:$0xff]
        %v354 = vld [vmem:[%s262 + $0x78] sm:$0xff]
        %v355 = vld [vmem:[%s262 + $0x80] sm:$0xff]
        %v356 = vld [vmem:[%s262 + $0x88] sm:$0xff]
        %v357 = vld [vmem:[%s262 + $0x90] sm:$0xff]
        %v358 = vld [vmem:[%s262 + $0x98] sm:$0xff]
        %v359 = vld [vmem:[%s262 + $0xa0] sm:$0xff]
        %v360 = vld [vmem:[%s262 + $0xa8] sm:$0xff]
        %v361 = vld [vmem:[%s262 + $0xb0] sm:$0xff]
        %v362 = vld [vmem:[%s262 + $0xb8] sm:$0xff]
        %v363 = vld [vmem:[%s262 + $0xc0] sm:$0xff]
        %v364 = vld [vmem:[%s262 + $0xc8] sm:$0xff]
        %v365 = vld [vmem:[%s262 + $0xd0] sm:$0xff]
        %v366 = vld [vmem:[%s262 + $0xd8] sm:$0xff]
        %v367 = vld [vmem:[%s262 + $0xe0] sm:$0xff]
        %v368 = vld [vmem:[%s262 + $0xe8] sm:$0xff]
        %v369 = vld [vmem:[%s262 + $0xf0] sm:$0xff]
        %v370 = vld [vmem:[%s262 + $0xf8] sm:$0xff]
        %v371 = vld [vmem:[%s262 + $0x100] sm:$0xff]
        %v372 = vld [vmem:[%s262 + $0x108] sm:$0xff]
        %v373 = vld [vmem:[%s262 + $0x110] sm:$0xff]
        %v374 = vld [vmem:[%s262 + $0x118] sm:$0xff]
        %v375 = vld [vmem:[%s262 + $0x120] sm:$0xff]
        %v376 = vld [vmem:[%s262 + $0x128] sm:$0xff]
        %v377 = vld [vmem:[%s262 + $0x130] sm:$0xff]
        %v378 = vld [vmem:[%s262 + $0x138] sm:$0xff]
        %v379 = vld [vmem:[%s262 + $0x140] sm:$0xff]
        %v380 = vld [vmem:[%s262 + $0x148] sm:$0xff]
        %v381 = vld [vmem:[%s262 + $0x150] sm:$0xff]
        %v382 = vld [vmem:[%s262 + $0x158] sm:$0xff]
        %v383 = vld [vmem:[%s262 + $0x160] sm:$0xff]
        %v384 = vld [vmem:[%s262 + $0x168] sm:$0xff]
        %v385 = vld [vmem:[%s262 + $0x170] sm:$0xff]
        %v386 = vld [vmem:[%s262 + $0x178] sm:$0xff]
        %v387 = vld [vmem:[%s262 + $0x180] sm:$0xff]
        %v388 = vld [vmem:[%s262 + $0x188] sm:$0xff]
        %v389 = vld [vmem:[%s262 + $0x190] sm:$0xff]
        %v390 = vld [vmem:[%s262 + $0x198] sm:$0xff]
        %v391 = vld [vmem:[%s262 + $0x1a0] sm:$0xff]
        %v392 = vld [vmem:[%s262 + $0x1a8] sm:$0xff]
        %v393 = vld [vmem:[%s262 + $0x1b0] sm:$0xff]
        %v394 = vld [vmem:[%s262 + $0x1b8] sm:$0xff]
        %v395 = vld [vmem:[%s262 + $0x1c0] sm:$0xff]
        %v396 = vld [vmem:[%s262 + $0x1c8] sm:$0xff]
        %v397 = vld [vmem:[%s262 + $0x1d0] sm:$0xff]
        %v398 = vld [vmem:[%s262 + $0x1d8] sm:$0xff]
        %v399 = vld [vmem:[%s262 + $0x1e0] sm:$0xff]
        %v400 = vld [vmem:[%s262 + $0x1e8] sm:$0xff]
        %v401 = vld [vmem:[%s262 + $0x1f0] sm:$0xff]
        %v402 = vld [vmem:[%s262 + $0x1f8] sm:$0xff]
        %v403 = vld [vmem:[%s262 + $0x200] sm:$0xff]
        %v404 = vld [vmem:[%s262 + $0x208] sm:$0xff]
        %v405 = vld [vmem:[%s262 + $0x210] sm:$0xff]
        %v406 = vld [vmem:[%s262 + $0x218] sm:$0xff]
        %v407 = vld [vmem:[%s262 + $0x220] sm:$0xff]
        %v408 = vld [vmem:[%s262 + $0x228] sm:$0xff]
        %v409 = vld [vmem:[%s262 + $0x230] sm:$0xff]
        %v410 = vld [vmem:[%s262 + $0x238] sm:$0xff]
        %v411 = vld [vmem:[%s262 + $0x240] sm:$0xff]
        %v412 = vld [vmem:[%s262 + $0x248] sm:$0xff]
        %v413 = vld [vmem:[%s262 + $0x250] sm:$0xff]
        %v414 = vld [vmem:[%s262 + $0x258] sm:$0xff]
        %v415 = vld [vmem:[%s262 + $0x260] sm:$0xff]
        %v416 = vld [vmem:[%s262 + $0x268] sm:$0xff]
        %v417 = vld [vmem:[%s262 + $0x270] sm:$0xff]
        %v418 = vld [vmem:[%s262 + $0x278] sm:$0xff]
        %v419 = vld [vmem:[%s262 + $0x280] sm:$0xff]
        %v420 = vld [vmem:[%s262 + $0x288] sm:$0xff]
        %v421 = vld [vmem:[%s262 + $0x290] sm:$0xff]
        %v422 = vld [vmem:[%s262 + $0x298] sm:$0xff]
        %v423 = vld [vmem:[%s262 + $0x2a0] sm:$0xff]
        %v424 = vld [vmem:[%s262 + $0x2a8] sm:$0xff]
        %v425 = vld [vmem:[%s262 + $0x2b0] sm:$0xff]
        %v426 = vld [vmem:[%s262 + $0x2b8] sm:$0xff]
        %v427 = vld [vmem:[%s262 + $0x2c0] sm:$0xff]
        %v428 = vld [vmem:[%s262 + $0x2c8] sm:$0xff]
        %v429 = vld [vmem:[%s262 + $0x2d0] sm:$0xff]
        %v430 = vld [vmem:[%s262 + $0x2d8] sm:$0xff]
        %v431 = vld [vmem:[%s262 + $0x2e0] sm:$0xff]
        %v432 = vld [vmem:[%s262 + $0x2e8] sm:$0xff]
        %v433 = vld [vmem:[%s262 + $0x2f0] sm:$0xff]
        %v434 = vld [vmem:[%s262 + $0x2f8] sm:$0xff]
        %v435 = vld [vmem:[%s262 + $0x300] sm:$0xff]
        %v436 = vld [vmem:[%s262 + $0x308] sm:$0xff]
        %v437 = vld [vmem:[%s262 + $0x310] sm:$0xff]
        %v438 = vld [vmem:[%s262 + $0x318] sm:$0xff]
        %v439 = vld [vmem:[%s262 + $0x320] sm:$0xff]
        %v440 = vld [vmem:[%s262 + $0x328] sm:$0xff]
        %v441 = vld [vmem:[%s262 + $0x330] sm:$0xff]
        %v442 = vld [vmem:[%s262 + $0x338] sm:$0xff]
        %v443 = vld [vmem:[%s262 + $0x340] sm:$0xff]
        %v444 = vld [vmem:[%s262 + $0x348] sm:$0xff]
        %v445 = vld [vmem:[%s262 + $0x350] sm:$0xff]
        %v446 = vld [vmem:[%s262 + $0x358] sm:$0xff]
        %v447 = vld [vmem:[%s262 + $0x360] sm:$0xff]
        %v448 = vld [vmem:[%s262 + $0x368] sm:$0xff]
        %v449 = vld [vmem:[%s262 + $0x370] sm:$0xff]
        %v450 = vld [vmem:[%s262 + $0x378] sm:$0xff]
        %v451 = vld [vmem:[%s262 + $0x380] sm:$0xff]
        %v452 = vld [vmem:[%s262 + $0x388] sm:$0xff]
        %v453 = vld [vmem:[%s262 + $0x390] sm:$0xff]
        %v454 = vld [vmem:[%s262 + $0x398] sm:$0xff]
        %v455 = vld [vmem:[%s262 + $0x3a0] sm:$0xff]
        %v456 = vld [vmem:[%s262 + $0x3a8] sm:$0xff]
        %v457 = vld [vmem:[%s262 + $0x3b0] sm:$0xff]
        %v458 = vld [vmem:[%s262 + $0x3b8] sm:$0xff]
        %v459 = vld [vmem:[%s262 + $0x3c0] sm:$0xff]
        %v460 = vld [vmem:[%s262 + $0x3c8] sm:$0xff]
        %v461 = vld [vmem:[%s262 + $0x3d0] sm:$0xff]
        %v462 = vld [vmem:[%s262 + $0x3d8] sm:$0xff]
        %v463 = vld [vmem:[%s262 + $0x3e0] sm:$0xff]
        %v464 = vld [vmem:[%s262 + $0x3e8] sm:$0xff]
        %v465 = vld [vmem:[%s262 + $0x3f0] sm:$0xff]
        %v466 = vld [vmem:[%s262 + $0x3f8] sm:$0xff]
        %v467 = vld [vmem:[%s262 + $0x400] sm:$0xff]
        %v468 = vld [vmem:[%s262 + $0x408] sm:$0xff]
        %v469 = vld [vmem:[%s262 + $0x410] sm:$0xff]
        %v470 = vld [vmem:[%s262 + $0x418] sm:$0xff]
        %v471 = vld [vmem:[%s262 + $0x420] sm:$0xff]
        %v472 = vld [vmem:[%s262 + $0x428] sm:$0xff]
        %v473 = vld [vmem:[%s262 + $0x430] sm:$0xff]
        %v474 = vld [vmem:[%s262 + $0x438] sm:$0xff]
        %v475 = vld [vmem:[%s262 + $0x440] sm:$0xff]
        %v476 = vld [vmem:[%s262 + $0x448] sm:$0xff]
        %v477 = vld [vmem:[%s262 + $0x450] sm:$0xff]
        %v478 = vld [vmem:[%s262 + $0x458] sm:$0xff]
        %v479 = vld [vmem:[%s262 + $0x460] sm:$0xff]
        %v480 = vld [vmem:[%s262 + $0x468] sm:$0xff]
        %v481 = vld [vmem:[%s262 + $0x470] sm:$0xff]
        %v482 = vld [vmem:[%s262 + $0x478] sm:$0xff]
        %v483 = vld [vmem:[%s262 + $0x480] sm:$0xff]
        %v484 = vld [vmem:[%s262 + $0x488] sm:$0xff]
        %v485 = vld [vmem:[%s262 + $0x490] sm:$0xff]
        %v486 = vld [vmem:[%s262 + $0x498] sm:$0xff]
        %v487 = vld [vmem:[%s262 + $0x4a0] sm:$0xff]
        %v488 = vld [vmem:[%s262 + $0x4a8] sm:$0xff]
        %v489 = vld [vmem:[%s262 + $0x4b0] sm:$0xff]
        %v490 = vld [vmem:[%s262 + $0x4b8] sm:$0xff]
        %v491 = vld [vmem:[%s262 + $0x4c0] sm:$0xff]
        %v492 = vld [vmem:[%s262 + $0x4c8] sm:$0xff]
        %v493 = vld [vmem:[%s262 + $0x4d0] sm:$0xff]
        %v494 = vld [vmem:[%s262 + $0x4d8] sm:$0xff]
        %v495 = vld [vmem:[%s262 + $0x4e0] sm:$0xff]
        %v496 = vld [vmem:[%s262 + $0x4e8] sm:$0xff]
        %v497 = vld [vmem:[%s262 + $0x4f0] sm:$0xff]
        %v498 = vld [vmem:[%s262 + $0x4f8] sm:$0xff]
        %v499 = vld [vmem:[%s262 + $0x500] sm:$0xff]
        %v500 = vld [vmem:[%s262 + $0x508] sm:$0xff]
        %v501 = vld [vmem:[%s262 + $0x510] sm:$0xff]
        %v502 = vld [vmem:[%s262 + $0x518] sm:$0xff]
        %v503 = vld [vmem:[%s262 + $0x520] sm:$0xff]
        %v504 = vld [vmem:[%s262 + $0x528] sm:$0xff]
        %v505 = vld [vmem:[%s262 + $0x530] sm:$0xff]
        %v506 = vld [vmem:[%s262 + $0x538] sm:$0xff]
        %v507 = vld [vmem:[%s262 + $0x540] sm:$0xff]
        %v508 = vld [vmem:[%s262 + $0x548] sm:$0xff]
        %v509 = vld [vmem:[%s262 + $0x550] sm:$0xff]
        %v510 = vld [vmem:[%s262 + $0x558] sm:$0xff]
        %v511 = vld [vmem:[%s262 + $0x560] sm:$0xff]
        %v512 = vld [vmem:[%s262 + $0x568] sm:$0xff]
        %v513 = vld [vmem:[%s262 + $0x570] sm:$0xff]
        %v514 = vld [vmem:[%s262 + $0x578] sm:$0xff]
        %v515 = vld [vmem:[%s262 + $0x580] sm:$0xff]
        %v516 = vld [vmem:[%s262 + $0x588] sm:$0xff]
        %v517 = vld [vmem:[%s262 + $0x590] sm:$0xff]
        %v518 = vld [vmem:[%s262 + $0x598] sm:$0xff]
        %v519 = vld [vmem:[%s262 + $0x5a0] sm:$0xff]
        %v520 = vld [vmem:[%s262 + $0x5a8] sm:$0xff]
        %v521 = vld [vmem:[%s262 + $0x5b0] sm:$0xff]
        %v522 = vld [vmem:[%s262 + $0x5b8] sm:$0xff]
        %v523 = vld [vmem:[%s262 + $0x5c0] sm:$0xff]
        %v524 = vld [vmem:[%s262 + $0x5c8] sm:$0xff]
        %v525 = vld [vmem:[%s262 + $0x5d0] sm:$0xff]
        %v526 = vld [vmem:[%s262 + $0x5d8] sm:$0xff]
        %v527 = vld [vmem:[%s262 + $0x5e0] sm:$0xff]
        %v528 = vld [vmem:[%s262 + $0x5e8] sm:$0xff]
        %v529 = vld [vmem:[%s262 + $0x5f0] sm:$0xff]
        %v530 = vld [vmem:[%s262 + $0x5f8] sm:$0xff]
        %v531 = vld [vmem:[%s262 + $0x600] sm:$0xff]
        %v532 = vld [vmem:[%s262 + $0x608] sm:$0xff]
        %v533 = vld [vmem:[%s262 + $0x610] sm:$0xff]
        %v534 = vld [vmem:[%s262 + $0x618] sm:$0xff]
        %v535 = vld [vmem:[%s262 + $0x620] sm:$0xff]
        %v536 = vld [vmem:[%s262 + $0x628] sm:$0xff]
        %v537 = vld [vmem:[%s262 + $0x630] sm:$0xff]
        %v538 = vld [vmem:[%s262 + $0x638] sm:$0xff]
        %v539 = vld [vmem:[%s262 + $0x640] sm:$0xff]
        %v540 = vld [vmem:[%s262 + $0x648] sm:$0xff]
        %v541 = vld [vmem:[%s262 + $0x650] sm:$0xff]
        %v542 = vld [vmem:[%s262 + $0x658] sm:$0xff]
        %v543 = vld [vmem:[%s262 + $0x660] sm:$0xff]
        %v544 = vld [vmem:[%s262 + $0x668] sm:$0xff]
        %v545 = vld [vmem:[%s262 + $0x670] sm:$0xff]
        %v546 = vld [vmem:[%s262 + $0x678] sm:$0xff]
        %v547 = vld [vmem:[%s262 + $0x680] sm:$0xff]
        %v548 = vld [vmem:[%s262 + $0x688] sm:$0xff]
        %v549 = vld [vmem:[%s262 + $0x690] sm:$0xff]
        %v550 = vld [vmem:[%s262 + $0x698] sm:$0xff]
        %v551 = vld [vmem:[%s262 + $0x6a0] sm:$0xff]
        %v552 = vld [vmem:[%s262 + $0x6a8] sm:$0xff]
        %v553 = vld [vmem:[%s262 + $0x6b0] sm:$0xff]
        %v554 = vld [vmem:[%s262 + $0x6b8] sm:$0xff]
        %v555 = vld [vmem:[%s262 + $0x6c0] sm:$0xff]
        %v556 = vld [vmem:[%s262 + $0x6c8] sm:$0xff]
        %v557 = vld [vmem:[%s262 + $0x6d0] sm:$0xff]
        %v558 = vld [vmem:[%s262 + $0x6d8] sm:$0xff]
        %v559 = vld [vmem:[%s262 + $0x6e0] sm:$0xff]
        %v560 = vld [vmem:[%s262 + $0x6e8] sm:$0xff]
        %v561 = vld [vmem:[%s262 + $0x6f0] sm:$0xff]
        %v562 = vld [vmem:[%s262 + $0x6f8] sm:$0xff]
        %v563 = vld [vmem:[%s262 + $0x700] sm:$0xff]
        %v564 = vld [vmem:[%s262 + $0x708] sm:$0xff]
        %v565 = vld [vmem:[%s262 + $0x710] sm:$0xff]
        %v566 = vld [vmem:[%s262 + $0x718] sm:$0xff]
        %v567 = vld [vmem:[%s262 + $0x720] sm:$0xff]
        %v568 = vld [vmem:[%s262 + $0x728] sm:$0xff]
        %v569 = vld [vmem:[%s262 + $0x730] sm:$0xff]
        %v570 = vld [vmem:[%s262 + $0x738] sm:$0xff]
        %v571 = vld [vmem:[%s262 + $0x740] sm:$0xff]
        %v572 = vld [vmem:[%s262 + $0x748] sm:$0xff]
        %v573 = vld [vmem:[%s262 + $0x750] sm:$0xff]
        %v574 = vld [vmem:[%s262 + $0x758] sm:$0xff]
        %v575 = vld [vmem:[%s262 + $0x760] sm:$0xff]
        %v576 = vld [vmem:[%s262 + $0x768] sm:$0xff]
        %v577 = vld [vmem:[%s262 + $0x770] sm:$0xff]
        %v578 = vld [vmem:[%s262 + $0x778] sm:$0xff]
        %v579 = vld [vmem:[%s262 + $0x780] sm:$0xff]
        %v580 = vld [vmem:[%s262 + $0x788] sm:$0xff]
        %v581 = vld [vmem:[%s262 + $0x790] sm:$0xff]
        %v582 = vld [vmem:[%s262 + $0x798] sm:$0xff]
        %v583 = vld [vmem:[%s262 + $0x7a0] sm:$0xff]
        %v584 = vld [vmem:[%s262 + $0x7a8] sm:$0xff]
        %v585 = vld [vmem:[%s262 + $0x7b0] sm:$0xff]
        %v586 = vld [vmem:[%s262 + $0x7b8] sm:$0xff]
        %v587 = vld [vmem:[%s262 + $0x7c0] sm:$0xff]
        %v588 = vld [vmem:[%s262 + $0x7c8] sm:$0xff]
        %v589 = vld [vmem:[%s262 + $0x7d0] sm:$0xff]
        %v590 = vld [vmem:[%s262 + $0x7d8] sm:$0xff]
        %v591 = vld [vmem:[%s262 + $0x7e0] sm:$0xff]
        %v592 = vld [vmem:[%s262 + $0x7e8] sm:$0xff]
        %v593 = vld [vmem:[%s262 + $0x7f0] sm:$0xff]
        %v594 = vld [vmem:[%s262 + $0x7f8] sm:$0xff]
        %v595 = vld [vmem:[%s262 + $0x800] sm:$0xff]
        %v596 = vld [vmem:[%s262 + $0x808] sm:$0xff]
        %v597 = vld [vmem:[%s262 + $0x810] sm:$0xff]
        %v598 = vld [vmem:[%s262 + $0x818] sm:$0xff]
        %v599 = vld [vmem:[%s262 + $0x820] sm:$0xff]
        %v600 = vld [vmem:[%s262 + $0x828] sm:$0xff]
        %v601 = vld [vmem:[%s262 + $0x830] sm:$0xff]
        %v602 = vld [vmem:[%s262 + $0x838] sm:$0xff]
        %v603 = vld [vmem:[%s262 + $0x840] sm:$0xff]
        %v604 = vld [vmem:[%s262 + $0x848] sm:$0xff]
        %v605 = vld [vmem:[%s262 + $0x850] sm:$0xff]
        %v606 = vld [vmem:[%s262 + $0x858] sm:$0xff]
        %v607 = vld [vmem:[%s262 + $0x860] sm:$0xff]
        %v608 = vld [vmem:[%s262 + $0x868] sm:$0xff]
        %v609 = vld [vmem:[%s262 + $0x870] sm:$0xff]
        %v610 = vld [vmem:[%s262 + $0x878] sm:$0xff]
        %v611 = vld [vmem:[%s262 + $0x880] sm:$0xff]
        %v612 = vld [vmem:[%s262 + $0x888] sm:$0xff]
        %v613 = vld [vmem:[%s262 + $0x890] sm:$0xff]
        %v614 = vld [vmem:[%s262 + $0x898] sm:$0xff]
        %v615 = vld [vmem:[%s262 + $0x8a0] sm:$0xff]
        %v616 = vld [vmem:[%s262 + $0x8a8] sm:$0xff]
        %v617 = vld [vmem:[%s262 + $0x8b0] sm:$0xff]
        %v618 = vld [vmem:[%s262 + $0x8b8] sm:$0xff]
        %v619 = vld [vmem:[%s262 + $0x8c0] sm:$0xff]
        %v620 = vld [vmem:[%s262 + $0x8c8] sm:$0xff]
        %v621 = vld [vmem:[%s262 + $0x8d0] sm:$0xff]
        %v622 = vld [vmem:[%s262 + $0x8d8] sm:$0xff]
        %v623 = vld [vmem:[%s262 + $0x8e0] sm:$0xff]
        %v624 = vld [vmem:[%s262 + $0x8e8] sm:$0xff]
        %v625 = vld [vmem:[%s262 + $0x8f0] sm:$0xff]
        %v626 = vld [vmem:[%s262 + $0x8f8] sm:$0xff]
        %v627 = vld [vmem:[%s262 + $0x900] sm:$0xff]
        %v628 = vld [vmem:[%s262 + $0x908] sm:$0xff]
        %v629 = vld [vmem:[%s262 + $0x910] sm:$0xff]
        %v630 = vld [vmem:[%s262 + $0x918] sm:$0xff]
        %v631 = vld [vmem:[%s262 + $0x920] sm:$0xff]
        %v632 = vld [vmem:[%s262 + $0x928] sm:$0xff]
        %v633 = vld [vmem:[%s262 + $0x930] sm:$0xff]
        %v634 = vld [vmem:[%s262 + $0x938] sm:$0xff]
        %v635 = vld [vmem:[%s262 + $0x940] sm:$0xff]
        %v636 = vld [vmem:[%s262 + $0x948] sm:$0xff]
        %v637 = vld [vmem:[%s262 + $0x950] sm:$0xff]
        %v638 = vld [vmem:[%s262 + $0x958] sm:$0xff]
        %v639 = vld [vmem:[%s262 + $0x960] sm:$0xff]
        %v640 = vld [vmem:[%s262 + $0x968] sm:$0xff]
        %v641 = vld [vmem:[%s262 + $0x970] sm:$0xff]
        %v642 = vld [vmem:[%s262 + $0x978] sm:$0xff]
        %v643 = vld [vmem:[%s262 + $0x980] sm:$0xff]
        %v644 = vld [vmem:[%s262 + $0x988] sm:$0xff]
        %v645 = vld [vmem:[%s262 + $0x990] sm:$0xff]
        %v646 = vld [vmem:[%s262 + $0x998] sm:$0xff]
        %v647 = vld [vmem:[%s262 + $0x9a0] sm:$0xff]
        %v648 = vld [vmem:[%s262 + $0x9a8] sm:$0xff]
        %v649 = vld [vmem:[%s262 + $0x9b0] sm:$0xff]
        %v650 = vld [vmem:[%s262 + $0x9b8] sm:$0xff]
        %v651 = vld [vmem:[%s262 + $0x9c0] sm:$0xff]
        %v652 = vld [vmem:[%s262 + $0x9c8] sm:$0xff]
        %v653 = vld [vmem:[%s262 + $0x9d0] sm:$0xff]
        %v654 = vld [vmem:[%s262 + $0x9d8] sm:$0xff]
        %v655 = vld [vmem:[%s262 + $0x9e0] sm:$0xff]
        %v656 = vld [vmem:[%s262 + $0x9e8] sm:$0xff]
        %v657 = vld [vmem:[%s262 + $0x9f0] sm:$0xff]
        %v658 = vld [vmem:[%s262 + $0x9f8] sm:$0xff]
        %v659 = vld [vmem:[%s262 + $0xa00] sm:$0xff]
        %v660 = vld [vmem:[%s262 + $0xa08] sm:$0xff]
        %v661 = vld [vmem:[%s262 + $0xa10] sm:$0xff]
        %v662 = vld [vmem:[%s262 + $0xa18] sm:$0xff]
        %v663 = vld [vmem:[%s262 + $0xa20] sm:$0xff]
        %v664 = vld [vmem:[%s262 + $0xa28] sm:$0xff]
        %v665 = vld [vmem:[%s262 + $0xa30] sm:$0xff]
        %v666 = vld [vmem:[%s262 + $0xa38] sm:$0xff]
        %v667 = vld [vmem:[%s262 + $0xa40] sm:$0xff]
        %v668 = vld [vmem:[%s262 + $0xa48] sm:$0xff]
        %v669 = vld [vmem:[%s262 + $0xa50] sm:$0xff]
        %v670 = vld [vmem:[%s262 + $0xa58] sm:$0xff]
        %v671 = vld [vmem:[%s262 + $0xa60] sm:$0xff]
        %v672 = vld [vmem:[%s262 + $0xa68] sm:$0xff]
        %v673 = vld [vmem:[%s262 + $0xa70] sm:$0xff]
        %v674 = vld [vmem:[%s262 + $0xa78] sm:$0xff]
        %v675 = vld [vmem:[%s262 + $0xa80] sm:$0xff]
        %v676 = vld [vmem:[%s262 + $0xa88] sm:$0xff]
        %v677 = vld [vmem:[%s262 + $0xa90] sm:$0xff]
        %v678 = vld [vmem:[%s262 + $0xa98] sm:$0xff]
        %v679 = vld [vmem:[%s262 + $0xaa0] sm:$0xff]
        %v680 = vld [vmem:[%s262 + $0xaa8] sm:$0xff]
        %v681 = vld [vmem:[%s262 + $0xab0] sm:$0xff]
        %v682 = vld [vmem:[%s262 + $0xab8] sm:$0xff]
        %v683 = vld [vmem:[%s262 + $0xac0] sm:$0xff]
        %v684 = vld [vmem:[%s262 + $0xac8] sm:$0xff]
        %v685 = vld [vmem:[%s262 + $0xad0] sm:$0xff]
        %v686 = vld [vmem:[%s262 + $0xad8] sm:$0xff]
        %v687 = vld [vmem:[%s262 + $0xae0] sm:$0xff]
        %v688 = vld [vmem:[%s262 + $0xae8] sm:$0xff]
        %v689 = vld [vmem:[%s262 + $0xaf0] sm:$0xff]
        %v690 = vld [vmem:[%s262 + $0xaf8] sm:$0xff]
        %v691 = vld [vmem:[%s262 + $0xb00] sm:$0xff]
        %v692 = vld [vmem:[%s262 + $0xb08] sm:$0xff]
        %v693 = vld [vmem:[%s262 + $0xb10] sm:$0xff]
        %v694 = vld [vmem:[%s262 + $0xb18] sm:$0xff]
        %v695 = vld [vmem:[%s262 + $0xb20] sm:$0xff]
        %v696 = vld [vmem:[%s262 + $0xb28] sm:$0xff]
        %v697 = vld [vmem:[%s262 + $0xb30] sm:$0xff]
        %v698 = vld [vmem:[%s262 + $0xb38] sm:$0xff]
        %v699 = vld [vmem:[%s262 + $0xb40] sm:$0xff]
        %v700 = vld [vmem:[%s262 + $0xb48] sm:$0xff]
        %v701 = vld [vmem:[%s262 + $0xb50] sm:$0xff]
        %v702 = vld [vmem:[%s262 + $0xb58] sm:$0xff]
        %v703 = vld [vmem:[%s262 + $0xb60] sm:$0xff]
        %v704 = vld [vmem:[%s262 + $0xb68] sm:$0xff]
        %v705 = vld [vmem:[%s262 + $0xb70] sm:$0xff]
        %v706 = vld [vmem:[%s262 + $0xb78] sm:$0xff]
        %v707 = vld [vmem:[%s262 + $0xb80] sm:$0xff]
        %v708 = vld [vmem:[%s262 + $0xb88] sm:$0xff]
        %v709 = vld [vmem:[%s262 + $0xb90] sm:$0xff]
        %v710 = vld [vmem:[%s262 + $0xb98] sm:$0xff]
        %v711 = vld [vmem:[%s262 + $0xba0] sm:$0xff]
        %v712 = vld [vmem:[%s262 + $0xba8] sm:$0xff]
        %v713 = vld [vmem:[%s262 + $0xbb0] sm:$0xff]
        %v714 = vld [vmem:[%s262 + $0xbb8] sm:$0xff]
        %v715 = vld [vmem:[%s262 + $0xbc0] sm:$0xff]
        %v716 = vld [vmem:[%s262 + $0xbc8] sm:$0xff]
        %v717 = vld [vmem:[%s262 + $0xbd0] sm:$0xff]
        %v718 = vld [vmem:[%s262 + $0xbd8] sm:$0xff]
        %v719 = vld [vmem:[%s262 + $0xbe0] sm:$0xff]
        %v720 = vld [vmem:[%s262 + $0xbe8] sm:$0xff]
        %v721 = vld [vmem:[%s262 + $0xbf0] sm:$0xff]
        %v722 = vld [vmem:[%s262 + $0xbf8] sm:$0xff]
        %v723 = vld [vmem:[%s262 + $0xc00] sm:$0xff]
        %v724 = vld [vmem:[%s262 + $0xc08] sm:$0xff]
        %v725 = vld [vmem:[%s262 + $0xc10] sm:$0xff]
        %v726 = vld [vmem:[%s262 + $0xc18] sm:$0xff]
        %v727 = vld [vmem:[%s262 + $0xc20] sm:$0xff]
        %v728 = vld [vmem:[%s262 + $0xc28] sm:$0xff]
        %v729 = vld [vmem:[%s262 + $0xc30] sm:$0xff]
        %v730 = vld [vmem:[%s262 + $0xc38] sm:$0xff]
        %v731 = vld [vmem:[%s262 + $0xc40] sm:$0xff]
        %v732 = vld [vmem:[%s262 + $0xc48] sm:$0xff]
        %v733 = vld [vmem:[%s262 + $0xc50] sm:$0xff]
        %v734 = vld [vmem:[%s262 + $0xc58] sm:$0xff]
        %v735 = vld [vmem:[%s262 + $0xc60] sm:$0xff]
        %v736 = vld [vmem:[%s262 + $0xc68] sm:$0xff]
        %v737 = vld [vmem:[%s262 + $0xc70] sm:$0xff]
        %v738 = vld [vmem:[%s262 + $0xc78] sm:$0xff]
        %v739 = vld [vmem:[%s262 + $0xc80] sm:$0xff]
        %v740 = vld [vmem:[%s262 + $0xc88] sm:$0xff]
        %v741 = vld [vmem:[%s262 + $0xc90] sm:$0xff]
        %v742 = vld [vmem:[%s262 + $0xc98] sm:$0xff]
        %v743 = vld [vmem:[%s262 + $0xca0] sm:$0xff]
        %v744 = vld [vmem:[%s262 + $0xca8] sm:$0xff]
        %v745 = vld [vmem:[%s262 + $0xcb0] sm:$0xff]
        %v746 = vld [vmem:[%s262 + $0xcb8] sm:$0xff]
        %v747 = vld [vmem:[%s262 + $0xcc0] sm:$0xff]
        %v748 = vld [vmem:[%s262 + $0xcc8] sm:$0xff]
        %v749 = vld [vmem:[%s262 + $0xcd0] sm:$0xff]
        %v750 = vld [vmem:[%s262 + $0xcd8] sm:$0xff]
        %v751 = vld [vmem:[%s262 + $0xce0] sm:$0xff]
        %v752 = vld [vmem:[%s262 + $0xce8] sm:$0xff]
        %v753 = vld [vmem:[%s262 + $0xcf0] sm:$0xff]
        %v754 = vld [vmem:[%s262 + $0xcf8] sm:$0xff]
        %v755 = vld [vmem:[%s262 + $0xd00] sm:$0xff]
        %v756 = vld [vmem:[%s262 + $0xd08] sm:$0xff]
        %v757 = vld [vmem:[%s262 + $0xd10] sm:$0xff]
        %v758 = vld [vmem:[%s262 + $0xd18] sm:$0xff]
        %v759 = vld [vmem:[%s262 + $0xd20] sm:$0xff]
        %v760 = vld [vmem:[%s262 + $0xd28] sm:$0xff]
        %v761 = vld [vmem:[%s262 + $0xd30] sm:$0xff]
        %v762 = vld [vmem:[%s262 + $0xd38] sm:$0xff]
        %v763 = vld [vmem:[%s262 + $0xd40] sm:$0xff]
        %v764 = vld [vmem:[%s262 + $0xd48] sm:$0xff]
        %v765 = vld [vmem:[%s262 + $0xd50] sm:$0xff]
        %v766 = vld [vmem:[%s262 + $0xd58] sm:$0xff]
        %v767 = vld [vmem:[%s262 + $0xd60] sm:$0xff]
        %v768 = vld [vmem:[%s262 + $0xd68] sm:$0xff]
        %v769 = vld [vmem:[%s262 + $0xd70] sm:$0xff]
        %v770 = vld [vmem:[%s262 + $0xd78] sm:$0xff]
        %v771 = vld [vmem:[%s262 + $0xd80] sm:$0xff]
        %v772 = vld [vmem:[%s262 + $0xd88] sm:$0xff]
        %v773 = vld [vmem:[%s262 + $0xd90] sm:$0xff]
        %v774 = vld [vmem:[%s262 + $0xd98] sm:$0xff]
        %v775 = vld [vmem:[%s262 + $0xda0] sm:$0xff]
        %v776 = vld [vmem:[%s262 + $0xda8] sm:$0xff]
        %v777 = vld [vmem:[%s262 + $0xdb0] sm:$0xff]
        %v778 = vld [vmem:[%s262 + $0xdb8] sm:$0xff]
        %v779 = vld [vmem:[%s262 + $0xdc0] sm:$0xff]
        %v780 = vld [vmem:[%s262 + $0xdc8] sm:$0xff]
        %v781 = vld [vmem:[%s262 + $0xdd0] sm:$0xff]
        %v782 = vld [vmem:[%s262 + $0xdd8] sm:$0xff]
        %v783 = vld [vmem:[%s262 + $0xde0] sm:$0xff]
        %v784 = vld [vmem:[%s262 + $0xde8] sm:$0xff]
        %v785 = vld [vmem:[%s262 + $0xdf0] sm:$0xff]
        %v786 = vld [vmem:[%s262 + $0xdf8] sm:$0xff]
        %v787 = vld [vmem:[%s262 + $0xe00] sm:$0xff]
        %v788 = vld [vmem:[%s262 + $0xe08] sm:$0xff]
        %v789 = vld [vmem:[%s262 + $0xe10] sm:$0xff]
        %v790 = vld [vmem:[%s262 + $0xe18] sm:$0xff]
        %v791 = vld [vmem:[%s262 + $0xe20] sm:$0xff]
        %v792 = vld [vmem:[%s262 + $0xe28] sm:$0xff]
        %v793 = vld [vmem:[%s262 + $0xe30] sm:$0xff]
        %v794 = vld [vmem:[%s262 + $0xe38] sm:$0xff]
        %v795 = vld [vmem:[%s262 + $0xe40] sm:$0xff]
        %v796 = vld [vmem:[%s262 + $0xe48] sm:$0xff]
        %v797 = vld [vmem:[%s262 + $0xe50] sm:$0xff]
        %v798 = vld [vmem:[%s262 + $0xe58] sm:$0xff]
        %v799 = vld [vmem:[%s262 + $0xe60] sm:$0xff]
        %v800 = vld [vmem:[%s262 + $0xe68] sm:$0xff]
        %v801 = vld [vmem:[%s262 + $0xe70] sm:$0xff]
        %v802 = vld [vmem:[%s262 + $0xe78] sm:$0xff]
        %v803 = vld [vmem:[%s262 + $0xe80] sm:$0xff]
        %v804 = vld [vmem:[%s262 + $0xe88] sm:$0xff]
        %v805 = vld [vmem:[%s262 + $0xe90] sm:$0xff]
        %v806 = vld [vmem:[%s262 + $0xe98] sm:$0xff]
        %v807 = vld [vmem:[%s262 + $0xea0] sm:$0xff]
        %v808 = vld [vmem:[%s262 + $0xea8] sm:$0xff]
        %v809 = vld [vmem:[%s262 + $0xeb0] sm:$0xff]
        %v810 = vld [vmem:[%s262 + $0xeb8] sm:$0xff]
        %v811 = vld [vmem:[%s262 + $0xec0] sm:$0xff]
        %v812 = vld [vmem:[%s262 + $0xec8] sm:$0xff]
        %v813 = vld [vmem:[%s262 + $0xed0] sm:$0xff]
        %v814 = vld [vmem:[%s262 + $0xed8] sm:$0xff]
        %v815 = vld [vmem:[%s262 + $0xee0] sm:$0xff]
        %v816 = vld [vmem:[%s262 + $0xee8] sm:$0xff]
        %v817 = vld [vmem:[%s262 + $0xef0] sm:$0xff]
        %v818 = vld [vmem:[%s262 + $0xef8] sm:$0xff]
        %v819 = vld [vmem:[%s262 + $0xf00] sm:$0xff]
        %v820 = vld [vmem:[%s262 + $0xf08] sm:$0xff]
        %v821 = vld [vmem:[%s262 + $0xf10] sm:$0xff]
        %v822 = vld [vmem:[%s262 + $0xf18] sm:$0xff]
        %v823 = vld [vmem:[%s262 + $0xf20] sm:$0xff]
        %v824 = vld [vmem:[%s262 + $0xf28] sm:$0xff]
        %v825 = vld [vmem:[%s262 + $0xf30] sm:$0xff]
        %v826 = vld [vmem:[%s262 + $0xf38] sm:$0xff]
        %v827 = vld [vmem:[%s262 + $0xf40] sm:$0xff]
        %v828 = vld [vmem:[%s262 + $0xf48] sm:$0xff]
        %v829 = vld [vmem:[%s262 + $0xf50] sm:$0xff]
        %v830 = vld [vmem:[%s262 + $0xf58] sm:$0xff]
        %v831 = vld [vmem:[%s262 + $0xf60] sm:$0xff]
        %v832 = vld [vmem:[%s262 + $0xf68] sm:$0xff]
        %v833 = vld [vmem:[%s262 + $0xf70] sm:$0xff]
        %v834 = vld [vmem:[%s262 + $0xf78] sm:$0xff]
        %v835 = vld [vmem:[%s262 + $0xf80] sm:$0xff]
        %v836 = vld [vmem:[%s262 + $0xf88] sm:$0xff]
        %v837 = vld [vmem:[%s262 + $0xf90] sm:$0xff]
        %v838 = vld [vmem:[%s262 + $0xf98] sm:$0xff]
        %v839 = vld [vmem:[%s262 + $0xfa0] sm:$0xff]
        %v840 = vld [vmem:[%s262 + $0xfa8] sm:$0xff]
        %v841 = vld [vmem:[%s262 + $0xfb0] sm:$0xff]
        %v842 = vld [vmem:[%s262 + $0xfb8] sm:$0xff]
        %v843 = vld [vmem:[%s262 + $0xfc0] sm:$0xff]
        %v844 = vld [vmem:[%s262 + $0xfc8] sm:$0xff]
        %v845 = vld [vmem:[%s262 + $0xfd0] sm:$0xff]
        %v846 = vld [vmem:[%s262 + $0xfd8] sm:$0xff]
        %v847 = vld [vmem:[%s262 + $0xfe0] sm:$0xff]
        %v848 = vld [vmem:[%s262 + $0xfe8] sm:$0xff]
        %v849 = vld [vmem:[%s262 + $0xff0] sm:$0xff]
        %v850 = vld [vmem:[%s262 + $0xff8] sm:$0xff]
        %v851 = vld [vmem:[%s262 + $0x1000] sm:$0xff]
        %v852 = vld [vmem:[%s262 + $0x1008] sm:$0xff]
        %v853 = vld [vmem:[%s262 + $0x1010] sm:$0xff]
        %v854 = vld [vmem:[%s262 + $0x1018] sm:$0xff]
        %v855 = vld [vmem:[%s262 + $0x1020] sm:$0xff]
        %v856 = vld [vmem:[%s262 + $0x1028] sm:$0xff]
        %v857 = vld [vmem:[%s262 + $0x1030] sm:$0xff]
        %v858 = vld [vmem:[%s262 + $0x1038] sm:$0xff]
        %v859 = vld [vmem:[%s262 + $0x1040] sm:$0xff]
        %v860 = vld [vmem:[%s262 + $0x1048] sm:$0xff]
        %v861 = vld [vmem:[%s262 + $0x1050] sm:$0xff]
        %v862 = vld [vmem:[%s262 + $0x1058] sm:$0xff]
        %v863 = vld [vmem:[%s262 + $0x1060] sm:$0xff]
        %v864 = vld [vmem:[%s262 + $0x1068] sm:$0xff]
        %v865 = vld [vmem:[%s262 + $0x1070] sm:$0xff]
        %v866 = vld [vmem:[%s262 + $0x1078] sm:$0xff]
        %v867 = vld [vmem:[%s262 + $0x1080] sm:$0xff]
        %v868 = vld [vmem:[%s262 + $0x1088] sm:$0xff]
        %v869 = vld [vmem:[%s262 + $0x1090] sm:$0xff]
        %v870 = vld [vmem:[%s262 + $0x1098] sm:$0xff]
        %v871 = vld [vmem:[%s262 + $0x10a0] sm:$0xff]
        %v872 = vld [vmem:[%s262 + $0x10a8] sm:$0xff]
        %v873 = vld [vmem:[%s262 + $0x10b0] sm:$0xff]
        %v874 = vld [vmem:[%s262 + $0x10b8] sm:$0xff]
        %v875 = vld [vmem:[%s262 + $0x10c0] sm:$0xff]
        %v876 = vld [vmem:[%s262 + $0x10c8] sm:$0xff]
        %v877 = vld [vmem:[%s262 + $0x10d0] sm:$0xff]
        %v878 = vld [vmem:[%s262 + $0x10d8] sm:$0xff]
        %v879 = vld [vmem:[%s262 + $0x10e0] sm:$0xff]
        %v880 = vld [vmem:[%s262 + $0x10e8] sm:$0xff]
        %v881 = vld [vmem:[%s262 + $0x10f0] sm:$0xff]
        %v882 = vld [vmem:[%s262 + $0x10f8] sm:$0xff]
        %v883 = vld [vmem:[%s262 + $0x1100] sm:$0xff]
        %v884 = vld [vmem:[%s262 + $0x1108] sm:$0xff]
        %v885 = vld [vmem:[%s262 + $0x1110] sm:$0xff]
        %v886 = vld [vmem:[%s262 + $0x1118] sm:$0xff]
        %v887 = vld [vmem:[%s262 + $0x1120] sm:$0xff]
        %v888 = vld [vmem:[%s262 + $0x1128] sm:$0xff]
        %v889 = vld [vmem:[%s262 + $0x1130] sm:$0xff]
        %v890 = vld [vmem:[%s262 + $0x1138] sm:$0xff]
        %v891 = vld [vmem:[%s262 + $0x1140] sm:$0xff]
        %v892 = vld [vmem:[%s262 + $0x1148] sm:$0xff]
        %v893 = vld [vmem:[%s262 + $0x1150] sm:$0xff]
        %v894 = vld [vmem:[%s262 + $0x1158] sm:$0xff]
        %v895 = vld [vmem:[%s262 + $0x1160] sm:$0xff]
        %v896 = vld [vmem:[%s262 + $0x1168] sm:$0xff]
        %v897 = vld [vmem:[%s262 + $0x1170] sm:$0xff]
        %v898 = vld [vmem:[%s262 + $0x1178] sm:$0xff]
        %v899 = vld [vmem:[%s262 + $0x1180] sm:$0xff]
        %v900 = vld [vmem:[%s262 + $0x1188] sm:$0xff]
        %v901 = vld [vmem:[%s262 + $0x1190] sm:$0xff]
        %v902 = vld [vmem:[%s262 + $0x1198] sm:$0xff]
        %v903 = vld [vmem:[%s262 + $0x11a0] sm:$0xff]
        %v904 = vld [vmem:[%s262 + $0x11a8] sm:$0xff]
        %v905 = vld [vmem:[%s262 + $0x11b0] sm:$0xff]
        %v906 = vld [vmem:[%s262 + $0x11b8] sm:$0xff]
        %v907 = vld [vmem:[%s262 + $0x11c0] sm:$0xff]
        %v908 = vld [vmem:[%s262 + $0x11c8] sm:$0xff]
        %v909 = vld [vmem:[%s262 + $0x11d0] sm:$0xff]
        %v910 = vld [vmem:[%s262 + $0x11d8] sm:$0xff]
        %v911 = vld [vmem:[%s262 + $0x11e0] sm:$0xff]
        %v912 = vld [vmem:[%s262 + $0x11e8] sm:$0xff]
        %v913 = vld [vmem:[%s262 + $0x11f0] sm:$0xff]
        %v914 = vld [vmem:[%s262 + $0x11f8] sm:$0xff]
        %v915 = vld [vmem:[%s262 + $0x1200] sm:$0xff]
        %v916 = vld [vmem:[%s262 + $0x1208] sm:$0xff]
        %v917 = vld [vmem:[%s262 + $0x1210] sm:$0xff]
        %v918 = vld [vmem:[%s262 + $0x1218] sm:$0xff]
        %v919 = vld [vmem:[%s262 + $0x1220] sm:$0xff]
        %v920 = vld [vmem:[%s262 + $0x1228] sm:$0xff]
        %v921 = vld [vmem:[%s262 + $0x1230] sm:$0xff]
        %v922 = vld [vmem:[%s262 + $0x1238] sm:$0xff]
        %v923 = vld [vmem:[%s262 + $0x1240] sm:$0xff]
        %v924 = vld [vmem:[%s262 + $0x1248] sm:$0xff]
        %v925 = vld [vmem:[%s262 + $0x1250] sm:$0xff]
        %v926 = vld [vmem:[%s262 + $0x1258] sm:$0xff]
        %v927 = vld [vmem:[%s262 + $0x1260] sm:$0xff]
        %v928 = vld [vmem:[%s262 + $0x1268] sm:$0xff]
        %v929 = vld [vmem:[%s262 + $0x1270] sm:$0xff]
        %v930 = vld [vmem:[%s262 + $0x1278] sm:$0xff]
        %v931 = vld [vmem:[%s262 + $0x1280] sm:$0xff]
        %v932 = vld [vmem:[%s262 + $0x1288] sm:$0xff]
        %v933 = vld [vmem:[%s262 + $0x1290] sm:$0xff]
        %v934 = vld [vmem:[%s262 + $0x1298] sm:$0xff]
        %v935 = vld [vmem:[%s262 + $0x12a0] sm:$0xff]
        %v936 = vld [vmem:[%s262 + $0x12a8] sm:$0xff]
        %v937 = vld [vmem:[%s262 + $0x12b0] sm:$0xff]
        %v938 = vld [vmem:[%s262 + $0x12b8] sm:$0xff]
        %v939 = vld [vmem:[%s262 + $0x12c0] sm:$0xff]
        %v940 = vld [vmem:[%s262 + $0x12c8] sm:$0xff]
        %v941 = vld [vmem:[%s262 + $0x12d0] sm:$0xff]
        %v942 = vld [vmem:[%s262 + $0x12d8] sm:$0xff]
        %v943 = vld [vmem:[%s262 + $0x12e0] sm:$0xff]
        %v944 = vld [vmem:[%s262 + $0x12e8] sm:$0xff]
        %v945 = vld [vmem:[%s262 + $0x12f0] sm:$0xff]
        %v946 = vld [vmem:[%s262 + $0x12f8] sm:$0xff]
        %v947 = vld [vmem:[%s262 + $0x1300] sm:$0xff]
        %v948 = vld [vmem:[%s262 + $0x1308] sm:$0xff]
        %v949 = vld [vmem:[%s262 + $0x1310] sm:$0xff]
        %v950 = vld [vmem:[%s262 + $0x1318] sm:$0xff]
        %v951 = vld [vmem:[%s262 + $0x1320] sm:$0xff]
        %v952 = vld [vmem:[%s262 + $0x1328] sm:$0xff]
        %v953 = vld [vmem:[%s262 + $0x1330] sm:$0xff]
        %v954 = vld [vmem:[%s262 + $0x1338] sm:$0xff]
        %v955 = vld [vmem:[%s262 + $0x1340] sm:$0xff]
        %v956 = vld [vmem:[%s262 + $0x1348] sm:$0xff]
        %v957 = vld [vmem:[%s262 + $0x1350] sm:$0xff]
        %v958 = vld [vmem:[%s262 + $0x1358] sm:$0xff]
        %v959 = vld [vmem:[%s262 + $0x1360] sm:$0xff]
        %v960 = vld [vmem:[%s262 + $0x1368] sm:$0xff]
        %v961 = vld [vmem:[%s262 + $0x1370] sm:$0xff]
        %v962 = vld [vmem:[%s262 + $0x1378] sm:$0xff]
        %v963 = vld [vmem:[%s262 + $0x1380] sm:$0xff]
        %v964 = vld [vmem:[%s262 + $0x1388] sm:$0xff]
        %v965 = vld [vmem:[%s262 + $0x1390] sm:$0xff]
        %v966 = vld [vmem:[%s262 + $0x1398] sm:$0xff]
        %v967 = vld [vmem:[%s262 + $0x13a0] sm:$0xff]
        %v968 = vld [vmem:[%s262 + $0x13a8] sm:$0xff]
        %v969 = vld [vmem:[%s262 + $0x13b0] sm:$0xff]
        %v970 = vld [vmem:[%s262 + $0x13b8] sm:$0xff]
        %v971 = vld [vmem:[%s262 + $0x13c0] sm:$0xff]
        %v972 = vld [vmem:[%s262 + $0x13c8] sm:$0xff]
        %v973 = vld [vmem:[%s262 + $0x13d0] sm:$0xff]
        %v974 = vld [vmem:[%s262 + $0x13d8] sm:$0xff]
        %v975 = vld [vmem:[%s262 + $0x13e0] sm:$0xff]
        %v976 = vld [vmem:[%s262 + $0x13e8] sm:$0xff]
        %v977 = vld [vmem:[%s262 + $0x13f0] sm:$0xff]
        %v978 = vld [vmem:[%s262 + $0x13f8] sm:$0xff]
        %v979 = vld [vmem:[%s262 + $0x1400] sm:$0xff]
        %v980 = vld [vmem:[%s262 + $0x1408] sm:$0xff]
        %v981 = vld [vmem:[%s262 + $0x1410] sm:$0xff]
        %v982 = vld [vmem:[%s262 + $0x1418] sm:$0xff]
        %v983 = vld [vmem:[%s262 + $0x1420] sm:$0xff]
        %v984 = vld [vmem:[%s262 + $0x1428] sm:$0xff]
        %v985 = vld [vmem:[%s262 + $0x1430] sm:$0xff]
        %v986 = vld [vmem:[%s262 + $0x1438] sm:$0xff]
        %v987 = vld [vmem:[%s262 + $0x1440] sm:$0xff]
        %v988 = vld [vmem:[%s262 + $0x1448] sm:$0xff]
        %v989 = vld [vmem:[%s262 + $0x1450] sm:$0xff]
        %v990 = vld [vmem:[%s262 + $0x1458] sm:$0xff]
        %v991 = vld [vmem:[%s262 + $0x1460] sm:$0xff]
        %v992 = vld [vmem:[%s262 + $0x1468] sm:$0xff]
        %v993 = vld [vmem:[%s262 + $0x1470] sm:$0xff]
        %v994 = vld [vmem:[%s262 + $0x1478] sm:$0xff]
        %v995 = vld [vmem:[%s262 + $0x1480] sm:$0xff]
        %v996 = vld [vmem:[%s262 + $0x1488] sm:$0xff]
        %v997 = vld [vmem:[%s262 + $0x1490] sm:$0xff]
        %v998 = vld [vmem:[%s262 + $0x1498] sm:$0xff]
        %v999 = vld [vmem:[%s262 + $0x14a0] sm:$0xff]
        %v1000 = vld [vmem:[%s262 + $0x14a8] sm:$0xff]
        %v1001 = vld [vmem:[%s262 + $0x14b0] sm:$0xff]
        %v1002 = vld [vmem:[%s262 + $0x14b8] sm:$0xff]
        %v1003 = vld [vmem:[%s262 + $0x14c0] sm:$0xff]
        %v1004 = vld [vmem:[%s262 + $0x14c8] sm:$0xff]
        %v1005 = vld [vmem:[%s262 + $0x14d0] sm:$0xff]
        %v1006 = vld [vmem:[%s262 + $0x14d8] sm:$0xff]
        %v1007 = vld [vmem:[%s262 + $0x14e0] sm:$0xff]
        %v1008 = vld [vmem:[%s262 + $0x14e8] sm:$0xff]
        %v1009 = vld [vmem:[%s262 + $0x14f0] sm:$0xff]
        %v1010 = vld [vmem:[%s262 + $0x14f8] sm:$0xff]
        %v1011 = vld [vmem:[%s262 + $0x1500] sm:$0xff]
        %v1012 = vld [vmem:[%s262 + $0x1508] sm:$0xff]
        %v1013 = vld [vmem:[%s262 + $0x1510] sm:$0xff]
        %v1014 = vld [vmem:[%s262 + $0x1518] sm:$0xff]
        %v1015 = vld [vmem:[%s262 + $0x1520] sm:$0xff]
        %v1016 = vld [vmem:[%s262 + $0x1528] sm:$0xff]
        %v1017 = vld [vmem:[%s262 + $0x1530] sm:$0xff]
        %v1018 = vld [vmem:[%s262 + $0x1538] sm:$0xff]
        %v1019 = vld [vmem:[%s262 + $0x1540] sm:$0xff]
        %v1020 = vld [vmem:[%s262 + $0x1548] sm:$0xff]
        %v1021 = vld [vmem:[%s262 + $0x1550] sm:$0xff]
        %v1022 = vld [vmem:[%s262 + $0x1558] sm:$0xff]
        %v1023 = vld [vmem:[%s262 + $0x1560] sm:$0xff]
        %v1024 = vld [vmem:[%s262 + $0x1568] sm:$0xff]
        %v1025 = vld [vmem:[%s262 + $0x1570] sm:$0xff]
        %v1026 = vld [vmem:[%s262 + $0x1578] sm:$0xff]
        %v1027 = vld [vmem:[%s262 + $0x1580] sm:$0xff]
        %v1028 = vld [vmem:[%s262 + $0x1588] sm:$0xff]
        %v1029 = vld [vmem:[%s262 + $0x1590] sm:$0xff]
        %v1030 = vld [vmem:[%s262 + $0x1598] sm:$0xff]
        %v1031 = vld [vmem:[%s262 + $0x15a0] sm:$0xff]
        %v1032 = vld [vmem:[%s262 + $0x15a8] sm:$0xff]
        %v1033 = vld [vmem:[%s262 + $0x15b0] sm:$0xff]
        %v1034 = vld [vmem:[%s262 + $0x15b8] sm:$0xff]
        %v1035 = vld [vmem:[%s262 + $0x15c0] sm:$0xff]
        %v1036 = vld [vmem:[%s262 + $0x15c8] sm:$0xff]
        %v1037 = vld [vmem:[%s262 + $0x15d0] sm:$0xff]
        %v1038 = vld [vmem:[%s262 + $0x15d8] sm:$0xff]
        %v1039 = vld [vmem:[%s262 + $0x15e0] sm:$0xff]
        %v1040 = vld [vmem:[%s262 + $0x15e8] sm:$0xff]
        %v1041 = vld [vmem:[%s262 + $0x15f0] sm:$0xff]
        %v1042 = vld [vmem:[%s262 + $0x15f8] sm:$0xff]
        %v1043 = vld [vmem:[%s262 + $0x1600] sm:$0xff]
        %v1044 = vld [vmem:[%s262 + $0x1608] sm:$0xff]
        %v1045 = vld [vmem:[%s262 + $0x1610] sm:$0xff]
        %v1046 = vld [vmem:[%s262 + $0x1618] sm:$0xff]
        %v1047 = vld [vmem:[%s262 + $0x1620] sm:$0xff]
        %v1048 = vld [vmem:[%s262 + $0x1628] sm:$0xff]
        %v1049 = vld [vmem:[%s262 + $0x1630] sm:$0xff]
        %v1050 = vld [vmem:[%s262 + $0x1638] sm:$0xff]
        %v1051 = vld [vmem:[%s262 + $0x1640] sm:$0xff]
        %v1052 = vld [vmem:[%s262 + $0x1648] sm:$0xff]
        %v1053 = vld [vmem:[%s262 + $0x1650] sm:$0xff]
        %v1054 = vld [vmem:[%s262 + $0x1658] sm:$0xff]
        %v1055 = vld [vmem:[%s262 + $0x1660] sm:$0xff]
        %v1056 = vld [vmem:[%s262 + $0x1668] sm:$0xff]
        %v1057 = vld [vmem:[%s262 + $0x1670] sm:$0xff]
        %v1058 = vld [vmem:[%s262 + $0x1678] sm:$0xff]
        %v1059 = vld [vmem:[%s262 + $0x1680] sm:$0xff]
        %v1060 = vld [vmem:[%s262 + $0x1688] sm:$0xff]
        %v1061 = vld [vmem:[%s262 + $0x1690] sm:$0xff]
        %v1062 = vld [vmem:[%s262 + $0x1698] sm:$0xff]
        %v1063 = vld [vmem:[%s262 + $0x16a0] sm:$0xff]
        %v1064 = vld [vmem:[%s262 + $0x16a8] sm:$0xff]
        %v1065 = vld [vmem:[%s262 + $0x16b0] sm:$0xff]
        %v1066 = vld [vmem:[%s262 + $0x16b8] sm:$0xff]
        %v1067 = vld [vmem:[%s262 + $0x16c0] sm:$0xff]
        %v1068 = vld [vmem:[%s262 + $0x16c8] sm:$0xff]
        %v1069 = vld [vmem:[%s262 + $0x16d0] sm:$0xff]
        %v1070 = vld [vmem:[%s262 + $0x16d8] sm:$0xff]
        %v1071 = vld [vmem:[%s262 + $0x16e0] sm:$0xff]
        %v1072 = vld [vmem:[%s262 + $0x16e8] sm:$0xff]
        %v1073 = vld [vmem:[%s262 + $0x16f0] sm:$0xff]
        %v1074 = vld [vmem:[%s262 + $0x16f8] sm:$0xff]
        %v1075 = vld [vmem:[%s262 + $0x1700] sm:$0xff]
        %v1076 = vld [vmem:[%s262 + $0x1708] sm:$0xff]
        %v1077 = vld [vmem:[%s262 + $0x1710] sm:$0xff]
        %v1078 = vld [vmem:[%s262 + $0x1718] sm:$0xff]
        %v1079 = vld [vmem:[%s262 + $0x1720] sm:$0xff]
        %v1080 = vld [vmem:[%s262 + $0x1728] sm:$0xff]
        %v1081 = vld [vmem:[%s262 + $0x1730] sm:$0xff]
        %v1082 = vld [vmem:[%s262 + $0x1738] sm:$0xff]
        %v1083 = vld [vmem:[%s262 + $0x1740] sm:$0xff]
        %v1084 = vld [vmem:[%s262 + $0x1748] sm:$0xff]
        %v1085 = vld [vmem:[%s262 + $0x1750] sm:$0xff]
        %v1086 = vld [vmem:[%s262 + $0x1758] sm:$0xff]
        %v1087 = vld [vmem:[%s262 + $0x1760] sm:$0xff]
        %v1088 = vld [vmem:[%s262 + $0x1768] sm:$0xff]
        %v1089 = vld [vmem:[%s262 + $0x1770] sm:$0xff]
        %v1090 = vld [vmem:[%s262 + $0x1778] sm:$0xff]
        %v1091 = vld [vmem:[%s262 + $0x1780] sm:$0xff]
        %v1092 = vld [vmem:[%s262 + $0x1788] sm:$0xff]
        %v1093 = vld [vmem:[%s262 + $0x1790] sm:$0xff]
        %v1094 = vld [vmem:[%s262 + $0x1798] sm:$0xff]
        %v1095 = vld [vmem:[%s262 + $0x17a0] sm:$0xff]
        %v1096 = vld [vmem:[%s262 + $0x17a8] sm:$0xff]
        %v1097 = vld [vmem:[%s262 + $0x17b0] sm:$0xff]
        %v1098 = vld [vmem:[%s262 + $0x17b8] sm:$0xff]
        %v1099 = vld [vmem:[%s262 + $0x17c0] sm:$0xff]
        %v1100 = vld [vmem:[%s262 + $0x17c8] sm:$0xff]
        %v1101 = vld [vmem:[%s262 + $0x17d0] sm:$0xff]
        %v1102 = vld [vmem:[%s262 + $0x17d8] sm:$0xff]
        %v1103 = vld [vmem:[%s262 + $0x17e0] sm:$0xff]
        %v1104 = vld [vmem:[%s262 + $0x17e8] sm:$0xff]
        %v1105 = vld [vmem:[%s262 + $0x17f0] sm:$0xff]
        %v1106 = vld [vmem:[%s262 + $0x17f8] sm:$0xff]
        %v1107 = vld [vmem:[%s262 + $0x1800] sm:$0xff]
        %v1108 = vld [vmem:[%s262 + $0x1808] sm:$0xff]
        %v1109 = vld [vmem:[%s262 + $0x1810] sm:$0xff]
        %v1110 = vld [vmem:[%s262 + $0x1818] sm:$0xff]
        %v1111 = vld [vmem:[%s262 + $0x1820] sm:$0xff]
        %v1112 = vld [vmem:[%s262 + $0x1828] sm:$0xff]
        %v1113 = vld [vmem:[%s262 + $0x1830] sm:$0xff]
        %v1114 = vld [vmem:[%s262 + $0x1838] sm:$0xff]
        %v1115 = vld [vmem:[%s262 + $0x1840] sm:$0xff]
        %v1116 = vld [vmem:[%s262 + $0x1848] sm:$0xff]
        %v1117 = vld [vmem:[%s262 + $0x1850] sm:$0xff]
        %v1118 = vld [vmem:[%s262 + $0x1858] sm:$0xff]
        %v1119 = vld [vmem:[%s262 + $0x1860] sm:$0xff]
        %v1120 = vld [vmem:[%s262 + $0x1868] sm:$0xff]
        %v1121 = vld [vmem:[%s262 + $0x1870] sm:$0xff]
        %v1122 = vld [vmem:[%s262 + $0x1878] sm:$0xff]
        %v1123 = vld [vmem:[%s262 + $0x1880] sm:$0xff]
        %v1124 = vld [vmem:[%s262 + $0x1888] sm:$0xff]
        %v1125 = vld [vmem:[%s262 + $0x1890] sm:$0xff]
        %v1126 = vld [vmem:[%s262 + $0x1898] sm:$0xff]
        %v1127 = vld [vmem:[%s262 + $0x18a0] sm:$0xff]
        %v1128 = vld [vmem:[%s262 + $0x18a8] sm:$0xff]
        %v1129 = vld [vmem:[%s262 + $0x18b0] sm:$0xff]
        %v1130 = vld [vmem:[%s262 + $0x18b8] sm:$0xff]
        %v1131 = vld [vmem:[%s262 + $0x18c0] sm:$0xff]
        %v1132 = vld [vmem:[%s262 + $0x18c8] sm:$0xff]
        %v1133 = vld [vmem:[%s262 + $0x18d0] sm:$0xff]
        %v1134 = vld [vmem:[%s262 + $0x18d8] sm:$0xff]
        %v1135 = vld [vmem:[%s262 + $0x18e0] sm:$0xff]
        %v1136 = vld [vmem:[%s262 + $0x18e8] sm:$0xff]
        %v1137 = vld [vmem:[%s262 + $0x18f0] sm:$0xff]
        %v1138 = vld [vmem:[%s262 + $0x18f8] sm:$0xff]
        %v1139 = vld [vmem:[%s262 + $0x1900] sm:$0xff]
        %v1140 = vld [vmem:[%s262 + $0x1908] sm:$0xff]
        %v1141 = vld [vmem:[%s262 + $0x1910] sm:$0xff]
        %v1142 = vld [vmem:[%s262 + $0x1918] sm:$0xff]
        %v1143 = vld [vmem:[%s262 + $0x1920] sm:$0xff]
        %v1144 = vld [vmem:[%s262 + $0x1928] sm:$0xff]
        %v1145 = vld [vmem:[%s262 + $0x1930] sm:$0xff]
        %v1146 = vld [vmem:[%s262 + $0x1938] sm:$0xff]
        %v1147 = vld [vmem:[%s262 + $0x1940] sm:$0xff]
        %v1148 = vld [vmem:[%s262 + $0x1948] sm:$0xff]
        %v1149 = vld [vmem:[%s262 + $0x1950] sm:$0xff]
        %v1150 = vld [vmem:[%s262 + $0x1958] sm:$0xff]
        %v1151 = vld [vmem:[%s262 + $0x1960] sm:$0xff]
        %v1152 = vld [vmem:[%s262 + $0x1968] sm:$0xff]
        %v1153 = vld [vmem:[%s262 + $0x1970] sm:$0xff]
        %v1154 = vld [vmem:[%s262 + $0x1978] sm:$0xff]
        %v1155 = vld [vmem:[%s262 + $0x1980] sm:$0xff]
        %v1156 = vld [vmem:[%s262 + $0x1988] sm:$0xff]
        %v1157 = vld [vmem:[%s262 + $0x1990] sm:$0xff]
        %v1158 = vld [vmem:[%s262 + $0x1998] sm:$0xff]
        %v1159 = vld [vmem:[%s262 + $0x19a0] sm:$0xff]
        %v1160 = vld [vmem:[%s262 + $0x19a8] sm:$0xff]
        %v1161 = vld [vmem:[%s262 + $0x19b0] sm:$0xff]
        %v1162 = vld [vmem:[%s262 + $0x19b8] sm:$0xff]
        %v1163 = vld [vmem:[%s262 + $0x19c0] sm:$0xff]
        %v1164 = vld [vmem:[%s262 + $0x19c8] sm:$0xff]
        %v1165 = vld [vmem:[%s262 + $0x19d0] sm:$0xff]
        %v1166 = vld [vmem:[%s262 + $0x19d8] sm:$0xff]
        %v1167 = vld [vmem:[%s262 + $0x19e0] sm:$0xff]
        %v1168 = vld [vmem:[%s262 + $0x19e8] sm:$0xff]
        %v1169 = vld [vmem:[%s262 + $0x19f0] sm:$0xff]
        %v1170 = vld [vmem:[%s262 + $0x19f8] sm:$0xff]
        %v1171 = vld [vmem:[%s262 + $0x1a00] sm:$0xff]
        %v1172 = vld [vmem:[%s262 + $0x1a08] sm:$0xff]
        %v1173 = vld [vmem:[%s262 + $0x1a10] sm:$0xff]
        %v1174 = vld [vmem:[%s262 + $0x1a18] sm:$0xff]
        %v1175 = vld [vmem:[%s262 + $0x1a20] sm:$0xff]
        %v1176 = vld [vmem:[%s262 + $0x1a28] sm:$0xff]
        %v1177 = vld [vmem:[%s262 + $0x1a30] sm:$0xff]
        %v1178 = vld [vmem:[%s262 + $0x1a38] sm:$0xff]
        %v1179 = vld [vmem:[%s262 + $0x1a40] sm:$0xff]
        %v1180 = vld [vmem:[%s262 + $0x1a48] sm:$0xff]
        %v1181 = vld [vmem:[%s262 + $0x1a50] sm:$0xff]
        %v1182 = vld [vmem:[%s262 + $0x1a58] sm:$0xff]
        %v1183 = vld [vmem:[%s262 + $0x1a60] sm:$0xff]
        %v1184 = vld [vmem:[%s262 + $0x1a68] sm:$0xff]
        %v1185 = vld [vmem:[%s262 + $0x1a70] sm:$0xff]
        %v1186 = vld [vmem:[%s262 + $0x1a78] sm:$0xff]
        %v1187 = vld [vmem:[%s262 + $0x1a80] sm:$0xff]
        %v1188 = vld [vmem:[%s262 + $0x1a88] sm:$0xff]
        %v1189 = vld [vmem:[%s262 + $0x1a90] sm:$0xff]
        %v1190 = vld [vmem:[%s262 + $0x1a98] sm:$0xff]
        %v1191 = vld [vmem:[%s262 + $0x1aa0] sm:$0xff]
        %v1192 = vld [vmem:[%s262 + $0x1aa8] sm:$0xff]
        %v1193 = vld [vmem:[%s262 + $0x1ab0] sm:$0xff]
        %v1194 = vld [vmem:[%s262 + $0x1ab8] sm:$0xff]
        %v1195 = vld [vmem:[%s262 + $0x1ac0] sm:$0xff]
        %v1196 = vld [vmem:[%s262 + $0x1ac8] sm:$0xff]
        %v1197 = vld [vmem:[%s262 + $0x1ad0] sm:$0xff]
        %v1198 = vld [vmem:[%s262 + $0x1ad8] sm:$0xff]
        %v1199 = vld [vmem:[%s262 + $0x1ae0] sm:$0xff]
        %v1200 = vld [vmem:[%s262 + $0x1ae8] sm:$0xff]
        %v1201 = vld [vmem:[%s262 + $0x1af0] sm:$0xff]
        %v1202 = vld [vmem:[%s262 + $0x1af8] sm:$0xff]
        %v1203 = vld [vmem:[%s262 + $0x1b00] sm:$0xff]
        %v1204 = vld [vmem:[%s262 + $0x1b08] sm:$0xff]
        %v1205 = vld [vmem:[%s262 + $0x1b10] sm:$0xff]
        %v1206 = vld [vmem:[%s262 + $0x1b18] sm:$0xff]
        %v1207 = vld [vmem:[%s262 + $0x1b20] sm:$0xff]
        %v1208 = vld [vmem:[%s262 + $0x1b28] sm:$0xff]
        %v1209 = vld [vmem:[%s262 + $0x1b30] sm:$0xff]
        %v1210 = vld [vmem:[%s262 + $0x1b38] sm:$0xff]
        %v1211 = vld [vmem:[%s262 + $0x1b40] sm:$0xff]
        %v1212 = vld [vmem:[%s262 + $0x1b48] sm:$0xff]
        %v1213 = vld [vmem:[%s262 + $0x1b50] sm:$0xff]
        %v1214 = vld [vmem:[%s262 + $0x1b58] sm:$0xff]
        %v1215 = vld [vmem:[%s262 + $0x1b60] sm:$0xff]
        %v1216 = vld [vmem:[%s262 + $0x1b68] sm:$0xff]
        %v1217 = vld [vmem:[%s262 + $0x1b70] sm:$0xff]
        %v1218 = vld [vmem:[%s262 + $0x1b78] sm:$0xff]
        %v1219 = vld [vmem:[%s262 + $0x1b80] sm:$0xff]
        %v1220 = vld [vmem:[%s262 + $0x1b88] sm:$0xff]
        %v1221 = vld [vmem:[%s262 + $0x1b90] sm:$0xff]
        %v1222 = vld [vmem:[%s262 + $0x1b98] sm:$0xff]
        %v1223 = vld [vmem:[%s262 + $0x1ba0] sm:$0xff]
        %v1224 = vld [vmem:[%s262 + $0x1ba8] sm:$0xff]
        %v1225 = vld [vmem:[%s262 + $0x1bb0] sm:$0xff]
        %v1226 = vld [vmem:[%s262 + $0x1bb8] sm:$0xff]
        %v1227 = vld [vmem:[%s262 + $0x1bc0] sm:$0xff]
        %v1228 = vld [vmem:[%s262 + $0x1bc8] sm:$0xff]
        %v1229 = vld [vmem:[%s262 + $0x1bd0] sm:$0xff]
        %v1230 = vld [vmem:[%s262 + $0x1bd8] sm:$0xff]
        %v1231 = vld [vmem:[%s262 + $0x1be0] sm:$0xff]
        %v1232 = vld [vmem:[%s262 + $0x1be8] sm:$0xff]
        %v1233 = vld [vmem:[%s262 + $0x1bf0] sm:$0xff]
        %v1234 = vld [vmem:[%s262 + $0x1bf8] sm:$0xff]
        %v1235 = vld [vmem:[%s262 + $0x1c00] sm:$0xff]
        %v1236 = vld [vmem:[%s262 + $0x1c08] sm:$0xff]
        %v1237 = vld [vmem:[%s262 + $0x1c10] sm:$0xff]
        %v1238 = vld [vmem:[%s262 + $0x1c18] sm:$0xff]
        %v1239 = vld [vmem:[%s262 + $0x1c20] sm:$0xff]
        %v1240 = vld [vmem:[%s262 + $0x1c28] sm:$0xff]
        %v1241 = vld [vmem:[%s262 + $0x1c30] sm:$0xff]
        %v1242 = vld [vmem:[%s262 + $0x1c38] sm:$0xff]
        %v1243 = vld [vmem:[%s262 + $0x1c40] sm:$0xff]
        %v1244 = vld [vmem:[%s262 + $0x1c48] sm:$0xff]
        %v1245 = vld [vmem:[%s262 + $0x1c50] sm:$0xff]
        %v1246 = vld [vmem:[%s262 + $0x1c58] sm:$0xff]
        %v1247 = vld [vmem:[%s262 + $0x1c60] sm:$0xff]
        %v1248 = vld [vmem:[%s262 + $0x1c68] sm:$0xff]
        %v1249 = vld [vmem:[%s262 + $0x1c70] sm:$0xff]
        %v1250 = vld [vmem:[%s262 + $0x1c78] sm:$0xff]
        %v1251 = vld [vmem:[%s262 + $0x1c80] sm:$0xff]
        %v1252 = vld [vmem:[%s262 + $0x1c88] sm:$0xff]
        %v1253 = vld [vmem:[%s262 + $0x1c90] sm:$0xff]
        %v1254 = vld [vmem:[%s262 + $0x1c98] sm:$0xff]
        %v1255 = vld [vmem:[%s262 + $0x1ca0] sm:$0xff]
        %v1256 = vld [vmem:[%s262 + $0x1ca8] sm:$0xff]
        %v1257 = vld [vmem:[%s262 + $0x1cb0] sm:$0xff]
        %v1258 = vld [vmem:[%s262 + $0x1cb8] sm:$0xff]
        %v1259 = vld [vmem:[%s262 + $0x1cc0] sm:$0xff]
        %v1260 = vld [vmem:[%s262 + $0x1cc8] sm:$0xff]
        %v1261 = vld [vmem:[%s262 + $0x1cd0] sm:$0xff]
        %v1262 = vld [vmem:[%s262 + $0x1cd8] sm:$0xff]
        %v1263 = vld [vmem:[%s262 + $0x1ce0] sm:$0xff]
        %v1264 = vld [vmem:[%s262 + $0x1ce8] sm:$0xff]
        %v1265 = vld [vmem:[%s262 + $0x1cf0] sm:$0xff]
        %v1266 = vld [vmem:[%s262 + $0x1cf8] sm:$0xff]
        %v1267 = vld [vmem:[%s262 + $0x1d00] sm:$0xff]
        %v1268 = vld [vmem:[%s262 + $0x1d08] sm:$0xff]
        %v1269 = vld [vmem:[%s262 + $0x1d10] sm:$0xff]
        %v1270 = vld [vmem:[%s262 + $0x1d18] sm:$0xff]
        %v1271 = vld [vmem:[%s262 + $0x1d20] sm:$0xff]
        %v1272 = vld [vmem:[%s262 + $0x1d28] sm:$0xff]
        %v1273 = vld [vmem:[%s262 + $0x1d30] sm:$0xff]
        %v1274 = vld [vmem:[%s262 + $0x1d38] sm:$0xff]
        %v1275 = vld [vmem:[%s262 + $0x1d40] sm:$0xff]
        %v1276 = vld [vmem:[%s262 + $0x1d48] sm:$0xff]
        %v1277 = vld [vmem:[%s262 + $0x1d50] sm:$0xff]
        %v1278 = vld [vmem:[%s262 + $0x1d58] sm:$0xff]
        %v1279 = vld [vmem:[%s262 + $0x1d60] sm:$0xff]
        %v1280 = vld [vmem:[%s262 + $0x1d68] sm:$0xff]
        %v1281 = vld [vmem:[%s262 + $0x1d70] sm:$0xff]
        %v1282 = vld [vmem:[%s262 + $0x1d78] sm:$0xff]
        %v1283 = vld [vmem:[%s262 + $0x1d80] sm:$0xff]
        %v1284 = vld [vmem:[%s262 + $0x1d88] sm:$0xff]
        %v1285 = vld [vmem:[%s262 + $0x1d90] sm:$0xff]
        %v1286 = vld [vmem:[%s262 + $0x1d98] sm:$0xff]
        %v1287 = vld [vmem:[%s262 + $0x1da0] sm:$0xff]
        %v1288 = vld [vmem:[%s262 + $0x1da8] sm:$0xff]
        %v1289 = vld [vmem:[%s262 + $0x1db0] sm:$0xff]
        %v1290 = vld [vmem:[%s262 + $0x1db8] sm:$0xff]
        %v1291 = vld [vmem:[%s262 + $0x1dc0] sm:$0xff]
        %v1292 = vld [vmem:[%s262 + $0x1dc8] sm:$0xff]
        %v1293 = vld [vmem:[%s262 + $0x1dd0] sm:$0xff]
        %v1294 = vld [vmem:[%s262 + $0x1dd8] sm:$0xff]
        %v1295 = vld [vmem:[%s262 + $0x1de0] sm:$0xff]
        %v1296 = vld [vmem:[%s262 + $0x1de8] sm:$0xff]
        %v1297 = vld [vmem:[%s262 + $0x1df0] sm:$0xff]
        %v1298 = vld [vmem:[%s262 + $0x1df8] sm:$0xff]
        %v1299 = vld [vmem:[%s262 + $0x1e00] sm:$0xff]
        %v1300 = vld [vmem:[%s262 + $0x1e08] sm:$0xff]
        %v1301 = vld [vmem:[%s262 + $0x1e10] sm:$0xff]
        %v1302 = vld [vmem:[%s262 + $0x1e18] sm:$0xff]
        %v1303 = vld [vmem:[%s262 + $0x1e20] sm:$0xff]
        %v1304 = vld [vmem:[%s262 + $0x1e28] sm:$0xff]
        %v1305 = vld [vmem:[%s262 + $0x1e30] sm:$0xff]
        %v1306 = vld [vmem:[%s262 + $0x1e38] sm:$0xff]
        %v1307 = vld [vmem:[%s262 + $0x1e40] sm:$0xff]
        %v1308 = vld [vmem:[%s262 + $0x1e48] sm:$0xff]
        %v1309 = vld [vmem:[%s262 + $0x1e50] sm:$0xff]
        %v1310 = vld [vmem:[%s262 + $0x1e58] sm:$0xff]
        %v1311 = vld [vmem:[%s262 + $0x1e60] sm:$0xff]
        %v1312 = vld [vmem:[%s262 + $0x1e68] sm:$0xff]
        %v1313 = vld [vmem:[%s262 + $0x1e70] sm:$0xff]
        %v1314 = vld [vmem:[%s262 + $0x1e78] sm:$0xff]
        %v1315 = vld [vmem:[%s262 + $0x1e80] sm:$0xff]
        %v1316 = vld [vmem:[%s262 + $0x1e88] sm:$0xff]
        %v1317 = vld [vmem:[%s262 + $0x1e90] sm:$0xff]
        %v1318 = vld [vmem:[%s262 + $0x1e98] sm:$0xff]
        %v1319 = vld [vmem:[%s262 + $0x1ea0] sm:$0xff]
        %v1320 = vld [vmem:[%s262 + $0x1ea8] sm:$0xff]
        %v1321 = vld [vmem:[%s262 + $0x1eb0] sm:$0xff]
        %v1322 = vld [vmem:[%s262 + $0x1eb8] sm:$0xff]
        %v1323 = vld [vmem:[%s262 + $0x1ec0] sm:$0xff]
        %v1324 = vld [vmem:[%s262 + $0x1ec8] sm:$0xff]
        %v1325 = vld [vmem:[%s262 + $0x1ed0] sm:$0xff]
        %v1326 = vld [vmem:[%s262 + $0x1ed8] sm:$0xff]
        %v1327 = vld [vmem:[%s262 + $0x1ee0] sm:$0xff]
        %v1328 = vld [vmem:[%s262 + $0x1ee8] sm:$0xff]
        %v1329 = vld [vmem:[%s262 + $0x1ef0] sm:$0xff]
        %v1330 = vld [vmem:[%s262 + $0x1ef8] sm:$0xff]
        %v1331 = vld [vmem:[%s262 + $0x1f00] sm:$0xff]
        %v1332 = vld [vmem:[%s262 + $0x1f08] sm:$0xff]
        %v1333 = vld [vmem:[%s262 + $0x1f10] sm:$0xff]
        %v1334 = vld [vmem:[%s262 + $0x1f18] sm:$0xff]
        %v1335 = vld [vmem:[%s262 + $0x1f20] sm:$0xff]
        %v1336 = vld [vmem:[%s262 + $0x1f28] sm:$0xff]
        %v1337 = vld [vmem:[%s262 + $0x1f30] sm:$0xff]
        %v1338 = vld [vmem:[%s262 + $0x1f38] sm:$0xff]
        %v1339 = vld [vmem:[%s262 + $0x1f40] sm:$0xff]
        %v1340 = vld [vmem:[%s262 + $0x1f48] sm:$0xff]
        %v1341 = vld [vmem:[%s262 + $0x1f50] sm:$0xff]
        %v1342 = vld [vmem:[%s262 + $0x1f58] sm:$0xff]
        %v1343 = vld [vmem:[%s262 + $0x1f60] sm:$0xff]
        %v1344 = vld [vmem:[%s262 + $0x1f68] sm:$0xff]
        %v1345 = vld [vmem:[%s262 + $0x1f70] sm:$0xff]
        %v1346 = vld [vmem:[%s262 + $0x1f78] sm:$0xff]
        %v1347 = vld [vmem:[%s262 + $0x1f80] sm:$0xff]
        %v1348 = vld [vmem:[%s262 + $0x1f88] sm:$0xff]
        %v1349 = vld [vmem:[%s262 + $0x1f90] sm:$0xff]
        %v1350 = vld [vmem:[%s262 + $0x1f98] sm:$0xff]
        %v1351 = vld [vmem:[%s262 + $0x1fa0] sm:$0xff]
        %v1352 = vld [vmem:[%s262 + $0x1fa8] sm:$0xff]
        %v1353 = vld [vmem:[%s262 + $0x1fb0] sm:$0xff]
        %v1354 = vld [vmem:[%s262 + $0x1fb8] sm:$0xff]
        %v1355 = vld [vmem:[%s262 + $0x1fc0] sm:$0xff]
        %v1356 = vld [vmem:[%s262 + $0x1fc8] sm:$0xff]
        %v1357 = vld [vmem:[%s262 + $0x1fd0] sm:$0xff]
        %v1358 = vld [vmem:[%s262 + $0x1fd8] sm:$0xff]
        %v1359 = vld [vmem:[%s262 + $0x1fe0] sm:$0xff]
        %v1360 = vld [vmem:[%s262 + $0x1fe8] sm:$0xff]
        %v1361 = vld [vmem:[%s262 + $0x1ff0] sm:$0xff]
        %v1362 = vld [vmem:[%s262 + $0x1ff8] sm:$0xff]
        %v1371 = vcombine.high %v331, %v331
        %v1373 = vunpack.c.l.s4 1983009808
        %v1374 = vunpack.c.0.s8 %v1373
        %v1375 = vlaneseq
        %v1376 = vshrl.u32 %v1375, 7
        %v1377 = vsub.s32 %v1374, %v1376
        %v1378 = vrot.slane %v331, %v1377
        %v1380 = vunpack.c.l.s4 1983009808
        %v1381 = vunpack.c.0.s8 %v1380
        %v1382 = vlaneseq
        %v1383 = vshrl.u32 %v1382, 7
        %v1384 = vsub.s32 %v1381, %v1383
        %v1385 = vrot.slane %v1371, %v1384
        %v1386 = vcombine.high %v1378, %v1378
        %v1387 = vcombine.high %v1385, %v1385
        %v1388 = vcombine.high %v332, %v332
        %v1390 = vunpack.c.l.s4 1983009808
        %v1391 = vunpack.c.0.s8 %v1390
        %v1392 = vlaneseq
        %v1393 = vshrl.u32 %v1392, 7
        %v1394 = vsub.s32 %v1391, %v1393
        %v1395 = vrot.slane %v332, %v1394
        %v1397 = vunpack.c.l.s4 1983009808
        %v1398 = vunpack.c.0.s8 %v1397
        %v1399 = vlaneseq
        %v1400 = vshrl.u32 %v1399, 7
        %v1401 = vsub.s32 %v1398, %v1400
        %v1402 = vrot.slane %v1388, %v1401
        %v1403 = vcombine.high %v1395, %v1395
        %v1404 = vcombine.high %v1402, %v1402
        %v1405 = vcombine.high %v333, %v333
        %v1407 = vunpack.c.l.s4 1983009808
        %v1408 = vunpack.c.0.s8 %v1407
        %v1409 = vlaneseq
        %v1410 = vshrl.u32 %v1409, 7
        %v1411 = vsub.s32 %v1408, %v1410
        %v1412 = vrot.slane %v333, %v1411
        %v1414 = vunpack.c.l.s4 1983009808
        %v1415 = vunpack.c.0.s8 %v1414
        %v1416 = vlaneseq
        %v1417 = vshrl.u32 %v1416, 7
        %v1418 = vsub.s32 %v1415, %v1417
        %v1419 = vrot.slane %v1405, %v1418
        %v1420 = vcombine.high %v1412, %v1412
        %v1421 = vcombine.high %v1419, %v1419
        %v1422 = vcombine.high %v334, %v334
        %v1424 = vunpack.c.l.s4 1983009808
        %v1425 = vunpack.c.0.s8 %v1424
        %v1426 = vlaneseq
        %v1427 = vshrl.u32 %v1426, 7
        %v1428 = vsub.s32 %v1425, %v1427
        %v1429 = vrot.slane %v334, %v1428
        %v1431 = vunpack.c.l.s4 1983009808
        %v1432 = vunpack.c.0.s8 %v1431
        %v1433 = vlaneseq
        %v1434 = vshrl.u32 %v1433, 7
        %v1435 = vsub.s32 %v1432, %v1434
        %v1436 = vrot.slane %v1422, %v1435
        %v1437 = vcombine.high %v1429, %v1429
        %v1438 = vcombine.high %v1436, %v1436
        %v1439 = vcombine.high %v335, %v335
        %v1441 = vunpack.c.l.s4 1983009808
        %v1442 = vunpack.c.0.s8 %v1441
        %v1443 = vlaneseq
        %v1444 = vshrl.u32 %v1443, 7
        %v1445 = vsub.s32 %v1442, %v1444
        %v1446 = vrot.slane %v335, %v1445
        %v1448 = vunpack.c.l.s4 1983009808
        %v1449 = vunpack.c.0.s8 %v1448
        %v1450 = vlaneseq
        %v1451 = vshrl.u32 %v1450, 7
        %v1452 = vsub.s32 %v1449, %v1451
        %v1453 = vrot.slane %v1439, %v1452
        %v1454 = vcombine.high %v1446, %v1446
        %v1455 = vcombine.high %v1453, %v1453
        %v1456 = vcombine.high %v336, %v336
        %v1458 = vunpack.c.l.s4 1983009808
        %v1459 = vunpack.c.0.s8 %v1458
        %v1460 = vlaneseq
        %v1461 = vshrl.u32 %v1460, 7
        %v1462 = vsub.s32 %v1459, %v1461
        %v1463 = vrot.slane %v336, %v1462
        %v1465 = vunpack.c.l.s4 1983009808
        %v1466 = vunpack.c.0.s8 %v1465
        %v1467 = vlaneseq
        %v1468 = vshrl.u32 %v1467, 7
        %v1469 = vsub.s32 %v1466, %v1468
        %v1470 = vrot.slane %v1456, %v1469
        %v1471 = vcombine.high %v1463, %v1463
        %v1472 = vcombine.high %v1470, %v1470
        %v1473 = vcombine.high %v337, %v337
        %v1475 = vunpack.c.l.s4 1983009808
        %v1476 = vunpack.c.0.s8 %v1475
        %v1477 = vlaneseq
        %v1478 = vshrl.u32 %v1477, 7
        %v1479 = vsub.s32 %v1476, %v1478
        %v1480 = vrot.slane %v337, %v1479
        %v1482 = vunpack.c.l.s4 1983009808
        %v1483 = vunpack.c.0.s8 %v1482
        %v1484 = vlaneseq
        %v1485 = vshrl.u32 %v1484, 7
        %v1486 = vsub.s32 %v1483, %v1485
        %v1487 = vrot.slane %v1473, %v1486
        %v1488 = vcombine.high %v1480, %v1480
        %v1489 = vcombine.high %v1487, %v1487
        %v1490 = vcombine.high %v338, %v338
        %v1492 = vunpack.c.l.s4 1983009808
        %v1493 = vunpack.c.0.s8 %v1492
        %v1494 = vlaneseq
        %v1495 = vshrl.u32 %v1494, 7
        %v1496 = vsub.s32 %v1493, %v1495
        %v1497 = vrot.slane %v338, %v1496
        %v1499 = vunpack.c.l.s4 1983009808
        %v1500 = vunpack.c.0.s8 %v1499
        %v1501 = vlaneseq
        %v1502 = vshrl.u32 %v1501, 7
        %v1503 = vsub.s32 %v1500, %v1502
        %v1504 = vrot.slane %v1490, %v1503
        %v1505 = vcombine.high %v1497, %v1497
        %v1506 = vcombine.high %v1504, %v1504
        %1539 = vmatprep.subr.mxu0 %v340
        %1540 = vmatpush1.msra.mxu0 %v339
        %1541 = vmatprep.subr.mxu0 %v342
        %1542 = vmatpush1.msra.mxu0 %v341
        %1543 = vmatprep.subr.mxu0 %v344
        %1544 = vmatpush1.msra.mxu0 %v343
        %1545 = vmatprep.subr.mxu0 %v346
        %1546 = vmatpush1.msra.mxu0 %v345
        %1547 = vmatprep.subr.mxu0 %v348
        %1548 = vmatpush1.msra.mxu0 %v347
        %1549 = vmatprep.subr.mxu0 %v350
        %1550 = vmatpush1.msra.mxu0 %v349
        %1551 = vmatprep.subr.mxu0 %v352
        %1552 = vmatpush1.msra.mxu0 %v351
        %1553 = vmatprep.subr.mxu0 %v354
        %1554 = vmatpush1.msra.mxu0 %v353
        %1555 = vmatprep.subr.mxu0 %v356
        %1556 = vmatpush1.msra.mxu0 %v355
        %1557 = vmatprep.subr.mxu0 %v358
        %1558 = vmatpush1.msra.mxu0 %v357
        %1559 = vmatprep.subr.mxu0 %v360
        %1560 = vmatpush1.msra.mxu0 %v359
        %1561 = vmatprep.subr.mxu0 %v362
        %1562 = vmatpush1.msra.mxu0 %v361
        %1563 = vmatprep.subr.mxu0 %v364
        %1564 = vmatpush1.msra.mxu0 %v363
        %1565 = vmatprep.subr.mxu0 %v366
        %1566 = vmatpush1.msra.mxu0 %v365
        %1567 = vmatprep.subr.mxu0 %v368
        %1568 = vmatpush1.msra.mxu0 %v367
        %1569 = vmatprep.subr.mxu0 %v370
        %1570 = vmatpush1.msra.mxu0 %v369
        %1571 = vmatprep.subr.mxu0 %v372
        %1572 = vmatpush1.msra.mxu0 %v371
        %1573 = vmatprep.subr.mxu0 %v374
        %1574 = vmatpush1.msra.mxu0 %v373
        %1575 = vmatprep.subr.mxu0 %v376
        %1576 = vmatpush1.msra.mxu0 %v375
        %1577 = vmatprep.subr.mxu0 %v378
        %1578 = vmatpush1.msra.mxu0 %v377
        %1579 = vmatprep.subr.mxu0 %v380
        %1580 = vmatpush1.msra.mxu0 %v379
        %1581 = vmatprep.subr.mxu0 %v382
        %1582 = vmatpush1.msra.mxu0 %v381
        %1583 = vmatprep.subr.mxu0 %v384
        %1584 = vmatpush1.msra.mxu0 %v383
        %1585 = vmatprep.subr.mxu0 %v386
        %1586 = vmatpush1.msra.mxu0 %v385
        %1587 = vmatprep.subr.mxu0 %v388
        %1588 = vmatpush1.msra.mxu0 %v387
        %1589 = vmatprep.subr.mxu0 %v390
        %1590 = vmatpush1.msra.mxu0 %v389
        %1591 = vmatprep.subr.mxu0 %v392
        %1592 = vmatpush1.msra.mxu0 %v391
        %1593 = vmatprep.subr.mxu0 %v394
        %1594 = vmatpush1.msra.mxu0 %v393
        %1595 = vmatprep.subr.mxu0 %v396
        %1596 = vmatpush1.msra.mxu0 %v395
        %1597 = vmatprep.subr.mxu0 %v398
        %1598 = vmatpush1.msra.mxu0 %v397
        %1599 = vmatprep.subr.mxu0 %v400
        %1600 = vmatpush1.msra.mxu0 %v399
        %1601 = vmatprep.subr.mxu0 %v402
        %1602 = vmatpush1.msra.mxu0 %v401
        %1603 = vmatprep.mubr.f32.mxu0 %v1386
        %1604 = vmatmul.mubr.f32.gmra.mrb[0].mxu0 %v1378
        %v1605 = vpop.f32.mrb[0].mxu0
        %v1606 = vadd.f32 0.0, %v1605
        %v1607 = vpop.f32.mrb[0].mxu0
        %v1608 = vadd.f32 0.0, %v1607
        %1609 = vdwg.mxu0
        %1610 = vmatprep.subr.mxu0 %v404
        %1611 = vmatpush1.msra.mxu0 %v403
        %1612 = vmatprep.subr.mxu0 %v406
        %1613 = vmatpush1.msra.mxu0 %v405
        %1614 = vmatprep.subr.mxu0 %v408
        %1615 = vmatpush1.msra.mxu0 %v407
        %1616 = vmatprep.subr.mxu0 %v410
        %1617 = vmatpush1.msra.mxu0 %v409
        %1618 = vmatprep.subr.mxu0 %v412
        %1619 = vmatpush1.msra.mxu0 %v411
        %1620 = vmatprep.subr.mxu0 %v414
        %1621 = vmatpush1.msra.mxu0 %v413
        %1622 = vmatprep.subr.mxu0 %v416
        %1623 = vmatpush1.msra.mxu0 %v415
        %1624 = vmatprep.subr.mxu0 %v418
        %1625 = vmatpush1.msra.mxu0 %v417
        %1626 = vmatprep.subr.mxu0 %v420
        %1627 = vmatpush1.msra.mxu0 %v419
        %1628 = vmatprep.subr.mxu0 %v422
        %1629 = vmatpush1.msra.mxu0 %v421
        %1630 = vmatprep.subr.mxu0 %v424
        %1631 = vmatpush1.msra.mxu0 %v423
        %1632 = vmatprep.subr.mxu0 %v426
        %1633 = vmatpush1.msra.mxu0 %v425
        %1634 = vmatprep.subr.mxu0 %v428
        %1635 = vmatpush1.msra.mxu0 %v427
        %1636 = vmatprep.subr.mxu0 %v430
        %1637 = vmatpush1.msra.mxu0 %v429
        %1638 = vmatprep.subr.mxu0 %v432
        %1639 = vmatpush1.msra.mxu0 %v431
        %1640 = vmatprep.subr.mxu0 %v434
        %1641 = vmatpush1.msra.mxu0 %v433
        %1642 = vmatprep.subr.mxu0 %v436
        %1643 = vmatpush1.msra.mxu0 %v435
        %1644 = vmatprep.subr.mxu0 %v438
        %1645 = vmatpush1.msra.mxu0 %v437
        %1646 = vmatprep.subr.mxu0 %v440
        %1647 = vmatpush1.msra.mxu0 %v439
        %1648 = vmatprep.subr.mxu0 %v442
        %1649 = vmatpush1.msra.mxu0 %v441
        %1650 = vmatprep.subr.mxu0 %v444
        %1651 = vmatpush1.msra.mxu0 %v443
        %1652 = vmatprep.subr.mxu0 %v446
        %1653 = vmatpush1.msra.mxu0 %v445
        %1654 = vmatprep.subr.mxu0 %v448
        %1655 = vmatpush1.msra.mxu0 %v447
        %1656 = vmatprep.subr.mxu0 %v450
        %1657 = vmatpush1.msra.mxu0 %v449
        %1658 = vmatprep.subr.mxu0 %v452
        %1659 = vmatpush1.msra.mxu0 %v451
        %1660 = vmatprep.subr.mxu0 %v454
        %1661 = vmatpush1.msra.mxu0 %v453
        %1662 = vmatprep.subr.mxu0 %v456
        %1663 = vmatpush1.msra.mxu0 %v455
        %1664 = vmatprep.subr.mxu0 %v458
        %1665 = vmatpush1.msra.mxu0 %v457
        %1666 = vmatprep.subr.mxu0 %v460
        %1667 = vmatpush1.msra.mxu0 %v459
        %1668 = vmatprep.subr.mxu0 %v462
        %1669 = vmatpush1.msra.mxu0 %v461
        %1670 = vmatprep.subr.mxu0 %v464
        %1671 = vmatpush1.msra.mxu0 %v463
        %1672 = vmatprep.subr.mxu0 %v466
        %1673 = vmatpush1.msra.mxu0 %v465
        %1674 = vmatprep.mubr.f32.mxu0 %v1387
        %1675 = vmatmul.mubr.f32.gmra.mrb[0].mxu0 %v1385
        %v1676 = vpop.f32.mrb[0].mxu0
        %v1677 = vadd.f32 %v1606, %v1676
        %v1678 = vpop.f32.mrb[0].mxu0
        %v1679 = vadd.f32 %v1608, %v1678
        %1680 = vdwg.mxu0
        %1681 = vmatprep.subr.mxu0 %v468
        %1682 = vmatpush1.msra.mxu0 %v467
        %1683 = vmatprep.subr.mxu0 %v470
        %1684 = vmatpush1.msra.mxu0 %v469
        %1685 = vmatprep.subr.mxu0 %v472
        %1686 = vmatpush1.msra.mxu0 %v471
        %1687 = vmatprep.subr.mxu0 %v474
        %1688 = vmatpush1.msra.mxu0 %v473
        %1689 = vmatprep.subr.mxu0 %v476
        %1690 = vmatpush1.msra.mxu0 %v475
        %1691 = vmatprep.subr.mxu0 %v478
        %1692 = vmatpush1.msra.mxu0 %v477
        %1693 = vmatprep.subr.mxu0 %v480
        %1694 = vmatpush1.msra.mxu0 %v479
        %1695 = vmatprep.subr.mxu0 %v482
        %1696 = vmatpush1.msra.mxu0 %v481
        %1697 = vmatprep.subr.mxu0 %v484
        %1698 = vmatpush1.msra.mxu0 %v483
        %1699 = vmatprep.subr.mxu0 %v486
        %1700 = vmatpush1.msra.mxu0 %v485
        %1701 = vmatprep.subr.mxu0 %v488
        %1702 = vmatpush1.msra.mxu0 %v487
        %1703 = vmatprep.subr.mxu0 %v490
        %1704 = vmatpush1.msra.mxu0 %v489
        %1705 = vmatprep.subr.mxu0 %v492
        %1706 = vmatpush1.msra.mxu0 %v491
        %1707 = vmatprep.subr.mxu0 %v494
        %1708 = vmatpush1.msra.mxu0 %v493
        %1709 = vmatprep.subr.mxu0 %v496
        %1710 = vmatpush1.msra.mxu0 %v495
        %1711 = vmatprep.subr.mxu0 %v498
        %1712 = vmatpush1.msra.mxu0 %v497
        %1713 = vmatprep.subr.mxu0 %v500
        %1714 = vmatpush1.msra.mxu0 %v499
        %1715 = vmatprep.subr.mxu0 %v502
        %1716 = vmatpush1.msra.mxu0 %v501
        %1717 = vmatprep.subr.mxu0 %v504
        %1718 = vmatpush1.msra.mxu0 %v503
        %1719 = vmatprep.subr.mxu0 %v506
        %1720 = vmatpush1.msra.mxu0 %v505
        %1721 = vmatprep.subr.mxu0 %v508
        %1722 = vmatpush1.msra.mxu0 %v507
        %1723 = vmatprep.subr.mxu0 %v510
        %1724 = vmatpush1.msra.mxu0 %v509
        %1725 = vmatprep.subr.mxu0 %v512
        %1726 = vmatpush1.msra.mxu0 %v511
        %1727 = vmatprep.subr.mxu0 %v514
        %1728 = vmatpush1.msra.mxu0 %v513
        %1729 = vmatprep.subr.mxu0 %v516
        %1730 = vmatpush1.msra.mxu0 %v515
        %1731 = vmatprep.subr.mxu0 %v518
        %1732 = vmatpush1.msra.mxu0 %v517
        %1733 = vmatprep.subr.mxu0 %v520
        %1734 = vmatpush1.msra.mxu0 %v519
        %1735 = vmatprep.subr.mxu0 %v522
        %1736 = vmatpush1.msra.mxu0 %v521
        %1737 = vmatprep.subr.mxu0 %v524
        %1738 = vmatpush1.msra.mxu0 %v523
        %1739 = vmatprep.subr.mxu0 %v526
        %1740 = vmatpush1.msra.mxu0 %v525
        %1741 = vmatprep.subr.mxu0 %v528
        %1742 = vmatpush1.msra.mxu0 %v527
        %1743 = vmatprep.subr.mxu0 %v530
        %1744 = vmatpush1.msra.mxu0 %v529
        %1745 = vmatprep.mubr.f32.mxu0 %v1403
        %1746 = vmatmul.mubr.f32.gmra.mrb[0].mxu0 %v1395
        %v1747 = vpop.f32.mrb[0].mxu0
        %v1748 = vadd.f32 %v1677, %v1747
        %v1749 = vpop.f32.mrb[0].mxu0
        %v1750 = vadd.f32 %v1679, %v1749
        %1751 = vdwg.mxu0
        %1752 = vmatprep.subr.mxu0 %v532
        %1753 = vmatpush1.msra.mxu0 %v531
        %1754 = vmatprep.subr.mxu0 %v534
        %1755 = vmatpush1.msra.mxu0 %v533
        %1756 = vmatprep.subr.mxu0 %v536
        %1757 = vmatpush1.msra.mxu0 %v535
        %1758 = vmatprep.subr.mxu0 %v538
        %1759 = vmatpush1.msra.mxu0 %v537
        %1760 = vmatprep.subr.mxu0 %v540
        %1761 = vmatpush1.msra.mxu0 %v539
        %1762 = vmatprep.subr.mxu0 %v542
        %1763 = vmatpush1.msra.mxu0 %v541
        %1764 = vmatprep.subr.mxu0 %v544
        %1765 = vmatpush1.msra.mxu0 %v543
        %1766 = vmatprep.subr.mxu0 %v546
        %1767 = vmatpush1.msra.mxu0 %v545
        %1768 = vmatprep.subr.mxu0 %v548
        %1769 = vmatpush1.msra.mxu0 %v547
        %1770 = vmatprep.subr.mxu0 %v550
        %1771 = vmatpush1.msra.mxu0 %v549
        %1772 = vmatprep.subr.mxu0 %v552
        %1773 = vmatpush1.msra.mxu0 %v551
        %1774 = vmatprep.subr.mxu0 %v554
        %1775 = vmatpush1.msra.mxu0 %v553
        %1776 = vmatprep.subr.mxu0 %v556
        %1777 = vmatpush1.msra.mxu0 %v555
        %1778 = vmatprep.subr.mxu0 %v558
        %1779 = vmatpush1.msra.mxu0 %v557
        %1780 = vmatprep.subr.mxu0 %v560
        %1781 = vmatpush1.msra.mxu0 %v559
        %1782 = vmatprep.subr.mxu0 %v562
        %1783 = vmatpush1.msra.mxu0 %v561
        %1784 = vmatprep.subr.mxu0 %v564
        %1785 = vmatpush1.msra.mxu0 %v563
        %1786 = vmatprep.subr.mxu0 %v566
        %1787 = vmatpush1.msra.mxu0 %v565
        %1788 = vmatprep.subr.mxu0 %v568
        %1789 = vmatpush1.msra.mxu0 %v567
        %1790 = vmatprep.subr.mxu0 %v570
        %1791 = vmatpush1.msra.mxu0 %v569
        %1792 = vmatprep.subr.mxu0 %v572
        %1793 = vmatpush1.msra.mxu0 %v571
        %1794 = vmatprep.subr.mxu0 %v574
        %1795 = vmatpush1.msra.mxu0 %v573
        %1796 = vmatprep.subr.mxu0 %v576
        %1797 = vmatpush1.msra.mxu0 %v575
        %1798 = vmatprep.subr.mxu0 %v578
        %1799 = vmatpush1.msra.mxu0 %v577
        %1800 = vmatprep.subr.mxu0 %v580
        %1801 = vmatpush1.msra.mxu0 %v579
        %1802 = vmatprep.subr.mxu0 %v582
        %1803 = vmatpush1.msra.mxu0 %v581
        %1804 = vmatprep.subr.mxu0 %v584
        %1805 = vmatpush1.msra.mxu0 %v583
        %1806 = vmatprep.subr.mxu0 %v586
        %1807 = vmatpush1.msra.mxu0 %v585
        %1808 = vmatprep.subr.mxu0 %v588
        %1809 = vmatpush1.msra.mxu0 %v587
        %1810 = vmatprep.subr.mxu0 %v590
        %1811 = vmatpush1.msra.mxu0 %v589
        %1812 = vmatprep.subr.mxu0 %v592
        %1813 = vmatpush1.msra.mxu0 %v591
        %1814 = vmatprep.subr.mxu0 %v594
        %1815 = vmatpush1.msra.mxu0 %v593
        %1816 = vmatprep.mubr.f32.mxu0 %v1404
        %1817 = vmatmul.mubr.f32.gmra.mrb[0].mxu0 %v1402
        %v1818 = vpop.f32.mrb[0].mxu0
        %v1819 = vadd.f32 %v1748, %v1818
        %v1820 = vpop.f32.mrb[0].mxu0
        %v1821 = vadd.f32 %v1750, %v1820
        %1822 = vdwg.mxu0
        %1823 = vmatprep.subr.mxu0 %v596
        %1824 = vmatpush1.msra.mxu0 %v595
        %1825 = vmatprep.subr.mxu0 %v598
        %1826 = vmatpush1.msra.mxu0 %v597
        %1827 = vmatprep.subr.mxu0 %v600
        %1828 = vmatpush1.msra.mxu0 %v599
        %1829 = vmatprep.subr.mxu0 %v602
        %1830 = vmatpush1.msra.mxu0 %v601
        %1831 = vmatprep.subr.mxu0 %v604
        %1832 = vmatpush1.msra.mxu0 %v603
        %1833 = vmatprep.subr.mxu0 %v606
        %1834 = vmatpush1.msra.mxu0 %v605
        %1835 = vmatprep.subr.mxu0 %v608
        %1836 = vmatpush1.msra.mxu0 %v607
        %1837 = vmatprep.subr.mxu0 %v610
        %1838 = vmatpush1.msra.mxu0 %v609
        %1839 = vmatprep.subr.mxu0 %v612
        %1840 = vmatpush1.msra.mxu0 %v611
        %1841 = vmatprep.subr.mxu0 %v614
        %1842 = vmatpush1.msra.mxu0 %v613
        %1843 = vmatprep.subr.mxu0 %v616
        %1844 = vmatpush1.msra.mxu0 %v615
        %1845 = vmatprep.subr.mxu0 %v618
        %1846 = vmatpush1.msra.mxu0 %v617
        %1847 = vmatprep.subr.mxu0 %v620
        %1848 = vmatpush1.msra.mxu0 %v619
        %1849 = vmatprep.subr.mxu0 %v622
        %1850 = vmatpush1.msra.mxu0 %v621
        %1851 = vmatprep.subr.mxu0 %v624
        %1852 = vmatpush1.msra.mxu0 %v623
        %1853 = vmatprep.subr.mxu0 %v626
        %1854 = vmatpush1.msra.mxu0 %v625
        %1855 = vmatprep.subr.mxu0 %v628
        %1856 = vmatpush1.msra.mxu0 %v627
        %1857 = vmatprep.subr.mxu0 %v630
        %1858 = vmatpush1.msra.mxu0 %v629
        %1859 = vmatprep.subr.mxu0 %v632
        %1860 = vmatpush1.msra.mxu0 %v631
        %1861 = vmatprep.subr.mxu0 %v634
        %1862 = vmatpush1.msra.mxu0 %v633
        %1863 = vmatprep.subr.mxu0 %v636
        %1864 = vmatpush1.msra.mxu0 %v635
        %1865 = vmatprep.subr.mxu0 %v638
        %1866 = vmatpush1.msra.mxu0 %v637
        %1867 = vmatprep.subr.mxu0 %v640
        %1868 = vmatpush1.msra.mxu0 %v639
        %1869 = vmatprep.subr.mxu0 %v642
        %1870 = vmatpush1.msra.mxu0 %v641
        %1871 = vmatprep.subr.mxu0 %v644
        %1872 = vmatpush1.msra.mxu0 %v643
        %1873 = vmatprep.subr.mxu0 %v646
        %1874 = vmatpush1.msra.mxu0 %v645
        %1875 = vmatprep.subr.mxu0 %v648
        %1876 = vmatpush1.msra.mxu0 %v647
        %1877 = vmatprep.subr.mxu0 %v650
        %1878 = vmatpush1.msra.mxu0 %v649
        %1879 = vmatprep.subr.mxu0 %v652
        %1880 = vmatpush1.msra.mxu0 %v651
        %1881 = vmatprep.subr.mxu0 %v654
        %1882 = vmatpush1.msra.mxu0 %v653
        %1883 = vmatprep.subr.mxu0 %v656
        %1884 = vmatpush1.msra.mxu0 %v655
        %1885 = vmatprep.subr.mxu0 %v658
        %1886 = vmatpush1.msra.mxu0 %v657
        %1887 = vmatprep.mubr.f32.mxu0 %v1420
        %1888 = vmatmul.mubr.f32.gmra.mrb[0].mxu0 %v1412
        %v1889 = vpop.f32.mrb[0].mxu0
        %v1890 = vadd.f32 %v1819, %v1889
        %v1891 = vpop.f32.mrb[0].mxu0
        %v1892 = vadd.f32 %v1821, %v1891
        %1893 = vdwg.mxu0
        %1894 = vmatprep.subr.mxu0 %v660
        %1895 = vmatpush1.msra.mxu0 %v659
        %1896 = vmatprep.subr.mxu0 %v662
        %1897 = vmatpush1.msra.mxu0 %v661
        %1898 = vmatprep.subr.mxu0 %v664
        %1899 = vmatpush1.msra.mxu0 %v663
        %1900 = vmatprep.subr.mxu0 %v666
        %1901 = vmatpush1.msra.mxu0 %v665
        %1902 = vmatprep.subr.mxu0 %v668
        %1903 = vmatpush1.msra.mxu0 %v667
        %1904 = vmatprep.subr.mxu0 %v670
        %1905 = vmatpush1.msra.mxu0 %v669
        %1906 = vmatprep.subr.mxu0 %v672
        %1907 = vmatpush1.msra.mxu0 %v671
        %1908 = vmatprep.subr.mxu0 %v674
        %1909 = vmatpush1.msra.mxu0 %v673
        %1910 = vmatprep.subr.mxu0 %v676
        %1911 = vmatpush1.msra.mxu0 %v675
        %1912 = vmatprep.subr.mxu0 %v678
        %1913 = vmatpush1.msra.mxu0 %v677
        %1914 = vmatprep.subr.mxu0 %v680
        %1915 = vmatpush1.msra.mxu0 %v679
        %1916 = vmatprep.subr.mxu0 %v682
        %1917 = vmatpush1.msra.mxu0 %v681
        %1918 = vmatprep.subr.mxu0 %v684
        %1919 = vmatpush1.msra.mxu0 %v683
        %1920 = vmatprep.subr.mxu0 %v686
        %1921 = vmatpush1.msra.mxu0 %v685
        %1922 = vmatprep.subr.mxu0 %v688
        %1923 = vmatpush1.msra.mxu0 %v687
        %1924 = vmatprep.subr.mxu0 %v690
        %1925 = vmatpush1.msra.mxu0 %v689
        %1926 = vmatprep.subr.mxu0 %v692
        %1927 = vmatpush1.msra.mxu0 %v691
        %1928 = vmatprep.subr.mxu0 %v694
        %1929 = vmatpush1.msra.mxu0 %v693
        %1930 = vmatprep.subr.mxu0 %v696
        %1931 = vmatpush1.msra.mxu0 %v695
        %1932 = vmatprep.subr.mxu0 %v698
        %1933 = vmatpush1.msra.mxu0 %v697
        %1934 = vmatprep.subr.mxu0 %v700
        %1935 = vmatpush1.msra.mxu0 %v699
        %1936 = vmatprep.subr.mxu0 %v702
        %1937 = vmatpush1.msra.mxu0 %v701
        %1938 = vmatprep.subr.mxu0 %v704
        %1939 = vmatpush1.msra.mxu0 %v703
        %1940 = vmatprep.subr.mxu0 %v706
        %1941 = vmatpush1.msra.mxu0 %v705
        %1942 = vmatprep.subr.mxu0 %v708
        %1943 = vmatpush1.msra.mxu0 %v707
        %1944 = vmatprep.subr.mxu0 %v710
        %1945 = vmatpush1.msra.mxu0 %v709
        %1946 = vmatprep.subr.mxu0 %v712
        %1947 = vmatpush1.msra.mxu0 %v711
        %1948 = vmatprep.subr.mxu0 %v714
        %1949 = vmatpush1.msra.mxu0 %v713
        %1950 = vmatprep.subr.mxu0 %v716
        %1951 = vmatpush1.msra.mxu0 %v715
        %1952 = vmatprep.subr.mxu0 %v718
        %1953 = vmatpush1.msra.mxu0 %v717
        %1954 = vmatprep.subr.mxu0 %v720
        %1955 = vmatpush1.msra.mxu0 %v719
        %1956 = vmatprep.subr.mxu0 %v722
        %1957 = vmatpush1.msra.mxu0 %v721
        %1958 = vmatprep.mubr.f32.mxu0 %v1421
        %1959 = vmatmul.mubr.f32.gmra.mrb[0].mxu0 %v1419
        %v1960 = vpop.f32.mrb[0].mxu0
        %v1961 = vadd.f32 %v1890, %v1960
        %v1962 = vpop.f32.mrb[0].mxu0
        %v1963 = vadd.f32 %v1892, %v1962
        %1964 = vdwg.mxu0
        %1965 = vmatprep.subr.mxu0 %v724
        %1966 = vmatpush1.msra.mxu0 %v723
        %1967 = vmatprep.subr.mxu0 %v726
        %1968 = vmatpush1.msra.mxu0 %v725
        %1969 = vmatprep.subr.mxu0 %v728
        %1970 = vmatpush1.msra.mxu0 %v727
        %1971 = vmatprep.subr.mxu0 %v730
        %1972 = vmatpush1.msra.mxu0 %v729
        %1973 = vmatprep.subr.mxu0 %v732
        %1974 = vmatpush1.msra.mxu0 %v731
        %1975 = vmatprep.subr.mxu0 %v734
        %1976 = vmatpush1.msra.mxu0 %v733
        %1977 = vmatprep.subr.mxu0 %v736
        %1978 = vmatpush1.msra.mxu0 %v735
        %1979 = vmatprep.subr.mxu0 %v738
        %1980 = vmatpush1.msra.mxu0 %v737
        %1981 = vmatprep.subr.mxu0 %v740
        %1982 = vmatpush1.msra.mxu0 %v739
        %1983 = vmatprep.subr.mxu0 %v742
        %1984 = vmatpush1.msra.mxu0 %v741
        %1985 = vmatprep.subr.mxu0 %v744
        %1986 = vmatpush1.msra.mxu0 %v743
        %1987 = vmatprep.subr.mxu0 %v746
        %1988 = vmatpush1.msra.mxu0 %v745
        %1989 = vmatprep.subr.mxu0 %v748
        %1990 = vmatpush1.msra.mxu0 %v747
        %1991 = vmatprep.subr.mxu0 %v750
        %1992 = vmatpush1.msra.mxu0 %v749
        %1993 = vmatprep.subr.mxu0 %v752
        %1994 = vmatpush1.msra.mxu0 %v751
        %1995 = vmatprep.subr.mxu0 %v754
        %1996 = vmatpush1.msra.mxu0 %v753
        %1997 = vmatprep.subr.mxu0 %v756
        %1998 = vmatpush1.msra.mxu0 %v755
        %1999 = vmatprep.subr.mxu0 %v758
        %2000 = vmatpush1.msra.mxu0 %v757
        %2001 = vmatprep.subr.mxu0 %v760
        %2002 = vmatpush1.msra.mxu0 %v759
        %2003 = vmatprep.subr.mxu0 %v762
        %2004 = vmatpush1.msra.mxu0 %v761
        %2005 = vmatprep.subr.mxu0 %v764
        %2006 = vmatpush1.msra.mxu0 %v763
        %2007 = vmatprep.subr.mxu0 %v766
        %2008 = vmatpush1.msra.mxu0 %v765
        %2009 = vmatprep.subr.mxu0 %v768
        %2010 = vmatpush1.msra.mxu0 %v767
        %2011 = vmatprep.subr.mxu0 %v770
        %2012 = vmatpush1.msra.mxu0 %v769
        %2013 = vmatprep.subr.mxu0 %v772
        %2014 = vmatpush1.msra.mxu0 %v771
        %2015 = vmatprep.subr.mxu0 %v774
        %2016 = vmatpush1.msra.mxu0 %v773
        %2017 = vmatprep.subr.mxu0 %v776
        %2018 = vmatpush1.msra.mxu0 %v775
        %2019 = vmatprep.subr.mxu0 %v778
        %2020 = vmatpush1.msra.mxu0 %v777
        %2021 = vmatprep.subr.mxu0 %v780
        %2022 = vmatpush1.msra.mxu0 %v779
        %2023 = vmatprep.subr.mxu0 %v782
        %2024 = vmatpush1.msra.mxu0 %v781
        %2025 = vmatprep.subr.mxu0 %v784
        %2026 = vmatpush1.msra.mxu0 %v783
        %2027 = vmatprep.subr.mxu0 %v786
        %2028 = vmatpush1.msra.mxu0 %v785
        %2029 = vmatprep.mubr.f32.mxu0 %v1437
        %2030 = vmatmul.mubr.f32.gmra.mrb[0].mxu0 %v1429
        %v2031 = vpop.f32.mrb[0].mxu0
        %v2032 = vadd.f32 %v1961, %v2031
        %v2033 = vpop.f32.mrb[0].mxu0
        %v2034 = vadd.f32 %v1963, %v2033
        %2035 = vdwg.mxu0
        %2036 = vmatprep.subr.mxu0 %v788
        %2037 = vmatpush1.msra.mxu0 %v787
        %2038 = vmatprep.subr.mxu0 %v790
        %2039 = vmatpush1.msra.mxu0 %v789
        %2040 = vmatprep.subr.mxu0 %v792
        %2041 = vmatpush1.msra.mxu0 %v791
        %2042 = vmatprep.subr.mxu0 %v794
        %2043 = vmatpush1.msra.mxu0 %v793
        %2044 = vmatprep.subr.mxu0 %v796
        %2045 = vmatpush1.msra.mxu0 %v795
        %2046 = vmatprep.subr.mxu0 %v798
        %2047 = vmatpush1.msra.mxu0 %v797
        %2048 = vmatprep.subr.mxu0 %v800
        %2049 = vmatpush1.msra.mxu0 %v799
        %2050 = vmatprep.subr.mxu0 %v802
        %2051 = vmatpush1.msra.mxu0 %v801
        %2052 = vmatprep.subr.mxu0 %v804
        %2053 = vmatpush1.msra.mxu0 %v803
        %2054 = vmatprep.subr.mxu0 %v806
        %2055 = vmatpush1.msra.mxu0 %v805
        %2056 = vmatprep.subr.mxu0 %v808
        %2057 = vmatpush1.msra.mxu0 %v807
        %2058 = vmatprep.subr.mxu0 %v810
        %2059 = vmatpush1.msra.mxu0 %v809
        %2060 = vmatprep.subr.mxu0 %v812
        %2061 = vmatpush1.msra.mxu0 %v811
        %2062 = vmatprep.subr.mxu0 %v814
        %2063 = vmatpush1.msra.mxu0 %v813
        %2064 = vmatprep.subr.mxu0 %v816
        %2065 = vmatpush1.msra.mxu0 %v815
        %2066 = vmatprep.subr.mxu0 %v818
        %2067 = vmatpush1.msra.mxu0 %v817
        %2068 = vmatprep.subr.mxu0 %v820
        %2069 = vmatpush1.msra.mxu0 %v819
        %2070 = vmatprep.subr.mxu0 %v822
        %2071 = vmatpush1.msra.mxu0 %v821
        %2072 = vmatprep.subr.mxu0 %v824
        %2073 = vmatpush1.msra.mxu0 %v823
        %2074 = vmatprep.subr.mxu0 %v826
        %2075 = vmatpush1.msra.mxu0 %v825
        %2076 = vmatprep.subr.mxu0 %v828
        %2077 = vmatpush1.msra.mxu0 %v827
        %2078 = vmatprep.subr.mxu0 %v830
        %2079 = vmatpush1.msra.mxu0 %v829
        %2080 = vmatprep.subr.mxu0 %v832
        %2081 = vmatpush1.msra.mxu0 %v831
        %2082 = vmatprep.subr.mxu0 %v834
        %2083 = vmatpush1.msra.mxu0 %v833
        %2084 = vmatprep.subr.mxu0 %v836
        %2085 = vmatpush1.msra.mxu0 %v835
        %2086 = vmatprep.subr.mxu0 %v838
        %2087 = vmatpush1.msra.mxu0 %v837
        %2088 = vmatprep.subr.mxu0 %v840
        %2089 = vmatpush1.msra.mxu0 %v839
        %2090 = vmatprep.subr.mxu0 %v842
        %2091 = vmatpush1.msra.mxu0 %v841
        %2092 = vmatprep.subr.mxu0 %v844
        %2093 = vmatpush1.msra.mxu0 %v843
        %2094 = vmatprep.subr.mxu0 %v846
        %2095 = vmatpush1.msra.mxu0 %v845
        %2096 = vmatprep.subr.mxu0 %v848
        %2097 = vmatpush1.msra.mxu0 %v847
        %2098 = vmatprep.subr.mxu0 %v850
        %2099 = vmatpush1.msra.mxu0 %v849
        %2100 = vmatprep.mubr.f32.mxu0 %v1438
        %2101 = vmatmul.mubr.f32.gmra.mrb[0].mxu0 %v1436
        %v2102 = vpop.f32.mrb[0].mxu0
        %v2103 = vadd.f32 %v2032, %v2102
        %v2104 = vpop.f32.mrb[0].mxu0
        %v2105 = vadd.f32 %v2034, %v2104
        %2106 = vdwg.mxu0
        %2107 = vmatprep.subr.mxu0 %v852
        %2108 = vmatpush1.msra.mxu0 %v851
        %2109 = vmatprep.subr.mxu0 %v854
        %2110 = vmatpush1.msra.mxu0 %v853
        %2111 = vmatprep.subr.mxu0 %v856
        %2112 = vmatpush1.msra.mxu0 %v855
        %2113 = vmatprep.subr.mxu0 %v858
        %2114 = vmatpush1.msra.mxu0 %v857
        %2115 = vmatprep.subr.mxu0 %v860
        %2116 = vmatpush1.msra.mxu0 %v859
        %2117 = vmatprep.subr.mxu0 %v862
        %2118 = vmatpush1.msra.mxu0 %v861
        %2119 = vmatprep.subr.mxu0 %v864
        %2120 = vmatpush1.msra.mxu0 %v863
        %2121 = vmatprep.subr.mxu0 %v866
        %2122 = vmatpush1.msra.mxu0 %v865
        %2123 = vmatprep.subr.mxu0 %v868
        %2124 = vmatpush1.msra.mxu0 %v867
        %2125 = vmatprep.subr.mxu0 %v870
        %2126 = vmatpush1.msra.mxu0 %v869
        %2127 = vmatprep.subr.mxu0 %v872
        %2128 = vmatpush1.msra.mxu0 %v871
        %2129 = vmatprep.subr.mxu0 %v874
        %2130 = vmatpush1.msra.mxu0 %v873
        %2131 = vmatprep.subr.mxu0 %v876
        %2132 = vmatpush1.msra.mxu0 %v875
        %2133 = vmatprep.subr.mxu0 %v878
        %2134 = vmatpush1.msra.mxu0 %v877
        %2135 = vmatprep.subr.mxu0 %v880
        %2136 = vmatpush1.msra.mxu0 %v879
        %2137 = vmatprep.subr.mxu0 %v882
        %2138 = vmatpush1.msra.mxu0 %v881
        %2139 = vmatprep.subr.mxu0 %v884
        %2140 = vmatpush1.msra.mxu0 %v883
        %2141 = vmatprep.subr.mxu0 %v886
        %2142 = vmatpush1.msra.mxu0 %v885
        %2143 = vmatprep.subr.mxu0 %v888
        %2144 = vmatpush1.msra.mxu0 %v887
        %2145 = vmatprep.subr.mxu0 %v890
        %2146 = vmatpush1.msra.mxu0 %v889
        %2147 = vmatprep.subr.mxu0 %v892
        %2148 = vmatpush1.msra.mxu0 %v891
        %2149 = vmatprep.subr.mxu0 %v894
        %2150 = vmatpush1.msra.mxu0 %v893
        %2151 = vmatprep.subr.mxu0 %v896
        %2152 = vmatpush1.msra.mxu0 %v895
        %2153 = vmatprep.subr.mxu0 %v898
        %2154 = vmatpush1.msra.mxu0 %v897
        %2155 = vmatprep.subr.mxu0 %v900
        %2156 = vmatpush1.msra.mxu0 %v899
        %2157 = vmatprep.subr.mxu0 %v902
        %2158 = vmatpush1.msra.mxu0 %v901
        %2159 = vmatprep.subr.mxu0 %v904
        %2160 = vmatpush1.msra.mxu0 %v903
        %2161 = vmatprep.subr.mxu0 %v906
        %2162 = vmatpush1.msra.mxu0 %v905
        %2163 = vmatprep.subr.mxu0 %v908
        %2164 = vmatpush1.msra.mxu0 %v907
        %2165 = vmatprep.subr.mxu0 %v910
        %2166 = vmatpush1.msra.mxu0 %v909
        %2167 = vmatprep.subr.mxu0 %v912
        %2168 = vmatpush1.msra.mxu0 %v911
        %2169 = vmatprep.subr.mxu0 %v914
        %2170 = vmatpush1.msra.mxu0 %v913
        %2171 = vmatprep.mubr.f32.mxu0 %v1454
        %2172 = vmatmul.mubr.f32.gmra.mrb[0].mxu0 %v1446
        %v2173 = vpop.f32.mrb[0].mxu0
        %v2174 = vadd.f32 %v2103, %v2173
        %v2175 = vpop.f32.mrb[0].mxu0
        %v2176 = vadd.f32 %v2105, %v2175
        %2177 = vdwg.mxu0
        %2178 = vmatprep.subr.mxu0 %v916
        %2179 = vmatpush1.msra.mxu0 %v915
        %2180 = vmatprep.subr.mxu0 %v918
        %2181 = vmatpush1.msra.mxu0 %v917
        %2182 = vmatprep.subr.mxu0 %v920
        %2183 = vmatpush1.msra.mxu0 %v919
        %2184 = vmatprep.subr.mxu0 %v922
        %2185 = vmatpush1.msra.mxu0 %v921
        %2186 = vmatprep.subr.mxu0 %v924
        %2187 = vmatpush1.msra.mxu0 %v923
        %2188 = vmatprep.subr.mxu0 %v926
        %2189 = vmatpush1.msra.mxu0 %v925
        %2190 = vmatprep.subr.mxu0 %v928
        %2191 = vmatpush1.msra.mxu0 %v927
        %2192 = vmatprep.subr.mxu0 %v930
        %2193 = vmatpush1.msra.mxu0 %v929
        %2194 = vmatprep.subr.mxu0 %v932
        %2195 = vmatpush1.msra.mxu0 %v931
        %2196 = vmatprep.subr.mxu0 %v934
        %2197 = vmatpush1.msra.mxu0 %v933
        %2198 = vmatprep.subr.mxu0 %v936
        %2199 = vmatpush1.msra.mxu0 %v935
        %2200 = vmatprep.subr.mxu0 %v938
        %2201 = vmatpush1.msra.mxu0 %v937
        %2202 = vmatprep.subr.mxu0 %v940
        %2203 = vmatpush1.msra.mxu0 %v939
        %2204 = vmatprep.subr.mxu0 %v942
        %2205 = vmatpush1.msra.mxu0 %v941
        %2206 = vmatprep.subr.mxu0 %v944
        %2207 = vmatpush1.msra.mxu0 %v943
        %2208 = vmatprep.subr.mxu0 %v946
        %2209 = vmatpush1.msra.mxu0 %v945
        %2210 = vmatprep.subr.mxu0 %v948
        %2211 = vmatpush1.msra.mxu0 %v947
        %2212 = vmatprep.subr.mxu0 %v950
        %2213 = vmatpush1.msra.mxu0 %v949
        %2214 = vmatprep.subr.mxu0 %v952
        %2215 = vmatpush1.msra.mxu0 %v951
        %2216 = vmatprep.subr.mxu0 %v954
        %2217 = vmatpush1.msra.mxu0 %v953
        %2218 = vmatprep.subr.mxu0 %v956
        %2219 = vmatpush1.msra.mxu0 %v955
        %2220 = vmatprep.subr.mxu0 %v958
        %2221 = vmatpush1.msra.mxu0 %v957
        %2222 = vmatprep.subr.mxu0 %v960
        %2223 = vmatpush1.msra.mxu0 %v959
        %2224 = vmatprep.subr.mxu0 %v962
        %2225 = vmatpush1.msra.mxu0 %v961
        %2226 = vmatprep.subr.mxu0 %v964
        %2227 = vmatpush1.msra.mxu0 %v963
        %2228 = vmatprep.subr.mxu0 %v966
        %2229 = vmatpush1.msra.mxu0 %v965
        %2230 = vmatprep.subr.mxu0 %v968
        %2231 = vmatpush1.msra.mxu0 %v967
        %2232 = vmatprep.subr.mxu0 %v970
        %2233 = vmatpush1.msra.mxu0 %v969
        %2234 = vmatprep.subr.mxu0 %v972
        %2235 = vmatpush1.msra.mxu0 %v971
        %2236 = vmatprep.subr.mxu0 %v974
        %2237 = vmatpush1.msra.mxu0 %v973
        %2238 = vmatprep.subr.mxu0 %v976
        %2239 = vmatpush1.msra.mxu0 %v975
        %2240 = vmatprep.subr.mxu0 %v978
        %2241 = vmatpush1.msra.mxu0 %v977
        %2242 = vmatprep.mubr.f32.mxu0 %v1455
        %2243 = vmatmul.mubr.f32.gmra.mrb[0].mxu0 %v1453
        %v2244 = vpop.f32.mrb[0].mxu0
        %v2245 = vadd.f32 %v2174, %v2244
        %v2246 = vpop.f32.mrb[0].mxu0
        %v2247 = vadd.f32 %v2176, %v2246
        %2248 = vdwg.mxu0
        %2249 = vmatprep.subr.mxu0 %v980
        %2250 = vmatpush1.msra.mxu0 %v979
        %2251 = vmatprep.subr.mxu0 %v982
        %2252 = vmatpush1.msra.mxu0 %v981
        %2253 = vmatprep.subr.mxu0 %v984
        %2254 = vmatpush1.msra.mxu0 %v983
        %2255 = vmatprep.subr.mxu0 %v986
        %2256 = vmatpush1.msra.mxu0 %v985
        %2257 = vmatprep.subr.mxu0 %v988
        %2258 = vmatpush1.msra.mxu0 %v987
        %2259 = vmatprep.subr.mxu0 %v990
        %2260 = vmatpush1.msra.mxu0 %v989
        %2261 = vmatprep.subr.mxu0 %v992
        %2262 = vmatpush1.msra.mxu0 %v991
        %2263 = vmatprep.subr.mxu0 %v994
        %2264 = vmatpush1.msra.mxu0 %v993
        %2265 = vmatprep.subr.mxu0 %v996
        %2266 = vmatpush1.msra.mxu0 %v995
        %2267 = vmatprep.subr.mxu0 %v998
        %2268 = vmatpush1.msra.mxu0 %v997
        %2269 = vmatprep.subr.mxu0 %v1000
        %2270 = vmatpush1.msra.mxu0 %v999
        %2271 = vmatprep.subr.mxu0 %v1002
        %2272 = vmatpush1.msra.mxu0 %v1001
        %2273 = vmatprep.subr.mxu0 %v1004
        %2274 = vmatpush1.msra.mxu0 %v1003
        %2275 = vmatprep.subr.mxu0 %v1006
        %2276 = vmatpush1.msra.mxu0 %v1005
        %2277 = vmatprep.subr.mxu0 %v1008
        %2278 = vmatpush1.msra.mxu0 %v1007
        %2279 = vmatprep.subr.mxu0 %v1010
        %2280 = vmatpush1.msra.mxu0 %v1009
        %2281 = vmatprep.subr.mxu0 %v1012
        %2282 = vmatpush1.msra.mxu0 %v1011
        %2283 = vmatprep.subr.mxu0 %v1014
        %2284 = vmatpush1.msra.mxu0 %v1013
        %2285 = vmatprep.subr.mxu0 %v1016
        %2286 = vmatpush1.msra.mxu0 %v1015
        %2287 = vmatprep.subr.mxu0 %v1018
        %2288 = vmatpush1.msra.mxu0 %v1017
        %2289 = vmatprep.subr.mxu0 %v1020
        %2290 = vmatpush1.msra.mxu0 %v1019
        %2291 = vmatprep.subr.mxu0 %v1022
        %2292 = vmatpush1.msra.mxu0 %v1021
        %2293 = vmatprep.subr.mxu0 %v1024
        %2294 = vmatpush1.msra.mxu0 %v1023
        %2295 = vmatprep.subr.mxu0 %v1026
        %2296 = vmatpush1.msra.mxu0 %v1025
        %2297 = vmatprep.subr.mxu0 %v1028
        %2298 = vmatpush1.msra.mxu0 %v1027
        %2299 = vmatprep.subr.mxu0 %v1030
        %2300 = vmatpush1.msra.mxu0 %v1029
        %2301 = vmatprep.subr.mxu0 %v1032
        %2302 = vmatpush1.msra.mxu0 %v1031
        %2303 = vmatprep.subr.mxu0 %v1034
        %2304 = vmatpush1.msra.mxu0 %v1033
        %2305 = vmatprep.subr.mxu0 %v1036
        %2306 = vmatpush1.msra.mxu0 %v1035
        %2307 = vmatprep.subr.mxu0 %v1038
        %2308 = vmatpush1.msra.mxu0 %v1037
        %2309 = vmatprep.subr.mxu0 %v1040
        %2310 = vmatpush1.msra.mxu0 %v1039
        %2311 = vmatprep.subr.mxu0 %v1042
        %2312 = vmatpush1.msra.mxu0 %v1041
        %2313 = vmatprep.mubr.f32.mxu0 %v1471
        %2314 = vmatmul.mubr.f32.gmra.mrb[0].mxu0 %v1463
        %v2315 = vpop.f32.mrb[0].mxu0
        %v2316 = vadd.f32 %v2245, %v2315
        %v2317 = vpop.f32.mrb[0].mxu0
        %v2318 = vadd.f32 %v2247, %v2317
        %2319 = vdwg.mxu0
        %2320 = vmatprep.subr.mxu0 %v1044
        %2321 = vmatpush1.msra.mxu0 %v1043
        %2322 = vmatprep.subr.mxu0 %v1046
        %2323 = vmatpush1.msra.mxu0 %v1045
        %2324 = vmatprep.subr.mxu0 %v1048
        %2325 = vmatpush1.msra.mxu0 %v1047
        %2326 = vmatprep.subr.mxu0 %v1050
        %2327 = vmatpush1.msra.mxu0 %v1049
        %2328 = vmatprep.subr.mxu0 %v1052
        %2329 = vmatpush1.msra.mxu0 %v1051
        %2330 = vmatprep.subr.mxu0 %v1054
        %2331 = vmatpush1.msra.mxu0 %v1053
        %2332 = vmatprep.subr.mxu0 %v1056
        %2333 = vmatpush1.msra.mxu0 %v1055
        %2334 = vmatprep.subr.mxu0 %v1058
        %2335 = vmatpush1.msra.mxu0 %v1057
        %2336 = vmatprep.subr.mxu0 %v1060
        %2337 = vmatpush1.msra.mxu0 %v1059
        %2338 = vmatprep.subr.mxu0 %v1062
        %2339 = vmatpush1.msra.mxu0 %v1061
        %2340 = vmatprep.subr.mxu0 %v1064
        %2341 = vmatpush1.msra.mxu0 %v1063
        %2342 = vmatprep.subr.mxu0 %v1066
        %2343 = vmatpush1.msra.mxu0 %v1065
        %2344 = vmatprep.subr.mxu0 %v1068
        %2345 = vmatpush1.msra.mxu0 %v1067
        %2346 = vmatprep.subr.mxu0 %v1070
        %2347 = vmatpush1.msra.mxu0 %v1069
        %2348 = vmatprep.subr.mxu0 %v1072
        %2349 = vmatpush1.msra.mxu0 %v1071
        %2350 = vmatprep.subr.mxu0 %v1074
        %2351 = vmatpush1.msra.mxu0 %v1073
        %2352 = vmatprep.subr.mxu0 %v1076
        %2353 = vmatpush1.msra.mxu0 %v1075
        %2354 = vmatprep.subr.mxu0 %v1078
        %2355 = vmatpush1.msra.mxu0 %v1077
        %2356 = vmatprep.subr.mxu0 %v1080
        %2357 = vmatpush1.msra.mxu0 %v1079
        %2358 = vmatprep.subr.mxu0 %v1082
        %2359 = vmatpush1.msra.mxu0 %v1081
        %2360 = vmatprep.subr.mxu0 %v1084
        %2361 = vmatpush1.msra.mxu0 %v1083
        %2362 = vmatprep.subr.mxu0 %v1086
        %2363 = vmatpush1.msra.mxu0 %v1085
        %2364 = vmatprep.subr.mxu0 %v1088
        %2365 = vmatpush1.msra.mxu0 %v1087
        %2366 = vmatprep.subr.mxu0 %v1090
        %2367 = vmatpush1.msra.mxu0 %v1089
        %2368 = vmatprep.subr.mxu0 %v1092
        %2369 = vmatpush1.msra.mxu0 %v1091
        %2370 = vmatprep.subr.mxu0 %v1094
        %2371 = vmatpush1.msra.mxu0 %v1093
        %2372 = vmatprep.subr.mxu0 %v1096
        %2373 = vmatpush1.msra.mxu0 %v1095
        %2374 = vmatprep.subr.mxu0 %v1098
        %2375 = vmatpush1.msra.mxu0 %v1097
        %2376 = vmatprep.subr.mxu0 %v1100
        %2377 = vmatpush1.msra.mxu0 %v1099
        %2378 = vmatprep.subr.mxu0 %v1102
        %2379 = vmatpush1.msra.mxu0 %v1101
        %2380 = vmatprep.subr.mxu0 %v1104
        %2381 = vmatpush1.msra.mxu0 %v1103
        %2382 = vmatprep.subr.mxu0 %v1106
        %2383 = vmatpush1.msra.mxu0 %v1105
        %2384 = vmatprep.mubr.f32.mxu0 %v1472
        %2385 = vmatmul.mubr.f32.gmra.mrb[0].mxu0 %v1470
        %v2386 = vpop.f32.mrb[0].mxu0
        %v2387 = vadd.f32 %v2316, %v2386
        %v2388 = vpop.f32.mrb[0].mxu0
        %v2389 = vadd.f32 %v2318, %v2388
        %2390 = vdwg.mxu0
        %2391 = vmatprep.subr.mxu0 %v1108
        %2392 = vmatpush1.msra.mxu0 %v1107
        %2393 = vmatprep.subr.mxu0 %v1110
        %2394 = vmatpush1.msra.mxu0 %v1109
        %2395 = vmatprep.subr.mxu0 %v1112
        %2396 = vmatpush1.msra.mxu0 %v1111
        %2397 = vmatprep.subr.mxu0 %v1114
        %2398 = vmatpush1.msra.mxu0 %v1113
        %2399 = vmatprep.subr.mxu0 %v1116
        %2400 = vmatpush1.msra.mxu0 %v1115
        %2401 = vmatprep.subr.mxu0 %v1118
        %2402 = vmatpush1.msra.mxu0 %v1117
        %2403 = vmatprep.subr.mxu0 %v1120
        %2404 = vmatpush1.msra.mxu0 %v1119
        %2405 = vmatprep.subr.mxu0 %v1122
        %2406 = vmatpush1.msra.mxu0 %v1121
        %2407 = vmatprep.subr.mxu0 %v1124
        %2408 = vmatpush1.msra.mxu0 %v1123
        %2409 = vmatprep.subr.mxu0 %v1126
        %2410 = vmatpush1.msra.mxu0 %v1125
        %2411 = vmatprep.subr.mxu0 %v1128
        %2412 = vmatpush1.msra.mxu0 %v1127
        %2413 = vmatprep.subr.mxu0 %v1130
        %2414 = vmatpush1.msra.mxu0 %v1129
        %2415 = vmatprep.subr.mxu0 %v1132
        %2416 = vmatpush1.msra.mxu0 %v1131
        %2417 = vmatprep.subr.mxu0 %v1134
        %2418 = vmatpush1.msra.mxu0 %v1133
        %2419 = vmatprep.subr.mxu0 %v1136
        %2420 = vmatpush1.msra.mxu0 %v1135
        %2421 = vmatprep.subr.mxu0 %v1138
        %2422 = vmatpush1.msra.mxu0 %v1137
        %2423 = vmatprep.subr.mxu0 %v1140
        %2424 = vmatpush1.msra.mxu0 %v1139
        %2425 = vmatprep.subr.mxu0 %v1142
        %2426 = vmatpush1.msra.mxu0 %v1141
        %2427 = vmatprep.subr.mxu0 %v1144
        %2428 = vmatpush1.msra.mxu0 %v1143
        %2429 = vmatprep.subr.mxu0 %v1146
        %2430 = vmatpush1.msra.mxu0 %v1145
        %2431 = vmatprep.subr.mxu0 %v1148
        %2432 = vmatpush1.msra.mxu0 %v1147
        %2433 = vmatprep.subr.mxu0 %v1150
        %2434 = vmatpush1.msra.mxu0 %v1149
        %2435 = vmatprep.subr.mxu0 %v1152
        %2436 = vmatpush1.msra.mxu0 %v1151
        %2437 = vmatprep.subr.mxu0 %v1154
        %2438 = vmatpush1.msra.mxu0 %v1153
        %2439 = vmatprep.subr.mxu0 %v1156
        %2440 = vmatpush1.msra.mxu0 %v1155
        %2441 = vmatprep.subr.mxu0 %v1158
        %2442 = vmatpush1.msra.mxu0 %v1157
        %2443 = vmatprep.subr.mxu0 %v1160
        %2444 = vmatpush1.msra.mxu0 %v1159
        %2445 = vmatprep.subr.mxu0 %v1162
        %2446 = vmatpush1.msra.mxu0 %v1161
        %2447 = vmatprep.subr.mxu0 %v1164
        %2448 = vmatpush1.msra.mxu0 %v1163
        %2449 = vmatprep.subr.mxu0 %v1166
        %2450 = vmatpush1.msra.mxu0 %v1165
        %2451 = vmatprep.subr.mxu0 %v1168
        %2452 = vmatpush1.msra.mxu0 %v1167
        %2453 = vmatprep.subr.mxu0 %v1170
        %2454 = vmatpush1.msra.mxu0 %v1169
        %2455 = vmatprep.mubr.f32.mxu0 %v1488
        %2456 = vmatmul.mubr.f32.gmra.mrb[0].mxu0 %v1480
        %v2457 = vpop.f32.mrb[0].mxu0
        %v2458 = vadd.f32 %v2387, %v2457
        %v2459 = vpop.f32.mrb[0].mxu0
        %v2460 = vadd.f32 %v2389, %v2459
        %2461 = vdwg.mxu0
        %2462 = vmatprep.subr.mxu0 %v1172
        %2463 = vmatpush1.msra.mxu0 %v1171
        %2464 = vmatprep.subr.mxu0 %v1174
        %2465 = vmatpush1.msra.mxu0 %v1173
        %2466 = vmatprep.subr.mxu0 %v1176
        %2467 = vmatpush1.msra.mxu0 %v1175
        %2468 = vmatprep.subr.mxu0 %v1178
        %2469 = vmatpush1.msra.mxu0 %v1177
        %2470 = vmatprep.subr.mxu0 %v1180
        %2471 = vmatpush1.msra.mxu0 %v1179
        %2472 = vmatprep.subr.mxu0 %v1182
        %2473 = vmatpush1.msra.mxu0 %v1181
        %2474 = vmatprep.subr.mxu0 %v1184
        %2475 = vmatpush1.msra.mxu0 %v1183
        %2476 = vmatprep.subr.mxu0 %v1186
        %2477 = vmatpush1.msra.mxu0 %v1185
        %2478 = vmatprep.subr.mxu0 %v1188
        %2479 = vmatpush1.msra.mxu0 %v1187
        %2480 = vmatprep.subr.mxu0 %v1190
        %2481 = vmatpush1.msra.mxu0 %v1189
        %2482 = vmatprep.subr.mxu0 %v1192
        %2483 = vmatpush1.msra.mxu0 %v1191
        %2484 = vmatprep.subr.mxu0 %v1194
        %2485 = vmatpush1.msra.mxu0 %v1193
        %2486 = vmatprep.subr.mxu0 %v1196
        %2487 = vmatpush1.msra.mxu0 %v1195
        %2488 = vmatprep.subr.mxu0 %v1198
        %2489 = vmatpush1.msra.mxu0 %v1197
        %2490 = vmatprep.subr.mxu0 %v1200
        %2491 = vmatpush1.msra.mxu0 %v1199
        %2492 = vmatprep.subr.mxu0 %v1202
        %2493 = vmatpush1.msra.mxu0 %v1201
        %2494 = vmatprep.subr.mxu0 %v1204
        %2495 = vmatpush1.msra.mxu0 %v1203
        %2496 = vmatprep.subr.mxu0 %v1206
        %2497 = vmatpush1.msra.mxu0 %v1205
        %2498 = vmatprep.subr.mxu0 %v1208
        %2499 = vmatpush1.msra.mxu0 %v1207
        %2500 = vmatprep.subr.mxu0 %v1210
        %2501 = vmatpush1.msra.mxu0 %v1209
        %2502 = vmatprep.subr.mxu0 %v1212
        %2503 = vmatpush1.msra.mxu0 %v1211
        %2504 = vmatprep.subr.mxu0 %v1214
        %2505 = vmatpush1.msra.mxu0 %v1213
        %2506 = vmatprep.subr.mxu0 %v1216
        %2507 = vmatpush1.msra.mxu0 %v1215
        %2508 = vmatprep.subr.mxu0 %v1218
        %2509 = vmatpush1.msra.mxu0 %v1217
        %2510 = vmatprep.subr.mxu0 %v1220
        %2511 = vmatpush1.msra.mxu0 %v1219
        %2512 = vmatprep.subr.mxu0 %v1222
        %2513 = vmatpush1.msra.mxu0 %v1221
        %2514 = vmatprep.subr.mxu0 %v1224
        %2515 = vmatpush1.msra.mxu0 %v1223
        %2516 = vmatprep.subr.mxu0 %v1226
        %2517 = vmatpush1.msra.mxu0 %v1225
        %2518 = vmatprep.subr.mxu0 %v1228
        %2519 = vmatpush1.msra.mxu0 %v1227
        %2520 = vmatprep.subr.mxu0 %v1230
        %2521 = vmatpush1.msra.mxu0 %v1229
        %2522 = vmatprep.subr.mxu0 %v1232
        %2523 = vmatpush1.msra.mxu0 %v1231
        %2524 = vmatprep.subr.mxu0 %v1234
        %2525 = vmatpush1.msra.mxu0 %v1233
        %2526 = vmatprep.mubr.f32.mxu0 %v1489
        %2527 = vmatmul.mubr.f32.gmra.mrb[0].mxu0 %v1487
        %v2528 = vpop.f32.mrb[0].mxu0
        %v2529 = vadd.f32 %v2458, %v2528
        %v2530 = vpop.f32.mrb[0].mxu0
        %v2531 = vadd.f32 %v2460, %v2530
        %2532 = vdwg.mxu0
        %2533 = vmatprep.subr.mxu0 %v1236
        %2534 = vmatpush1.msra.mxu0 %v1235
        %2535 = vmatprep.subr.mxu0 %v1238
        %2536 = vmatpush1.msra.mxu0 %v1237
        %2537 = vmatprep.subr.mxu0 %v1240
        %2538 = vmatpush1.msra.mxu0 %v1239
        %2539 = vmatprep.subr.mxu0 %v1242
        %2540 = vmatpush1.msra.mxu0 %v1241
        %2541 = vmatprep.subr.mxu0 %v1244
        %2542 = vmatpush1.msra.mxu0 %v1243
        %2543 = vmatprep.subr.mxu0 %v1246
        %2544 = vmatpush1.msra.mxu0 %v1245
        %2545 = vmatprep.subr.mxu0 %v1248
        %2546 = vmatpush1.msra.mxu0 %v1247
        %2547 = vmatprep.subr.mxu0 %v1250
        %2548 = vmatpush1.msra.mxu0 %v1249
        %2549 = vmatprep.subr.mxu0 %v1252
        %2550 = vmatpush1.msra.mxu0 %v1251
        %2551 = vmatprep.subr.mxu0 %v1254
        %2552 = vmatpush1.msra.mxu0 %v1253
        %2553 = vmatprep.subr.mxu0 %v1256
        %2554 = vmatpush1.msra.mxu0 %v1255
        %2555 = vmatprep.subr.mxu0 %v1258
        %2556 = vmatpush1.msra.mxu0 %v1257
        %2557 = vmatprep.subr.mxu0 %v1260
        %2558 = vmatpush1.msra.mxu0 %v1259
        %2559 = vmatprep.subr.mxu0 %v1262
        %2560 = vmatpush1.msra.mxu0 %v1261
        %2561 = vmatprep.subr.mxu0 %v1264
        %2562 = vmatpush1.msra.mxu0 %v1263
        %2563 = vmatprep.subr.mxu0 %v1266
        %2564 = vmatpush1.msra.mxu0 %v1265
        %2565 = vmatprep.subr.mxu0 %v1268
        %2566 = vmatpush1.msra.mxu0 %v1267
        %2567 = vmatprep.subr.mxu0 %v1270
        %2568 = vmatpush1.msra.mxu0 %v1269
        %2569 = vmatprep.subr.mxu0 %v1272
        %2570 = vmatpush1.msra.mxu0 %v1271
        %2571 = vmatprep.subr.mxu0 %v1274
        %2572 = vmatpush1.msra.mxu0 %v1273
        %2573 = vmatprep.subr.mxu0 %v1276
        %2574 = vmatpush1.msra.mxu0 %v1275
        %2575 = vmatprep.subr.mxu0 %v1278
        %2576 = vmatpush1.msra.mxu0 %v1277
        %2577 = vmatprep.subr.mxu0 %v1280
        %2578 = vmatpush1.msra.mxu0 %v1279
        %2579 = vmatprep.subr.mxu0 %v1282
        %2580 = vmatpush1.msra.mxu0 %v1281
        %2581 = vmatprep.subr.mxu0 %v1284
        %2582 = vmatpush1.msra.mxu0 %v1283
        %2583 = vmatprep.subr.mxu0 %v1286
        %2584 = vmatpush1.msra.mxu0 %v1285
        %2585 = vmatprep.subr.mxu0 %v1288
        %2586 = vmatpush1.msra.mxu0 %v1287
        %2587 = vmatprep.subr.mxu0 %v1290
        %2588 = vmatpush1.msra.mxu0 %v1289
        %2589 = vmatprep.subr.mxu0 %v1292
        %2590 = vmatpush1.msra.mxu0 %v1291
        %2591 = vmatprep.subr.mxu0 %v1294
        %2592 = vmatpush1.msra.mxu0 %v1293
        %2593 = vmatprep.subr.mxu0 %v1296
        %2594 = vmatpush1.msra.mxu0 %v1295
        %2595 = vmatprep.subr.mxu0 %v1298
        %2596 = vmatpush1.msra.mxu0 %v1297
        %2597 = vmatprep.mubr.f32.mxu0 %v1505
        %2598 = vmatmul.mubr.f32.gmra.mrb[0].mxu0 %v1497
        %v2599 = vpop.f32.mrb[0].mxu0
        %v2600 = vadd.f32 %v2529, %v2599
        %v2601 = vpop.f32.mrb[0].mxu0
        %v2602 = vadd.f32 %v2531, %v2601
        %2603 = vdwg.mxu0
        %2604 = vmatprep.subr.mxu0 %v1300
        %2605 = vmatpush1.msra.mxu0 %v1299
        %2606 = vmatprep.subr.mxu0 %v1302
        %2607 = vmatpush1.msra.mxu0 %v1301
        %2608 = vmatprep.subr.mxu0 %v1304
        %2609 = vmatpush1.msra.mxu0 %v1303
        %2610 = vmatprep.subr.mxu0 %v1306
        %2611 = vmatpush1.msra.mxu0 %v1305
        %2612 = vmatprep.subr.mxu0 %v1308
        %2613 = vmatpush1.msra.mxu0 %v1307
        %2614 = vmatprep.subr.mxu0 %v1310
        %2615 = vmatpush1.msra.mxu0 %v1309
        %2616 = vmatprep.subr.mxu0 %v1312
        %2617 = vmatpush1.msra.mxu0 %v1311
        %2618 = vmatprep.subr.mxu0 %v1314
        %2619 = vmatpush1.msra.mxu0 %v1313
        %2620 = vmatprep.subr.mxu0 %v1316
        %2621 = vmatpush1.msra.mxu0 %v1315
        %2622 = vmatprep.subr.mxu0 %v1318
        %2623 = vmatpush1.msra.mxu0 %v1317
        %2624 = vmatprep.subr.mxu0 %v1320
        %2625 = vmatpush1.msra.mxu0 %v1319
        %2626 = vmatprep.subr.mxu0 %v1322
        %2627 = vmatpush1.msra.mxu0 %v1321
        %2628 = vmatprep.subr.mxu0 %v1324
        %2629 = vmatpush1.msra.mxu0 %v1323
        %2630 = vmatprep.subr.mxu0 %v1326
        %2631 = vmatpush1.msra.mxu0 %v1325
        %2632 = vmatprep.subr.mxu0 %v1328
        %2633 = vmatpush1.msra.mxu0 %v1327
        %2634 = vmatprep.subr.mxu0 %v1330
        %2635 = vmatpush1.msra.mxu0 %v1329
        %2636 = vmatprep.subr.mxu0 %v1332
        %2637 = vmatpush1.msra.mxu0 %v1331
        %2638 = vmatprep.subr.mxu0 %v1334
        %2639 = vmatpush1.msra.mxu0 %v1333
        %2640 = vmatprep.subr.mxu0 %v1336
        %2641 = vmatpush1.msra.mxu0 %v1335
        %2642 = vmatprep.subr.mxu0 %v1338
        %2643 = vmatpush1.msra.mxu0 %v1337
        %2644 = vmatprep.subr.mxu0 %v1340
        %2645 = vmatpush1.msra.mxu0 %v1339
        %2646 = vmatprep.subr.mxu0 %v1342
        %2647 = vmatpush1.msra.mxu0 %v1341
        %2648 = vmatprep.subr.mxu0 %v1344
        %2649 = vmatpush1.msra.mxu0 %v1343
        %2650 = vmatprep.subr.mxu0 %v1346
        %2651 = vmatpush1.msra.mxu0 %v1345
        %2652 = vmatprep.subr.mxu0 %v1348
        %2653 = vmatpush1.msra.mxu0 %v1347
        %2654 = vmatprep.subr.mxu0 %v1350
        %2655 = vmatpush1.msra.mxu0 %v1349
        %2656 = vmatprep.subr.mxu0 %v1352
        %2657 = vmatpush1.msra.mxu0 %v1351
        %2658 = vmatprep.subr.mxu0 %v1354
        %2659 = vmatpush1.msra.mxu0 %v1353
        %2660 = vmatprep.subr.mxu0 %v1356
        %2661 = vmatpush1.msra.mxu0 %v1355
        %2662 = vmatprep.subr.mxu0 %v1358
        %2663 = vmatpush1.msra.mxu0 %v1357
        %2664 = vmatprep.subr.mxu0 %v1360
        %2665 = vmatpush1.msra.mxu0 %v1359
        %2666 = vmatprep.subr.mxu0 %v1362
        %2667 = vmatpush1.msra.mxu0 %v1361
        %2668 = vmatprep.mubr.f32.mxu0 %v1506
        %2669 = vmatmul.mubr.f32.gmra.mrb[0].mxu0 %v1504
        %v2670 = vpop.f32.mrb[0].mxu0
        %v2671 = vadd.f32 %v2600, %v2670
        %v2672 = vpop.f32.mrb[0].mxu0
        %v2673 = vadd.f32 %v2602, %v2672
        %2674 = vdwg.mxu0
        %v2677 = vcombine.low %v2671, %v2673
        %v2679 = vunpack.c.l.s4 1983009808
        %v2680 = vunpack.c.0.s8 %v2679
        %v2681 = vlaneseq
        %v2682 = vshrl.u32 %v2681, 7
        %v2683 = vsub.s32 %v2680, %v2682
        %v2684 = vrot.slane %v2677, %v2683
        %v2686 = vadd.f32 %v330, %v2684
        %2687 = vst [vmem:[#allocation2] sm:$0xf] %v2686
        %p2688 = scmp.eq.s32.totalorder %s24, 4
        // Predicated region
        $region49: #{lenet_forward.5} parent=39 // pred_check
          %p2689 = pneg %p2688
        $region50: #{lenet_forward.5} parent=39 // pred_check_branch
          %2691 = sbr.rel (%p2689) target = $region52
        $region51: #{lenet_forward.5} parent=39 // pred_region
          %v2692 = vld [vmem:[#allocation2] sm:$0xf]
          %v2693 = vld [vmem:[%s313] sm:$0x3]
          %v2695 = vlaneseq
          %v2696 = vshrl.u32 %v2695, 7
          %v2697 = vsub.s32 0, %v2696
          %v2698 = vrot.slane %v2693, %v2697
          %v2699 = vlaneseq
          %v2700 = vshrl.u32 %v2699, 7
          %v2701 = vsub.s32 1, %v2700
          %v2702 = vrot.slane %v2693, %v2701
          %v2703 = vcombine.low %v2698, %v2702
          %v2705 = vunpack.c.l.s4 1983009808
          %v2706 = vunpack.c.0.s8 %v2705
          %v2707 = vlaneseq
          %v2708 = vshrl.u32 %v2707, 7
          %v2709 = vsub.s32 %v2706, %v2708
          %v2710 = vrot.slane %v2703, %v2709
          %v2712 = vadd.f32 %v2692, %v2710
          %v2713 = vmax.f32 %v2712, 0.0
          %v2714 = vld [vmem:[%s319] sm:$0xff]
          %v2715 = vld [vmem:[%s319 + $0x8] sm:$0xff]
          %v2716 = vld [vmem:[%s319 + $0x10] sm:$0xff]
          %v2717 = vld [vmem:[%s319 + $0x18] sm:$0xff]
          %v2718 = vld [vmem:[%s319 + $0x20] sm:$0xff]
          %v2719 = vld [vmem:[%s319 + $0x28] sm:$0xff]
          %v2720 = vld [vmem:[%s319 + $0x30] sm:$0xff]
          %v2721 = vld [vmem:[%s319 + $0x38] sm:$0xff]
          %v2722 = vld [vmem:[%s319 + $0x40] sm:$0xff]
          %v2723 = vld [vmem:[%s319 + $0x48] sm:$0xff]
          %v2724 = vld [vmem:[%s319 + $0x50] sm:$0xff]
          %v2725 = vld [vmem:[%s319 + $0x58] sm:$0xff]
          %v2726 = vld [vmem:[%s319 + $0x60] sm:$0xff]
          %v2727 = vld [vmem:[%s319 + $0x68] sm:$0xff]
          %v2728 = vld [vmem:[%s319 + $0x70] sm:$0xff]
          %v2729 = vld [vmem:[%s319 + $0x78] sm:$0xff]
          %v2730 = vld [vmem:[%s319 + $0x80] sm:$0xff]
          %v2731 = vld [vmem:[%s319 + $0x88] sm:$0xff]
          %v2732 = vld [vmem:[%s319 + $0x90] sm:$0xff]
          %v2733 = vld [vmem:[%s319 + $0x98] sm:$0xff]
          %v2734 = vld [vmem:[%s319 + $0xa0] sm:$0xff]
          %v2735 = vld [vmem:[%s319 + $0xa8] sm:$0xff]
          %v2736 = vld [vmem:[%s319 + $0xb0] sm:$0xff]
          %v2737 = vld [vmem:[%s319 + $0xb8] sm:$0xff]
          %v2738 = vld [vmem:[%s319 + $0xc0] sm:$0xff]
          %v2739 = vld [vmem:[%s319 + $0xc8] sm:$0xff]
          %v2740 = vld [vmem:[%s319 + $0xd0] sm:$0xff]
          %v2741 = vld [vmem:[%s319 + $0xd8] sm:$0xff]
          %v2742 = vld [vmem:[%s319 + $0xe0] sm:$0xff]
          %v2743 = vld [vmem:[%s319 + $0xe8] sm:$0xff]
          %v2744 = vld [vmem:[%s319 + $0xf0] sm:$0xff]
          %v2745 = vld [vmem:[%s319 + $0xf8] sm:$0xff]
          %p2746 = scmp.eq.s32.totalorder %s23, 0
          %v2747 = vld [vmem:[%s4] sm:$0x1]
          %s2748 = scalar_select %p2746, 1, 0
          %v2749 = vstv %s2748
          %vm2750 = vcmp.eq.s32.totalorder %v2749, 1
          %v2751 = vsel %vm2750, %v2747, 0.0
          %v2753 = vlaneseq
          %v2754 = vshrl.u32 %v2753, 7
          %v2755 = vsub.s32 0, %v2754
          %v2756 = vrot.slane %v2751, %v2755
          %v2760 = vunpack.c.l.s4 1983009808
          %v2761 = vunpack.c.0.s8 %v2760
          %v2762 = vlaneseq
          %v2763 = vshrl.u32 %v2762, 7
          %v2764 = vsub.s32 %v2761, %v2763
          %v2765 = vrot.slane %v2713, %v2764
          %v2766 = vcombine.high %v2765, %v2765
          %2769 = vmatprep.subr.mxu0 0.0
          %2770 = vmatpush1.msra.mxu0 %v2714
          %2771 = vmatprep.subr.mxu0 0.0
          %2772 = vmatpush1.msra.mxu0 %v2715
          %2773 = vmatprep.subr.mxu0 0.0
          %2774 = vmatpush1.msra.mxu0 %v2716
          %2775 = vmatprep.subr.mxu0 0.0
          %2776 = vmatpush1.msra.mxu0 %v2717
          %2777 = vmatprep.subr.mxu0 0.0
          %2778 = vmatpush1.msra.mxu0 %v2718
          %2779 = vmatprep.subr.mxu0 0.0
          %2780 = vmatpush1.msra.mxu0 %v2719
          %2781 = vmatprep.subr.mxu0 0.0
          %2782 = vmatpush1.msra.mxu0 %v2720
          %2783 = vmatprep.subr.mxu0 0.0
          %2784 = vmatpush1.msra.mxu0 %v2721
          %2785 = vmatprep.subr.mxu0 0.0
          %2786 = vmatpush1.msra.mxu0 %v2722
          %2787 = vmatprep.subr.mxu0 0.0
          %2788 = vmatpush1.msra.mxu0 %v2723
          %2789 = vmatprep.subr.mxu0 0.0
          %2790 = vmatpush1.msra.mxu0 %v2724
          %2791 = vmatprep.subr.mxu0 0.0
          %2792 = vmatpush1.msra.mxu0 %v2725
          %2793 = vmatprep.subr.mxu0 0.0
          %2794 = vmatpush1.msra.mxu0 %v2726
          %2795 = vmatprep.subr.mxu0 0.0
          %2796 = vmatpush1.msra.mxu0 %v2727
          %2797 = vmatprep.subr.mxu0 0.0
          %2798 = vmatpush1.msra.mxu0 %v2728
          %2799 = vmatprep.subr.mxu0 0.0
          %2800 = vmatpush1.msra.mxu0 %v2729
          %2801 = vmatprep.subr.mxu0 0.0
          %2802 = vmatpush1.msra.mxu0 %v2730
          %2803 = vmatprep.subr.mxu0 0.0
          %2804 = vmatpush1.msra.mxu0 %v2731
          %2805 = vmatprep.subr.mxu0 0.0
          %2806 = vmatpush1.msra.mxu0 %v2732
          %2807 = vmatprep.subr.mxu0 0.0
          %2808 = vmatpush1.msra.mxu0 %v2733
          %2809 = vmatprep.subr.mxu0 0.0
          %2810 = vmatpush1.msra.mxu0 %v2734
          %2811 = vmatprep.subr.mxu0 0.0
          %2812 = vmatpush1.msra.mxu0 %v2735
          %2813 = vmatprep.subr.mxu0 0.0
          %2814 = vmatpush1.msra.mxu0 %v2736
          %2815 = vmatprep.subr.mxu0 0.0
          %2816 = vmatpush1.msra.mxu0 %v2737
          %2817 = vmatprep.subr.mxu0 0.0
          %2818 = vmatpush1.msra.mxu0 %v2738
          %2819 = vmatprep.subr.mxu0 0.0
          %2820 = vmatpush1.msra.mxu0 %v2739
          %2821 = vmatprep.subr.mxu0 0.0
          %2822 = vmatpush1.msra.mxu0 %v2740
          %2823 = vmatprep.subr.mxu0 0.0
          %2824 = vmatpush1.msra.mxu0 %v2741
          %2825 = vmatprep.subr.mxu0 0.0
          %2826 = vmatpush1.msra.mxu0 %v2742
          %2827 = vmatprep.subr.mxu0 0.0
          %2828 = vmatpush1.msra.mxu0 %v2743
          %2829 = vmatprep.subr.mxu0 0.0
          %2830 = vmatpush1.msra.mxu0 %v2744
          %2831 = vmatprep.subr.mxu0 0.0
          %2832 = vmatpush1.msra.mxu0 %v2745
          %2833 = vmatprep.mubr.f32.mxu0 %v2766
          %2834 = vmatmul.mubr.f32.gmra.mrb[0].mxu0 %v2765
          %v2835 = vpop.f32.mrb[0].mxu0
          %v2836 = vadd.f32 %v2756, %v2835
          %v2837 = vpop.f32.mrb[0].mxu0
          %2838 = vdwg.mxu0
          %vm2839 = vcmask 74752
          %2840 = vst.msk [vmem:[%s324] sm:$0x3] %vm2839, %v2836
        $region52: #{lenet_forward.5} parent=39 // pred_fallthru
          _
        %p2841 = scmp.lt.s32.totalorder %s23, 1
        %s2842 = scalar_select %p2841, %s23, 1
        %s2843 = smul.addr %s2842, 2
        %s2844 = scalar_lea.vmem %s5, %s2843
        // Predicated region
        $region53: #{lenet_forward.5} parent=39 // pred_check
          %p2845 = pneg %p176
        $region54: #{lenet_forward.5} parent=39 // pred_check_branch
          %2847 = sbr.rel (%p2845) target = $region56
        $region55: #{lenet_forward.5} parent=39 // pred_region
          _
        $region56: #{lenet_forward.5} parent=39 // pred_fallthru
          _
      $region40: #{lenet_forward.5} parent=5 // pred_fallthru
        _
      %p2848 = scmp.le.s32.totalorder 2, %s14
      // Predicated region
      $region57: #{lenet_forward.5} parent=5 // pred_check
        %p2849 = pneg %p2848
      $region58: #{lenet_forward.5} parent=5 // pred_check_branch
        %2851 = sbr.rel (%p2849) target = $region60
      $region59: #{lenet_forward.5} parent=5 // pred_region
        %s2852 = ssub.s32 %s14, 2
        // Predicated region
        $region61: #{lenet_forward.5} parent=59 // pred_check
          %p2853 = pneg %p182
        $region62: #{lenet_forward.5} parent=59 // pred_check_branch
          %2855 = sbr.rel (%p2853) target = $region64
        $region63: #{lenet_forward.5} parent=59 // pred_region
          %p2856 = scmp.lt.s32.totalorder %s25, 1
          %s2857 = scalar_select %p2856, %s25, 1
          %s2858 = smul.addr %s2857, 2
          %s2859 = scalar_lea.vmem %s5, %s2858
        $region64: #{lenet_forward.5} parent=59 // pred_fallthru
          _
      $region60: #{lenet_forward.5} parent=5 // pred_fallthru
        _
    $region6: #{lenet_forward.5} parent=1 // loop_footer
      %s18 = sadd.s32 1, %s14
    $region7: #{lenet_forward.5} parent=1 // loop_footer_branch
      %13 = sbr.rel target = $region3
    $region8: #{lenet_forward.5} parent=1 // loop_exit
      _
    %2860 = vsyncpa [#allocation4], 1
    %s2861 = scalar_lea.sflag [#allocation4], 1
    %2862 = vsyncpa %s2861, 1

</llo_original>
